<compile_context>
chip_gen: v7x
topology: tpu7x:2x2x1
jax: 0.10.0
libtpu: 0.0.40
codegen_flags: <defaults>
</compile_context>

<pallas_src>
import jax
import jax.numpy as jnp
from jax import lax
from jax.experimental import pallas as pl
from jax.experimental.pallas import tpu as pltpu

EPS = 1e-5
INV_1414 = 1.0 / 1.414
LANES = 128


def _round_up(x, m):
    return (x + m - 1) // m * m


# --------------------------------------------------------------------------- kernel
def _resblock_kernel(xb_ref, w1_ref, b1_ref, w2_ref, b2_ref, ws_ref, bsk_ref,
                     out_ref, mid_ref):
    """One (batch, row-band) grid step.

    xb_ref : (TH+4, W+2, CIN_P)  bf16  zero-padded input band (2-row / 1-col halo)
    w1_ref : (9, CIN_P, COUT_P)  bf16  conv1 3x3 weights (BN1 scale folded in)
    w2_ref : (9, COUT_P, COUT_P) bf16  conv2 3x3 weights (BN2 scale folded in)
    ws_ref : (CIN_P, COUT_P)     bf16  skip 1x1 weights (skip-BN scale folded in)
    b*_ref : (1, COUT_P)         f32   per-channel shifts (folded BN shift / bias)
    out_ref: (TH, W, COUT_P)     f32
    mid_ref: (TH+2, W+2, COUT_P) bf16  scratch: conv1 output band + conv2 halo
    """
    TH = out_ref.shape[0]
    TH2 = TH + 2
    _, Wp, CIN_P = xb_ref.shape
    W = Wp - 2
    COUT_P = out_ref.shape[-1]
    M1 = TH2 * W
    M2 = TH * W

    r = pl.program_id(1)
    last_r = pl.num_programs(1) - 1

    # ---- conv1 (3x3, pad=1) + BN1(shift) + ReLU over band rows incl. 1-row halo ----
    # Shifted windows are read directly from the ref; K=CIN_P=128 per tap, f32 acc.
    acc1 = jnp.zeros((M1, COUT_P), jnp.float32)
    for k in range(9):
        dy, dx = divmod(k, 3)
        xs = xb_ref[dy:dy + TH2, dx:dx + W, :].reshape(M1, CIN_P)
        acc1 += jnp.dot(xs, w1_ref[k], preferred_element_type=jnp.float32)
    mid = jnp.maximum(acc1 + b1_ref[...], 0.0).astype(mid_ref.dtype)

    # Write the interior directly; zero only the 1-px column borders (no full memset).
    mid_ref[:, 1:W + 1, :] = mid.reshape(TH2, W, COUT_P)
    mid_ref[:, 0:1, :] = jnp.zeros((TH2, 1, COUT_P), mid_ref.dtype)
    mid_ref[:, W + 1:W + 2, :] = jnp.zeros((TH2, 1, COUT_P), mid_ref.dtype)

    # conv2's zero padding at the image top / bottom edges (only first / last band).
    @pl.when(r == 0)
    def _():
        mid_ref[0:1, :, :] = jnp.zeros((1, W + 2, COUT_P), mid_ref.dtype)

    @pl.when(r == last_r)
    def _():
        mid_ref[TH2 - 1:TH2, :, :] = jnp.zeros((1, W + 2, COUT_P), mid_ref.dtype)

    # ---- conv2 (3x3, pad=1) + BN2(shift) ----
    acc2 = jnp.zeros((M2, COUT_P), jnp.float32)
    for k in range(9):
        dy, dx = divmod(k, 3)
        ms = mid_ref[dy:dy + TH, dx:dx + W, :].reshape(M2, COUT_P)
        acc2 += jnp.dot(ms, w2_ref[k], preferred_element_type=jnp.float32)
    out_main = acc2 + b2_ref[...]

    # ---- skip: 1x1 conv (+bias) + BN (scale folded into ws, bias folded into bsk) ----
    xc = xb_ref[2:2 + TH, 1:1 + W, :].reshape(M2, CIN_P)   # band centre window
    res = jnp.dot(xc, ws_ref[...], preferred_element_type=jnp.float32) + bsk_ref[...]

    # ---- merge ----
    out = jnp.maximum((res + out_main) * INV_1414, 0.0)
    out_ref[...] = out.reshape(TH, W, COUT_P)


# --------------------------------------------------------------------------- wrapper
def _fold_bn(gamma, beta, mean, var):
    scale = gamma / jnp.sqrt(var + EPS)
    shift = beta - mean * scale
    return scale, shift


def _pick_tile_h(H, W, cin_p, cout_p, budget_bytes=8 * 1024 * 1024):
    """Largest divisor of H whose per-step working set fits a conservative budget
    (safe for v5e's 16 MiB scoped default; v6e/v7x have more headroom)."""
    best = 1
    for th in range(1, H + 1):
        if H % th:
            continue
        in_b = (th + 4) * (W + 2) * cin_p * 2 * 2     # bf16 input band, double-buffered
        out_b = th * W * cout_p * 4 * 2               # f32 output band, double-buffered
        mid_b = (th + 2) * (W + 2) * cout_p * 2       # bf16 scratch
        if in_b + out_b + mid_b <= budget_bytes:
            best = th
    return best


def resblock_forward(x_nchw, params, stride=1, tile_h=None):
    """ResBlock forward via the Pallas kernel. x_nchw: (N, Cin, H, W) f32."""
    # TODO(synk): stride > 1 not implemented in the kernel (module default is stride=1).
    assert stride == 1, "kernel implements stride=1 only"

    N, Cin, H, W = x_nchw.shape
    Cout = params["w1"].shape[-1]
    CIN_P = _round_up(Cin, LANES)    # lane-dense channel padding
    COUT_P = _round_up(Cout, LANES)

    if tile_h is None:
        tile_h = _pick_tile_h(H, W, CIN_P, COUT_P)
    assert H % tile_h == 0, (H, tile_h)
    TH = tile_h
    R = H // TH

    # ---- fold BN scales into the conv weights (wrapper-side, f32) -------------------
    s1, b1 = _fold_bn(params["bn1_g"], params["bn1_b"], params["bn1_m"], params["bn1_v"])
    s2, b2 = _fold_bn(params["bn2_g"], params["bn2_b"], params["bn2_m"], params["bn2_v"])
    ss, ts = _fold_bn(params["bns_g"], params["bns_b"], params["bns_m"], params["bns_v"])

    w1 = params["w1"] * s1                      # (3,3,Cin,Cout)
    w2 = params["w2"] * s2
    ws = params["ws"] * ss                      # (Cin,Cout)
    bskip = params["bs"] * ss + ts              # skip conv bias folded through skip BN

    # ---- channel-pad, reshape taps, cast to bf16 ------------------------------------
    def pad_w3(w, ci_p, co_p):
        w = jnp.pad(w, ((0, 0), (0, 0), (0, ci_p - w.shape[2]), (0, co_p - w.shape[3])))
        return w.reshape(9, ci_p, co_p).astype(jnp.bfloat16)

    w1p = pad_w3(w1, CIN_P, COUT_P)
    w2p = pad_w3(w2, COUT_P, COUT_P)
    wsp = jnp.pad(ws, ((0, CIN_P - Cin), (0, COUT_P - Cout))).astype(jnp.bfloat16)

    def pad_b(b):
        return jnp.pad(b, (0, COUT_P - Cout)).astype(jnp.float32).reshape(1, COUT_P)

    b1p, b2p, bskp = pad_b(b1), pad_b(b2), pad_b(bskip)

    # ---- NCHW -> NHWC, channel pad, spatial halo pad (2 rows / 1 col), bf16 ---------
    x = jnp.transpose(x_nchw, (0, 2, 3, 1)).astype(jnp.float32)
    xpad = jnp.pad(x, ((0, 0), (2, 2), (1, 1), (0, CIN_P - Cin))).astype(jnp.bfloat16)
    # Pre-band rows so each grid step gets its (TH+4)-row halo window with a plain
    # Blocked BlockSpec (halo rows duplicated in HBM: (TH+4)/TH overhead).
    x_bands = jnp.stack([xpad[:, b * TH:b * TH + TH + 4] for b in range(R)], axis=1)
    # x_bands: (N, R, TH+4, W+2, CIN_P)

    full = lambda a: pl.BlockSpec(a.shape, lambda n, r: (0,) * a.ndim)

    out_nhwc = pl.pallas_call(
        _resblock_kernel,
        out_shape=jax.ShapeDtypeStruct((N, H, W, COUT_P), jnp.float32),
        grid=(N, R),
        in_specs=[
            pl.BlockSpec((None, None, TH + 4, W + 2, CIN_P),
                         lambda n, r: (n, r, 0, 0, 0)),
            full(w1p), full(b1p), full(w2p), full(b2p), full(wsp), full(bskp),
        ],
        out_specs=pl.BlockSpec((None, TH, W, COUT_P), lambda n, r: (n, r, 0, 0)),
        scratch_shapes=[pltpu.VMEM((TH + 2, W + 2, COUT_P), jnp.bfloat16)],
        compiler_params=pltpu.CompilerParams(
            dimension_semantics=("parallel", "parallel"),   # v7x: shard across 2 TCs
            vmem_limit_bytes=32 * 1024 * 1024,
        ),
    )(x_bands, w1p, b1p, w2p, b2p, wsp, bskp)

    # glue: drop channel padding, NHWC -> NCHW
    return jnp.transpose(out_nhwc[..., :Cout], (0, 3, 1, 2))


# --------------------------------------------------------------------------- reference
def resblock_reference(x_nchw, params):
    """Pure-JAX f32 reference (lax.conv) for correctness checking."""
    x = jnp.transpose(x_nchw, (0, 2, 3, 1)).astype(jnp.float32)
    dn = ("NHWC", "HWIO", "NHWC")

    def bn(y, g, b, m, v):
        s = g / jnp.sqrt(v + EPS)
        return y * s + (b - m * s)

    h = lax.conv_general_dilated(x, params["w1"], (1, 1), "SAME", dimension_numbers=dn)
    h = jnp.maximum(bn(h, params["bn1_g"], params["bn1_b"], params["bn1_m"], params["bn1_v"]), 0.0)
    h = lax.conv_general_dilated(h, params["w2"], (1, 1), "SAME", dimension_numbers=dn)
    h = bn(h, params["bn2_g"], params["bn2_b"], params["bn2_m"], params["bn2_v"])

    ws = params["ws"][None, None]  # (1,1,Cin,Cout)
    r = lax.conv_general_dilated(x, ws, (1, 1), "SAME", dimension_numbers=dn) + params["bs"]
    r = bn(r, params["bns_g"], params["bns_b"], params["bns_m"], params["bns_v"])

    out = jnp.maximum((r + h) * INV_1414, 0.0)
    return jnp.transpose(out, (0, 3, 1, 2))


def make_params(key, inplanes, planes):
    ks = jax.random.split(key, 8)
    return {
        "w1": jax.random.normal(ks[0], (3, 3, inplanes, planes), jnp.float32) * 0.2,
        "w2": jax.random.normal(ks[1], (3, 3, planes, planes), jnp.float32) * 0.2,
        "ws": jax.random.normal(ks[2], (inplanes, planes), jnp.float32) * 0.2,
        "bs": jax.random.normal(ks[3], (planes,), jnp.float32) * 0.1,
        "bn1_g": 1.0 + 0.1 * jax.random.normal(ks[4], (planes,), jnp.float32),
        "bn1_b": 0.05 * jnp.arange(planes, dtype=jnp.float32),
        "bn1_m": jnp.zeros((planes,), jnp.float32),
        "bn1_v": jnp.ones((planes,), jnp.float32),
        "bn2_g": 1.0 + 0.1 * jax.random.normal(ks[5], (planes,), jnp.float32),
        "bn2_b": -0.03 * jnp.arange(planes, dtype=jnp.float32),
        "bn2_m": jnp.zeros((planes,), jnp.float32),
        "bn2_v": jnp.ones((planes,), jnp.float32),
        "bns_g": 1.0 + 0.1 * jax.random.normal(ks[6], (planes,), jnp.float32),
        "bns_b": 0.02 * jnp.arange(planes, dtype=jnp.float32),
        "bns_m": jnp.zeros((planes,), jnp.float32),
        "bns_v": jnp.ones((planes,), jnp.float32),
    }


if __name__ == "__main__":
    key = jax.random.PRNGKey(0)
    kx, kp = jax.random.split(key)

    N, Cin, Cout, H, W = 2, 4, 8, 16, 16
    x = jax.random.normal(kx, (N, Cin, H, W), jnp.float32)
    params = make_params(kp, Cin, Cout)

    ref = jax.block_until_ready(resblock_reference(x, params))

    # tile_h=8 exercises the multi-band halo path; None exercises auto tile selection.
    for th in (8, None):
        out = jax.block_until_ready(resblock_forward(x, params, stride=1, tile_h=th))
        assert out.shape == (N, Cout, H, W), out.shape
        # bf16 matmul inputs (f32 accumulation) vs f32 reference -> bf16-level tolerance.
        err = float(jnp.max(jnp.abs(out - ref)))
        assert jnp.allclose(out, ref, rtol=2e-2, atol=1e-1), err

    print("KERNEL_OK")
</pallas_src>

<mosaic_0001>
module attributes {stable_mosaic.version = 11 : i64} {
  func.func @_resblock_kernel(%arg0: i32, %arg1: i32, %arg2: memref<1x1x12x18x128xbf16, #tpu.memory_space<vmem>>, %arg3: memref<9x128x128xbf16, #tpu.memory_space<vmem>>, %arg4: memref<1x128xf32, #tpu.memory_space<vmem>>, %arg5: memref<9x128x128xbf16, #tpu.memory_space<vmem>>, %arg6: memref<1x128xf32, #tpu.memory_space<vmem>>, %arg7: memref<128x128xbf16, #tpu.memory_space<vmem>>, %arg8: memref<1x128xf32, #tpu.memory_space<vmem>>, %arg9: memref<1x8x16x128xf32, #tpu.memory_space<vmem>>, %arg10: memref<10x18x128xbf16, #tpu.memory_space<vmem>>) attributes {dimension_semantics = [#tpu.dimension_semantics<parallel>, #tpu.dimension_semantics<parallel>], iteration_bounds = array<i64: 2, 2>, scalar_prefetch = 0 : i64, scratch_operands = 1 : i64, tpu.core_type = #tpu.core_type<tc>, window_params = [{transform_indices = @transform_0, window_bounds = array<i64: 1, 1, 12, 18, 128>}, {pipeline_mode = #tpu.pipeline_mode<synchronous>, transform_indices = @transform_1, window_bounds = array<i64: 9, 128, 128>}, {pipeline_mode = #tpu.pipeline_mode<synchronous>, transform_indices = @transform_2, window_bounds = array<i64: 1, 128>}, {pipeline_mode = #tpu.pipeline_mode<synchronous>, transform_indices = @transform_3, window_bounds = array<i64: 9, 128, 128>}, {pipeline_mode = #tpu.pipeline_mode<synchronous>, transform_indices = @transform_4, window_bounds = array<i64: 1, 128>}, {pipeline_mode = #tpu.pipeline_mode<synchronous>, transform_indices = @transform_5, window_bounds = array<i64: 128, 128>}, {pipeline_mode = #tpu.pipeline_mode<synchronous>, transform_indices = @transform_6, window_bounds = array<i64: 1, 128>}, {transform_indices = @transform_7, window_bounds = array<i64: 1, 8, 16, 128>}]} {
    %cst = arith.constant 0.000000e+00 : f32
    %0 = vector.broadcast %cst : f32 to vector<160x128xf32>
    %c0 = arith.constant 0 : index
    %c0_0 = arith.constant 0 : index
    %c0_1 = arith.constant 0 : index
    %c0_2 = arith.constant 0 : index
    %c0_3 = arith.constant 0 : index
    %1 = vector.load %arg2[%c0, %c0_0, %c0_1, %c0_2, %c0_3] : memref<1x1x12x18x128xbf16, #tpu.memory_space<vmem>>, vector<1x1x10x16x128xbf16>
    %2 = vector.shape_cast %1 : vector<1x1x10x16x128xbf16> to vector<10x16x128xbf16>
    %3 = vector.shape_cast %2 : vector<10x16x128xbf16> to vector<160x128xbf16>
    %c0_4 = arith.constant 0 : index
    %c0_5 = arith.constant 0 : index
    %c0_6 = arith.constant 0 : index
    %4 = vector.load %arg3[%c0_4, %c0_5, %c0_6] : memref<9x128x128xbf16, #tpu.memory_space<vmem>>, vector<1x128x128xbf16>
    %5 = vector.shape_cast %4 : vector<1x128x128xbf16> to vector<128x128xbf16>
    %cst_7 = arith.constant dense<0.000000e+00> : vector<160x128xf32>
    %6 = tpu.matmul %3, %5, %cst_7 {dimension_numbers = #tpu.dot_dimension_numbers<[1], [0], [0], [1], [0, 0, 1, 1], [], []>} : vector<160x128xbf16>, vector<128x128xbf16>, vector<160x128xf32> -> vector<160x128xf32>
    %7 = arith.addf %0, %6 : vector<160x128xf32>
    %c0_8 = arith.constant 0 : index
    %c0_9 = arith.constant 0 : index
    %c0_10 = arith.constant 0 : index
    %c1 = arith.constant 1 : index
    %c0_11 = arith.constant 0 : index
    %8 = vector.load %arg2[%c0_8, %c0_9, %c0_10, %c1, %c0_11] : memref<1x1x12x18x128xbf16, #tpu.memory_space<vmem>>, vector<1x1x10x16x128xbf16>
    %9 = vector.shape_cast %8 : vector<1x1x10x16x128xbf16> to vector<10x16x128xbf16>
    %10 = vector.shape_cast %9 : vector<10x16x128xbf16> to vector<160x128xbf16>
    %c1_12 = arith.constant 1 : index
    %c0_13 = arith.constant 0 : index
    %c0_14 = arith.constant 0 : index
    %11 = vector.load %arg3[%c1_12, %c0_13, %c0_14] : memref<9x128x128xbf16, #tpu.memory_space<vmem>>, vector<1x128x128xbf16>
    %12 = vector.shape_cast %11 : vector<1x128x128xbf16> to vector<128x128xbf16>
    %cst_15 = arith.constant dense<0.000000e+00> : vector<160x128xf32>
    %13 = tpu.matmul %10, %12, %cst_15 {dimension_numbers = #tpu.dot_dimension_numbers<[1], [0], [0], [1], [0, 0, 1, 1], [], []>} : vector<160x128xbf16>, vector<128x128xbf16>, vector<160x128xf32> -> vector<160x128xf32>
    %14 = arith.addf %7, %13 : vector<160x128xf32>
    %c0_16 = arith.constant 0 : index
    %c0_17 = arith.constant 0 : index
    %c0_18 = arith.constant 0 : index
    %c2 = arith.constant 2 : index
    %c0_19 = arith.constant 0 : index
    %15 = vector.load %arg2[%c0_16, %c0_17, %c0_18, %c2, %c0_19] : memref<1x1x12x18x128xbf16, #tpu.memory_space<vmem>>, vector<1x1x10x16x128xbf16>
    %16 = vector.shape_cast %15 : vector<1x1x10x16x128xbf16> to vector<10x16x128xbf16>
    %17 = vector.shape_cast %16 : vector<10x16x128xbf16> to vector<160x128xbf16>
    %c2_20 = arith.constant 2 : index
    %c0_21 = arith.constant 0 : index
    %c0_22 = arith.constant 0 : index
    %18 = vector.load %arg3[%c2_20, %c0_21, %c0_22] : memref<9x128x128xbf16, #tpu.memory_space<vmem>>, vector<1x128x128xbf16>
    %19 = vector.shape_cast %18 : vector<1x128x128xbf16> to vector<128x128xbf16>
    %cst_23 = arith.constant dense<0.000000e+00> : vector<160x128xf32>
    %20 = tpu.matmul %17, %19, %cst_23 {dimension_numbers = #tpu.dot_dimension_numbers<[1], [0], [0], [1], [0, 0, 1, 1], [], []>} : vector<160x128xbf16>, vector<128x128xbf16>, vector<160x128xf32> -> vector<160x128xf32>
    %21 = arith.addf %14, %20 : vector<160x128xf32>
    %c0_24 = arith.constant 0 : index
    %c0_25 = arith.constant 0 : index
    %c1_26 = arith.constant 1 : index
    %c0_27 = arith.constant 0 : index
    %c0_28 = arith.constant 0 : index
    %22 = vector.load %arg2[%c0_24, %c0_25, %c1_26, %c0_27, %c0_28] : memref<1x1x12x18x128xbf16, #tpu.memory_space<vmem>>, vector<1x1x10x16x128xbf16>
    %23 = vector.shape_cast %22 : vector<1x1x10x16x128xbf16> to vector<10x16x128xbf16>
    %24 = vector.shape_cast %23 : vector<10x16x128xbf16> to vector<160x128xbf16>
    %c3 = arith.constant 3 : index
    %c0_29 = arith.constant 0 : index
    %c0_30 = arith.constant 0 : index
    %25 = vector.load %arg3[%c3, %c0_29, %c0_30] : memref<9x128x128xbf16, #tpu.memory_space<vmem>>, vector<1x128x128xbf16>
    %26 = vector.shape_cast %25 : vector<1x128x128xbf16> to vector<128x128xbf16>
    %cst_31 = arith.constant dense<0.000000e+00> : vector<160x128xf32>
    %27 = tpu.matmul %24, %26, %cst_31 {dimension_numbers = #tpu.dot_dimension_numbers<[1], [0], [0], [1], [0, 0, 1, 1], [], []>} : vector<160x128xbf16>, vector<128x128xbf16>, vector<160x128xf32> -> vector<160x128xf32>
    %28 = arith.addf %21, %27 : vector<160x128xf32>
    %c0_32 = arith.constant 0 : index
    %c0_33 = arith.constant 0 : index
    %c1_34 = arith.constant 1 : index
    %c1_35 = arith.constant 1 : index
    %c0_36 = arith.constant 0 : index
    %29 = vector.load %arg2[%c0_32, %c0_33, %c1_34, %c1_35, %c0_36] : memref<1x1x12x18x128xbf16, #tpu.memory_space<vmem>>, vector<1x1x10x16x128xbf16>
    %30 = vector.shape_cast %29 : vector<1x1x10x16x128xbf16> to vector<10x16x128xbf16>
    %31 = vector.shape_cast %30 : vector<10x16x128xbf16> to vector<160x128xbf16>
    %c4 = arith.constant 4 : index
    %c0_37 = arith.constant 0 : index
    %c0_38 = arith.constant 0 : index
    %32 = vector.load %arg3[%c4, %c0_37, %c0_38] : memref<9x128x128xbf16, #tpu.memory_space<vmem>>, vector<1x128x128xbf16>
    %33 = vector.shape_cast %32 : vector<1x128x128xbf16> to vector<128x128xbf16>
    %cst_39 = arith.constant dense<0.000000e+00> : vector<160x128xf32>
    %34 = tpu.matmul %31, %33, %cst_39 {dimension_numbers = #tpu.dot_dimension_numbers<[1], [0], [0], [1], [0, 0, 1, 1], [], []>} : vector<160x128xbf16>, vector<128x128xbf16>, vector<160x128xf32> -> vector<160x128xf32>
    %35 = arith.addf %28, %34 : vector<160x128xf32>
    %c0_40 = arith.constant 0 : index
    %c0_41 = arith.constant 0 : index
    %c1_42 = arith.constant 1 : index
    %c2_43 = arith.constant 2 : index
    %c0_44 = arith.constant 0 : index
    %36 = vector.load %arg2[%c0_40, %c0_41, %c1_42, %c2_43, %c0_44] : memref<1x1x12x18x128xbf16, #tpu.memory_space<vmem>>, vector<1x1x10x16x128xbf16>
    %37 = vector.shape_cast %36 : vector<1x1x10x16x128xbf16> to vector<10x16x128xbf16>
    %38 = vector.shape_cast %37 : vector<10x16x128xbf16> to vector<160x128xbf16>
    %c5 = arith.constant 5 : index
    %c0_45 = arith.constant 0 : index
    %c0_46 = arith.constant 0 : index
    %39 = vector.load %arg3[%c5, %c0_45, %c0_46] : memref<9x128x128xbf16, #tpu.memory_space<vmem>>, vector<1x128x128xbf16>
    %40 = vector.shape_cast %39 : vector<1x128x128xbf16> to vector<128x128xbf16>
    %cst_47 = arith.constant dense<0.000000e+00> : vector<160x128xf32>
    %41 = tpu.matmul %38, %40, %cst_47 {dimension_numbers = #tpu.dot_dimension_numbers<[1], [0], [0], [1], [0, 0, 1, 1], [], []>} : vector<160x128xbf16>, vector<128x128xbf16>, vector<160x128xf32> -> vector<160x128xf32>
    %42 = arith.addf %35, %41 : vector<160x128xf32>
    %c0_48 = arith.constant 0 : index
    %c0_49 = arith.constant 0 : index
    %c2_50 = arith.constant 2 : index
    %c0_51 = arith.constant 0 : index
    %c0_52 = arith.constant 0 : index
    %43 = vector.load %arg2[%c0_48, %c0_49, %c2_50, %c0_51, %c0_52] : memref<1x1x12x18x128xbf16, #tpu.memory_space<vmem>>, vector<1x1x10x16x128xbf16>
    %44 = vector.shape_cast %43 : vector<1x1x10x16x128xbf16> to vector<10x16x128xbf16>
    %45 = vector.shape_cast %44 : vector<10x16x128xbf16> to vector<160x128xbf16>
    %c6 = arith.constant 6 : index
    %c0_53 = arith.constant 0 : index
    %c0_54 = arith.constant 0 : index
    %46 = vector.load %arg3[%c6, %c0_53, %c0_54] : memref<9x128x128xbf16, #tpu.memory_space<vmem>>, vector<1x128x128xbf16>
    %47 = vector.shape_cast %46 : vector<1x128x128xbf16> to vector<128x128xbf16>
    %cst_55 = arith.constant dense<0.000000e+00> : vector<160x128xf32>
    %48 = tpu.matmul %45, %47, %cst_55 {dimension_numbers = #tpu.dot_dimension_numbers<[1], [0], [0], [1], [0, 0, 1, 1], [], []>} : vector<160x128xbf16>, vector<128x128xbf16>, vector<160x128xf32> -> vector<160x128xf32>
    %49 = arith.addf %42, %48 : vector<160x128xf32>
    %c0_56 = arith.constant 0 : index
    %c0_57 = arith.constant 0 : index
    %c2_58 = arith.constant 2 : index
    %c1_59 = arith.constant 1 : index
    %c0_60 = arith.constant 0 : index
    %50 = vector.load %arg2[%c0_56, %c0_57, %c2_58, %c1_59, %c0_60] : memref<1x1x12x18x128xbf16, #tpu.memory_space<vmem>>, vector<1x1x10x16x128xbf16>
    %51 = vector.shape_cast %50 : vector<1x1x10x16x128xbf16> to vector<10x16x128xbf16>
    %52 = vector.shape_cast %51 : vector<10x16x128xbf16> to vector<160x128xbf16>
    %c7 = arith.constant 7 : index
    %c0_61 = arith.constant 0 : index
    %c0_62 = arith.constant 0 : index
    %53 = vector.load %arg3[%c7, %c0_61, %c0_62] : memref<9x128x128xbf16, #tpu.memory_space<vmem>>, vector<1x128x128xbf16>
    %54 = vector.shape_cast %53 : vector<1x128x128xbf16> to vector<128x128xbf16>
    %cst_63 = arith.constant dense<0.000000e+00> : vector<160x128xf32>
    %55 = tpu.matmul %52, %54, %cst_63 {dimension_numbers = #tpu.dot_dimension_numbers<[1], [0], [0], [1], [0, 0, 1, 1], [], []>} : vector<160x128xbf16>, vector<128x128xbf16>, vector<160x128xf32> -> vector<160x128xf32>
    %56 = arith.addf %49, %55 : vector<160x128xf32>
    %c0_64 = arith.constant 0 : index
    %c0_65 = arith.constant 0 : index
    %c2_66 = arith.constant 2 : index
    %c2_67 = arith.constant 2 : index
    %c0_68 = arith.constant 0 : index
    %57 = vector.load %arg2[%c0_64, %c0_65, %c2_66, %c2_67, %c0_68] : memref<1x1x12x18x128xbf16, #tpu.memory_space<vmem>>, vector<1x1x10x16x128xbf16>
    %58 = vector.shape_cast %57 : vector<1x1x10x16x128xbf16> to vector<10x16x128xbf16>
    %59 = vector.shape_cast %58 : vector<10x16x128xbf16> to vector<160x128xbf16>
    %c8 = arith.constant 8 : index
    %c0_69 = arith.constant 0 : index
    %c0_70 = arith.constant 0 : index
    %60 = vector.load %arg3[%c8, %c0_69, %c0_70] : memref<9x128x128xbf16, #tpu.memory_space<vmem>>, vector<1x128x128xbf16>
    %61 = vector.shape_cast %60 : vector<1x128x128xbf16> to vector<128x128xbf16>
    %cst_71 = arith.constant dense<0.000000e+00> : vector<160x128xf32>
    %62 = tpu.matmul %59, %61, %cst_71 {dimension_numbers = #tpu.dot_dimension_numbers<[1], [0], [0], [1], [0, 0, 1, 1], [], []>} : vector<160x128xbf16>, vector<128x128xbf16>, vector<160x128xf32> -> vector<160x128xf32>
    %63 = arith.addf %56, %62 : vector<160x128xf32>
    %c0_72 = arith.constant 0 : index
    %c0_73 = arith.constant 0 : index
    %64 = vector.load %arg4[%c0_72, %c0_73] : memref<1x128xf32, #tpu.memory_space<vmem>>, vector<1x128xf32>
    %65 = vector.broadcast %64 : vector<1x128xf32> to vector<160x128xf32>
    %66 = arith.addf %63, %65 : vector<160x128xf32>
    %cst_74 = arith.constant 0.000000e+00 : f32
    %67 = vector.broadcast %cst_74 : f32 to vector<160x128xf32>
    %68 = arith.maximumf %66, %67 : vector<160x128xf32>
    %69 = arith.truncf %68 : vector<160x128xf32> to vector<160x128xbf16>
    %70 = vector.shape_cast %69 : vector<160x128xbf16> to vector<10x16x128xbf16>
    %c0_75 = arith.constant 0 : index
    %c1_76 = arith.constant 1 : index
    %c0_77 = arith.constant 0 : index
    %71 = vector.load %arg10[%c0_75, %c1_76, %c0_77] : memref<10x18x128xbf16, #tpu.memory_space<vmem>>, vector<10x16x128xbf16>
    tpu.vector_store %arg10[%c0_75, %c1_76, %c0_77], %70 {strides = array<i32>} : memref<10x18x128xbf16, #tpu.memory_space<vmem>>, vector<10x16x128xbf16>,
    %cst_78 = arith.constant 0.000000e+00 : bf16
    %72 = vector.broadcast %cst_78 : bf16 to vector<10x1x128xbf16>
    %c0_79 = arith.constant 0 : index
    %c0_80 = arith.constant 0 : index
    %c0_81 = arith.constant 0 : index
    %73 = vector.load %arg10[%c0_79, %c0_80, %c0_81] : memref<10x18x128xbf16, #tpu.memory_space<vmem>>, vector<10x1x128xbf16>
    tpu.vector_store %arg10[%c0_79, %c0_80, %c0_81], %72 {strides = array<i32>} : memref<10x18x128xbf16, #tpu.memory_space<vmem>>, vector<10x1x128xbf16>,
    %cst_82 = arith.constant 0.000000e+00 : bf16
    %74 = vector.broadcast %cst_82 : bf16 to vector<10x1x128xbf16>
    %c0_83 = arith.constant 0 : index
    %c17 = arith.constant 17 : index
    %c0_84 = arith.constant 0 : index
    %75 = vector.load %arg10[%c0_83, %c17, %c0_84] : memref<10x18x128xbf16, #tpu.memory_space<vmem>>, vector<10x1x128xbf16>
    tpu.vector_store %arg10[%c0_83, %c17, %c0_84], %74 {strides = array<i32>} : memref<10x18x128xbf16, #tpu.memory_space<vmem>>, vector<10x1x128xbf16>,
    %c0_i32 = arith.constant 0 : i32
    %76 = arith.cmpi eq, %arg1, %c0_i32 : i32
    %77 = arith.extui %76 : i1 to i32
    %c0_i32_85 = arith.constant 0 : i32
    %78 = arith.cmpi ne, %77, %c0_i32_85 : i32
    scf.if %78 {
      %cst_169 = arith.constant 0.000000e+00 : bf16
      %157 = vector.broadcast %cst_169 : bf16 to vector<1x18x128xbf16>
      %c0_170 = arith.constant 0 : index
      %c0_171 = arith.constant 0 : index
      %c0_172 = arith.constant 0 : index
      %158 = vector.load %arg10[%c0_170, %c0_171, %c0_172] : memref<10x18x128xbf16, #tpu.memory_space<vmem>>, vector<1x18x128xbf16>
      tpu.vector_store %arg10[%c0_170, %c0_171, %c0_172], %157 {strides = array<i32>} : memref<10x18x128xbf16, #tpu.memory_space<vmem>>, vector<1x18x128xbf16>,
    } else {
    }
    %c1_i32 = arith.constant 1 : i32
    %79 = arith.cmpi eq, %arg1, %c1_i32 : i32
    %80 = arith.extui %79 : i1 to i32
    %c0_i32_86 = arith.constant 0 : i32
    %81 = arith.cmpi ne, %80, %c0_i32_86 : i32
    scf.if %81 {
      %cst_169 = arith.constant 0.000000e+00 : bf16
      %157 = vector.broadcast %cst_169 : bf16 to vector<1x18x128xbf16>
      %c9 = arith.constant 9 : index
      %c0_170 = arith.constant 0 : index
      %c0_171 = arith.constant 0 : index
      %158 = vector.load %arg10[%c9, %c0_170, %c0_171] : memref<10x18x128xbf16, #tpu.memory_space<vmem>>, vector<1x18x128xbf16>
      tpu.vector_store %arg10[%c9, %c0_170, %c0_171], %157 {strides = array<i32>} : memref<10x18x128xbf16, #tpu.memory_space<vmem>>, vector<1x18x128xbf16>,
    } else {
    }
    %cst_87 = arith.constant 0.000000e+00 : f32
    %82 = vector.broadcast %cst_87 : f32 to vector<128x128xf32>
    %c0_88 = arith.constant 0 : index
    %c0_89 = arith.constant 0 : index
    %c0_90 = arith.constant 0 : index
    %83 = vector.load %arg10[%c0_88, %c0_89, %c0_90] : memref<10x18x128xbf16, #tpu.memory_space<vmem>>, vector<8x16x128xbf16>
    %84 = vector.shape_cast %83 : vector<8x16x128xbf16> to vector<128x128xbf16>
    %c0_91 = arith.constant 0 : index
    %c0_92 = arith.constant 0 : index
    %c0_93 = arith.constant 0 : index
    %85 = vector.load %arg5[%c0_91, %c0_92, %c0_93] : memref<9x128x128xbf16, #tpu.memory_space<vmem>>, vector<1x128x128xbf16>
    %86 = vector.shape_cast %85 : vector<1x128x128xbf16> to vector<128x128xbf16>
    %cst_94 = arith.constant dense<0.000000e+00> : vector<128x128xf32>
    %87 = tpu.matmul %84, %86, %cst_94 {dimension_numbers = #tpu.dot_dimension_numbers<[1], [0], [0], [1], [0, 0, 1, 1], [], []>} : vector<128x128xbf16>, vector<128x128xbf16>, vector<128x128xf32> -> vector<128x128xf32>
    %88 = arith.addf %82, %87 : vector<128x128xf32>
    %c0_95 = arith.constant 0 : index
    %c1_96 = arith.constant 1 : index
    %c0_97 = arith.constant 0 : index
    %89 = vector.load %arg10[%c0_95, %c1_96, %c0_97] : memref<10x18x128xbf16, #tpu.memory_space<vmem>>, vector<8x16x128xbf16>
    %90 = vector.shape_cast %89 : vector<8x16x128xbf16> to vector<128x128xbf16>
    %c1_98 = arith.constant 1 : index
    %c0_99 = arith.constant 0 : index
    %c0_100 = arith.constant 0 : index
    %91 = vector.load %arg5[%c1_98, %c0_99, %c0_100] : memref<9x128x128xbf16, #tpu.memory_space<vmem>>, vector<1x128x128xbf16>
    %92 = vector.shape_cast %91 : vector<1x128x128xbf16> to vector<128x128xbf16>
    %cst_101 = arith.constant dense<0.000000e+00> : vector<128x128xf32>
    %93 = tpu.matmul %90, %92, %cst_101 {dimension_numbers = #tpu.dot_dimension_numbers<[1], [0], [0], [1], [0, 0, 1, 1], [], []>} : vector<128x128xbf16>, vector<128x128xbf16>, vector<128x128xf32> -> vector<128x128xf32>
    %94 = arith.addf %88, %93 : vector<128x128xf32>
    %c0_102 = arith.constant 0 : index
    %c2_103 = arith.constant 2 : index
    %c0_104 = arith.constant 0 : index
    %95 = vector.load %arg10[%c0_102, %c2_103, %c0_104] : memref<10x18x128xbf16, #tpu.memory_space<vmem>>, vector<8x16x128xbf16>
    %96 = vector.shape_cast %95 : vector<8x16x128xbf16> to vector<128x128xbf16>
    %c2_105 = arith.constant 2 : index
    %c0_106 = arith.constant 0 : index
    %c0_107 = arith.constant 0 : index
    %97 = vector.load %arg5[%c2_105, %c0_106, %c0_107] : memref<9x128x128xbf16, #tpu.memory_space<vmem>>, vector<1x128x128xbf16>
    %98 = vector.shape_cast %97 : vector<1x128x128xbf16> to vector<128x128xbf16>
    %cst_108 = arith.constant dense<0.000000e+00> : vector<128x128xf32>
    %99 = tpu.matmul %96, %98, %cst_108 {dimension_numbers = #tpu.dot_dimension_numbers<[1], [0], [0], [1], [0, 0, 1, 1], [], []>} : vector<128x128xbf16>, vector<128x128xbf16>, vector<128x128xf32> -> vector<128x128xf32>
    %100 = arith.addf %94, %99 : vector<128x128xf32>
    %c1_109 = arith.constant 1 : index
    %c0_110 = arith.constant 0 : index
    %c0_111 = arith.constant 0 : index
    %101 = vector.load %arg10[%c1_109, %c0_110, %c0_111] : memref<10x18x128xbf16, #tpu.memory_space<vmem>>, vector<8x16x128xbf16>
    %102 = vector.shape_cast %101 : vector<8x16x128xbf16> to vector<128x128xbf16>
    %c3_112 = arith.constant 3 : index
    %c0_113 = arith.constant 0 : index
    %c0_114 = arith.constant 0 : index
    %103 = vector.load %arg5[%c3_112, %c0_113, %c0_114] : memref<9x128x128xbf16, #tpu.memory_space<vmem>>, vector<1x128x128xbf16>
    %104 = vector.shape_cast %103 : vector<1x128x128xbf16> to vector<128x128xbf16>
    %cst_115 = arith.constant dense<0.000000e+00> : vector<128x128xf32>
    %105 = tpu.matmul %102, %104, %cst_115 {dimension_numbers = #tpu.dot_dimension_numbers<[1], [0], [0], [1], [0, 0, 1, 1], [], []>} : vector<128x128xbf16>, vector<128x128xbf16>, vector<128x128xf32> -> vector<128x128xf32>
    %106 = arith.addf %100, %105 : vector<128x128xf32>
    %c1_116 = arith.constant 1 : index
    %c1_117 = arith.constant 1 : index
    %c0_118 = arith.constant 0 : index
    %107 = vector.load %arg10[%c1_116, %c1_117, %c0_118] : memref<10x18x128xbf16, #tpu.memory_space<vmem>>, vector<8x16x128xbf16>
    %108 = vector.shape_cast %107 : vector<8x16x128xbf16> to vector<128x128xbf16>
    %c4_119 = arith.constant 4 : index
    %c0_120 = arith.constant 0 : index
    %c0_121 = arith.constant 0 : index
    %109 = vector.load %arg5[%c4_119, %c0_120, %c0_121] : memref<9x128x128xbf16, #tpu.memory_space<vmem>>, vector<1x128x128xbf16>
    %110 = vector.shape_cast %109 : vector<1x128x128xbf16> to vector<128x128xbf16>
    %cst_122 = arith.constant dense<0.000000e+00> : vector<128x128xf32>
    %111 = tpu.matmul %108, %110, %cst_122 {dimension_numbers = #tpu.dot_dimension_numbers<[1], [0], [0], [1], [0, 0, 1, 1], [], []>} : vector<128x128xbf16>, vector<128x128xbf16>, vector<128x128xf32> -> vector<128x128xf32>
    %112 = arith.addf %106, %111 : vector<128x128xf32>
    %c1_123 = arith.constant 1 : index
    %c2_124 = arith.constant 2 : index
    %c0_125 = arith.constant 0 : index
    %113 = vector.load %arg10[%c1_123, %c2_124, %c0_125] : memref<10x18x128xbf16, #tpu.memory_space<vmem>>, vector<8x16x128xbf16>
    %114 = vector.shape_cast %113 : vector<8x16x128xbf16> to vector<128x128xbf16>
    %c5_126 = arith.constant 5 : index
    %c0_127 = arith.constant 0 : index
    %c0_128 = arith.constant 0 : index
    %115 = vector.load %arg5[%c5_126, %c0_127, %c0_128] : memref<9x128x128xbf16, #tpu.memory_space<vmem>>, vector<1x128x128xbf16>
    %116 = vector.shape_cast %115 : vector<1x128x128xbf16> to vector<128x128xbf16>
    %cst_129 = arith.constant dense<0.000000e+00> : vector<128x128xf32>
    %117 = tpu.matmul %114, %116, %cst_129 {dimension_numbers = #tpu.dot_dimension_numbers<[1], [0], [0], [1], [0, 0, 1, 1], [], []>} : vector<128x128xbf16>, vector<128x128xbf16>, vector<128x128xf32> -> vector<128x128xf32>
    %118 = arith.addf %112, %117 : vector<128x128xf32>
    %c2_130 = arith.constant 2 : index
    %c0_131 = arith.constant 0 : index
    %c0_132 = arith.constant 0 : index
    %119 = vector.load %arg10[%c2_130, %c0_131, %c0_132] : memref<10x18x128xbf16, #tpu.memory_space<vmem>>, vector<8x16x128xbf16>
    %120 = vector.shape_cast %119 : vector<8x16x128xbf16> to vector<128x128xbf16>
    %c6_133 = arith.constant 6 : index
    %c0_134 = arith.constant 0 : index
    %c0_135 = arith.constant 0 : index
    %121 = vector.load %arg5[%c6_133, %c0_134, %c0_135] : memref<9x128x128xbf16, #tpu.memory_space<vmem>>, vector<1x128x128xbf16>
    %122 = vector.shape_cast %121 : vector<1x128x128xbf16> to vector<128x128xbf16>
    %cst_136 = arith.constant dense<0.000000e+00> : vector<128x128xf32>
    %123 = tpu.matmul %120, %122, %cst_136 {dimension_numbers = #tpu.dot_dimension_numbers<[1], [0], [0], [1], [0, 0, 1, 1], [], []>} : vector<128x128xbf16>, vector<128x128xbf16>, vector<128x128xf32> -> vector<128x128xf32>
    %124 = arith.addf %118, %123 : vector<128x128xf32>
    %c2_137 = arith.constant 2 : index
    %c1_138 = arith.constant 1 : index
    %c0_139 = arith.constant 0 : index
    %125 = vector.load %arg10[%c2_137, %c1_138, %c0_139] : memref<10x18x128xbf16, #tpu.memory_space<vmem>>, vector<8x16x128xbf16>
    %126 = vector.shape_cast %125 : vector<8x16x128xbf16> to vector<128x128xbf16>
    %c7_140 = arith.constant 7 : index
    %c0_141 = arith.constant 0 : index
    %c0_142 = arith.constant 0 : index
    %127 = vector.load %arg5[%c7_140, %c0_141, %c0_142] : memref<9x128x128xbf16, #tpu.memory_space<vmem>>, vector<1x128x128xbf16>
    %128 = vector.shape_cast %127 : vector<1x128x128xbf16> to vector<128x128xbf16>
    %cst_143 = arith.constant dense<0.000000e+00> : vector<128x128xf32>
    %129 = tpu.matmul %126, %128, %cst_143 {dimension_numbers = #tpu.dot_dimension_numbers<[1], [0], [0], [1], [0, 0, 1, 1], [], []>} : vector<128x128xbf16>, vector<128x128xbf16>, vector<128x128xf32> -> vector<128x128xf32>
    %130 = arith.addf %124, %129 : vector<128x128xf32>
    %c2_144 = arith.constant 2 : index
    %c2_145 = arith.constant 2 : index
    %c0_146 = arith.constant 0 : index
    %131 = vector.load %arg10[%c2_144, %c2_145, %c0_146] : memref<10x18x128xbf16, #tpu.memory_space<vmem>>, vector<8x16x128xbf16>
    %132 = vector.shape_cast %131 : vector<8x16x128xbf16> to vector<128x128xbf16>
    %c8_147 = arith.constant 8 : index
    %c0_148 = arith.constant 0 : index
    %c0_149 = arith.constant 0 : index
    %133 = vector.load %arg5[%c8_147, %c0_148, %c0_149] : memref<9x128x128xbf16, #tpu.memory_space<vmem>>, vector<1x128x128xbf16>
    %134 = vector.shape_cast %133 : vector<1x128x128xbf16> to vector<128x128xbf16>
    %cst_150 = arith.constant dense<0.000000e+00> : vector<128x128xf32>
    %135 = tpu.matmul %132, %134, %cst_150 {dimension_numbers = #tpu.dot_dimension_numbers<[1], [0], [0], [1], [0, 0, 1, 1], [], []>} : vector<128x128xbf16>, vector<128x128xbf16>, vector<128x128xf32> -> vector<128x128xf32>
    %136 = arith.addf %130, %135 : vector<128x128xf32>
    %c0_151 = arith.constant 0 : index
    %c0_152 = arith.constant 0 : index
    %137 = vector.load %arg6[%c0_151, %c0_152] : memref<1x128xf32, #tpu.memory_space<vmem>>, vector<1x128xf32>
    %138 = vector.broadcast %137 : vector<1x128xf32> to vector<128x128xf32>
    %139 = arith.addf %136, %138 : vector<128x128xf32>
    %c0_153 = arith.constant 0 : index
    %c0_154 = arith.constant 0 : index
    %c2_155 = arith.constant 2 : index
    %c1_156 = arith.constant 1 : index
    %c0_157 = arith.constant 0 : index
    %140 = vector.load %arg2[%c0_153, %c0_154, %c2_155, %c1_156, %c0_157] : memref<1x1x12x18x128xbf16, #tpu.memory_space<vmem>>, vector<1x1x8x16x128xbf16>
    %141 = vector.shape_cast %140 : vector<1x1x8x16x128xbf16> to vector<8x16x128xbf16>
    %142 = vector.shape_cast %141 : vector<8x16x128xbf16> to vector<128x128xbf16>
    %c0_158 = arith.constant 0 : index
    %c0_159 = arith.constant 0 : index
    %143 = vector.load %arg7[%c0_158, %c0_159] : memref<128x128xbf16, #tpu.memory_space<vmem>>, vector<128x128xbf16>
    %cst_160 = arith.constant dense<0.000000e+00> : vector<128x128xf32>
    %144 = tpu.matmul %142, %143, %cst_160 {dimension_numbers = #tpu.dot_dimension_numbers<[1], [0], [0], [1], [0, 0, 1, 1], [], []>} : vector<128x128xbf16>, vector<128x128xbf16>, vector<128x128xf32> -> vector<128x128xf32>
    %c0_161 = arith.constant 0 : index
    %c0_162 = arith.constant 0 : index
    %145 = vector.load %arg8[%c0_161, %c0_162] : memref<1x128xf32, #tpu.memory_space<vmem>>, vector<1x128xf32>
    %146 = vector.broadcast %145 : vector<1x128xf32> to vector<128x128xf32>
    %147 = arith.addf %144, %146 : vector<128x128xf32>
    %148 = arith.addf %147, %139 : vector<128x128xf32>
    %cst_163 = arith.constant 0.70721358 : f32
    %149 = vector.broadcast %cst_163 : f32 to vector<128x128xf32>
    %150 = arith.mulf %148, %149 : vector<128x128xf32>
    %cst_164 = arith.constant 0.000000e+00 : f32
    %151 = vector.broadcast %cst_164 : f32 to vector<128x128xf32>
    %152 = arith.maximumf %150, %151 : vector<128x128xf32>
    %153 = vector.shape_cast %152 : vector<128x128xf32> to vector<8x16x128xf32>
    %c0_165 = arith.constant 0 : index
    %c0_166 = arith.constant 0 : index
    %c0_167 = arith.constant 0 : index
    %c0_168 = arith.constant 0 : index
    %154 = vector.load %arg9[%c0_165, %c0_166, %c0_167, %c0_168] : memref<1x8x16x128xf32, #tpu.memory_space<vmem>>, vector<1x8x16x128xf32>
    %155 = vector.shape_cast %154 : vector<1x8x16x128xf32> to vector<8x16x128xf32>
    %156 = vector.shape_cast %153 : vector<8x16x128xf32> to vector<1x8x16x128xf32>
    tpu.vector_store %arg9[%c0_165, %c0_166, %c0_167, %c0_168], %156 {strides = array<i32>} : memref<1x8x16x128xf32, #tpu.memory_space<vmem>>, vector<1x8x16x128xf32>,
    return
  }
  func.func @transform_0(%arg0: i32, %arg1: i32) -> (i32, i32, i32, i32, i32) {
    %c0_i32 = arith.constant 0 : i32
    %c0_i32_0 = arith.constant 0 : i32
    %c0_i32_1 = arith.constant 0 : i32
    %c0_i32_2 = arith.constant 0 : i32
    return %arg0, %arg1, %c0_i32, %c0_i32_0, %c0_i32_1 : i32, i32, i32, i32, i32
  }
  func.func @transform_1(%arg0: i32, %arg1: i32) -> (i32, i32, i32) {
    %c0_i32 = arith.constant 0 : i32
    %c0_i32_0 = arith.constant 0 : i32
    %c0_i32_1 = arith.constant 0 : i32
    %c0_i32_2 = arith.constant 0 : i32
    return %c0_i32, %c0_i32_0, %c0_i32_1 : i32, i32, i32
  }
  func.func @transform_2(%arg0: i32, %arg1: i32) -> (i32, i32) {
    %c0_i32 = arith.constant 0 : i32
    %c0_i32_0 = arith.constant 0 : i32
    %c0_i32_1 = arith.constant 0 : i32
    return %c0_i32, %c0_i32_0 : i32, i32
  }
  func.func @transform_3(%arg0: i32, %arg1: i32) -> (i32, i32, i32) {
    %c0_i32 = arith.constant 0 : i32
    %c0_i32_0 = arith.constant 0 : i32
    %c0_i32_1 = arith.constant 0 : i32
    %c0_i32_2 = arith.constant 0 : i32
    return %c0_i32, %c0_i32_0, %c0_i32_1 : i32, i32, i32
  }
  func.func @transform_4(%arg0: i32, %arg1: i32) -> (i32, i32) {
    %c0_i32 = arith.constant 0 : i32
    %c0_i32_0 = arith.constant 0 : i32
    %c0_i32_1 = arith.constant 0 : i32
    return %c0_i32, %c0_i32_0 : i32, i32
  }
  func.func @transform_5(%arg0: i32, %arg1: i32) -> (i32, i32) {
    %c0_i32 = arith.constant 0 : i32
    %c0_i32_0 = arith.constant 0 : i32
    %c0_i32_1 = arith.constant 0 : i32
    return %c0_i32, %c0_i32_0 : i32, i32
  }
  func.func @transform_6(%arg0: i32, %arg1: i32) -> (i32, i32) {
    %c0_i32 = arith.constant 0 : i32
    %c0_i32_0 = arith.constant 0 : i32
    %c0_i32_1 = arith.constant 0 : i32
    return %c0_i32, %c0_i32_0 : i32, i32
  }
  func.func @transform_7(%arg0: i32, %arg1: i32) -> (i32, i32, i32, i32) {
    %c0_i32 = arith.constant 0 : i32
    %c0_i32_0 = arith.constant 0 : i32
    %c0_i32_1 = arith.constant 0 : i32
    return %arg0, %arg1, %c0_i32, %c0_i32_0 : i32, i32, i32, i32
  }
}

</mosaic_0001>

<llo_original>
// kernel: tpu_custom_call.1
$region0: #{tpu_custom_call.1}
  #allocation0 [shape = 'u32[]', space=smem, size = 0x4, offset = 0x4, fixed_abs, tag = 'smem constant byte address 0x4 - core index']
  #allocation1 [shape = 'u32[144,128]{1,0:T(1,128)}', space=vmem, size = 0x12000, scoped, tag = 'internal scratch']
  #allocation2 [shape = 'bf16[10,18,128]{2,1,0:T(8,128)(2,1)}', space=vmem, size = 0xf000, scoped, tag = 'scratch operand']
  %s0 = inlined_call_operand.vmem [shape: bf16[2,2,12,18,128], index: 0, kind: input, shape index: {}]
  %s1 = inlined_call_operand.vmem [shape: bf16[9,128,128], index: 1, kind: input, shape index: {}]
  %s2 = inlined_call_operand.vmem [shape: f32[1,128], index: 2, kind: input, shape index: {}]
  %s3 = inlined_call_operand.hbm [shape: bf16[9,128,128], index: 3, kind: input, shape index: {}]
  %s4 = inlined_call_operand.vmem [shape: f32[1,128], index: 4, kind: input, shape index: {}]
  %s5 = inlined_call_operand.vmem [shape: bf16[128,128], index: 5, kind: input, shape index: {}]
  %s6 = inlined_call_operand.vmem [shape: f32[1,128], index: 6, kind: input, shape index: {}]
  %s7 = inlined_call_operand.hbm [shape: f32[2,16,16,128], index: 7, kind: output, shape index: {}]
  %s8 = sld [smem:[#allocation0]]
  $region73: #{tpu_custom_call.1} parent=0
    _
  %s10 = ssub.s32 1, %s8
  %s11 = scalar_select 0, %s10, %s8
  $region1: #{tpu_custom_call.1} parent=0
    #allocation3 [shape = 'u8[294912]{0}', space=vmem, size = 0x48000, scoped, tag = 'input window, operand 3, single buffered']
    #allocation4 [shape = 's32[2]{0}', space=sflag, size = 0x8, scoped, tag = 'scoped memory for tpu_custom_call.1']
    #allocation5 [shape = 's32[2]{0}', space=sflag, size = 0x8, scoped, tag = 'scoped memory for tpu_custom_call.1']
    #allocation6 [shape = 'u8[131072]{0}', space=vmem, size = 0x20000, scoped, tag = 'output window, operand 0']
    %12 = vsyncpa [#allocation4], 0
    %13 = vsyncpa [#allocation5], 0
    %s14 = scalar_lea.sflag [#allocation5], 1
    %15 = vsyncpa %s14, 0
    loop: start=0, step=1, limit=6
    $region2: #{tpu_custom_call.1} parent=1 // loop_pre_header
      _
    $region3: #{tpu_custom_call.1} parent=1 // loop_header
      %s17 = sphi 0, %s21
      %p18 = scmp.ge.s32.totalorder %s17, 6
      %s24 = sphi 0, %s36
      %s25 = sphi 0, %s32
      %s26 = sphi 0, %s24
      %s27 = sphi 0, %s25
      %s28 = sphi 0, %s26
      %s29 = sphi 0, %s27
      %s41 = sphi 0, %s43
      %s44 = sphi 0, %s41
      %s45 = sphi 0, %s44
      %s61 = sphi 0, %s45
      %s65 = sphi 0, %s65
      %s67 = sphi 0, %s65
      %s68 = sphi 0, %s67
      %s82 = sphi 0, %s68
      %s86 = sphi 0, %s86
      %s88 = sphi 0, %s86
      %s89 = sphi 0, %s88
      %s103 = sphi 0, %s89
      %s107 = sphi 0, %s107
      %s109 = sphi 0, %s107
      %s110 = sphi 0, %s109
      %s124 = sphi 0, %s110
      %s128 = sphi 0, %s128
      %s130 = sphi 0, %s128
      %s131 = sphi 0, %s130
      %s145 = sphi 0, %s131
      %s149 = sphi 0, %s149
      %s151 = sphi 0, %s149
      %s152 = sphi 0, %s151
      %s166 = sphi 0, %s152
      %s170 = sphi 0, %s170
      %s172 = sphi 0, %s170
      %s173 = sphi 0, %s172
      %s187 = sphi 0, %s173
      %s195 = sphi 0, %s197
      %s198 = sphi 0, %s195
      %s199 = sphi 0, %s198
      %s215 = sphi 0, %s199
    $region4: #{tpu_custom_call.1} parent=1 // loop_header_branch
      %20 = sbr.rel (%p18) target = $region8
    $region5: #{tpu_custom_call.1} parent=1 // loop_body
      %s22 = ssub.s32 %s17, 1
      %s23 = ssub.s32 %s17, 2
      %s30 = sadd.s32 1, %s25
      %p31 = scmp.ge.s32.totalorder %s30, 2
      %s32 = scalar_select %p31, 0, %s30
      %s33 = sadd.s32 1, %s24
      %s34 = scalar_select %p31, %s33, %s24
      %p35 = scmp.ge.s32.totalorder %s34, 2
      %s36 = scalar_select %p35, 0, %s34
      %s37 = ssub.s32 %s24, %s36
      %s38 = ssub.s32 %s25, %s32
      %s39 = sor.u32 %s37, %s38
      %p40 = scmp.eq.s32.totalorder %s39, 0
      %s42 = sadd.s32 %s41, 1
      %s43 = scalar_select %p40, %s41, %s42
      %p46 = pneg %p40
      %p47 = scmp.eq.s32.totalorder %s17, 3
      %p48 = por %p46, %p47
      %p49 = scmp.ne.s32.totalorder %s41, %s44
      %p50 = scmp.eq.s32.totalorder %s17, 0
      %p51 = por %p49, %p50
      %p52 = scmp.ne.s32.totalorder %s41, %s44
      %p53 = scmp.eq.s32.totalorder %s22, 3
      %p54 = por %p52, %p53
      %p55 = scmp.ne.s32.totalorder %s44, %s45
      %p56 = scmp.eq.s32.totalorder %s22, 0
      %p57 = por %p55, %p56
      %p58 = scmp.ne.s32.totalorder %s44, %s45
      %p59 = scmp.eq.s32.totalorder %s23, 3
      %p60 = por %p58, %p59
      %p62 = scmp.ne.s32.totalorder %s45, %s61
      %p63 = scmp.eq.s32.totalorder %s23, 0
      %p64 = por %p62, %p63
      %s66 = sadd.s32 %s65, 1
      %p69 = scmp.eq.s32.totalorder %s17, 3
      %p70 = scmp.ne.s32.totalorder %s65, %s67
      %p71 = scmp.eq.s32.totalorder %s17, 0
      %p72 = por %p70, %p71
      %p73 = scmp.ne.s32.totalorder %s65, %s67
      %p74 = scmp.eq.s32.totalorder %s22, 3
      %p75 = por %p73, %p74
      %p76 = scmp.ne.s32.totalorder %s67, %s68
      %p77 = scmp.eq.s32.totalorder %s22, 0
      %p78 = por %p76, %p77
      %p79 = scmp.ne.s32.totalorder %s67, %s68
      %p80 = scmp.eq.s32.totalorder %s23, 3
      %p81 = por %p79, %p80
      %p83 = scmp.ne.s32.totalorder %s68, %s82
      %p84 = scmp.eq.s32.totalorder %s23, 0
      %p85 = por %p83, %p84
      %s87 = sadd.s32 %s86, 1
      %p90 = scmp.eq.s32.totalorder %s17, 3
      %p91 = scmp.ne.s32.totalorder %s86, %s88
      %p92 = scmp.eq.s32.totalorder %s17, 0
      %p93 = por %p91, %p92
      %p94 = scmp.ne.s32.totalorder %s86, %s88
      %p95 = scmp.eq.s32.totalorder %s22, 3
      %p96 = por %p94, %p95
      %p97 = scmp.ne.s32.totalorder %s88, %s89
      %p98 = scmp.eq.s32.totalorder %s22, 0
      %p99 = por %p97, %p98
      %p100 = scmp.ne.s32.totalorder %s88, %s89
      %p101 = scmp.eq.s32.totalorder %s23, 3
      %p102 = por %p100, %p101
      %p104 = scmp.ne.s32.totalorder %s89, %s103
      %p105 = scmp.eq.s32.totalorder %s23, 0
      %p106 = por %p104, %p105
      %s108 = sadd.s32 %s107, 1
      %p111 = scmp.eq.s32.totalorder %s17, 3
      %p112 = scmp.ne.s32.totalorder %s107, %s109
      %p113 = scmp.eq.s32.totalorder %s17, 0
      %p114 = por %p112, %p113
      %p115 = scmp.ne.s32.totalorder %s107, %s109
      %p116 = scmp.eq.s32.totalorder %s22, 3
      %p117 = por %p115, %p116
      %p118 = scmp.ne.s32.totalorder %s109, %s110
      %p119 = scmp.eq.s32.totalorder %s22, 0
      %p120 = por %p118, %p119
      %p121 = scmp.ne.s32.totalorder %s109, %s110
      %p122 = scmp.eq.s32.totalorder %s23, 3
      %p123 = por %p121, %p122
      %p125 = scmp.ne.s32.totalorder %s110, %s124
      %p126 = scmp.eq.s32.totalorder %s23, 0
      %p127 = por %p125, %p126
      %s129 = sadd.s32 %s128, 1
      %p132 = scmp.eq.s32.totalorder %s17, 3
      %p133 = scmp.ne.s32.totalorder %s128, %s130
      %p134 = scmp.eq.s32.totalorder %s17, 0
      %p135 = por %p133, %p134
      %p136 = scmp.ne.s32.totalorder %s128, %s130
      %p137 = scmp.eq.s32.totalorder %s22, 3
      %p138 = por %p136, %p137
      %p139 = scmp.ne.s32.totalorder %s130, %s131
      %p140 = scmp.eq.s32.totalorder %s22, 0
      %p141 = por %p139, %p140
      %p142 = scmp.ne.s32.totalorder %s130, %s131
      %p143 = scmp.eq.s32.totalorder %s23, 3
      %p144 = por %p142, %p143
      %p146 = scmp.ne.s32.totalorder %s131, %s145
      %p147 = scmp.eq.s32.totalorder %s23, 0
      %p148 = por %p146, %p147
      %s150 = sadd.s32 %s149, 1
      %p153 = scmp.eq.s32.totalorder %s17, 3
      %p154 = scmp.ne.s32.totalorder %s149, %s151
      %p155 = scmp.eq.s32.totalorder %s17, 0
      %p156 = por %p154, %p155
      %p157 = scmp.ne.s32.totalorder %s149, %s151
      %p158 = scmp.eq.s32.totalorder %s22, 3
      %p159 = por %p157, %p158
      %p160 = scmp.ne.s32.totalorder %s151, %s152
      %p161 = scmp.eq.s32.totalorder %s22, 0
      %p162 = por %p160, %p161
      %p163 = scmp.ne.s32.totalorder %s151, %s152
      %p164 = scmp.eq.s32.totalorder %s23, 3
      %p165 = por %p163, %p164
      %p167 = scmp.ne.s32.totalorder %s152, %s166
      %p168 = scmp.eq.s32.totalorder %s23, 0
      %p169 = por %p167, %p168
      %s171 = sadd.s32 %s170, 1
      %p174 = scmp.eq.s32.totalorder %s17, 3
      %p175 = scmp.ne.s32.totalorder %s170, %s172
      %p176 = scmp.eq.s32.totalorder %s17, 0
      %p177 = por %p175, %p176
      %p178 = scmp.ne.s32.totalorder %s170, %s172
      %p179 = scmp.eq.s32.totalorder %s22, 3
      %p180 = por %p178, %p179
      %p181 = scmp.ne.s32.totalorder %s172, %s173
      %p182 = scmp.eq.s32.totalorder %s22, 0
      %p183 = por %p181, %p182
      %p184 = scmp.ne.s32.totalorder %s172, %s173
      %p185 = scmp.eq.s32.totalorder %s23, 3
      %p186 = por %p184, %p185
      %p188 = scmp.ne.s32.totalorder %s173, %s187
      %p189 = scmp.eq.s32.totalorder %s23, 0
      %p190 = por %p188, %p189
      %s191 = ssub.s32 %s24, %s36
      %s192 = ssub.s32 %s25, %s32
      %s193 = sor.u32 %s191, %s192
      %p194 = scmp.eq.s32.totalorder %s193, 0
      %s196 = sadd.s32 %s195, 1
      %s197 = scalar_select %p194, %s195, %s196
      %p200 = pneg %p194
      %p201 = scmp.eq.s32.totalorder %s17, 3
      %p202 = por %p200, %p201
      %p203 = scmp.ne.s32.totalorder %s195, %s198
      %p204 = scmp.eq.s32.totalorder %s17, 0
      %p205 = por %p203, %p204
      %p206 = scmp.ne.s32.totalorder %s195, %s198
      %p207 = scmp.eq.s32.totalorder %s22, 3
      %p208 = por %p206, %p207
      %p209 = scmp.ne.s32.totalorder %s198, %s199
      %p210 = scmp.eq.s32.totalorder %s22, 0
      %p211 = por %p209, %p210
      %p212 = scmp.ne.s32.totalorder %s198, %s199
      %p213 = scmp.eq.s32.totalorder %s23, 3
      %p214 = por %p212, %p213
      %p216 = scmp.ne.s32.totalorder %s199, %s215
      %p217 = scmp.eq.s32.totalorder %s23, 0
      %p218 = por %p216, %p217
      %p219 = scmp.le.s32.totalorder 1, %s17
      %p220 = scmp.lt.s32.totalorder %s17, 5
      %p221 = pnand %p219, %p220
      %p222 = pneg %p221
      // Predicated region
      $region9: #{tpu_custom_call.1} parent=5 // pred_check
        _
      $region10: #{tpu_custom_call.1} parent=5 // pred_check_branch
        %224 = sbr.rel (%p221) target = $region12
      $region11: #{tpu_custom_call.1} parent=5 // pred_region
        %s225 = ssub.s32 %s17, 1
        // Predicated region
        $region13: #{tpu_custom_call.1} parent=11 // pred_check
          %p226 = pneg %p78
        $region14: #{tpu_custom_call.1} parent=11 // pred_check_branch
          %228 = sbr.rel (%p226) target = $region16
        $region15: #{tpu_custom_call.1} parent=11 // pred_region
          _
        $region16: #{tpu_custom_call.1} parent=11 // pred_fallthru
          _
        // Predicated region
        $region17: #{tpu_custom_call.1} parent=11 // pred_check
          %p229 = pneg %p99
        $region18: #{tpu_custom_call.1} parent=11 // pred_check_branch
          %231 = sbr.rel (%p229) target = $region20
        $region19: #{tpu_custom_call.1} parent=11 // pred_region
          _
        $region20: #{tpu_custom_call.1} parent=11 // pred_fallthru
          _
        // Predicated region
        $region21: #{tpu_custom_call.1} parent=11 // pred_check
          %p232 = pneg %p120
        $region22: #{tpu_custom_call.1} parent=11 // pred_check_branch
          %234 = sbr.rel (%p232) target = $region24
        $region23: #{tpu_custom_call.1} parent=11 // pred_region
          %s236 = ssub.s32 9216, 9216
          %237 = vsyncadd [#allocation4], %s236
          %s238 = sshll.u32 [#allocation3], 4
          %s239 = int_to_ptr.vmem [resolvable:$true] %s238
          %244 = dma.hbm_to_vmem [thread:$0]  %s3, 9216, %s239, [#allocation4], 64, 64, 4
        $region24: #{tpu_custom_call.1} parent=11 // pred_fallthru
          _
        // Predicated region
        $region25: #{tpu_custom_call.1} parent=11 // pred_check
          %p245 = pneg %p141
        $region26: #{tpu_custom_call.1} parent=11 // pred_check_branch
          %247 = sbr.rel (%p245) target = $region28
        $region27: #{tpu_custom_call.1} parent=11 // pred_region
          _
        $region28: #{tpu_custom_call.1} parent=11 // pred_fallthru
          _
        // Predicated region
        $region29: #{tpu_custom_call.1} parent=11 // pred_check
          %p248 = pneg %p162
        $region30: #{tpu_custom_call.1} parent=11 // pred_check_branch
          %250 = sbr.rel (%p248) target = $region32
        $region31: #{tpu_custom_call.1} parent=11 // pred_region
          _
        $region32: #{tpu_custom_call.1} parent=11 // pred_fallthru
          _
        // Predicated region
        $region33: #{tpu_custom_call.1} parent=11 // pred_check
          %p251 = pneg %p183
        $region34: #{tpu_custom_call.1} parent=11 // pred_check_branch
          %253 = sbr.rel (%p251) target = $region36
        $region35: #{tpu_custom_call.1} parent=11 // pred_region
          _
        $region36: #{tpu_custom_call.1} parent=11 // pred_fallthru
          _
      $region12: #{tpu_custom_call.1} parent=5 // pred_fallthru
        _
      %p254 = scmp.lt.s32.totalorder %s17, 4
      // Predicated region
      $region37: #{tpu_custom_call.1} parent=5 // pred_check
        %p255 = pneg %p254
      $region38: #{tpu_custom_call.1} parent=5 // pred_check_branch
        %257 = sbr.rel (%p255) target = $region40
      $region39: #{tpu_custom_call.1} parent=5 // pred_region
        // Predicated region
        $region41: #{tpu_custom_call.1} parent=39 // pred_check
          %p258 = pneg %p51
        $region42: #{tpu_custom_call.1} parent=39 // pred_check_branch
          %260 = sbr.rel (%p258) target = $region44
        $region43: #{tpu_custom_call.1} parent=39 // pred_region
          %p261 = scmp.lt.s32.totalorder %s24, 1
          %s262 = scalar_select %p261, %s24, 1
          %p263 = scmp.lt.s32.totalorder %s25, 1
          %s264 = scalar_select %p263, %s25, 1
          %s265 = smul.addr %s264, 36
          %s266 = smul.addr %s262, 72
          %s267 = sadd.s32 %s265, %s266
          %s268 = smul.addr %s267, 4
          %s269 = scalar_lea.vmem %s0, %s268
        $region44: #{tpu_custom_call.1} parent=39 // pred_fallthru
          _
      $region40: #{tpu_custom_call.1} parent=5 // pred_fallthru
        _
      %p270 = scmp.le.s32.totalorder 1, %s17
      %p271 = scmp.lt.s32.totalorder %s17, 5
      %p272 = pnand %p270, %p271
      %p273 = pneg %p272
      // Predicated region
      $region45: #{tpu_custom_call.1} parent=5 // pred_check
        _
      $region46: #{tpu_custom_call.1} parent=5 // pred_check_branch
        %275 = sbr.rel (%p272) target = $region48
      $region47: #{tpu_custom_call.1} parent=5 // pred_region
        %s276 = ssub.s32 %s17, 1
        // Predicated region
        $region49: #{tpu_custom_call.1} parent=47 // pred_check
          %p277 = pneg %p120
        $region50: #{tpu_custom_call.1} parent=47 // pred_check_branch
          %279 = sbr.rel (%p277) target = $region52
        $region51: #{tpu_custom_call.1} parent=47 // pred_region
          %280 = dma.done [#allocation4], 9216
        $region52: #{tpu_custom_call.1} parent=47 // pred_fallthru
          _
        %p281 = scmp.lt.s32.totalorder %s26, 1
        %s282 = scalar_select %p281, %s26, 1
        %p283 = scmp.lt.s32.totalorder %s27, 1
        %s284 = scalar_select %p283, %s27, 1
        %s285 = smul.addr %s284, 36
        %s286 = smul.addr %s282, 72
        %s287 = sadd.s32 %s285, %s286
        %s288 = smul.addr %s287, 4
        %s289 = scalar_lea.vmem %s0, %s288
        %p290 = pneg %p57
        %p291 = pneg %p54
        %p292 = pneg %p78
        %p293 = pneg %p75
        %p294 = pneg %p99
        %p295 = pneg %p96
        %p296 = pneg %p120
        %p297 = pneg %p117
        %p298 = pneg %p141
        %p299 = pneg %p138
        %p300 = pneg %p162
        %p301 = pneg %p159
        %p302 = pneg %p183
        %p303 = pneg %p180
        %p304 = pneg %p211
        %p305 = pneg %p208
        %s306 = sand.u32 %s198, 1
        %s307 = scalar_lea.sflag [#allocation5], %s306
        %s308 = sand.u32 %s198, 1
        %s309 = smul.addr %s308, 128
        %s310 = scalar_lea.vmem [#allocation6], %s309
        %p311 = scmp.lt.s32.totalorder %s26, 1
        %s312 = scalar_select %p311, %s26, 1
        %p313 = scmp.lt.s32.totalorder %s27, 1
        %s314 = scalar_select %p313, %s27, 1
        %s315 = smul.addr %s314, 36
        %s316 = smul.addr %s312, 72
        %s317 = sadd.s32 %s315, %s316
        %s318 = smul.addr %s317, 4
        %s319 = scalar_lea.vmem %s0, %s318
        %s320 = smul.u32 8, %s27
        %v322 = vld [vmem:[%s319] sm:$0xf]
        %v323 = vld [vmem:[%s319 + $0x4] sm:$0xf]
        %v324 = vld [vmem:[%s319 + $0xc] sm:$0xf]
        %v325 = vld [vmem:[%s319 + $0x10] sm:$0xf]
        %v326 = vld [vmem:[%s319 + $0x18] sm:$0xf]
        %v327 = vld [vmem:[%s319 + $0x1c] sm:$0xf]
        %v328 = vld [vmem:[%s319 + $0x24] sm:$0xf]
        %v329 = vld [vmem:[%s319 + $0x28] sm:$0xf]
        %v330 = vld [vmem:[%s319 + $0x30] sm:$0xf]
        %v331 = vld [vmem:[%s319 + $0x34] sm:$0xf]
        %v332 = vld [vmem:[%s319 + $0x3c] sm:$0xf]
        %v333 = vld [vmem:[%s319 + $0x40] sm:$0xf]
        %v334 = vld [vmem:[%s319 + $0x48] sm:$0xf]
        %v335 = vld [vmem:[%s319 + $0x4c] sm:$0xf]
        %v336 = vld [vmem:[%s319 + $0x54] sm:$0xf]
        %v337 = vld [vmem:[%s319 + $0x58] sm:$0xf]
        %v338 = vld [vmem:[%s319 + $0x60] sm:$0xf]
        %v339 = vld [vmem:[%s319 + $0x64] sm:$0xf]
        %v340 = vld [vmem:[%s319 + $0x6c] sm:$0xf]
        %v341 = vld [vmem:[%s319 + $0x70] sm:$0xf]
        %v342 = vld [vmem:[%s1] sm:$0xf]
        %v343 = vld [vmem:[%s1 + $0x4] sm:$0xf]
        %v344 = vld [vmem:[%s1 + $0x8] sm:$0xf]
        %v345 = vld [vmem:[%s1 + $0xc] sm:$0xf]
        %v346 = vld [vmem:[%s1 + $0x10] sm:$0xf]
        %v347 = vld [vmem:[%s1 + $0x14] sm:$0xf]
        %v348 = vld [vmem:[%s1 + $0x18] sm:$0xf]
        %v349 = vld [vmem:[%s1 + $0x1c] sm:$0xf]
        %v350 = vld [vmem:[%s1 + $0x20] sm:$0xf]
        %v351 = vld [vmem:[%s1 + $0x24] sm:$0xf]
        %v352 = vld [vmem:[%s1 + $0x28] sm:$0xf]
        %v353 = vld [vmem:[%s1 + $0x2c] sm:$0xf]
        %v354 = vld [vmem:[%s1 + $0x30] sm:$0xf]
        %v355 = vld [vmem:[%s1 + $0x34] sm:$0xf]
        %v356 = vld [vmem:[%s1 + $0x38] sm:$0xf]
        %v357 = vld [vmem:[%s1 + $0x3c] sm:$0xf]
        %v358 = vld [vmem:[%s319 + $0x8] sm:$0x1]
        %v359 = vld [vmem:[%s319 + $0x14] sm:$0x1]
        %v360 = vld [vmem:[%s319 + $0x20] sm:$0x1]
        %v361 = vld [vmem:[%s319 + $0x2c] sm:$0x1]
        %v362 = vld [vmem:[%s319 + $0x38] sm:$0x1]
        %v363 = vld [vmem:[%s319 + $0x44] sm:$0x1]
        %v364 = vld [vmem:[%s319 + $0x50] sm:$0x1]
        %v365 = vld [vmem:[%s319 + $0x5c] sm:$0x1]
        %v366 = vld [vmem:[%s319 + $0x68] sm:$0x1]
        %v367 = vld [vmem:[%s319 + $0x74] sm:$0x1]
        %vm368 = vsmask.f32 3328
        %vm369 = vsmask.f32 7440
        %vm370 = vmor %vm368, %vm369
        %v372 = vshrl.u32 %v322, 16
        %v374 = vrot.slane %v372, 4
        %v375 = vshll.u32 %v322, 16
        %v377 = vrot.slane %v375, 5
        %v378 = vor.u32 %v374, %v377
        %v379 = vrot.slane %v378, 4
        %v381 = vshll.u32 %v323, 16
        %v383 = vrot.slane %v381, 5
        %v384 = vsel %vm370, %v379, %v383
        %v385 = vshrl.u32 %v323, 16
        %v387 = vrot.slane %v385, 4
        %v388 = vor.u32 %v387, %v383
        %v389 = vrot.slane %v388, 4
        %v391 = vshll.u32 %v358, 16
        %v393 = vrot.slane %v391, 5
        %v394 = vsel %vm370, %v389, %v393
        %v396 = vshrl.u32 %v324, 16
        %v398 = vrot.slane %v396, 4
        %v399 = vshll.u32 %v324, 16
        %v401 = vrot.slane %v399, 5
        %v402 = vor.u32 %v398, %v401
        %v403 = vrot.slane %v402, 4
        %v405 = vshll.u32 %v325, 16
        %v407 = vrot.slane %v405, 5
        %v408 = vsel %vm370, %v403, %v407
        %v409 = vshrl.u32 %v325, 16
        %v411 = vrot.slane %v409, 4
        %v412 = vor.u32 %v411, %v407
        %v413 = vrot.slane %v412, 4
        %v415 = vshll.u32 %v359, 16
        %v417 = vrot.slane %v415, 5
        %v418 = vsel %vm370, %v413, %v417
        %v420 = vshrl.u32 %v326, 16
        %v422 = vrot.slane %v420, 4
        %v423 = vshll.u32 %v326, 16
        %v425 = vrot.slane %v423, 5
        %v426 = vor.u32 %v422, %v425
        %v427 = vrot.slane %v426, 4
        %v429 = vshll.u32 %v327, 16
        %v431 = vrot.slane %v429, 5
        %v432 = vsel %vm370, %v427, %v431
        %v433 = vshrl.u32 %v327, 16
        %v435 = vrot.slane %v433, 4
        %v436 = vor.u32 %v435, %v431
        %v437 = vrot.slane %v436, 4
        %v439 = vshll.u32 %v360, 16
        %v441 = vrot.slane %v439, 5
        %v442 = vsel %vm370, %v437, %v441
        %v444 = vshrl.u32 %v328, 16
        %v446 = vrot.slane %v444, 4
        %v447 = vshll.u32 %v328, 16
        %v449 = vrot.slane %v447, 5
        %v450 = vor.u32 %v446, %v449
        %v451 = vrot.slane %v450, 4
        %v453 = vshll.u32 %v329, 16
        %v455 = vrot.slane %v453, 5
        %v456 = vsel %vm370, %v451, %v455
        %v457 = vshrl.u32 %v329, 16
        %v459 = vrot.slane %v457, 4
        %v460 = vor.u32 %v459, %v455
        %v461 = vrot.slane %v460, 4
        %v463 = vshll.u32 %v361, 16
        %v465 = vrot.slane %v463, 5
        %v466 = vsel %vm370, %v461, %v465
        %v468 = vshrl.u32 %v330, 16
        %v470 = vrot.slane %v468, 4
        %v471 = vshll.u32 %v330, 16
        %v473 = vrot.slane %v471, 5
        %v474 = vor.u32 %v470, %v473
        %v475 = vrot.slane %v474, 4
        %v477 = vshll.u32 %v331, 16
        %v479 = vrot.slane %v477, 5
        %v480 = vsel %vm370, %v475, %v479
        %v481 = vshrl.u32 %v331, 16
        %v483 = vrot.slane %v481, 4
        %v484 = vor.u32 %v483, %v479
        %v485 = vrot.slane %v484, 4
        %v487 = vshll.u32 %v362, 16
        %v489 = vrot.slane %v487, 5
        %v490 = vsel %vm370, %v485, %v489
        %v492 = vshrl.u32 %v332, 16
        %v494 = vrot.slane %v492, 4
        %v495 = vshll.u32 %v332, 16
        %v497 = vrot.slane %v495, 5
        %v498 = vor.u32 %v494, %v497
        %v499 = vrot.slane %v498, 4
        %v501 = vshll.u32 %v333, 16
        %v503 = vrot.slane %v501, 5
        %v504 = vsel %vm370, %v499, %v503
        %v505 = vshrl.u32 %v333, 16
        %v507 = vrot.slane %v505, 4
        %v508 = vor.u32 %v507, %v503
        %v509 = vrot.slane %v508, 4
        %v511 = vshll.u32 %v363, 16
        %v513 = vrot.slane %v511, 5
        %v514 = vsel %vm370, %v509, %v513
        %v516 = vshrl.u32 %v334, 16
        %v518 = vrot.slane %v516, 4
        %v519 = vshll.u32 %v334, 16
        %v521 = vrot.slane %v519, 5
        %v522 = vor.u32 %v518, %v521
        %v523 = vrot.slane %v522, 4
        %v525 = vshll.u32 %v335, 16
        %v527 = vrot.slane %v525, 5
        %v528 = vsel %vm370, %v523, %v527
        %v529 = vshrl.u32 %v335, 16
        %v531 = vrot.slane %v529, 4
        %v532 = vor.u32 %v531, %v527
        %v533 = vrot.slane %v532, 4
        %v535 = vshll.u32 %v364, 16
        %v537 = vrot.slane %v535, 5
        %v538 = vsel %vm370, %v533, %v537
        %v540 = vshrl.u32 %v336, 16
        %v542 = vrot.slane %v540, 4
        %v543 = vshll.u32 %v336, 16
        %v545 = vrot.slane %v543, 5
        %v546 = vor.u32 %v542, %v545
        %v547 = vrot.slane %v546, 4
        %v549 = vshll.u32 %v337, 16
        %v551 = vrot.slane %v549, 5
        %v552 = vsel %vm370, %v547, %v551
        %v553 = vshrl.u32 %v337, 16
        %v555 = vrot.slane %v553, 4
        %v556 = vor.u32 %v555, %v551
        %v557 = vrot.slane %v556, 4
        %v559 = vshll.u32 %v365, 16
        %v561 = vrot.slane %v559, 5
        %v562 = vsel %vm370, %v557, %v561
        %v564 = vshrl.u32 %v338, 16
        %v566 = vrot.slane %v564, 4
        %v567 = vshll.u32 %v338, 16
        %v569 = vrot.slane %v567, 5
        %v570 = vor.u32 %v566, %v569
        %v571 = vrot.slane %v570, 4
        %v573 = vshll.u32 %v339, 16
        %v575 = vrot.slane %v573, 5
        %v576 = vsel %vm370, %v571, %v575
        %v577 = vshrl.u32 %v339, 16
        %v579 = vrot.slane %v577, 4
        %v580 = vor.u32 %v579, %v575
        %v581 = vrot.slane %v580, 4
        %v583 = vshll.u32 %v366, 16
        %v585 = vrot.slane %v583, 5
        %v586 = vsel %vm370, %v581, %v585
        %v588 = vshrl.u32 %v340, 16
        %v590 = vrot.slane %v588, 4
        %v591 = vshll.u32 %v340, 16
        %v593 = vrot.slane %v591, 5
        %v594 = vor.u32 %v590, %v593
        %v595 = vrot.slane %v594, 4
        %v597 = vshll.u32 %v341, 16
        %v599 = vrot.slane %v597, 5
        %v600 = vsel %vm370, %v595, %v599
        %v601 = vshrl.u32 %v341, 16
        %v603 = vrot.slane %v601, 4
        %v604 = vor.u32 %v603, %v599
        %v605 = vrot.slane %v604, 4
        %v607 = vshll.u32 %v367, 16
        %v609 = vrot.slane %v607, 5
        %v610 = vsel %vm370, %v605, %v609
        %s611 = scalar_lea.vmem %s1, 64
        %v612 = vld [vmem:[%s611] sm:$0xf]
        %v613 = vld [vmem:[%s611 + $0x4] sm:$0xf]
        %v614 = vld [vmem:[%s611 + $0x8] sm:$0xf]
        %v615 = vld [vmem:[%s611 + $0xc] sm:$0xf]
        %v616 = vld [vmem:[%s611 + $0x10] sm:$0xf]
        %v617 = vld [vmem:[%s611 + $0x14] sm:$0xf]
        %v618 = vld [vmem:[%s611 + $0x18] sm:$0xf]
        %v619 = vld [vmem:[%s611 + $0x1c] sm:$0xf]
        %v620 = vld [vmem:[%s611 + $0x20] sm:$0xf]
        %v621 = vld [vmem:[%s611 + $0x24] sm:$0xf]
        %v622 = vld [vmem:[%s611 + $0x28] sm:$0xf]
        %v623 = vld [vmem:[%s611 + $0x2c] sm:$0xf]
        %v624 = vld [vmem:[%s611 + $0x30] sm:$0xf]
        %v625 = vld [vmem:[%s611 + $0x34] sm:$0xf]
        %v626 = vld [vmem:[%s611 + $0x38] sm:$0xf]
        %v627 = vld [vmem:[%s611 + $0x3c] sm:$0xf]
        %v628 = vunpack.c.l.b16 %v384
        %v629 = vunpack.c.l.b16 %v394
        %v630 = vunpack.c.l.b16 %v408
        %v631 = vunpack.c.l.b16 %v418
        %v632 = vunpack.c.l.b16 %v432
        %v633 = vunpack.c.l.b16 %v442
        %v634 = vunpack.c.l.b16 %v456
        %v635 = vunpack.c.l.b16 %v466
        %v636 = vunpack.c.l.b16 %v480
        %v637 = vunpack.c.l.b16 %v490
        %v638 = vunpack.c.l.b16 %v504
        %v639 = vunpack.c.l.b16 %v514
        %v640 = vunpack.c.l.b16 %v528
        %v641 = vunpack.c.l.b16 %v538
        %v642 = vunpack.c.l.b16 %v552
        %v643 = vunpack.c.l.b16 %v562
        %v644 = vunpack.c.l.b16 %v576
        %v645 = vunpack.c.l.b16 %v586
        %v646 = vunpack.c.l.b16 %v600
        %v647 = vunpack.c.l.b16 %v610
        %v648 = vpack.c.b16 %v629, %v628
        %v649 = vpack.c.b16 %v631, %v630
        %v650 = vpack.c.b16 %v633, %v632
        %v651 = vpack.c.b16 %v635, %v634
        %v652 = vpack.c.b16 %v637, %v636
        %v653 = vpack.c.b16 %v639, %v638
        %v654 = vpack.c.b16 %v641, %v640
        %v655 = vpack.c.b16 %v643, %v642
        %v656 = vpack.c.b16 %v645, %v644
        %v657 = vpack.c.b16 %v647, %v646
        %v684 = vunpack.c.l.b16 %v612
        %v685 = vunpack.c.l.b16 %v613
        %v686 = vunpack.c.l.b16 %v614
        %v687 = vunpack.c.l.b16 %v615
        %v688 = vunpack.c.l.b16 %v616
        %v689 = vunpack.c.l.b16 %v617
        %v690 = vunpack.c.l.b16 %v618
        %v691 = vunpack.c.l.b16 %v619
        %v692 = vunpack.c.l.b16 %v620
        %v693 = vunpack.c.l.b16 %v621
        %v694 = vunpack.c.l.b16 %v622
        %v695 = vunpack.c.l.b16 %v623
        %v696 = vunpack.c.l.b16 %v624
        %v697 = vunpack.c.l.b16 %v625
        %v698 = vunpack.c.l.b16 %v626
        %v699 = vunpack.c.l.b16 %v627
        %v700 = vpack.c.b16 %v685, %v684
        %v701 = vpack.c.b16 %v687, %v686
        %v702 = vpack.c.b16 %v689, %v688
        %v703 = vpack.c.b16 %v691, %v690
        %v704 = vpack.c.b16 %v693, %v692
        %v705 = vpack.c.b16 %v695, %v694
        %v706 = vpack.c.b16 %v697, %v696
        %v707 = vpack.c.b16 %v699, %v698
        %716 = vmatprep.subr.bf16.mxu0 0
        %717 = vmatpush1.bf16.msra.mxu0 %v700
        %718 = vmatprep.subr.bf16.mxu0 0
        %719 = vmatpush1.bf16.msra.mxu0 %v701
        %720 = vmatprep.subr.bf16.mxu0 0
        %721 = vmatpush1.bf16.msra.mxu0 %v702
        %722 = vmatprep.subr.bf16.mxu0 0
        %723 = vmatpush1.bf16.msra.mxu0 %v703
        %724 = vmatprep.subr.bf16.mxu0 0
        %725 = vmatpush1.bf16.msra.mxu0 %v704
        %726 = vmatprep.subr.bf16.mxu0 0
        %727 = vmatpush1.bf16.msra.mxu0 %v705
        %728 = vmatprep.subr.bf16.mxu0 0
        %729 = vmatpush1.bf16.msra.mxu0 %v706
        %730 = vmatprep.subr.bf16.mxu0 0
        %731 = vmatpush1.bf16.msra.mxu0 %v707
        %732 = vmatprep.subr.bf16.mxu0 0
        %733 = vmatpush1.bf16.msra.mxu0 0
        %734 = vmatprep.subr.bf16.mxu0 0
        %735 = vmatpush1.bf16.msra.mxu0 0
        %736 = vmatprep.subr.bf16.mxu0 0
        %737 = vmatpush1.bf16.msra.mxu0 0
        %738 = vmatprep.subr.bf16.mxu0 0
        %739 = vmatpush1.bf16.msra.mxu0 0
        %740 = vmatprep.subr.bf16.mxu0 0
        %741 = vmatpush1.bf16.msra.mxu0 0
        %742 = vmatprep.subr.bf16.mxu0 0
        %743 = vmatpush1.bf16.msra.mxu0 0
        %744 = vmatprep.subr.bf16.mxu0 0
        %745 = vmatpush1.bf16.msra.mxu0 0
        %746 = vmatprep.subr.bf16.mxu0 0
        %747 = vmatpush1.bf16.msra.mxu0 0
        %748 = vmatprep.mubr.bf16.mxu0 0
        %749 = vmatmul.mubr.bf16.gmra.mrb[0].mxu0 %v648
        %v750 = vpop.f32.mrb[0].mxu0
        %v751 = vadd.f32 0.0, %v750
        %v752 = vpop.f32.mrb[0].mxu0
        %v753 = vpop.f32.mrb[0].mxu0
        %v754 = vadd.f32 0.0, %v753
        %v755 = vpop.f32.mrb[0].mxu0
        %756 = vmatprep.mubr.bf16.mxu0 0
        %757 = vmatmul.mubr.bf16.gmra.mrb[0].mxu0 %v649
        %v758 = vpop.f32.mrb[0].mxu0
        %v759 = vadd.f32 0.0, %v758
        %v760 = vpop.f32.mrb[0].mxu0
        %v761 = vpop.f32.mrb[0].mxu0
        %v762 = vadd.f32 0.0, %v761
        %v763 = vpop.f32.mrb[0].mxu0
        %764 = vmatprep.mubr.bf16.mxu0 0
        %765 = vmatmul.mubr.bf16.gmra.mrb[0].mxu0 %v650
        %v766 = vpop.f32.mrb[0].mxu0
        %v767 = vadd.f32 0.0, %v766
        %v768 = vpop.f32.mrb[0].mxu0
        %v769 = vpop.f32.mrb[0].mxu0
        %v770 = vadd.f32 0.0, %v769
        %v771 = vpop.f32.mrb[0].mxu0
        %772 = vmatprep.mubr.bf16.mxu0 0
        %773 = vmatmul.mubr.bf16.gmra.mrb[0].mxu0 %v651
        %v774 = vpop.f32.mrb[0].mxu0
        %v775 = vadd.f32 0.0, %v774
        %v776 = vpop.f32.mrb[0].mxu0
        %v777 = vpop.f32.mrb[0].mxu0
        %v778 = vadd.f32 0.0, %v777
        %v779 = vpop.f32.mrb[0].mxu0
        %780 = vmatprep.mubr.bf16.mxu0 0
        %781 = vmatmul.mubr.bf16.gmra.mrb[0].mxu0 %v652
        %v782 = vpop.f32.mrb[0].mxu0
        %v783 = vadd.f32 0.0, %v782
        %v784 = vpop.f32.mrb[0].mxu0
        %v785 = vpop.f32.mrb[0].mxu0
        %v786 = vadd.f32 0.0, %v785
        %v787 = vpop.f32.mrb[0].mxu0
        %788 = vmatprep.mubr.bf16.mxu0 0
        %789 = vmatmul.mubr.bf16.gmra.mrb[0].mxu0 %v653
        %v790 = vpop.f32.mrb[0].mxu0
        %v791 = vadd.f32 0.0, %v790
        %v792 = vpop.f32.mrb[0].mxu0
        %v793 = vpop.f32.mrb[0].mxu0
        %v794 = vadd.f32 0.0, %v793
        %v795 = vpop.f32.mrb[0].mxu0
        %796 = vmatprep.mubr.bf16.mxu0 0
        %797 = vmatmul.mubr.bf16.gmra.mrb[0].mxu0 %v654
        %v798 = vpop.f32.mrb[0].mxu0
        %v799 = vadd.f32 0.0, %v798
        %v800 = vpop.f32.mrb[0].mxu0
        %v801 = vpop.f32.mrb[0].mxu0
        %v802 = vadd.f32 0.0, %v801
        %v803 = vpop.f32.mrb[0].mxu0
        %804 = vmatprep.mubr.bf16.mxu0 0
        %805 = vmatmul.mubr.bf16.gmra.mrb[0].mxu0 %v655
        %v806 = vpop.f32.mrb[0].mxu0
        %v807 = vadd.f32 0.0, %v806
        %v808 = vpop.f32.mrb[0].mxu0
        %v809 = vpop.f32.mrb[0].mxu0
        %v810 = vadd.f32 0.0, %v809
        %v811 = vpop.f32.mrb[0].mxu0
        %812 = vmatprep.mubr.bf16.mxu0 0
        %813 = vmatmul.mubr.bf16.gmra.mrb[0].mxu0 %v656
        %v814 = vpop.f32.mrb[0].mxu0
        %v815 = vadd.f32 0.0, %v814
        %v816 = vpop.f32.mrb[0].mxu0
        %v817 = vpop.f32.mrb[0].mxu0
        %v818 = vadd.f32 0.0, %v817
        %v819 = vpop.f32.mrb[0].mxu0
        %820 = vmatprep.mubr.bf16.mxu0 0
        %821 = vmatmul.mubr.bf16.gmra.mrb[0].mxu0 %v657
        %v822 = vpop.f32.mrb[0].mxu0
        %v823 = vadd.f32 0.0, %v822
        %v824 = vpop.f32.mrb[0].mxu0
        %v825 = vpop.f32.mrb[0].mxu0
        %v826 = vadd.f32 0.0, %v825
        %v827 = vpop.f32.mrb[0].mxu0
        %828 = vdwg.mxu0
        %v849 = vunpack.c.l.b16 %v322
        %v850 = vunpack.c.l.b16 %v323
        %v851 = vunpack.c.l.b16 %v324
        %v852 = vunpack.c.l.b16 %v325
        %v853 = vunpack.c.l.b16 %v326
        %v854 = vunpack.c.l.b16 %v327
        %v855 = vunpack.c.l.b16 %v328
        %v856 = vunpack.c.l.b16 %v329
        %v857 = vunpack.c.l.b16 %v330
        %v858 = vunpack.c.l.b16 %v331
        %v859 = vunpack.c.l.b16 %v332
        %v860 = vunpack.c.l.b16 %v333
        %v861 = vunpack.c.l.b16 %v334
        %v862 = vunpack.c.l.b16 %v335
        %v863 = vunpack.c.l.b16 %v336
        %v864 = vunpack.c.l.b16 %v337
        %v865 = vunpack.c.l.b16 %v338
        %v866 = vunpack.c.l.b16 %v339
        %v867 = vunpack.c.l.b16 %v340
        %v868 = vunpack.c.l.b16 %v341
        %v869 = vpack.c.b16 %v850, %v849
        %v870 = vpack.c.b16 %v852, %v851
        %v871 = vpack.c.b16 %v854, %v853
        %v872 = vpack.c.b16 %v856, %v855
        %v873 = vpack.c.b16 %v858, %v857
        %v874 = vpack.c.b16 %v860, %v859
        %v875 = vpack.c.b16 %v862, %v861
        %v876 = vpack.c.b16 %v864, %v863
        %v877 = vpack.c.b16 %v866, %v865
        %v878 = vpack.c.b16 %v868, %v867
        %v905 = vunpack.c.l.b16 %v342
        %v906 = vunpack.c.l.b16 %v343
        %v907 = vunpack.c.l.b16 %v344
        %v908 = vunpack.c.l.b16 %v345
        %v909 = vunpack.c.l.b16 %v346
        %v910 = vunpack.c.l.b16 %v347
        %v911 = vunpack.c.l.b16 %v348
        %v912 = vunpack.c.l.b16 %v349
        %v913 = vunpack.c.l.b16 %v350
        %v914 = vunpack.c.l.b16 %v351
        %v915 = vunpack.c.l.b16 %v352
        %v916 = vunpack.c.l.b16 %v353
        %v917 = vunpack.c.l.b16 %v354
        %v918 = vunpack.c.l.b16 %v355
        %v919 = vunpack.c.l.b16 %v356
        %v920 = vunpack.c.l.b16 %v357
        %v921 = vpack.c.b16 %v906, %v905
        %v922 = vpack.c.b16 %v908, %v907
        %v923 = vpack.c.b16 %v910, %v909
        %v924 = vpack.c.b16 %v912, %v911
        %v925 = vpack.c.b16 %v914, %v913
        %v926 = vpack.c.b16 %v916, %v915
        %v927 = vpack.c.b16 %v918, %v917
        %v928 = vpack.c.b16 %v920, %v919
        %937 = vmatprep.subr.bf16.mxu0 0
        %938 = vmatpush1.bf16.msra.mxu0 %v921
        %939 = vmatprep.subr.bf16.mxu0 0
        %940 = vmatpush1.bf16.msra.mxu0 %v922
        %941 = vmatprep.subr.bf16.mxu0 0
        %942 = vmatpush1.bf16.msra.mxu0 %v923
        %943 = vmatprep.subr.bf16.mxu0 0
        %944 = vmatpush1.bf16.msra.mxu0 %v924
        %945 = vmatprep.subr.bf16.mxu0 0
        %946 = vmatpush1.bf16.msra.mxu0 %v925
        %947 = vmatprep.subr.bf16.mxu0 0
        %948 = vmatpush1.bf16.msra.mxu0 %v926
        %949 = vmatprep.subr.bf16.mxu0 0
        %950 = vmatpush1.bf16.msra.mxu0 %v927
        %951 = vmatprep.subr.bf16.mxu0 0
        %952 = vmatpush1.bf16.msra.mxu0 %v928
        %953 = vmatprep.subr.bf16.mxu0 0
        %954 = vmatpush1.bf16.msra.mxu0 0
        %955 = vmatprep.subr.bf16.mxu0 0
        %956 = vmatpush1.bf16.msra.mxu0 0
        %957 = vmatprep.subr.bf16.mxu0 0
        %958 = vmatpush1.bf16.msra.mxu0 0
        %959 = vmatprep.subr.bf16.mxu0 0
        %960 = vmatpush1.bf16.msra.mxu0 0
        %961 = vmatprep.subr.bf16.mxu0 0
        %962 = vmatpush1.bf16.msra.mxu0 0
        %963 = vmatprep.subr.bf16.mxu0 0
        %964 = vmatpush1.bf16.msra.mxu0 0
        %965 = vmatprep.subr.bf16.mxu0 0
        %966 = vmatpush1.bf16.msra.mxu0 0
        %967 = vmatprep.subr.bf16.mxu0 0
        %968 = vmatpush1.bf16.msra.mxu0 0
        %969 = vmatprep.mubr.bf16.mxu0 0
        %970 = vmatmul.mubr.bf16.gmra.mrb[0].mxu0 %v869
        %v971 = vpop.f32.mrb[0].mxu0
        %v972 = vadd.f32 %v751, %v971
        %v973 = vpop.f32.mrb[0].mxu0
        %v974 = vpop.f32.mrb[0].mxu0
        %v975 = vadd.f32 %v754, %v974
        %v976 = vpop.f32.mrb[0].mxu0
        %977 = vmatprep.mubr.bf16.mxu0 0
        %978 = vmatmul.mubr.bf16.gmra.mrb[0].mxu0 %v870
        %v979 = vpop.f32.mrb[0].mxu0
        %v980 = vadd.f32 %v759, %v979
        %v981 = vpop.f32.mrb[0].mxu0
        %v982 = vpop.f32.mrb[0].mxu0
        %v983 = vadd.f32 %v762, %v982
        %v984 = vpop.f32.mrb[0].mxu0
        %985 = vmatprep.mubr.bf16.mxu0 0
        %986 = vmatmul.mubr.bf16.gmra.mrb[0].mxu0 %v871
        %v987 = vpop.f32.mrb[0].mxu0
        %v988 = vadd.f32 %v767, %v987
        %v989 = vpop.f32.mrb[0].mxu0
        %v990 = vpop.f32.mrb[0].mxu0
        %v991 = vadd.f32 %v770, %v990
        %v992 = vpop.f32.mrb[0].mxu0
        %993 = vmatprep.mubr.bf16.mxu0 0
        %994 = vmatmul.mubr.bf16.gmra.mrb[0].mxu0 %v872
        %v995 = vpop.f32.mrb[0].mxu0
        %v996 = vadd.f32 %v775, %v995
        %v997 = vpop.f32.mrb[0].mxu0
        %v998 = vpop.f32.mrb[0].mxu0
        %v999 = vadd.f32 %v778, %v998
        %v1000 = vpop.f32.mrb[0].mxu0
        %1001 = vmatprep.mubr.bf16.mxu0 0
        %1002 = vmatmul.mubr.bf16.gmra.mrb[0].mxu0 %v873
        %v1003 = vpop.f32.mrb[0].mxu0
        %v1004 = vadd.f32 %v783, %v1003
        %v1005 = vpop.f32.mrb[0].mxu0
        %v1006 = vpop.f32.mrb[0].mxu0
        %v1007 = vadd.f32 %v786, %v1006
        %v1008 = vpop.f32.mrb[0].mxu0
        %1009 = vmatprep.mubr.bf16.mxu0 0
        %1010 = vmatmul.mubr.bf16.gmra.mrb[0].mxu0 %v874
        %v1011 = vpop.f32.mrb[0].mxu0
        %v1012 = vadd.f32 %v791, %v1011
        %v1013 = vpop.f32.mrb[0].mxu0
        %v1014 = vpop.f32.mrb[0].mxu0
        %v1015 = vadd.f32 %v794, %v1014
        %v1016 = vpop.f32.mrb[0].mxu0
        %1017 = vmatprep.mubr.bf16.mxu0 0
        %1018 = vmatmul.mubr.bf16.gmra.mrb[0].mxu0 %v875
        %v1019 = vpop.f32.mrb[0].mxu0
        %v1020 = vadd.f32 %v799, %v1019
        %v1021 = vpop.f32.mrb[0].mxu0
        %v1022 = vpop.f32.mrb[0].mxu0
        %v1023 = vadd.f32 %v802, %v1022
        %v1024 = vpop.f32.mrb[0].mxu0
        %1025 = vmatprep.mubr.bf16.mxu0 0
        %1026 = vmatmul.mubr.bf16.gmra.mrb[0].mxu0 %v876
        %v1027 = vpop.f32.mrb[0].mxu0
        %v1028 = vadd.f32 %v807, %v1027
        %v1029 = vpop.f32.mrb[0].mxu0
        %v1030 = vpop.f32.mrb[0].mxu0
        %v1031 = vadd.f32 %v810, %v1030
        %v1032 = vpop.f32.mrb[0].mxu0
        %1033 = vmatprep.mubr.bf16.mxu0 0
        %1034 = vmatmul.mubr.bf16.gmra.mrb[0].mxu0 %v877
        %v1035 = vpop.f32.mrb[0].mxu0
        %v1036 = vadd.f32 %v815, %v1035
        %v1037 = vpop.f32.mrb[0].mxu0
        %v1038 = vpop.f32.mrb[0].mxu0
        %v1039 = vadd.f32 %v818, %v1038
        %v1040 = vpop.f32.mrb[0].mxu0
        %1041 = vmatprep.mubr.bf16.mxu0 0
        %1042 = vmatmul.mubr.bf16.gmra.mrb[0].mxu0 %v878
        %v1043 = vpop.f32.mrb[0].mxu0
        %v1044 = vadd.f32 %v823, %v1043
        %v1045 = vpop.f32.mrb[0].mxu0
        %v1046 = vpop.f32.mrb[0].mxu0
        %v1047 = vadd.f32 %v826, %v1046
        %v1048 = vpop.f32.mrb[0].mxu0
        %1049 = vdwg.mxu0
        %v1050 = vld [vmem:[%s319] sm:$0xe]
        %v1051 = vld [vmem:[%s319 + $0xc] sm:$0xe]
        %v1052 = vld [vmem:[%s319 + $0x18] sm:$0xe]
        %v1053 = vld [vmem:[%s319 + $0x24] sm:$0xe]
        %v1054 = vld [vmem:[%s319 + $0x30] sm:$0xe]
        %v1055 = vld [vmem:[%s319 + $0x3c] sm:$0xe]
        %v1056 = vld [vmem:[%s319 + $0x48] sm:$0xe]
        %v1057 = vld [vmem:[%s319 + $0x54] sm:$0xe]
        %v1058 = vld [vmem:[%s319 + $0x60] sm:$0xe]
        %v1059 = vld [vmem:[%s319 + $0x6c] sm:$0xe]
        %vm1080 = vcmask 1042432
        %vm1081 = vcmask 1046532
        %vm1082 = vmor %vm1080, %vm1081
        %v1083 = vrot.slane %v1050, 5
        %v1084 = vrot.slane %v1083, 4
        %v1085 = vrot.slane %v323, 5
        %v1086 = vsel %vm1082, %v1084, %v1085
        %v1087 = vrot.slane %v1085, 4
        %v1088 = vrot.slane %v358, 5
        %v1089 = vsel %vm1082, %v1087, %v1088
        %v1090 = vrot.slane %v1051, 5
        %v1091 = vrot.slane %v1090, 4
        %v1092 = vrot.slane %v325, 5
        %v1093 = vsel %vm1082, %v1091, %v1092
        %v1094 = vrot.slane %v1092, 4
        %v1095 = vrot.slane %v359, 5
        %v1096 = vsel %vm1082, %v1094, %v1095
        %v1097 = vrot.slane %v1052, 5
        %v1098 = vrot.slane %v1097, 4
        %v1099 = vrot.slane %v327, 5
        %v1100 = vsel %vm1082, %v1098, %v1099
        %v1101 = vrot.slane %v1099, 4
        %v1102 = vrot.slane %v360, 5
        %v1103 = vsel %vm1082, %v1101, %v1102
        %v1104 = vrot.slane %v1053, 5
        %v1105 = vrot.slane %v1104, 4
        %v1106 = vrot.slane %v329, 5
        %v1107 = vsel %vm1082, %v1105, %v1106
        %v1108 = vrot.slane %v1106, 4
        %v1109 = vrot.slane %v361, 5
        %v1110 = vsel %vm1082, %v1108, %v1109
        %v1111 = vrot.slane %v1054, 5
        %v1112 = vrot.slane %v1111, 4
        %v1113 = vrot.slane %v331, 5
        %v1114 = vsel %vm1082, %v1112, %v1113
        %v1115 = vrot.slane %v1113, 4
        %v1116 = vrot.slane %v362, 5
        %v1117 = vsel %vm1082, %v1115, %v1116
        %v1118 = vrot.slane %v1055, 5
        %v1119 = vrot.slane %v1118, 4
        %v1120 = vrot.slane %v333, 5
        %v1121 = vsel %vm1082, %v1119, %v1120
        %v1122 = vrot.slane %v1120, 4
        %v1123 = vrot.slane %v363, 5
        %v1124 = vsel %vm1082, %v1122, %v1123
        %v1125 = vrot.slane %v1056, 5
        %v1126 = vrot.slane %v1125, 4
        %v1127 = vrot.slane %v335, 5
        %v1128 = vsel %vm1082, %v1126, %v1127
        %v1129 = vrot.slane %v1127, 4
        %v1130 = vrot.slane %v364, 5
        %v1131 = vsel %vm1082, %v1129, %v1130
        %v1132 = vrot.slane %v1057, 5
        %v1133 = vrot.slane %v1132, 4
        %v1134 = vrot.slane %v337, 5
        %v1135 = vsel %vm1082, %v1133, %v1134
        %v1136 = vrot.slane %v1134, 4
        %v1137 = vrot.slane %v365, 5
        %v1138 = vsel %vm1082, %v1136, %v1137
        %v1139 = vrot.slane %v1058, 5
        %v1140 = vrot.slane %v1139, 4
        %v1141 = vrot.slane %v339, 5
        %v1142 = vsel %vm1082, %v1140, %v1141
        %v1143 = vrot.slane %v1141, 4
        %v1144 = vrot.slane %v366, 5
        %v1145 = vsel %vm1082, %v1143, %v1144
        %v1146 = vrot.slane %v1059, 5
        %v1147 = vrot.slane %v1146, 4
        %v1148 = vrot.slane %v341, 5
        %v1149 = vsel %vm1082, %v1147, %v1148
        %v1150 = vrot.slane %v1148, 4
        %v1151 = vrot.slane %v367, 5
        %v1152 = vsel %vm1082, %v1150, %v1151
        %s1153 = scalar_lea.vmem %s1, 128
        %v1154 = vld [vmem:[%s1153] sm:$0xf]
        %v1155 = vld [vmem:[%s1153 + $0x4] sm:$0xf]
        %v1156 = vld [vmem:[%s1153 + $0x8] sm:$0xf]
        %v1157 = vld [vmem:[%s1153 + $0xc] sm:$0xf]
        %v1158 = vld [vmem:[%s1153 + $0x10] sm:$0xf]
        %v1159 = vld [vmem:[%s1153 + $0x14] sm:$0xf]
        %v1160 = vld [vmem:[%s1153 + $0x18] sm:$0xf]
        %v1161 = vld [vmem:[%s1153 + $0x1c] sm:$0xf]
        %v1162 = vld [vmem:[%s1153 + $0x20] sm:$0xf]
        %v1163 = vld [vmem:[%s1153 + $0x24] sm:$0xf]
        %v1164 = vld [vmem:[%s1153 + $0x28] sm:$0xf]
        %v1165 = vld [vmem:[%s1153 + $0x2c] sm:$0xf]
        %v1166 = vld [vmem:[%s1153 + $0x30] sm:$0xf]
        %v1167 = vld [vmem:[%s1153 + $0x34] sm:$0xf]
        %v1168 = vld [vmem:[%s1153 + $0x38] sm:$0xf]
        %v1169 = vld [vmem:[%s1153 + $0x3c] sm:$0xf]
        %v1170 = vunpack.c.l.b16 %v1086
        %v1171 = vunpack.c.l.b16 %v1089
        %v1172 = vunpack.c.l.b16 %v1093
        %v1173 = vunpack.c.l.b16 %v1096
        %v1174 = vunpack.c.l.b16 %v1100
        %v1175 = vunpack.c.l.b16 %v1103
        %v1176 = vunpack.c.l.b16 %v1107
        %v1177 = vunpack.c.l.b16 %v1110
        %v1178 = vunpack.c.l.b16 %v1114
        %v1179 = vunpack.c.l.b16 %v1117
        %v1180 = vunpack.c.l.b16 %v1121
        %v1181 = vunpack.c.l.b16 %v1124
        %v1182 = vunpack.c.l.b16 %v1128
        %v1183 = vunpack.c.l.b16 %v1131
        %v1184 = vunpack.c.l.b16 %v1135
        %v1185 = vunpack.c.l.b16 %v1138
        %v1186 = vunpack.c.l.b16 %v1142
        %v1187 = vunpack.c.l.b16 %v1145
        %v1188 = vunpack.c.l.b16 %v1149
        %v1189 = vunpack.c.l.b16 %v1152
        %v1190 = vpack.c.b16 %v1171, %v1170
        %v1191 = vpack.c.b16 %v1173, %v1172
        %v1192 = vpack.c.b16 %v1175, %v1174
        %v1193 = vpack.c.b16 %v1177, %v1176
        %v1194 = vpack.c.b16 %v1179, %v1178
        %v1195 = vpack.c.b16 %v1181, %v1180
        %v1196 = vpack.c.b16 %v1183, %v1182
        %v1197 = vpack.c.b16 %v1185, %v1184
        %v1198 = vpack.c.b16 %v1187, %v1186
        %v1199 = vpack.c.b16 %v1189, %v1188
        %v1226 = vunpack.c.l.b16 %v1154
        %v1227 = vunpack.c.l.b16 %v1155
        %v1228 = vunpack.c.l.b16 %v1156
        %v1229 = vunpack.c.l.b16 %v1157
        %v1230 = vunpack.c.l.b16 %v1158
        %v1231 = vunpack.c.l.b16 %v1159
        %v1232 = vunpack.c.l.b16 %v1160
        %v1233 = vunpack.c.l.b16 %v1161
        %v1234 = vunpack.c.l.b16 %v1162
        %v1235 = vunpack.c.l.b16 %v1163
        %v1236 = vunpack.c.l.b16 %v1164
        %v1237 = vunpack.c.l.b16 %v1165
        %v1238 = vunpack.c.l.b16 %v1166
        %v1239 = vunpack.c.l.b16 %v1167
        %v1240 = vunpack.c.l.b16 %v1168
        %v1241 = vunpack.c.l.b16 %v1169
        %v1242 = vpack.c.b16 %v1227, %v1226
        %v1243 = vpack.c.b16 %v1229, %v1228
        %v1244 = vpack.c.b16 %v1231, %v1230
        %v1245 = vpack.c.b16 %v1233, %v1232
        %v1246 = vpack.c.b16 %v1235, %v1234
        %v1247 = vpack.c.b16 %v1237, %v1236
        %v1248 = vpack.c.b16 %v1239, %v1238
        %v1249 = vpack.c.b16 %v1241, %v1240
        %1258 = vmatprep.subr.bf16.mxu0 0
        %1259 = vmatpush1.bf16.msra.mxu0 %v1242
        %1260 = vmatprep.subr.bf16.mxu0 0
        %1261 = vmatpush1.bf16.msra.mxu0 %v1243
        %1262 = vmatprep.subr.bf16.mxu0 0
        %1263 = vmatpush1.bf16.msra.mxu0 %v1244
        %1264 = vmatprep.subr.bf16.mxu0 0
        %1265 = vmatpush1.bf16.msra.mxu0 %v1245
        %1266 = vmatprep.subr.bf16.mxu0 0
        %1267 = vmatpush1.bf16.msra.mxu0 %v1246
        %1268 = vmatprep.subr.bf16.mxu0 0
        %1269 = vmatpush1.bf16.msra.mxu0 %v1247
        %1270 = vmatprep.subr.bf16.mxu0 0
        %1271 = vmatpush1.bf16.msra.mxu0 %v1248
        %1272 = vmatprep.subr.bf16.mxu0 0
        %1273 = vmatpush1.bf16.msra.mxu0 %v1249
        %1274 = vmatprep.subr.bf16.mxu0 0
        %1275 = vmatpush1.bf16.msra.mxu0 0
        %1276 = vmatprep.subr.bf16.mxu0 0
        %1277 = vmatpush1.bf16.msra.mxu0 0
        %1278 = vmatprep.subr.bf16.mxu0 0
        %1279 = vmatpush1.bf16.msra.mxu0 0
        %1280 = vmatprep.subr.bf16.mxu0 0
        %1281 = vmatpush1.bf16.msra.mxu0 0
        %1282 = vmatprep.subr.bf16.mxu0 0
        %1283 = vmatpush1.bf16.msra.mxu0 0
        %1284 = vmatprep.subr.bf16.mxu0 0
        %1285 = vmatpush1.bf16.msra.mxu0 0
        %1286 = vmatprep.subr.bf16.mxu0 0
        %1287 = vmatpush1.bf16.msra.mxu0 0
        %1288 = vmatprep.subr.bf16.mxu0 0
        %1289 = vmatpush1.bf16.msra.mxu0 0
        %1290 = vmatprep.mubr.bf16.mxu0 0
        %1291 = vmatmul.mubr.bf16.gmra.mrb[0].mxu0 %v1190
        %v1292 = vpop.f32.mrb[0].mxu0
        %v1293 = vadd.f32 0.0, %v1292
        %v1294 = vpop.f32.mrb[0].mxu0
        %v1295 = vpop.f32.mrb[0].mxu0
        %v1296 = vadd.f32 0.0, %v1295
        %v1297 = vpop.f32.mrb[0].mxu0
        %1298 = vmatprep.mubr.bf16.mxu0 0
        %1299 = vmatmul.mubr.bf16.gmra.mrb[0].mxu0 %v1191
        %v1300 = vpop.f32.mrb[0].mxu0
        %v1301 = vadd.f32 0.0, %v1300
        %v1302 = vpop.f32.mrb[0].mxu0
        %v1303 = vpop.f32.mrb[0].mxu0
        %v1304 = vadd.f32 0.0, %v1303
        %v1305 = vpop.f32.mrb[0].mxu0
        %1306 = vmatprep.mubr.bf16.mxu0 0
        %1307 = vmatmul.mubr.bf16.gmra.mrb[0].mxu0 %v1192
        %v1308 = vpop.f32.mrb[0].mxu0
        %v1309 = vadd.f32 0.0, %v1308
        %v1310 = vpop.f32.mrb[0].mxu0
        %v1311 = vpop.f32.mrb[0].mxu0
        %v1312 = vadd.f32 0.0, %v1311
        %v1313 = vpop.f32.mrb[0].mxu0
        %1314 = vmatprep.mubr.bf16.mxu0 0
        %1315 = vmatmul.mubr.bf16.gmra.mrb[0].mxu0 %v1193
        %v1316 = vpop.f32.mrb[0].mxu0
        %v1317 = vadd.f32 0.0, %v1316
        %v1318 = vpop.f32.mrb[0].mxu0
        %v1319 = vpop.f32.mrb[0].mxu0
        %v1320 = vadd.f32 0.0, %v1319
        %v1321 = vpop.f32.mrb[0].mxu0
        %1322 = vmatprep.mubr.bf16.mxu0 0
        %1323 = vmatmul.mubr.bf16.gmra.mrb[0].mxu0 %v1194
        %v1324 = vpop.f32.mrb[0].mxu0
        %v1325 = vadd.f32 0.0, %v1324
        %v1326 = vpop.f32.mrb[0].mxu0
        %v1327 = vpop.f32.mrb[0].mxu0
        %v1328 = vadd.f32 0.0, %v1327
        %v1329 = vpop.f32.mrb[0].mxu0
        %1330 = vmatprep.mubr.bf16.mxu0 0
        %1331 = vmatmul.mubr.bf16.gmra.mrb[0].mxu0 %v1195
        %v1332 = vpop.f32.mrb[0].mxu0
        %v1333 = vadd.f32 0.0, %v1332
        %v1334 = vpop.f32.mrb[0].mxu0
        %v1335 = vpop.f32.mrb[0].mxu0
        %v1336 = vadd.f32 0.0, %v1335
        %v1337 = vpop.f32.mrb[0].mxu0
        %1338 = vmatprep.mubr.bf16.mxu0 0
        %1339 = vmatmul.mubr.bf16.gmra.mrb[0].mxu0 %v1196
        %v1340 = vpop.f32.mrb[0].mxu0
        %v1341 = vadd.f32 0.0, %v1340
        %v1342 = vpop.f32.mrb[0].mxu0
        %v1343 = vpop.f32.mrb[0].mxu0
        %v1344 = vadd.f32 0.0, %v1343
        %v1345 = vpop.f32.mrb[0].mxu0
        %1346 = vmatprep.mubr.bf16.mxu0 0
        %1347 = vmatmul.mubr.bf16.gmra.mrb[0].mxu0 %v1197
        %v1348 = vpop.f32.mrb[0].mxu0
        %v1349 = vadd.f32 0.0, %v1348
        %v1350 = vpop.f32.mrb[0].mxu0
        %v1351 = vpop.f32.mrb[0].mxu0
        %v1352 = vadd.f32 0.0, %v1351
        %v1353 = vpop.f32.mrb[0].mxu0
        %1354 = vmatprep.mubr.bf16.mxu0 0
        %1355 = vmatmul.mubr.bf16.gmra.mrb[0].mxu0 %v1198
        %v1356 = vpop.f32.mrb[0].mxu0
        %v1357 = vadd.f32 0.0, %v1356
        %v1358 = vpop.f32.mrb[0].mxu0
        %v1359 = vpop.f32.mrb[0].mxu0
        %v1360 = vadd.f32 0.0, %v1359
        %v1361 = vpop.f32.mrb[0].mxu0
        %1362 = vmatprep.mubr.bf16.mxu0 0
        %1363 = vmatmul.mubr.bf16.gmra.mrb[0].mxu0 %v1199
        %v1364 = vpop.f32.mrb[0].mxu0
        %v1365 = vadd.f32 0.0, %v1364
        %v1366 = vpop.f32.mrb[0].mxu0
        %v1367 = vpop.f32.mrb[0].mxu0
        %v1368 = vadd.f32 0.0, %v1367
        %v1369 = vpop.f32.mrb[0].mxu0
        %1370 = vdwg.mxu0
        %v1371 = vadd.f32 %v972, %v1293
        %v1372 = vadd.f32 %v975, %v1296
        %v1373 = vadd.f32 %v980, %v1301
        %v1374 = vadd.f32 %v983, %v1304
        %v1375 = vadd.f32 %v988, %v1309
        %v1376 = vadd.f32 %v991, %v1312
        %v1377 = vadd.f32 %v996, %v1317
        %v1378 = vadd.f32 %v999, %v1320
        %v1379 = vadd.f32 %v1004, %v1325
        %v1380 = vadd.f32 %v1007, %v1328
        %v1381 = vadd.f32 %v1012, %v1333
        %v1382 = vadd.f32 %v1015, %v1336
        %v1383 = vadd.f32 %v1020, %v1341
        %v1384 = vadd.f32 %v1023, %v1344
        %v1385 = vadd.f32 %v1028, %v1349
        %v1386 = vadd.f32 %v1031, %v1352
        %v1387 = vadd.f32 %v1036, %v1357
        %v1388 = vadd.f32 %v1039, %v1360
        %v1389 = vadd.f32 %v1044, %v1365
        %v1390 = vadd.f32 %v1047, %v1368
        %s1391 = scalar_lea.vmem %s319, 12
        %v1392 = vld [vmem:[%s1391] sm:$0xf]
        %v1393 = vld [vmem:[%s1391 + $0x4] sm:$0xf]
        %v1394 = vld [vmem:[%s1391 + $0xc] sm:$0xf]
        %v1395 = vld [vmem:[%s1391 + $0x10] sm:$0xf]
        %v1396 = vld [vmem:[%s1391 + $0x18] sm:$0xf]
        %v1397 = vld [vmem:[%s1391 + $0x1c] sm:$0xf]
        %v1398 = vld [vmem:[%s1391 + $0x24] sm:$0xf]
        %v1399 = vld [vmem:[%s1391 + $0x28] sm:$0xf]
        %v1400 = vld [vmem:[%s1391 + $0x30] sm:$0xf]
        %v1401 = vld [vmem:[%s1391 + $0x34] sm:$0xf]
        %v1402 = vld [vmem:[%s1391 + $0x3c] sm:$0xf]
        %v1403 = vld [vmem:[%s1391 + $0x40] sm:$0xf]
        %v1404 = vld [vmem:[%s1391 + $0x48] sm:$0xf]
        %v1405 = vld [vmem:[%s1391 + $0x4c] sm:$0xf]
        %v1406 = vld [vmem:[%s1391 + $0x54] sm:$0xf]
        %v1407 = vld [vmem:[%s1391 + $0x58] sm:$0xf]
        %v1408 = vld [vmem:[%s1391 + $0x60] sm:$0xf]
        %v1409 = vld [vmem:[%s1391 + $0x64] sm:$0xf]
        %v1410 = vld [vmem:[%s1391 + $0x6c] sm:$0xf]
        %v1411 = vld [vmem:[%s1391 + $0x70] sm:$0xf]
        %s1412 = scalar_lea.vmem %s1, 192
        %v1413 = vld [vmem:[%s1412] sm:$0xf]
        %v1414 = vld [vmem:[%s1412 + $0x4] sm:$0xf]
        %v1415 = vld [vmem:[%s1412 + $0x8] sm:$0xf]
        %v1416 = vld [vmem:[%s1412 + $0xc] sm:$0xf]
        %v1417 = vld [vmem:[%s1412 + $0x10] sm:$0xf]
        %v1418 = vld [vmem:[%s1412 + $0x14] sm:$0xf]
        %v1419 = vld [vmem:[%s1412 + $0x18] sm:$0xf]
        %v1420 = vld [vmem:[%s1412 + $0x1c] sm:$0xf]
        %v1421 = vld [vmem:[%s1412 + $0x20] sm:$0xf]
        %v1422 = vld [vmem:[%s1412 + $0x24] sm:$0xf]
        %v1423 = vld [vmem:[%s1412 + $0x28] sm:$0xf]
        %v1424 = vld [vmem:[%s1412 + $0x2c] sm:$0xf]
        %v1425 = vld [vmem:[%s1412 + $0x30] sm:$0xf]
        %v1426 = vld [vmem:[%s1412 + $0x34] sm:$0xf]
        %v1427 = vld [vmem:[%s1412 + $0x38] sm:$0xf]
        %v1428 = vld [vmem:[%s1412 + $0x3c] sm:$0xf]
        %v1449 = vunpack.c.l.b16 %v1392
        %v1450 = vunpack.c.l.b16 %v1393
        %v1451 = vunpack.c.l.b16 %v1394
        %v1452 = vunpack.c.l.b16 %v1395
        %v1453 = vunpack.c.l.b16 %v1396
        %v1454 = vunpack.c.l.b16 %v1397
        %v1455 = vunpack.c.l.b16 %v1398
        %v1456 = vunpack.c.l.b16 %v1399
        %v1457 = vunpack.c.l.b16 %v1400
        %v1458 = vunpack.c.l.b16 %v1401
        %v1459 = vunpack.c.l.b16 %v1402
        %v1460 = vunpack.c.l.b16 %v1403
        %v1461 = vunpack.c.l.b16 %v1404
        %v1462 = vunpack.c.l.b16 %v1405
        %v1463 = vunpack.c.l.b16 %v1406
        %v1464 = vunpack.c.l.b16 %v1407
        %v1465 = vunpack.c.l.b16 %v1408
        %v1466 = vunpack.c.l.b16 %v1409
        %v1467 = vunpack.c.l.b16 %v1410
        %v1468 = vunpack.c.l.b16 %v1411
        %v1469 = vpack.c.b16 %v1450, %v1449
        %v1470 = vpack.c.b16 %v1452, %v1451
        %v1471 = vpack.c.b16 %v1454, %v1453
        %v1472 = vpack.c.b16 %v1456, %v1455
        %v1473 = vpack.c.b16 %v1458, %v1457
        %v1474 = vpack.c.b16 %v1460, %v1459
        %v1475 = vpack.c.b16 %v1462, %v1461
        %v1476 = vpack.c.b16 %v1464, %v1463
        %v1477 = vpack.c.b16 %v1466, %v1465
        %v1478 = vpack.c.b16 %v1468, %v1467
        %v1505 = vunpack.c.l.b16 %v1413
        %v1506 = vunpack.c.l.b16 %v1414
        %v1507 = vunpack.c.l.b16 %v1415
        %v1508 = vunpack.c.l.b16 %v1416
        %v1509 = vunpack.c.l.b16 %v1417
        %v1510 = vunpack.c.l.b16 %v1418
        %v1511 = vunpack.c.l.b16 %v1419
        %v1512 = vunpack.c.l.b16 %v1420
        %v1513 = vunpack.c.l.b16 %v1421
        %v1514 = vunpack.c.l.b16 %v1422
        %v1515 = vunpack.c.l.b16 %v1423
        %v1516 = vunpack.c.l.b16 %v1424
        %v1517 = vunpack.c.l.b16 %v1425
        %v1518 = vunpack.c.l.b16 %v1426
        %v1519 = vunpack.c.l.b16 %v1427
        %v1520 = vunpack.c.l.b16 %v1428
        %v1521 = vpack.c.b16 %v1506, %v1505
        %v1522 = vpack.c.b16 %v1508, %v1507
        %v1523 = vpack.c.b16 %v1510, %v1509
        %v1524 = vpack.c.b16 %v1512, %v1511
        %v1525 = vpack.c.b16 %v1514, %v1513
        %v1526 = vpack.c.b16 %v1516, %v1515
        %v1527 = vpack.c.b16 %v1518, %v1517
        %v1528 = vpack.c.b16 %v1520, %v1519
        %1537 = vmatprep.subr.bf16.mxu0 0
        %1538 = vmatpush1.bf16.msra.mxu0 %v1521
        %1539 = vmatprep.subr.bf16.mxu0 0
        %1540 = vmatpush1.bf16.msra.mxu0 %v1522
        %1541 = vmatprep.subr.bf16.mxu0 0
        %1542 = vmatpush1.bf16.msra.mxu0 %v1523
        %1543 = vmatprep.subr.bf16.mxu0 0
        %1544 = vmatpush1.bf16.msra.mxu0 %v1524
        %1545 = vmatprep.subr.bf16.mxu0 0
        %1546 = vmatpush1.bf16.msra.mxu0 %v1525
        %1547 = vmatprep.subr.bf16.mxu0 0
        %1548 = vmatpush1.bf16.msra.mxu0 %v1526
        %1549 = vmatprep.subr.bf16.mxu0 0
        %1550 = vmatpush1.bf16.msra.mxu0 %v1527
        %1551 = vmatprep.subr.bf16.mxu0 0
        %1552 = vmatpush1.bf16.msra.mxu0 %v1528
        %1553 = vmatprep.subr.bf16.mxu0 0
        %1554 = vmatpush1.bf16.msra.mxu0 0
        %1555 = vmatprep.subr.bf16.mxu0 0
        %1556 = vmatpush1.bf16.msra.mxu0 0
        %1557 = vmatprep.subr.bf16.mxu0 0
        %1558 = vmatpush1.bf16.msra.mxu0 0
        %1559 = vmatprep.subr.bf16.mxu0 0
        %1560 = vmatpush1.bf16.msra.mxu0 0
        %1561 = vmatprep.subr.bf16.mxu0 0
        %1562 = vmatpush1.bf16.msra.mxu0 0
        %1563 = vmatprep.subr.bf16.mxu0 0
        %1564 = vmatpush1.bf16.msra.mxu0 0
        %1565 = vmatprep.subr.bf16.mxu0 0
        %1566 = vmatpush1.bf16.msra.mxu0 0
        %1567 = vmatprep.subr.bf16.mxu0 0
        %1568 = vmatpush1.bf16.msra.mxu0 0
        %1569 = vmatprep.mubr.bf16.mxu0 0
        %1570 = vmatmul.mubr.bf16.gmra.mrb[0].mxu0 %v1469
        %v1571 = vpop.f32.mrb[0].mxu0
        %v1572 = vadd.f32 0.0, %v1571
        %v1573 = vpop.f32.mrb[0].mxu0
        %v1574 = vpop.f32.mrb[0].mxu0
        %v1575 = vadd.f32 0.0, %v1574
        %v1576 = vpop.f32.mrb[0].mxu0
        %1577 = vmatprep.mubr.bf16.mxu0 0
        %1578 = vmatmul.mubr.bf16.gmra.mrb[0].mxu0 %v1470
        %v1579 = vpop.f32.mrb[0].mxu0
        %v1580 = vadd.f32 0.0, %v1579
        %v1581 = vpop.f32.mrb[0].mxu0
        %v1582 = vpop.f32.mrb[0].mxu0
        %v1583 = vadd.f32 0.0, %v1582
        %v1584 = vpop.f32.mrb[0].mxu0
        %1585 = vmatprep.mubr.bf16.mxu0 0
        %1586 = vmatmul.mubr.bf16.gmra.mrb[0].mxu0 %v1471
        %v1587 = vpop.f32.mrb[0].mxu0
        %v1588 = vadd.f32 0.0, %v1587
        %v1589 = vpop.f32.mrb[0].mxu0
        %v1590 = vpop.f32.mrb[0].mxu0
        %v1591 = vadd.f32 0.0, %v1590
        %v1592 = vpop.f32.mrb[0].mxu0
        %1593 = vmatprep.mubr.bf16.mxu0 0
        %1594 = vmatmul.mubr.bf16.gmra.mrb[0].mxu0 %v1472
        %v1595 = vpop.f32.mrb[0].mxu0
        %v1596 = vadd.f32 0.0, %v1595
        %v1597 = vpop.f32.mrb[0].mxu0
        %v1598 = vpop.f32.mrb[0].mxu0
        %v1599 = vadd.f32 0.0, %v1598
        %v1600 = vpop.f32.mrb[0].mxu0
        %1601 = vmatprep.mubr.bf16.mxu0 0
        %1602 = vmatmul.mubr.bf16.gmra.mrb[0].mxu0 %v1473
        %v1603 = vpop.f32.mrb[0].mxu0
        %v1604 = vadd.f32 0.0, %v1603
        %v1605 = vpop.f32.mrb[0].mxu0
        %v1606 = vpop.f32.mrb[0].mxu0
        %v1607 = vadd.f32 0.0, %v1606
        %v1608 = vpop.f32.mrb[0].mxu0
        %1609 = vmatprep.mubr.bf16.mxu0 0
        %1610 = vmatmul.mubr.bf16.gmra.mrb[0].mxu0 %v1474
        %v1611 = vpop.f32.mrb[0].mxu0
        %v1612 = vadd.f32 0.0, %v1611
        %v1613 = vpop.f32.mrb[0].mxu0
        %v1614 = vpop.f32.mrb[0].mxu0
        %v1615 = vadd.f32 0.0, %v1614
        %v1616 = vpop.f32.mrb[0].mxu0
        %1617 = vmatprep.mubr.bf16.mxu0 0
        %1618 = vmatmul.mubr.bf16.gmra.mrb[0].mxu0 %v1475
        %v1619 = vpop.f32.mrb[0].mxu0
        %v1620 = vadd.f32 0.0, %v1619
        %v1621 = vpop.f32.mrb[0].mxu0
        %v1622 = vpop.f32.mrb[0].mxu0
        %v1623 = vadd.f32 0.0, %v1622
        %v1624 = vpop.f32.mrb[0].mxu0
        %1625 = vmatprep.mubr.bf16.mxu0 0
        %1626 = vmatmul.mubr.bf16.gmra.mrb[0].mxu0 %v1476
        %v1627 = vpop.f32.mrb[0].mxu0
        %v1628 = vadd.f32 0.0, %v1627
        %v1629 = vpop.f32.mrb[0].mxu0
        %v1630 = vpop.f32.mrb[0].mxu0
        %v1631 = vadd.f32 0.0, %v1630
        %v1632 = vpop.f32.mrb[0].mxu0
        %1633 = vmatprep.mubr.bf16.mxu0 0
        %1634 = vmatmul.mubr.bf16.gmra.mrb[0].mxu0 %v1477
        %v1635 = vpop.f32.mrb[0].mxu0
        %v1636 = vadd.f32 0.0, %v1635
        %v1637 = vpop.f32.mrb[0].mxu0
        %v1638 = vpop.f32.mrb[0].mxu0
        %v1639 = vadd.f32 0.0, %v1638
        %v1640 = vpop.f32.mrb[0].mxu0
        %1641 = vmatprep.mubr.bf16.mxu0 0
        %1642 = vmatmul.mubr.bf16.gmra.mrb[0].mxu0 %v1478
        %v1643 = vpop.f32.mrb[0].mxu0
        %v1644 = vadd.f32 0.0, %v1643
        %v1645 = vpop.f32.mrb[0].mxu0
        %v1646 = vpop.f32.mrb[0].mxu0
        %v1647 = vadd.f32 0.0, %v1646
        %v1648 = vpop.f32.mrb[0].mxu0
        %1649 = vdwg.mxu0
        %v1650 = vadd.f32 %v1371, %v1572
        %v1651 = vadd.f32 %v1372, %v1575
        %v1652 = vadd.f32 %v1373, %v1580
        %v1653 = vadd.f32 %v1374, %v1583
        %v1654 = vadd.f32 %v1375, %v1588
        %v1655 = vadd.f32 %v1376, %v1591
        %v1656 = vadd.f32 %v1377, %v1596
        %v1657 = vadd.f32 %v1378, %v1599
        %v1658 = vadd.f32 %v1379, %v1604
        %v1659 = vadd.f32 %v1380, %v1607
        %v1660 = vadd.f32 %v1381, %v1612
        %v1661 = vadd.f32 %v1382, %v1615
        %v1662 = vadd.f32 %v1383, %v1620
        %v1663 = vadd.f32 %v1384, %v1623
        %v1664 = vadd.f32 %v1385, %v1628
        %v1665 = vadd.f32 %v1386, %v1631
        %v1666 = vadd.f32 %v1387, %v1636
        %v1667 = vadd.f32 %v1388, %v1639
        %v1668 = vadd.f32 %v1389, %v1644
        %v1669 = vadd.f32 %v1390, %v1647
        %v1670 = vld [vmem:[%s1391] sm:$0xf]
        %v1671 = vld [vmem:[%s1391 + $0x4] sm:$0xf]
        %v1672 = vld [vmem:[%s1391 + $0x8] sm:$0x1]
        %v1673 = vld [vmem:[%s1391 + $0xc] sm:$0xf]
        %v1674 = vld [vmem:[%s1391 + $0x10] sm:$0xf]
        %v1675 = vld [vmem:[%s1391 + $0x14] sm:$0x1]
        %v1676 = vld [vmem:[%s1391 + $0x18] sm:$0xf]
        %v1677 = vld [vmem:[%s1391 + $0x1c] sm:$0xf]
        %v1678 = vld [vmem:[%s1391 + $0x20] sm:$0x1]
        %v1679 = vld [vmem:[%s1391 + $0x24] sm:$0xf]
        %v1680 = vld [vmem:[%s1391 + $0x28] sm:$0xf]
        %v1681 = vld [vmem:[%s1391 + $0x2c] sm:$0x1]
        %v1682 = vld [vmem:[%s1391 + $0x30] sm:$0xf]
        %v1683 = vld [vmem:[%s1391 + $0x34] sm:$0xf]
        %v1684 = vld [vmem:[%s1391 + $0x38] sm:$0x1]
        %v1685 = vld [vmem:[%s1391 + $0x3c] sm:$0xf]
        %v1686 = vld [vmem:[%s1391 + $0x40] sm:$0xf]
        %v1687 = vld [vmem:[%s1391 + $0x44] sm:$0x1]
        %v1688 = vld [vmem:[%s1391 + $0x48] sm:$0xf]
        %v1689 = vld [vmem:[%s1391 + $0x4c] sm:$0xf]
        %v1690 = vld [vmem:[%s1391 + $0x50] sm:$0x1]
        %v1691 = vld [vmem:[%s1391 + $0x54] sm:$0xf]
        %v1692 = vld [vmem:[%s1391 + $0x58] sm:$0xf]
        %v1693 = vld [vmem:[%s1391 + $0x5c] sm:$0x1]
        %v1694 = vld [vmem:[%s1391 + $0x60] sm:$0xf]
        %v1695 = vld [vmem:[%s1391 + $0x64] sm:$0xf]
        %v1696 = vld [vmem:[%s1391 + $0x68] sm:$0x1]
        %v1697 = vld [vmem:[%s1391 + $0x6c] sm:$0xf]
        %v1698 = vld [vmem:[%s1391 + $0x70] sm:$0xf]
        %v1699 = vld [vmem:[%s1391 + $0x74] sm:$0x1]
        %v1701 = vshrl.u32 %v1670, 16
        %v1703 = vrot.slane %v1701, 4
        %v1704 = vshll.u32 %v1670, 16
        %v1706 = vrot.slane %v1704, 5
        %v1707 = vor.u32 %v1703, %v1706
        %v1708 = vrot.slane %v1707, 4
        %v1710 = vshll.u32 %v1671, 16
        %v1712 = vrot.slane %v1710, 5
        %v1713 = vsel %vm370, %v1708, %v1712
        %v1714 = vshrl.u32 %v1671, 16
        %v1716 = vrot.slane %v1714, 4
        %v1717 = vor.u32 %v1716, %v1712
        %v1718 = vrot.slane %v1717, 4
        %v1720 = vshll.u32 %v1672, 16
        %v1722 = vrot.slane %v1720, 5
        %v1723 = vsel %vm370, %v1718, %v1722
        %v1725 = vshrl.u32 %v1673, 16
        %v1727 = vrot.slane %v1725, 4
        %v1728 = vshll.u32 %v1673, 16
        %v1730 = vrot.slane %v1728, 5
        %v1731 = vor.u32 %v1727, %v1730
        %v1732 = vrot.slane %v1731, 4
        %v1734 = vshll.u32 %v1674, 16
        %v1736 = vrot.slane %v1734, 5
        %v1737 = vsel %vm370, %v1732, %v1736
        %v1738 = vshrl.u32 %v1674, 16
        %v1740 = vrot.slane %v1738, 4
        %v1741 = vor.u32 %v1740, %v1736
        %v1742 = vrot.slane %v1741, 4
        %v1744 = vshll.u32 %v1675, 16
        %v1746 = vrot.slane %v1744, 5
        %v1747 = vsel %vm370, %v1742, %v1746
        %v1749 = vshrl.u32 %v1676, 16
        %v1751 = vrot.slane %v1749, 4
        %v1752 = vshll.u32 %v1676, 16
        %v1754 = vrot.slane %v1752, 5
        %v1755 = vor.u32 %v1751, %v1754
        %v1756 = vrot.slane %v1755, 4
        %v1758 = vshll.u32 %v1677, 16
        %v1760 = vrot.slane %v1758, 5
        %v1761 = vsel %vm370, %v1756, %v1760
        %v1762 = vshrl.u32 %v1677, 16
        %v1764 = vrot.slane %v1762, 4
        %v1765 = vor.u32 %v1764, %v1760
        %v1766 = vrot.slane %v1765, 4
        %v1768 = vshll.u32 %v1678, 16
        %v1770 = vrot.slane %v1768, 5
        %v1771 = vsel %vm370, %v1766, %v1770
        %v1773 = vshrl.u32 %v1679, 16
        %v1775 = vrot.slane %v1773, 4
        %v1776 = vshll.u32 %v1679, 16
        %v1778 = vrot.slane %v1776, 5
        %v1779 = vor.u32 %v1775, %v1778
        %v1780 = vrot.slane %v1779, 4
        %v1782 = vshll.u32 %v1680, 16
        %v1784 = vrot.slane %v1782, 5
        %v1785 = vsel %vm370, %v1780, %v1784
        %v1786 = vshrl.u32 %v1680, 16
        %v1788 = vrot.slane %v1786, 4
        %v1789 = vor.u32 %v1788, %v1784
        %v1790 = vrot.slane %v1789, 4
        %v1792 = vshll.u32 %v1681, 16
        %v1794 = vrot.slane %v1792, 5
        %v1795 = vsel %vm370, %v1790, %v1794
        %v1797 = vshrl.u32 %v1682, 16
        %v1799 = vrot.slane %v1797, 4
        %v1800 = vshll.u32 %v1682, 16
        %v1802 = vrot.slane %v1800, 5
        %v1803 = vor.u32 %v1799, %v1802
        %v1804 = vrot.slane %v1803, 4
        %v1806 = vshll.u32 %v1683, 16
        %v1808 = vrot.slane %v1806, 5
        %v1809 = vsel %vm370, %v1804, %v1808
        %v1810 = vshrl.u32 %v1683, 16
        %v1812 = vrot.slane %v1810, 4
        %v1813 = vor.u32 %v1812, %v1808
        %v1814 = vrot.slane %v1813, 4
        %v1816 = vshll.u32 %v1684, 16
        %v1818 = vrot.slane %v1816, 5
        %v1819 = vsel %vm370, %v1814, %v1818
        %v1821 = vshrl.u32 %v1685, 16
        %v1823 = vrot.slane %v1821, 4
        %v1824 = vshll.u32 %v1685, 16
        %v1826 = vrot.slane %v1824, 5
        %v1827 = vor.u32 %v1823, %v1826
        %v1828 = vrot.slane %v1827, 4
        %v1830 = vshll.u32 %v1686, 16
        %v1832 = vrot.slane %v1830, 5
        %v1833 = vsel %vm370, %v1828, %v1832
        %v1834 = vshrl.u32 %v1686, 16
        %v1836 = vrot.slane %v1834, 4
        %v1837 = vor.u32 %v1836, %v1832
        %v1838 = vrot.slane %v1837, 4
        %v1840 = vshll.u32 %v1687, 16
        %v1842 = vrot.slane %v1840, 5
        %v1843 = vsel %vm370, %v1838, %v1842
        %v1845 = vshrl.u32 %v1688, 16
        %v1847 = vrot.slane %v1845, 4
        %v1848 = vshll.u32 %v1688, 16
        %v1850 = vrot.slane %v1848, 5
        %v1851 = vor.u32 %v1847, %v1850
        %v1852 = vrot.slane %v1851, 4
        %v1854 = vshll.u32 %v1689, 16
        %v1856 = vrot.slane %v1854, 5
        %v1857 = vsel %vm370, %v1852, %v1856
        %v1858 = vshrl.u32 %v1689, 16
        %v1860 = vrot.slane %v1858, 4
        %v1861 = vor.u32 %v1860, %v1856
        %v1862 = vrot.slane %v1861, 4
        %v1864 = vshll.u32 %v1690, 16
        %v1866 = vrot.slane %v1864, 5
        %v1867 = vsel %vm370, %v1862, %v1866
        %v1869 = vshrl.u32 %v1691, 16
        %v1871 = vrot.slane %v1869, 4
        %v1872 = vshll.u32 %v1691, 16
        %v1874 = vrot.slane %v1872, 5
        %v1875 = vor.u32 %v1871, %v1874
        %v1876 = vrot.slane %v1875, 4
        %v1878 = vshll.u32 %v1692, 16
        %v1880 = vrot.slane %v1878, 5
        %v1881 = vsel %vm370, %v1876, %v1880
        %v1882 = vshrl.u32 %v1692, 16
        %v1884 = vrot.slane %v1882, 4
        %v1885 = vor.u32 %v1884, %v1880
        %v1886 = vrot.slane %v1885, 4
        %v1888 = vshll.u32 %v1693, 16
        %v1890 = vrot.slane %v1888, 5
        %v1891 = vsel %vm370, %v1886, %v1890
        %v1893 = vshrl.u32 %v1694, 16
        %v1895 = vrot.slane %v1893, 4
        %v1896 = vshll.u32 %v1694, 16
        %v1898 = vrot.slane %v1896, 5
        %v1899 = vor.u32 %v1895, %v1898
        %v1900 = vrot.slane %v1899, 4
        %v1902 = vshll.u32 %v1695, 16
        %v1904 = vrot.slane %v1902, 5
        %v1905 = vsel %vm370, %v1900, %v1904
        %v1906 = vshrl.u32 %v1695, 16
        %v1908 = vrot.slane %v1906, 4
        %v1909 = vor.u32 %v1908, %v1904
        %v1910 = vrot.slane %v1909, 4
        %v1912 = vshll.u32 %v1696, 16
        %v1914 = vrot.slane %v1912, 5
        %v1915 = vsel %vm370, %v1910, %v1914
        %v1917 = vshrl.u32 %v1697, 16
        %v1919 = vrot.slane %v1917, 4
        %v1920 = vshll.u32 %v1697, 16
        %v1922 = vrot.slane %v1920, 5
        %v1923 = vor.u32 %v1919, %v1922
        %v1924 = vrot.slane %v1923, 4
        %v1926 = vshll.u32 %v1698, 16
        %v1928 = vrot.slane %v1926, 5
        %v1929 = vsel %vm370, %v1924, %v1928
        %v1930 = vshrl.u32 %v1698, 16
        %v1932 = vrot.slane %v1930, 4
        %v1933 = vor.u32 %v1932, %v1928
        %v1934 = vrot.slane %v1933, 4
        %v1936 = vshll.u32 %v1699, 16
        %v1938 = vrot.slane %v1936, 5
        %v1939 = vsel %vm370, %v1934, %v1938
        %s1940 = scalar_lea.vmem %s1, 256
        %v1941 = vld [vmem:[%s1940] sm:$0xf]
        %v1942 = vld [vmem:[%s1940 + $0x4] sm:$0xf]
        %v1943 = vld [vmem:[%s1940 + $0x8] sm:$0xf]
        %v1944 = vld [vmem:[%s1940 + $0xc] sm:$0xf]
        %v1945 = vld [vmem:[%s1940 + $0x10] sm:$0xf]
        %v1946 = vld [vmem:[%s1940 + $0x14] sm:$0xf]
        %v1947 = vld [vmem:[%s1940 + $0x18] sm:$0xf]
        %v1948 = vld [vmem:[%s1940 + $0x1c] sm:$0xf]
        %v1949 = vld [vmem:[%s1940 + $0x20] sm:$0xf]
        %v1950 = vld [vmem:[%s1940 + $0x24] sm:$0xf]
        %v1951 = vld [vmem:[%s1940 + $0x28] sm:$0xf]
        %v1952 = vld [vmem:[%s1940 + $0x2c] sm:$0xf]
        %v1953 = vld [vmem:[%s1940 + $0x30] sm:$0xf]
        %v1954 = vld [vmem:[%s1940 + $0x34] sm:$0xf]
        %v1955 = vld [vmem:[%s1940 + $0x38] sm:$0xf]
        %v1956 = vld [vmem:[%s1940 + $0x3c] sm:$0xf]
        %v1957 = vunpack.c.l.b16 %v1713
        %v1958 = vunpack.c.l.b16 %v1723
        %v1959 = vunpack.c.l.b16 %v1737
        %v1960 = vunpack.c.l.b16 %v1747
        %v1961 = vunpack.c.l.b16 %v1761
        %v1962 = vunpack.c.l.b16 %v1771
        %v1963 = vunpack.c.l.b16 %v1785
        %v1964 = vunpack.c.l.b16 %v1795
        %v1965 = vunpack.c.l.b16 %v1809
        %v1966 = vunpack.c.l.b16 %v1819
        %v1967 = vunpack.c.l.b16 %v1833
        %v1968 = vunpack.c.l.b16 %v1843
        %v1969 = vunpack.c.l.b16 %v1857
        %v1970 = vunpack.c.l.b16 %v1867
        %v1971 = vunpack.c.l.b16 %v1881
        %v1972 = vunpack.c.l.b16 %v1891
        %v1973 = vunpack.c.l.b16 %v1905
        %v1974 = vunpack.c.l.b16 %v1915
        %v1975 = vunpack.c.l.b16 %v1929
        %v1976 = vunpack.c.l.b16 %v1939
        %v1977 = vpack.c.b16 %v1958, %v1957
        %v1978 = vpack.c.b16 %v1960, %v1959
        %v1979 = vpack.c.b16 %v1962, %v1961
        %v1980 = vpack.c.b16 %v1964, %v1963
        %v1981 = vpack.c.b16 %v1966, %v1965
        %v1982 = vpack.c.b16 %v1968, %v1967
        %v1983 = vpack.c.b16 %v1970, %v1969
        %v1984 = vpack.c.b16 %v1972, %v1971
        %v1985 = vpack.c.b16 %v1974, %v1973
        %v1986 = vpack.c.b16 %v1976, %v1975
        %v2013 = vunpack.c.l.b16 %v1941
        %v2014 = vunpack.c.l.b16 %v1942
        %v2015 = vunpack.c.l.b16 %v1943
        %v2016 = vunpack.c.l.b16 %v1944
        %v2017 = vunpack.c.l.b16 %v1945
        %v2018 = vunpack.c.l.b16 %v1946
        %v2019 = vunpack.c.l.b16 %v1947
        %v2020 = vunpack.c.l.b16 %v1948
        %v2021 = vunpack.c.l.b16 %v1949
        %v2022 = vunpack.c.l.b16 %v1950
        %v2023 = vunpack.c.l.b16 %v1951
        %v2024 = vunpack.c.l.b16 %v1952
        %v2025 = vunpack.c.l.b16 %v1953
        %v2026 = vunpack.c.l.b16 %v1954
        %v2027 = vunpack.c.l.b16 %v1955
        %v2028 = vunpack.c.l.b16 %v1956
        %v2029 = vpack.c.b16 %v2014, %v2013
        %v2030 = vpack.c.b16 %v2016, %v2015
        %v2031 = vpack.c.b16 %v2018, %v2017
        %v2032 = vpack.c.b16 %v2020, %v2019
        %v2033 = vpack.c.b16 %v2022, %v2021
        %v2034 = vpack.c.b16 %v2024, %v2023
        %v2035 = vpack.c.b16 %v2026, %v2025
        %v2036 = vpack.c.b16 %v2028, %v2027
        %2045 = vmatprep.subr.bf16.mxu0 0
        %2046 = vmatpush1.bf16.msra.mxu0 %v2029
        %2047 = vmatprep.subr.bf16.mxu0 0
        %2048 = vmatpush1.bf16.msra.mxu0 %v2030
        %2049 = vmatprep.subr.bf16.mxu0 0
        %2050 = vmatpush1.bf16.msra.mxu0 %v2031
        %2051 = vmatprep.subr.bf16.mxu0 0
        %2052 = vmatpush1.bf16.msra.mxu0 %v2032
        %2053 = vmatprep.subr.bf16.mxu0 0
        %2054 = vmatpush1.bf16.msra.mxu0 %v2033
        %2055 = vmatprep.subr.bf16.mxu0 0
        %2056 = vmatpush1.bf16.msra.mxu0 %v2034
        %2057 = vmatprep.subr.bf16.mxu0 0
        %2058 = vmatpush1.bf16.msra.mxu0 %v2035
        %2059 = vmatprep.subr.bf16.mxu0 0
        %2060 = vmatpush1.bf16.msra.mxu0 %v2036
        %2061 = vmatprep.subr.bf16.mxu0 0
        %2062 = vmatpush1.bf16.msra.mxu0 0
        %2063 = vmatprep.subr.bf16.mxu0 0
        %2064 = vmatpush1.bf16.msra.mxu0 0
        %2065 = vmatprep.subr.bf16.mxu0 0
        %2066 = vmatpush1.bf16.msra.mxu0 0
        %2067 = vmatprep.subr.bf16.mxu0 0
        %2068 = vmatpush1.bf16.msra.mxu0 0
        %2069 = vmatprep.subr.bf16.mxu0 0
        %2070 = vmatpush1.bf16.msra.mxu0 0
        %2071 = vmatprep.subr.bf16.mxu0 0
        %2072 = vmatpush1.bf16.msra.mxu0 0
        %2073 = vmatprep.subr.bf16.mxu0 0
        %2074 = vmatpush1.bf16.msra.mxu0 0
        %2075 = vmatprep.subr.bf16.mxu0 0
        %2076 = vmatpush1.bf16.msra.mxu0 0
        %2077 = vmatprep.mubr.bf16.mxu0 0
        %2078 = vmatmul.mubr.bf16.gmra.mrb[0].mxu0 %v1977
        %v2079 = vpop.f32.mrb[0].mxu0
        %v2080 = vadd.f32 0.0, %v2079
        %v2081 = vpop.f32.mrb[0].mxu0
        %v2082 = vpop.f32.mrb[0].mxu0
        %v2083 = vadd.f32 0.0, %v2082
        %v2084 = vpop.f32.mrb[0].mxu0
        %2085 = vmatprep.mubr.bf16.mxu0 0
        %2086 = vmatmul.mubr.bf16.gmra.mrb[0].mxu0 %v1978
        %v2087 = vpop.f32.mrb[0].mxu0
        %v2088 = vadd.f32 0.0, %v2087
        %v2089 = vpop.f32.mrb[0].mxu0
        %v2090 = vpop.f32.mrb[0].mxu0
        %v2091 = vadd.f32 0.0, %v2090
        %v2092 = vpop.f32.mrb[0].mxu0
        %2093 = vmatprep.mubr.bf16.mxu0 0
        %2094 = vmatmul.mubr.bf16.gmra.mrb[0].mxu0 %v1979
        %v2095 = vpop.f32.mrb[0].mxu0
        %v2096 = vadd.f32 0.0, %v2095
        %v2097 = vpop.f32.mrb[0].mxu0
        %v2098 = vpop.f32.mrb[0].mxu0
        %v2099 = vadd.f32 0.0, %v2098
        %v2100 = vpop.f32.mrb[0].mxu0
        %2101 = vmatprep.mubr.bf16.mxu0 0
        %2102 = vmatmul.mubr.bf16.gmra.mrb[0].mxu0 %v1980
        %v2103 = vpop.f32.mrb[0].mxu0
        %v2104 = vadd.f32 0.0, %v2103
        %v2105 = vpop.f32.mrb[0].mxu0
        %v2106 = vpop.f32.mrb[0].mxu0
        %v2107 = vadd.f32 0.0, %v2106
        %v2108 = vpop.f32.mrb[0].mxu0
        %2109 = vmatprep.mubr.bf16.mxu0 0
        %2110 = vmatmul.mubr.bf16.gmra.mrb[0].mxu0 %v1981
        %v2111 = vpop.f32.mrb[0].mxu0
        %v2112 = vadd.f32 0.0, %v2111
        %v2113 = vpop.f32.mrb[0].mxu0
        %v2114 = vpop.f32.mrb[0].mxu0
        %v2115 = vadd.f32 0.0, %v2114
        %v2116 = vpop.f32.mrb[0].mxu0
        %2117 = vmatprep.mubr.bf16.mxu0 0
        %2118 = vmatmul.mubr.bf16.gmra.mrb[0].mxu0 %v1982
        %v2119 = vpop.f32.mrb[0].mxu0
        %v2120 = vadd.f32 0.0, %v2119
        %v2121 = vpop.f32.mrb[0].mxu0
        %v2122 = vpop.f32.mrb[0].mxu0
        %v2123 = vadd.f32 0.0, %v2122
        %v2124 = vpop.f32.mrb[0].mxu0
        %2125 = vmatprep.mubr.bf16.mxu0 0
        %2126 = vmatmul.mubr.bf16.gmra.mrb[0].mxu0 %v1983
        %v2127 = vpop.f32.mrb[0].mxu0
        %v2128 = vadd.f32 0.0, %v2127
        %v2129 = vpop.f32.mrb[0].mxu0
        %v2130 = vpop.f32.mrb[0].mxu0
        %v2131 = vadd.f32 0.0, %v2130
        %v2132 = vpop.f32.mrb[0].mxu0
        %2133 = vmatprep.mubr.bf16.mxu0 0
        %2134 = vmatmul.mubr.bf16.gmra.mrb[0].mxu0 %v1984
        %v2135 = vpop.f32.mrb[0].mxu0
        %v2136 = vadd.f32 0.0, %v2135
        %v2137 = vpop.f32.mrb[0].mxu0
        %v2138 = vpop.f32.mrb[0].mxu0
        %v2139 = vadd.f32 0.0, %v2138
        %v2140 = vpop.f32.mrb[0].mxu0
        %2141 = vmatprep.mubr.bf16.mxu0 0
        %2142 = vmatmul.mubr.bf16.gmra.mrb[0].mxu0 %v1985
        %v2143 = vpop.f32.mrb[0].mxu0
        %v2144 = vadd.f32 0.0, %v2143
        %v2145 = vpop.f32.mrb[0].mxu0
        %v2146 = vpop.f32.mrb[0].mxu0
        %v2147 = vadd.f32 0.0, %v2146
        %v2148 = vpop.f32.mrb[0].mxu0
        %2149 = vmatprep.mubr.bf16.mxu0 0
        %2150 = vmatmul.mubr.bf16.gmra.mrb[0].mxu0 %v1986
        %v2151 = vpop.f32.mrb[0].mxu0
        %v2152 = vadd.f32 0.0, %v2151
        %v2153 = vpop.f32.mrb[0].mxu0
        %v2154 = vpop.f32.mrb[0].mxu0
        %v2155 = vadd.f32 0.0, %v2154
        %v2156 = vpop.f32.mrb[0].mxu0
        %2157 = vdwg.mxu0
        %v2158 = vadd.f32 %v1650, %v2080
        %v2159 = vadd.f32 %v1651, %v2083
        %v2160 = vadd.f32 %v1652, %v2088
        %v2161 = vadd.f32 %v1653, %v2091
        %v2162 = vadd.f32 %v1654, %v2096
        %v2163 = vadd.f32 %v1655, %v2099
        %v2164 = vadd.f32 %v1656, %v2104
        %v2165 = vadd.f32 %v1657, %v2107
        %v2166 = vadd.f32 %v1658, %v2112
        %v2167 = vadd.f32 %v1659, %v2115
        %v2168 = vadd.f32 %v1660, %v2120
        %v2169 = vadd.f32 %v1661, %v2123
        %v2170 = vadd.f32 %v1662, %v2128
        %v2171 = vadd.f32 %v1663, %v2131
        %v2172 = vadd.f32 %v1664, %v2136
        %v2173 = vadd.f32 %v1665, %v2139
        %v2174 = vadd.f32 %v1666, %v2144
        %v2175 = vadd.f32 %v1667, %v2147
        %v2176 = vadd.f32 %v1668, %v2152
        %v2177 = vadd.f32 %v1669, %v2155
        %v2178 = vld [vmem:[%s1391] sm:$0xe]
        %v2179 = vld [vmem:[%s1391 + $0xc] sm:$0xe]
        %v2180 = vld [vmem:[%s1391 + $0x18] sm:$0xe]
        %v2181 = vld [vmem:[%s1391 + $0x24] sm:$0xe]
        %v2182 = vld [vmem:[%s1391 + $0x30] sm:$0xe]
        %v2183 = vld [vmem:[%s1391 + $0x3c] sm:$0xe]
        %v2184 = vld [vmem:[%s1391 + $0x48] sm:$0xe]
        %v2185 = vld [vmem:[%s1391 + $0x54] sm:$0xe]
        %v2186 = vld [vmem:[%s1391 + $0x60] sm:$0xe]
        %v2187 = vld [vmem:[%s1391 + $0x6c] sm:$0xe]
        %v2218 = vrot.slane %v2178, 5
        %v2219 = vrot.slane %v2218, 4
        %v2220 = vrot.slane %v1671, 5
        %v2221 = vsel %vm1082, %v2219, %v2220
        %v2222 = vrot.slane %v2220, 4
        %v2223 = vrot.slane %v1672, 5
        %v2224 = vsel %vm1082, %v2222, %v2223
        %v2225 = vrot.slane %v2179, 5
        %v2226 = vrot.slane %v2225, 4
        %v2227 = vrot.slane %v1674, 5
        %v2228 = vsel %vm1082, %v2226, %v2227
        %v2229 = vrot.slane %v2227, 4
        %v2230 = vrot.slane %v1675, 5
        %v2231 = vsel %vm1082, %v2229, %v2230
        %v2232 = vrot.slane %v2180, 5
        %v2233 = vrot.slane %v2232, 4
        %v2234 = vrot.slane %v1677, 5
        %v2235 = vsel %vm1082, %v2233, %v2234
        %v2236 = vrot.slane %v2234, 4
        %v2237 = vrot.slane %v1678, 5
        %v2238 = vsel %vm1082, %v2236, %v2237
        %v2239 = vrot.slane %v2181, 5
        %v2240 = vrot.slane %v2239, 4
        %v2241 = vrot.slane %v1680, 5
        %v2242 = vsel %vm1082, %v2240, %v2241
        %v2243 = vrot.slane %v2241, 4
        %v2244 = vrot.slane %v1681, 5
        %v2245 = vsel %vm1082, %v2243, %v2244
        %v2246 = vrot.slane %v2182, 5
        %v2247 = vrot.slane %v2246, 4
        %v2248 = vrot.slane %v1683, 5
        %v2249 = vsel %vm1082, %v2247, %v2248
        %v2250 = vrot.slane %v2248, 4
        %v2251 = vrot.slane %v1684, 5
        %v2252 = vsel %vm1082, %v2250, %v2251
        %v2253 = vrot.slane %v2183, 5
        %v2254 = vrot.slane %v2253, 4
        %v2255 = vrot.slane %v1686, 5
        %v2256 = vsel %vm1082, %v2254, %v2255
        %v2257 = vrot.slane %v2255, 4
        %v2258 = vrot.slane %v1687, 5
        %v2259 = vsel %vm1082, %v2257, %v2258
        %v2260 = vrot.slane %v2184, 5
        %v2261 = vrot.slane %v2260, 4
        %v2262 = vrot.slane %v1689, 5
        %v2263 = vsel %vm1082, %v2261, %v2262
        %v2264 = vrot.slane %v2262, 4
        %v2265 = vrot.slane %v1690, 5
        %v2266 = vsel %vm1082, %v2264, %v2265
        %v2267 = vrot.slane %v2185, 5
        %v2268 = vrot.slane %v2267, 4
        %v2269 = vrot.slane %v1692, 5
        %v2270 = vsel %vm1082, %v2268, %v2269
        %v2271 = vrot.slane %v2269, 4
        %v2272 = vrot.slane %v1693, 5
        %v2273 = vsel %vm1082, %v2271, %v2272
        %v2274 = vrot.slane %v2186, 5
        %v2275 = vrot.slane %v2274, 4
        %v2276 = vrot.slane %v1695, 5
        %v2277 = vsel %vm1082, %v2275, %v2276
        %v2278 = vrot.slane %v2276, 4
        %v2279 = vrot.slane %v1696, 5
        %v2280 = vsel %vm1082, %v2278, %v2279
        %v2281 = vrot.slane %v2187, 5
        %v2282 = vrot.slane %v2281, 4
        %v2283 = vrot.slane %v1698, 5
        %v2284 = vsel %vm1082, %v2282, %v2283
        %v2285 = vrot.slane %v2283, 4
        %v2286 = vrot.slane %v1699, 5
        %v2287 = vsel %vm1082, %v2285, %v2286
        %s2288 = scalar_lea.vmem %s1, 320
        %v2289 = vld [vmem:[%s2288] sm:$0xf]
        %v2290 = vld [vmem:[%s2288 + $0x4] sm:$0xf]
        %v2291 = vld [vmem:[%s2288 + $0x8] sm:$0xf]
        %v2292 = vld [vmem:[%s2288 + $0xc] sm:$0xf]
        %v2293 = vld [vmem:[%s2288 + $0x10] sm:$0xf]
        %v2294 = vld [vmem:[%s2288 + $0x14] sm:$0xf]
        %v2295 = vld [vmem:[%s2288 + $0x18] sm:$0xf]
        %v2296 = vld [vmem:[%s2288 + $0x1c] sm:$0xf]
        %v2297 = vld [vmem:[%s2288 + $0x20] sm:$0xf]
        %v2298 = vld [vmem:[%s2288 + $0x24] sm:$0xf]
        %v2299 = vld [vmem:[%s2288 + $0x28] sm:$0xf]
        %v2300 = vld [vmem:[%s2288 + $0x2c] sm:$0xf]
        %v2301 = vld [vmem:[%s2288 + $0x30] sm:$0xf]
        %v2302 = vld [vmem:[%s2288 + $0x34] sm:$0xf]
        %v2303 = vld [vmem:[%s2288 + $0x38] sm:$0xf]
        %v2304 = vld [vmem:[%s2288 + $0x3c] sm:$0xf]
        %v2305 = vunpack.c.l.b16 %v2221
        %v2306 = vunpack.c.l.b16 %v2224
        %v2307 = vunpack.c.l.b16 %v2228
        %v2308 = vunpack.c.l.b16 %v2231
        %v2309 = vunpack.c.l.b16 %v2235
        %v2310 = vunpack.c.l.b16 %v2238
        %v2311 = vunpack.c.l.b16 %v2242
        %v2312 = vunpack.c.l.b16 %v2245
        %v2313 = vunpack.c.l.b16 %v2249
        %v2314 = vunpack.c.l.b16 %v2252
        %v2315 = vunpack.c.l.b16 %v2256
        %v2316 = vunpack.c.l.b16 %v2259
        %v2317 = vunpack.c.l.b16 %v2263
        %v2318 = vunpack.c.l.b16 %v2266
        %v2319 = vunpack.c.l.b16 %v2270
        %v2320 = vunpack.c.l.b16 %v2273
        %v2321 = vunpack.c.l.b16 %v2277
        %v2322 = vunpack.c.l.b16 %v2280
        %v2323 = vunpack.c.l.b16 %v2284
        %v2324 = vunpack.c.l.b16 %v2287
        %v2325 = vpack.c.b16 %v2306, %v2305
        %v2326 = vpack.c.b16 %v2308, %v2307
        %v2327 = vpack.c.b16 %v2310, %v2309
        %v2328 = vpack.c.b16 %v2312, %v2311
        %v2329 = vpack.c.b16 %v2314, %v2313
        %v2330 = vpack.c.b16 %v2316, %v2315
        %v2331 = vpack.c.b16 %v2318, %v2317
        %v2332 = vpack.c.b16 %v2320, %v2319
        %v2333 = vpack.c.b16 %v2322, %v2321
        %v2334 = vpack.c.b16 %v2324, %v2323
        %v2361 = vunpack.c.l.b16 %v2289
        %v2362 = vunpack.c.l.b16 %v2290
        %v2363 = vunpack.c.l.b16 %v2291
        %v2364 = vunpack.c.l.b16 %v2292
        %v2365 = vunpack.c.l.b16 %v2293
        %v2366 = vunpack.c.l.b16 %v2294
        %v2367 = vunpack.c.l.b16 %v2295
        %v2368 = vunpack.c.l.b16 %v2296
        %v2369 = vunpack.c.l.b16 %v2297
        %v2370 = vunpack.c.l.b16 %v2298
        %v2371 = vunpack.c.l.b16 %v2299
        %v2372 = vunpack.c.l.b16 %v2300
        %v2373 = vunpack.c.l.b16 %v2301
        %v2374 = vunpack.c.l.b16 %v2302
        %v2375 = vunpack.c.l.b16 %v2303
        %v2376 = vunpack.c.l.b16 %v2304
        %v2377 = vpack.c.b16 %v2362, %v2361
        %v2378 = vpack.c.b16 %v2364, %v2363
        %v2379 = vpack.c.b16 %v2366, %v2365
        %v2380 = vpack.c.b16 %v2368, %v2367
        %v2381 = vpack.c.b16 %v2370, %v2369
        %v2382 = vpack.c.b16 %v2372, %v2371
        %v2383 = vpack.c.b16 %v2374, %v2373
        %v2384 = vpack.c.b16 %v2376, %v2375
        %2393 = vmatprep.subr.bf16.mxu0 0
        %2394 = vmatpush1.bf16.msra.mxu0 %v2377
        %2395 = vmatprep.subr.bf16.mxu0 0
        %2396 = vmatpush1.bf16.msra.mxu0 %v2378
        %2397 = vmatprep.subr.bf16.mxu0 0
        %2398 = vmatpush1.bf16.msra.mxu0 %v2379
        %2399 = vmatprep.subr.bf16.mxu0 0
        %2400 = vmatpush1.bf16.msra.mxu0 %v2380
        %2401 = vmatprep.subr.bf16.mxu0 0
        %2402 = vmatpush1.bf16.msra.mxu0 %v2381
        %2403 = vmatprep.subr.bf16.mxu0 0
        %2404 = vmatpush1.bf16.msra.mxu0 %v2382
        %2405 = vmatprep.subr.bf16.mxu0 0
        %2406 = vmatpush1.bf16.msra.mxu0 %v2383
        %2407 = vmatprep.subr.bf16.mxu0 0
        %2408 = vmatpush1.bf16.msra.mxu0 %v2384
        %2409 = vmatprep.subr.bf16.mxu0 0
        %2410 = vmatpush1.bf16.msra.mxu0 0
        %2411 = vmatprep.subr.bf16.mxu0 0
        %2412 = vmatpush1.bf16.msra.mxu0 0
        %2413 = vmatprep.subr.bf16.mxu0 0
        %2414 = vmatpush1.bf16.msra.mxu0 0
        %2415 = vmatprep.subr.bf16.mxu0 0
        %2416 = vmatpush1.bf16.msra.mxu0 0
        %2417 = vmatprep.subr.bf16.mxu0 0
        %2418 = vmatpush1.bf16.msra.mxu0 0
        %2419 = vmatprep.subr.bf16.mxu0 0
        %2420 = vmatpush1.bf16.msra.mxu0 0
        %2421 = vmatprep.subr.bf16.mxu0 0
        %2422 = vmatpush1.bf16.msra.mxu0 0
        %2423 = vmatprep.subr.bf16.mxu0 0
        %2424 = vmatpush1.bf16.msra.mxu0 0
        %2425 = vmatprep.mubr.bf16.mxu0 0
        %2426 = vmatmul.mubr.bf16.gmra.mrb[0].mxu0 %v2325
        %v2427 = vpop.f32.mrb[0].mxu0
        %v2428 = vadd.f32 0.0, %v2427
        %v2429 = vpop.f32.mrb[0].mxu0
        %v2430 = vpop.f32.mrb[0].mxu0
        %v2431 = vadd.f32 0.0, %v2430
        %v2432 = vpop.f32.mrb[0].mxu0
        %2433 = vmatprep.mubr.bf16.mxu0 0
        %2434 = vmatmul.mubr.bf16.gmra.mrb[0].mxu0 %v2326
        %v2435 = vpop.f32.mrb[0].mxu0
        %v2436 = vadd.f32 0.0, %v2435
        %v2437 = vpop.f32.mrb[0].mxu0
        %v2438 = vpop.f32.mrb[0].mxu0
        %v2439 = vadd.f32 0.0, %v2438
        %v2440 = vpop.f32.mrb[0].mxu0
        %2441 = vmatprep.mubr.bf16.mxu0 0
        %2442 = vmatmul.mubr.bf16.gmra.mrb[0].mxu0 %v2327
        %v2443 = vpop.f32.mrb[0].mxu0
        %v2444 = vadd.f32 0.0, %v2443
        %v2445 = vpop.f32.mrb[0].mxu0
        %v2446 = vpop.f32.mrb[0].mxu0
        %v2447 = vadd.f32 0.0, %v2446
        %v2448 = vpop.f32.mrb[0].mxu0
        %2449 = vmatprep.mubr.bf16.mxu0 0
        %2450 = vmatmul.mubr.bf16.gmra.mrb[0].mxu0 %v2328
        %v2451 = vpop.f32.mrb[0].mxu0
        %v2452 = vadd.f32 0.0, %v2451
        %v2453 = vpop.f32.mrb[0].mxu0
        %v2454 = vpop.f32.mrb[0].mxu0
        %v2455 = vadd.f32 0.0, %v2454
        %v2456 = vpop.f32.mrb[0].mxu0
        %2457 = vmatprep.mubr.bf16.mxu0 0
        %2458 = vmatmul.mubr.bf16.gmra.mrb[0].mxu0 %v2329
        %v2459 = vpop.f32.mrb[0].mxu0
        %v2460 = vadd.f32 0.0, %v2459
        %v2461 = vpop.f32.mrb[0].mxu0
        %v2462 = vpop.f32.mrb[0].mxu0
        %v2463 = vadd.f32 0.0, %v2462
        %v2464 = vpop.f32.mrb[0].mxu0
        %2465 = vmatprep.mubr.bf16.mxu0 0
        %2466 = vmatmul.mubr.bf16.gmra.mrb[0].mxu0 %v2330
        %v2467 = vpop.f32.mrb[0].mxu0
        %v2468 = vadd.f32 0.0, %v2467
        %v2469 = vpop.f32.mrb[0].mxu0
        %v2470 = vpop.f32.mrb[0].mxu0
        %v2471 = vadd.f32 0.0, %v2470
        %v2472 = vpop.f32.mrb[0].mxu0
        %2473 = vmatprep.mubr.bf16.mxu0 0
        %2474 = vmatmul.mubr.bf16.gmra.mrb[0].mxu0 %v2331
        %v2475 = vpop.f32.mrb[0].mxu0
        %v2476 = vadd.f32 0.0, %v2475
        %v2477 = vpop.f32.mrb[0].mxu0
        %v2478 = vpop.f32.mrb[0].mxu0
        %v2479 = vadd.f32 0.0, %v2478
        %v2480 = vpop.f32.mrb[0].mxu0
        %2481 = vmatprep.mubr.bf16.mxu0 0
        %2482 = vmatmul.mubr.bf16.gmra.mrb[0].mxu0 %v2332
        %v2483 = vpop.f32.mrb[0].mxu0
        %v2484 = vadd.f32 0.0, %v2483
        %v2485 = vpop.f32.mrb[0].mxu0
        %v2486 = vpop.f32.mrb[0].mxu0
        %v2487 = vadd.f32 0.0, %v2486
        %v2488 = vpop.f32.mrb[0].mxu0
        %2489 = vmatprep.mubr.bf16.mxu0 0
        %2490 = vmatmul.mubr.bf16.gmra.mrb[0].mxu0 %v2333
        %v2491 = vpop.f32.mrb[0].mxu0
        %v2492 = vadd.f32 0.0, %v2491
        %v2493 = vpop.f32.mrb[0].mxu0
        %v2494 = vpop.f32.mrb[0].mxu0
        %v2495 = vadd.f32 0.0, %v2494
        %v2496 = vpop.f32.mrb[0].mxu0
        %2497 = vmatprep.mubr.bf16.mxu0 0
        %2498 = vmatmul.mubr.bf16.gmra.mrb[0].mxu0 %v2334
        %v2499 = vpop.f32.mrb[0].mxu0
        %v2500 = vadd.f32 0.0, %v2499
        %v2501 = vpop.f32.mrb[0].mxu0
        %v2502 = vpop.f32.mrb[0].mxu0
        %v2503 = vadd.f32 0.0, %v2502
        %v2504 = vpop.f32.mrb[0].mxu0
        %2505 = vdwg.mxu0
        %v2506 = vadd.f32 %v2158, %v2428
        %v2507 = vadd.f32 %v2159, %v2431
        %v2508 = vadd.f32 %v2160, %v2436
        %v2509 = vadd.f32 %v2161, %v2439
        %v2510 = vadd.f32 %v2162, %v2444
        %v2511 = vadd.f32 %v2163, %v2447
        %v2512 = vadd.f32 %v2164, %v2452
        %v2513 = vadd.f32 %v2165, %v2455
        %v2514 = vadd.f32 %v2166, %v2460
        %v2515 = vadd.f32 %v2167, %v2463
        %v2516 = vadd.f32 %v2168, %v2468
        %v2517 = vadd.f32 %v2169, %v2471
        %v2518 = vadd.f32 %v2170, %v2476
        %v2519 = vadd.f32 %v2171, %v2479
        %v2520 = vadd.f32 %v2172, %v2484
        %v2521 = vadd.f32 %v2173, %v2487
        %v2522 = vadd.f32 %v2174, %v2492
        %v2523 = vadd.f32 %v2175, %v2495
        %v2524 = vadd.f32 %v2176, %v2500
        %v2525 = vadd.f32 %v2177, %v2503
        %s2526 = scalar_lea.vmem %s319, 24
        %v2527 = vld [vmem:[%s2526] sm:$0xf]
        %v2528 = vld [vmem:[%s2526 + $0x4] sm:$0xf]
        %v2529 = vld [vmem:[%s2526 + $0xc] sm:$0xf]
        %v2530 = vld [vmem:[%s2526 + $0x10] sm:$0xf]
        %v2531 = vld [vmem:[%s2526 + $0x18] sm:$0xf]
        %v2532 = vld [vmem:[%s2526 + $0x1c] sm:$0xf]
        %v2533 = vld [vmem:[%s2526 + $0x24] sm:$0xf]
        %v2534 = vld [vmem:[%s2526 + $0x28] sm:$0xf]
        %v2535 = vld [vmem:[%s2526 + $0x30] sm:$0xf]
        %v2536 = vld [vmem:[%s2526 + $0x34] sm:$0xf]
        %v2537 = vld [vmem:[%s2526 + $0x3c] sm:$0xf]
        %v2538 = vld [vmem:[%s2526 + $0x40] sm:$0xf]
        %v2539 = vld [vmem:[%s2526 + $0x48] sm:$0xf]
        %v2540 = vld [vmem:[%s2526 + $0x4c] sm:$0xf]
        %v2541 = vld [vmem:[%s2526 + $0x54] sm:$0xf]
        %v2542 = vld [vmem:[%s2526 + $0x58] sm:$0xf]
        %v2543 = vld [vmem:[%s2526 + $0x60] sm:$0xf]
        %v2544 = vld [vmem:[%s2526 + $0x64] sm:$0xf]
        %v2545 = vld [vmem:[%s2526 + $0x6c] sm:$0xf]
        %v2546 = vld [vmem:[%s2526 + $0x70] sm:$0xf]
        %s2547 = scalar_lea.vmem %s1, 384
        %v2548 = vld [vmem:[%s2547] sm:$0xf]
        %v2549 = vld [vmem:[%s2547 + $0x4] sm:$0xf]
        %v2550 = vld [vmem:[%s2547 + $0x8] sm:$0xf]
        %v2551 = vld [vmem:[%s2547 + $0xc] sm:$0xf]
        %v2552 = vld [vmem:[%s2547 + $0x10] sm:$0xf]
        %v2553 = vld [vmem:[%s2547 + $0x14] sm:$0xf]
        %v2554 = vld [vmem:[%s2547 + $0x18] sm:$0xf]
        %v2555 = vld [vmem:[%s2547 + $0x1c] sm:$0xf]
        %v2556 = vld [vmem:[%s2547 + $0x20] sm:$0xf]
        %v2557 = vld [vmem:[%s2547 + $0x24] sm:$0xf]
        %v2558 = vld [vmem:[%s2547 + $0x28] sm:$0xf]
        %v2559 = vld [vmem:[%s2547 + $0x2c] sm:$0xf]
        %v2560 = vld [vmem:[%s2547 + $0x30] sm:$0xf]
        %v2561 = vld [vmem:[%s2547 + $0x34] sm:$0xf]
        %v2562 = vld [vmem:[%s2547 + $0x38] sm:$0xf]
        %v2563 = vld [vmem:[%s2547 + $0x3c] sm:$0xf]
        %v2584 = vunpack.c.l.b16 %v2527
        %v2585 = vunpack.c.l.b16 %v2528
        %v2586 = vunpack.c.l.b16 %v2529
        %v2587 = vunpack.c.l.b16 %v2530
        %v2588 = vunpack.c.l.b16 %v2531
        %v2589 = vunpack.c.l.b16 %v2532
        %v2590 = vunpack.c.l.b16 %v2533
        %v2591 = vunpack.c.l.b16 %v2534
        %v2592 = vunpack.c.l.b16 %v2535
        %v2593 = vunpack.c.l.b16 %v2536
        %v2594 = vunpack.c.l.b16 %v2537
        %v2595 = vunpack.c.l.b16 %v2538
        %v2596 = vunpack.c.l.b16 %v2539
        %v2597 = vunpack.c.l.b16 %v2540
        %v2598 = vunpack.c.l.b16 %v2541
        %v2599 = vunpack.c.l.b16 %v2542
        %v2600 = vunpack.c.l.b16 %v2543
        %v2601 = vunpack.c.l.b16 %v2544
        %v2602 = vunpack.c.l.b16 %v2545
        %v2603 = vunpack.c.l.b16 %v2546
        %v2604 = vpack.c.b16 %v2585, %v2584
        %v2605 = vpack.c.b16 %v2587, %v2586
        %v2606 = vpack.c.b16 %v2589, %v2588
        %v2607 = vpack.c.b16 %v2591, %v2590
        %v2608 = vpack.c.b16 %v2593, %v2592
        %v2609 = vpack.c.b16 %v2595, %v2594
        %v2610 = vpack.c.b16 %v2597, %v2596
        %v2611 = vpack.c.b16 %v2599, %v2598
        %v2612 = vpack.c.b16 %v2601, %v2600
        %v2613 = vpack.c.b16 %v2603, %v2602
        %v2640 = vunpack.c.l.b16 %v2548
        %v2641 = vunpack.c.l.b16 %v2549
        %v2642 = vunpack.c.l.b16 %v2550
        %v2643 = vunpack.c.l.b16 %v2551
        %v2644 = vunpack.c.l.b16 %v2552
        %v2645 = vunpack.c.l.b16 %v2553
        %v2646 = vunpack.c.l.b16 %v2554
        %v2647 = vunpack.c.l.b16 %v2555
        %v2648 = vunpack.c.l.b16 %v2556
        %v2649 = vunpack.c.l.b16 %v2557
        %v2650 = vunpack.c.l.b16 %v2558
        %v2651 = vunpack.c.l.b16 %v2559
        %v2652 = vunpack.c.l.b16 %v2560
        %v2653 = vunpack.c.l.b16 %v2561
        %v2654 = vunpack.c.l.b16 %v2562
        %v2655 = vunpack.c.l.b16 %v2563
        %v2656 = vpack.c.b16 %v2641, %v2640
        %v2657 = vpack.c.b16 %v2643, %v2642
        %v2658 = vpack.c.b16 %v2645, %v2644
        %v2659 = vpack.c.b16 %v2647, %v2646
        %v2660 = vpack.c.b16 %v2649, %v2648
        %v2661 = vpack.c.b16 %v2651, %v2650
        %v2662 = vpack.c.b16 %v2653, %v2652
        %v2663 = vpack.c.b16 %v2655, %v2654
        %2672 = vmatprep.subr.bf16.mxu0 0
        %2673 = vmatpush1.bf16.msra.mxu0 %v2656
        %2674 = vmatprep.subr.bf16.mxu0 0
        %2675 = vmatpush1.bf16.msra.mxu0 %v2657
        %2676 = vmatprep.subr.bf16.mxu0 0
        %2677 = vmatpush1.bf16.msra.mxu0 %v2658
        %2678 = vmatprep.subr.bf16.mxu0 0
        %2679 = vmatpush1.bf16.msra.mxu0 %v2659
        %2680 = vmatprep.subr.bf16.mxu0 0
        %2681 = vmatpush1.bf16.msra.mxu0 %v2660
        %2682 = vmatprep.subr.bf16.mxu0 0
        %2683 = vmatpush1.bf16.msra.mxu0 %v2661
        %2684 = vmatprep.subr.bf16.mxu0 0
        %2685 = vmatpush1.bf16.msra.mxu0 %v2662
        %2686 = vmatprep.subr.bf16.mxu0 0
        %2687 = vmatpush1.bf16.msra.mxu0 %v2663
        %2688 = vmatprep.subr.bf16.mxu0 0
        %2689 = vmatpush1.bf16.msra.mxu0 0
        %2690 = vmatprep.subr.bf16.mxu0 0
        %2691 = vmatpush1.bf16.msra.mxu0 0
        %2692 = vmatprep.subr.bf16.mxu0 0
        %2693 = vmatpush1.bf16.msra.mxu0 0
        %2694 = vmatprep.subr.bf16.mxu0 0
        %2695 = vmatpush1.bf16.msra.mxu0 0
        %2696 = vmatprep.subr.bf16.mxu0 0
        %2697 = vmatpush1.bf16.msra.mxu0 0
        %2698 = vmatprep.subr.bf16.mxu0 0
        %2699 = vmatpush1.bf16.msra.mxu0 0
        %2700 = vmatprep.subr.bf16.mxu0 0
        %2701 = vmatpush1.bf16.msra.mxu0 0
        %2702 = vmatprep.subr.bf16.mxu0 0
        %2703 = vmatpush1.bf16.msra.mxu0 0
        %2704 = vmatprep.mubr.bf16.mxu0 0
        %2705 = vmatmul.mubr.bf16.gmra.mrb[0].mxu0 %v2604
        %v2706 = vpop.f32.mrb[0].mxu0
        %v2707 = vadd.f32 0.0, %v2706
        %v2708 = vpop.f32.mrb[0].mxu0
        %v2709 = vpop.f32.mrb[0].mxu0
        %v2710 = vadd.f32 0.0, %v2709
        %v2711 = vpop.f32.mrb[0].mxu0
        %2712 = vmatprep.mubr.bf16.mxu0 0
        %2713 = vmatmul.mubr.bf16.gmra.mrb[0].mxu0 %v2605
        %v2714 = vpop.f32.mrb[0].mxu0
        %v2715 = vadd.f32 0.0, %v2714
        %v2716 = vpop.f32.mrb[0].mxu0
        %v2717 = vpop.f32.mrb[0].mxu0
        %v2718 = vadd.f32 0.0, %v2717
        %v2719 = vpop.f32.mrb[0].mxu0
        %2720 = vmatprep.mubr.bf16.mxu0 0
        %2721 = vmatmul.mubr.bf16.gmra.mrb[0].mxu0 %v2606
        %v2722 = vpop.f32.mrb[0].mxu0
        %v2723 = vadd.f32 0.0, %v2722
        %v2724 = vpop.f32.mrb[0].mxu0
        %v2725 = vpop.f32.mrb[0].mxu0
        %v2726 = vadd.f32 0.0, %v2725
        %v2727 = vpop.f32.mrb[0].mxu0
        %2728 = vmatprep.mubr.bf16.mxu0 0
        %2729 = vmatmul.mubr.bf16.gmra.mrb[0].mxu0 %v2607
        %v2730 = vpop.f32.mrb[0].mxu0
        %v2731 = vadd.f32 0.0, %v2730
        %v2732 = vpop.f32.mrb[0].mxu0
        %v2733 = vpop.f32.mrb[0].mxu0
        %v2734 = vadd.f32 0.0, %v2733
        %v2735 = vpop.f32.mrb[0].mxu0
        %2736 = vmatprep.mubr.bf16.mxu0 0
        %2737 = vmatmul.mubr.bf16.gmra.mrb[0].mxu0 %v2608
        %v2738 = vpop.f32.mrb[0].mxu0
        %v2739 = vadd.f32 0.0, %v2738
        %v2740 = vpop.f32.mrb[0].mxu0
        %v2741 = vpop.f32.mrb[0].mxu0
        %v2742 = vadd.f32 0.0, %v2741
        %v2743 = vpop.f32.mrb[0].mxu0
        %2744 = vmatprep.mubr.bf16.mxu0 0
        %2745 = vmatmul.mubr.bf16.gmra.mrb[0].mxu0 %v2609
        %v2746 = vpop.f32.mrb[0].mxu0
        %v2747 = vadd.f32 0.0, %v2746
        %v2748 = vpop.f32.mrb[0].mxu0
        %v2749 = vpop.f32.mrb[0].mxu0
        %v2750 = vadd.f32 0.0, %v2749
        %v2751 = vpop.f32.mrb[0].mxu0
        %2752 = vmatprep.mubr.bf16.mxu0 0
        %2753 = vmatmul.mubr.bf16.gmra.mrb[0].mxu0 %v2610
        %v2754 = vpop.f32.mrb[0].mxu0
        %v2755 = vadd.f32 0.0, %v2754
        %v2756 = vpop.f32.mrb[0].mxu0
        %v2757 = vpop.f32.mrb[0].mxu0
        %v2758 = vadd.f32 0.0, %v2757
        %v2759 = vpop.f32.mrb[0].mxu0
        %2760 = vmatprep.mubr.bf16.mxu0 0
        %2761 = vmatmul.mubr.bf16.gmra.mrb[0].mxu0 %v2611
        %v2762 = vpop.f32.mrb[0].mxu0
        %v2763 = vadd.f32 0.0, %v2762
        %v2764 = vpop.f32.mrb[0].mxu0
        %v2765 = vpop.f32.mrb[0].mxu0
        %v2766 = vadd.f32 0.0, %v2765
        %v2767 = vpop.f32.mrb[0].mxu0
        %2768 = vmatprep.mubr.bf16.mxu0 0
        %2769 = vmatmul.mubr.bf16.gmra.mrb[0].mxu0 %v2612
        %v2770 = vpop.f32.mrb[0].mxu0
        %v2771 = vadd.f32 0.0, %v2770
        %v2772 = vpop.f32.mrb[0].mxu0
        %v2773 = vpop.f32.mrb[0].mxu0
        %v2774 = vadd.f32 0.0, %v2773
        %v2775 = vpop.f32.mrb[0].mxu0
        %2776 = vmatprep.mubr.bf16.mxu0 0
        %2777 = vmatmul.mubr.bf16.gmra.mrb[0].mxu0 %v2613
        %v2778 = vpop.f32.mrb[0].mxu0
        %v2779 = vadd.f32 0.0, %v2778
        %v2780 = vpop.f32.mrb[0].mxu0
        %v2781 = vpop.f32.mrb[0].mxu0
        %v2782 = vadd.f32 0.0, %v2781
        %v2783 = vpop.f32.mrb[0].mxu0
        %2784 = vdwg.mxu0
        %v2785 = vadd.f32 %v2506, %v2707
        %v2786 = vadd.f32 %v2507, %v2710
        %v2787 = vadd.f32 %v2508, %v2715
        %v2788 = vadd.f32 %v2509, %v2718
        %v2789 = vadd.f32 %v2510, %v2723
        %v2790 = vadd.f32 %v2511, %v2726
        %v2791 = vadd.f32 %v2512, %v2731
        %v2792 = vadd.f32 %v2513, %v2734
        %v2793 = vadd.f32 %v2514, %v2739
        %v2794 = vadd.f32 %v2515, %v2742
        %v2795 = vadd.f32 %v2516, %v2747
        %v2796 = vadd.f32 %v2517, %v2750
        %v2797 = vadd.f32 %v2518, %v2755
        %v2798 = vadd.f32 %v2519, %v2758
        %v2799 = vadd.f32 %v2520, %v2763
        %v2800 = vadd.f32 %v2521, %v2766
        %v2801 = vadd.f32 %v2522, %v2771
        %v2802 = vadd.f32 %v2523, %v2774
        %v2803 = vadd.f32 %v2524, %v2779
        %v2804 = vadd.f32 %v2525, %v2782
        %v2805 = vld [vmem:[%s2526] sm:$0xf]
        %v2806 = vld [vmem:[%s2526 + $0x4] sm:$0xf]
        %v2807 = vld [vmem:[%s2526 + $0x8] sm:$0x1]
        %v2808 = vld [vmem:[%s2526 + $0xc] sm:$0xf]
        %v2809 = vld [vmem:[%s2526 + $0x10] sm:$0xf]
        %v2810 = vld [vmem:[%s2526 + $0x14] sm:$0x1]
        %v2811 = vld [vmem:[%s2526 + $0x18] sm:$0xf]
        %v2812 = vld [vmem:[%s2526 + $0x1c] sm:$0xf]
        %v2813 = vld [vmem:[%s2526 + $0x20] sm:$0x1]
        %v2814 = vld [vmem:[%s2526 + $0x24] sm:$0xf]
        %v2815 = vld [vmem:[%s2526 + $0x28] sm:$0xf]
        %v2816 = vld [vmem:[%s2526 + $0x2c] sm:$0x1]
        %v2817 = vld [vmem:[%s2526 + $0x30] sm:$0xf]
        %v2818 = vld [vmem:[%s2526 + $0x34] sm:$0xf]
        %v2819 = vld [vmem:[%s2526 + $0x38] sm:$0x1]
        %v2820 = vld [vmem:[%s2526 + $0x3c] sm:$0xf]
        %v2821 = vld [vmem:[%s2526 + $0x40] sm:$0xf]
        %v2822 = vld [vmem:[%s2526 + $0x44] sm:$0x1]
        %v2823 = vld [vmem:[%s2526 + $0x48] sm:$0xf]
        %v2824 = vld [vmem:[%s2526 + $0x4c] sm:$0xf]
        %v2825 = vld [vmem:[%s2526 + $0x50] sm:$0x1]
        %v2826 = vld [vmem:[%s2526 + $0x54] sm:$0xf]
        %v2827 = vld [vmem:[%s2526 + $0x58] sm:$0xf]
        %v2828 = vld [vmem:[%s2526 + $0x5c] sm:$0x1]
        %v2829 = vld [vmem:[%s2526 + $0x60] sm:$0xf]
        %v2830 = vld [vmem:[%s2526 + $0x64] sm:$0xf]
        %v2831 = vld [vmem:[%s2526 + $0x68] sm:$0x1]
        %v2832 = vld [vmem:[%s2526 + $0x6c] sm:$0xf]
        %v2833 = vld [vmem:[%s2526 + $0x70] sm:$0xf]
        %v2834 = vld [vmem:[%s2526 + $0x74] sm:$0x1]
        %v2836 = vshrl.u32 %v2805, 16
        %v2838 = vrot.slane %v2836, 4
        %v2839 = vshll.u32 %v2805, 16
        %v2841 = vrot.slane %v2839, 5
        %v2842 = vor.u32 %v2838, %v2841
        %v2843 = vrot.slane %v2842, 4
        %v2845 = vshll.u32 %v2806, 16
        %v2847 = vrot.slane %v2845, 5
        %v2848 = vsel %vm370, %v2843, %v2847
        %v2849 = vshrl.u32 %v2806, 16
        %v2851 = vrot.slane %v2849, 4
        %v2852 = vor.u32 %v2851, %v2847
        %v2853 = vrot.slane %v2852, 4
        %v2855 = vshll.u32 %v2807, 16
        %v2857 = vrot.slane %v2855, 5
        %v2858 = vsel %vm370, %v2853, %v2857
        %v2860 = vshrl.u32 %v2808, 16
        %v2862 = vrot.slane %v2860, 4
        %v2863 = vshll.u32 %v2808, 16
        %v2865 = vrot.slane %v2863, 5
        %v2866 = vor.u32 %v2862, %v2865
        %v2867 = vrot.slane %v2866, 4
        %v2869 = vshll.u32 %v2809, 16
        %v2871 = vrot.slane %v2869, 5
        %v2872 = vsel %vm370, %v2867, %v2871
        %v2873 = vshrl.u32 %v2809, 16
        %v2875 = vrot.slane %v2873, 4
        %v2876 = vor.u32 %v2875, %v2871
        %v2877 = vrot.slane %v2876, 4
        %v2879 = vshll.u32 %v2810, 16
        %v2881 = vrot.slane %v2879, 5
        %v2882 = vsel %vm370, %v2877, %v2881
        %v2884 = vshrl.u32 %v2811, 16
        %v2886 = vrot.slane %v2884, 4
        %v2887 = vshll.u32 %v2811, 16
        %v2889 = vrot.slane %v2887, 5
        %v2890 = vor.u32 %v2886, %v2889
        %v2891 = vrot.slane %v2890, 4
        %v2893 = vshll.u32 %v2812, 16
        %v2895 = vrot.slane %v2893, 5
        %v2896 = vsel %vm370, %v2891, %v2895
        %v2897 = vshrl.u32 %v2812, 16
        %v2899 = vrot.slane %v2897, 4
        %v2900 = vor.u32 %v2899, %v2895
        %v2901 = vrot.slane %v2900, 4
        %v2903 = vshll.u32 %v2813, 16
        %v2905 = vrot.slane %v2903, 5
        %v2906 = vsel %vm370, %v2901, %v2905
        %v2908 = vshrl.u32 %v2814, 16
        %v2910 = vrot.slane %v2908, 4
        %v2911 = vshll.u32 %v2814, 16
        %v2913 = vrot.slane %v2911, 5
        %v2914 = vor.u32 %v2910, %v2913
        %v2915 = vrot.slane %v2914, 4
        %v2917 = vshll.u32 %v2815, 16
        %v2919 = vrot.slane %v2917, 5
        %v2920 = vsel %vm370, %v2915, %v2919
        %v2921 = vshrl.u32 %v2815, 16
        %v2923 = vrot.slane %v2921, 4
        %v2924 = vor.u32 %v2923, %v2919
        %v2925 = vrot.slane %v2924, 4
        %v2927 = vshll.u32 %v2816, 16
        %v2929 = vrot.slane %v2927, 5
        %v2930 = vsel %vm370, %v2925, %v2929
        %v2932 = vshrl.u32 %v2817, 16
        %v2934 = vrot.slane %v2932, 4
        %v2935 = vshll.u32 %v2817, 16
        %v2937 = vrot.slane %v2935, 5
        %v2938 = vor.u32 %v2934, %v2937
        %v2939 = vrot.slane %v2938, 4
        %v2941 = vshll.u32 %v2818, 16
        %v2943 = vrot.slane %v2941, 5
        %v2944 = vsel %vm370, %v2939, %v2943
        %v2945 = vshrl.u32 %v2818, 16
        %v2947 = vrot.slane %v2945, 4
        %v2948 = vor.u32 %v2947, %v2943
        %v2949 = vrot.slane %v2948, 4
        %v2951 = vshll.u32 %v2819, 16
        %v2953 = vrot.slane %v2951, 5
        %v2954 = vsel %vm370, %v2949, %v2953
        %v2956 = vshrl.u32 %v2820, 16
        %v2958 = vrot.slane %v2956, 4
        %v2959 = vshll.u32 %v2820, 16
        %v2961 = vrot.slane %v2959, 5
        %v2962 = vor.u32 %v2958, %v2961
        %v2963 = vrot.slane %v2962, 4
        %v2965 = vshll.u32 %v2821, 16
        %v2967 = vrot.slane %v2965, 5
        %v2968 = vsel %vm370, %v2963, %v2967
        %v2969 = vshrl.u32 %v2821, 16
        %v2971 = vrot.slane %v2969, 4
        %v2972 = vor.u32 %v2971, %v2967
        %v2973 = vrot.slane %v2972, 4
        %v2975 = vshll.u32 %v2822, 16
        %v2977 = vrot.slane %v2975, 5
        %v2978 = vsel %vm370, %v2973, %v2977
        %v2980 = vshrl.u32 %v2823, 16
        %v2982 = vrot.slane %v2980, 4
        %v2983 = vshll.u32 %v2823, 16
        %v2985 = vrot.slane %v2983, 5
        %v2986 = vor.u32 %v2982, %v2985
        %v2987 = vrot.slane %v2986, 4
        %v2989 = vshll.u32 %v2824, 16
        %v2991 = vrot.slane %v2989, 5
        %v2992 = vsel %vm370, %v2987, %v2991
        %v2993 = vshrl.u32 %v2824, 16
        %v2995 = vrot.slane %v2993, 4
        %v2996 = vor.u32 %v2995, %v2991
        %v2997 = vrot.slane %v2996, 4
        %v2999 = vshll.u32 %v2825, 16
        %v3001 = vrot.slane %v2999, 5
        %v3002 = vsel %vm370, %v2997, %v3001
        %v3004 = vshrl.u32 %v2826, 16
        %v3006 = vrot.slane %v3004, 4
        %v3007 = vshll.u32 %v2826, 16
        %v3009 = vrot.slane %v3007, 5
        %v3010 = vor.u32 %v3006, %v3009
        %v3011 = vrot.slane %v3010, 4
        %v3013 = vshll.u32 %v2827, 16
        %v3015 = vrot.slane %v3013, 5
        %v3016 = vsel %vm370, %v3011, %v3015
        %v3017 = vshrl.u32 %v2827, 16
        %v3019 = vrot.slane %v3017, 4
        %v3020 = vor.u32 %v3019, %v3015
        %v3021 = vrot.slane %v3020, 4
        %v3023 = vshll.u32 %v2828, 16
        %v3025 = vrot.slane %v3023, 5
        %v3026 = vsel %vm370, %v3021, %v3025
        %v3028 = vshrl.u32 %v2829, 16
        %v3030 = vrot.slane %v3028, 4
        %v3031 = vshll.u32 %v2829, 16
        %v3033 = vrot.slane %v3031, 5
        %v3034 = vor.u32 %v3030, %v3033
        %v3035 = vrot.slane %v3034, 4
        %v3037 = vshll.u32 %v2830, 16
        %v3039 = vrot.slane %v3037, 5
        %v3040 = vsel %vm370, %v3035, %v3039
        %v3041 = vshrl.u32 %v2830, 16
        %v3043 = vrot.slane %v3041, 4
        %v3044 = vor.u32 %v3043, %v3039
        %v3045 = vrot.slane %v3044, 4
        %v3047 = vshll.u32 %v2831, 16
        %v3049 = vrot.slane %v3047, 5
        %v3050 = vsel %vm370, %v3045, %v3049
        %v3052 = vshrl.u32 %v2832, 16
        %v3054 = vrot.slane %v3052, 4
        %v3055 = vshll.u32 %v2832, 16
        %v3057 = vrot.slane %v3055, 5
        %v3058 = vor.u32 %v3054, %v3057
        %v3059 = vrot.slane %v3058, 4
        %v3061 = vshll.u32 %v2833, 16
        %v3063 = vrot.slane %v3061, 5
        %v3064 = vsel %vm370, %v3059, %v3063
        %v3065 = vshrl.u32 %v2833, 16
        %v3067 = vrot.slane %v3065, 4
        %v3068 = vor.u32 %v3067, %v3063
        %v3069 = vrot.slane %v3068, 4
        %v3071 = vshll.u32 %v2834, 16
        %v3073 = vrot.slane %v3071, 5
        %v3074 = vsel %vm370, %v3069, %v3073
        %s3075 = scalar_lea.vmem %s1, 448
        %v3076 = vld [vmem:[%s3075] sm:$0xf]
        %v3077 = vld [vmem:[%s3075 + $0x4] sm:$0xf]
        %v3078 = vld [vmem:[%s3075 + $0x8] sm:$0xf]
        %v3079 = vld [vmem:[%s3075 + $0xc] sm:$0xf]
        %v3080 = vld [vmem:[%s3075 + $0x10] sm:$0xf]
        %v3081 = vld [vmem:[%s3075 + $0x14] sm:$0xf]
        %v3082 = vld [vmem:[%s3075 + $0x18] sm:$0xf]
        %v3083 = vld [vmem:[%s3075 + $0x1c] sm:$0xf]
        %v3084 = vld [vmem:[%s3075 + $0x20] sm:$0xf]
        %v3085 = vld [vmem:[%s3075 + $0x24] sm:$0xf]
        %v3086 = vld [vmem:[%s3075 + $0x28] sm:$0xf]
        %v3087 = vld [vmem:[%s3075 + $0x2c] sm:$0xf]
        %v3088 = vld [vmem:[%s3075 + $0x30] sm:$0xf]
        %v3089 = vld [vmem:[%s3075 + $0x34] sm:$0xf]
        %v3090 = vld [vmem:[%s3075 + $0x38] sm:$0xf]
        %v3091 = vld [vmem:[%s3075 + $0x3c] sm:$0xf]
        %v3092 = vunpack.c.l.b16 %v2848
        %v3093 = vunpack.c.l.b16 %v2858
        %v3094 = vunpack.c.l.b16 %v2872
        %v3095 = vunpack.c.l.b16 %v2882
        %v3096 = vunpack.c.l.b16 %v2896
        %v3097 = vunpack.c.l.b16 %v2906
        %v3098 = vunpack.c.l.b16 %v2920
        %v3099 = vunpack.c.l.b16 %v2930
        %v3100 = vunpack.c.l.b16 %v2944
        %v3101 = vunpack.c.l.b16 %v2954
        %v3102 = vunpack.c.l.b16 %v2968
        %v3103 = vunpack.c.l.b16 %v2978
        %v3104 = vunpack.c.l.b16 %v2992
        %v3105 = vunpack.c.l.b16 %v3002
        %v3106 = vunpack.c.l.b16 %v3016
        %v3107 = vunpack.c.l.b16 %v3026
        %v3108 = vunpack.c.l.b16 %v3040
        %v3109 = vunpack.c.l.b16 %v3050
        %v3110 = vunpack.c.l.b16 %v3064
        %v3111 = vunpack.c.l.b16 %v3074
        %v3112 = vpack.c.b16 %v3093, %v3092
        %v3113 = vpack.c.b16 %v3095, %v3094
        %v3114 = vpack.c.b16 %v3097, %v3096
        %v3115 = vpack.c.b16 %v3099, %v3098
        %v3116 = vpack.c.b16 %v3101, %v3100
        %v3117 = vpack.c.b16 %v3103, %v3102
        %v3118 = vpack.c.b16 %v3105, %v3104
        %v3119 = vpack.c.b16 %v3107, %v3106
        %v3120 = vpack.c.b16 %v3109, %v3108
        %v3121 = vpack.c.b16 %v3111, %v3110
        %v3148 = vunpack.c.l.b16 %v3076
        %v3149 = vunpack.c.l.b16 %v3077
        %v3150 = vunpack.c.l.b16 %v3078
        %v3151 = vunpack.c.l.b16 %v3079
        %v3152 = vunpack.c.l.b16 %v3080
        %v3153 = vunpack.c.l.b16 %v3081
        %v3154 = vunpack.c.l.b16 %v3082
        %v3155 = vunpack.c.l.b16 %v3083
        %v3156 = vunpack.c.l.b16 %v3084
        %v3157 = vunpack.c.l.b16 %v3085
        %v3158 = vunpack.c.l.b16 %v3086
        %v3159 = vunpack.c.l.b16 %v3087
        %v3160 = vunpack.c.l.b16 %v3088
        %v3161 = vunpack.c.l.b16 %v3089
        %v3162 = vunpack.c.l.b16 %v3090
        %v3163 = vunpack.c.l.b16 %v3091
        %v3164 = vpack.c.b16 %v3149, %v3148
        %v3165 = vpack.c.b16 %v3151, %v3150
        %v3166 = vpack.c.b16 %v3153, %v3152
        %v3167 = vpack.c.b16 %v3155, %v3154
        %v3168 = vpack.c.b16 %v3157, %v3156
        %v3169 = vpack.c.b16 %v3159, %v3158
        %v3170 = vpack.c.b16 %v3161, %v3160
        %v3171 = vpack.c.b16 %v3163, %v3162
        %3180 = vmatprep.subr.bf16.mxu0 0
        %3181 = vmatpush1.bf16.msra.mxu0 %v3164
        %3182 = vmatprep.subr.bf16.mxu0 0
        %3183 = vmatpush1.bf16.msra.mxu0 %v3165
        %3184 = vmatprep.subr.bf16.mxu0 0
        %3185 = vmatpush1.bf16.msra.mxu0 %v3166
        %3186 = vmatprep.subr.bf16.mxu0 0
        %3187 = vmatpush1.bf16.msra.mxu0 %v3167
        %3188 = vmatprep.subr.bf16.mxu0 0
        %3189 = vmatpush1.bf16.msra.mxu0 %v3168
        %3190 = vmatprep.subr.bf16.mxu0 0
        %3191 = vmatpush1.bf16.msra.mxu0 %v3169
        %3192 = vmatprep.subr.bf16.mxu0 0
        %3193 = vmatpush1.bf16.msra.mxu0 %v3170
        %3194 = vmatprep.subr.bf16.mxu0 0
        %3195 = vmatpush1.bf16.msra.mxu0 %v3171
        %3196 = vmatprep.subr.bf16.mxu0 0
        %3197 = vmatpush1.bf16.msra.mxu0 0
        %3198 = vmatprep.subr.bf16.mxu0 0
        %3199 = vmatpush1.bf16.msra.mxu0 0
        %3200 = vmatprep.subr.bf16.mxu0 0
        %3201 = vmatpush1.bf16.msra.mxu0 0
        %3202 = vmatprep.subr.bf16.mxu0 0
        %3203 = vmatpush1.bf16.msra.mxu0 0
        %3204 = vmatprep.subr.bf16.mxu0 0
        %3205 = vmatpush1.bf16.msra.mxu0 0
        %3206 = vmatprep.subr.bf16.mxu0 0
        %3207 = vmatpush1.bf16.msra.mxu0 0
        %3208 = vmatprep.subr.bf16.mxu0 0
        %3209 = vmatpush1.bf16.msra.mxu0 0
        %3210 = vmatprep.subr.bf16.mxu0 0
        %3211 = vmatpush1.bf16.msra.mxu0 0
        %3212 = vmatprep.mubr.bf16.mxu0 0
        %3213 = vmatmul.mubr.bf16.gmra.mrb[0].mxu0 %v3112
        %v3214 = vpop.f32.mrb[0].mxu0
        %v3215 = vadd.f32 0.0, %v3214
        %v3216 = vpop.f32.mrb[0].mxu0
        %v3217 = vpop.f32.mrb[0].mxu0
        %v3218 = vadd.f32 0.0, %v3217
        %v3219 = vpop.f32.mrb[0].mxu0
        %3220 = vmatprep.mubr.bf16.mxu0 0
        %3221 = vmatmul.mubr.bf16.gmra.mrb[0].mxu0 %v3113
        %v3222 = vpop.f32.mrb[0].mxu0
        %v3223 = vadd.f32 0.0, %v3222
        %v3224 = vpop.f32.mrb[0].mxu0
        %v3225 = vpop.f32.mrb[0].mxu0
        %v3226 = vadd.f32 0.0, %v3225
        %v3227 = vpop.f32.mrb[0].mxu0
        %3228 = vmatprep.mubr.bf16.mxu0 0
        %3229 = vmatmul.mubr.bf16.gmra.mrb[0].mxu0 %v3114
        %v3230 = vpop.f32.mrb[0].mxu0
        %v3231 = vadd.f32 0.0, %v3230
        %v3232 = vpop.f32.mrb[0].mxu0
        %v3233 = vpop.f32.mrb[0].mxu0
        %v3234 = vadd.f32 0.0, %v3233
        %v3235 = vpop.f32.mrb[0].mxu0
        %3236 = vmatprep.mubr.bf16.mxu0 0
        %3237 = vmatmul.mubr.bf16.gmra.mrb[0].mxu0 %v3115
        %v3238 = vpop.f32.mrb[0].mxu0
        %v3239 = vadd.f32 0.0, %v3238
        %v3240 = vpop.f32.mrb[0].mxu0
        %v3241 = vpop.f32.mrb[0].mxu0
        %v3242 = vadd.f32 0.0, %v3241
        %v3243 = vpop.f32.mrb[0].mxu0
        %3244 = vmatprep.mubr.bf16.mxu0 0
        %3245 = vmatmul.mubr.bf16.gmra.mrb[0].mxu0 %v3116
        %v3246 = vpop.f32.mrb[0].mxu0
        %v3247 = vadd.f32 0.0, %v3246
        %v3248 = vpop.f32.mrb[0].mxu0
        %v3249 = vpop.f32.mrb[0].mxu0
        %v3250 = vadd.f32 0.0, %v3249
        %v3251 = vpop.f32.mrb[0].mxu0
        %3252 = vmatprep.mubr.bf16.mxu0 0
        %3253 = vmatmul.mubr.bf16.gmra.mrb[0].mxu0 %v3117
        %v3254 = vpop.f32.mrb[0].mxu0
        %v3255 = vadd.f32 0.0, %v3254
        %v3256 = vpop.f32.mrb[0].mxu0
        %v3257 = vpop.f32.mrb[0].mxu0
        %v3258 = vadd.f32 0.0, %v3257
        %v3259 = vpop.f32.mrb[0].mxu0
        %3260 = vmatprep.mubr.bf16.mxu0 0
        %3261 = vmatmul.mubr.bf16.gmra.mrb[0].mxu0 %v3118
        %v3262 = vpop.f32.mrb[0].mxu0
        %v3263 = vadd.f32 0.0, %v3262
        %v3264 = vpop.f32.mrb[0].mxu0
        %v3265 = vpop.f32.mrb[0].mxu0
        %v3266 = vadd.f32 0.0, %v3265
        %v3267 = vpop.f32.mrb[0].mxu0
        %3268 = vmatprep.mubr.bf16.mxu0 0
        %3269 = vmatmul.mubr.bf16.gmra.mrb[0].mxu0 %v3119
        %v3270 = vpop.f32.mrb[0].mxu0
        %v3271 = vadd.f32 0.0, %v3270
        %v3272 = vpop.f32.mrb[0].mxu0
        %v3273 = vpop.f32.mrb[0].mxu0
        %v3274 = vadd.f32 0.0, %v3273
        %v3275 = vpop.f32.mrb[0].mxu0
        %3276 = vmatprep.mubr.bf16.mxu0 0
        %3277 = vmatmul.mubr.bf16.gmra.mrb[0].mxu0 %v3120
        %v3278 = vpop.f32.mrb[0].mxu0
        %v3279 = vadd.f32 0.0, %v3278
        %v3280 = vpop.f32.mrb[0].mxu0
        %v3281 = vpop.f32.mrb[0].mxu0
        %v3282 = vadd.f32 0.0, %v3281
        %v3283 = vpop.f32.mrb[0].mxu0
        %3284 = vmatprep.mubr.bf16.mxu0 0
        %3285 = vmatmul.mubr.bf16.gmra.mrb[0].mxu0 %v3121
        %v3286 = vpop.f32.mrb[0].mxu0
        %v3287 = vadd.f32 0.0, %v3286
        %v3288 = vpop.f32.mrb[0].mxu0
        %v3289 = vpop.f32.mrb[0].mxu0
        %v3290 = vadd.f32 0.0, %v3289
        %v3291 = vpop.f32.mrb[0].mxu0
        %3292 = vdwg.mxu0
        %v3293 = vadd.f32 %v2785, %v3215
        %v3294 = vadd.f32 %v2786, %v3218
        %v3295 = vadd.f32 %v2787, %v3223
        %v3296 = vadd.f32 %v2788, %v3226
        %v3297 = vadd.f32 %v2789, %v3231
        %v3298 = vadd.f32 %v2790, %v3234
        %v3299 = vadd.f32 %v2791, %v3239
        %v3300 = vadd.f32 %v2792, %v3242
        %v3301 = vadd.f32 %v2793, %v3247
        %v3302 = vadd.f32 %v2794, %v3250
        %v3303 = vadd.f32 %v2795, %v3255
        %v3304 = vadd.f32 %v2796, %v3258
        %v3305 = vadd.f32 %v2797, %v3263
        %v3306 = vadd.f32 %v2798, %v3266
        %v3307 = vadd.f32 %v2799, %v3271
        %v3308 = vadd.f32 %v2800, %v3274
        %v3309 = vadd.f32 %v2801, %v3279
        %v3310 = vadd.f32 %v2802, %v3282
        %v3311 = vadd.f32 %v2803, %v3287
        %v3312 = vadd.f32 %v2804, %v3290
        %v3313 = vld [vmem:[%s2526] sm:$0xe]
        %v3314 = vld [vmem:[%s2526 + $0xc] sm:$0xe]
        %v3315 = vld [vmem:[%s2526 + $0x18] sm:$0xe]
        %v3316 = vld [vmem:[%s2526 + $0x24] sm:$0xe]
        %v3317 = vld [vmem:[%s2526 + $0x30] sm:$0xe]
        %v3318 = vld [vmem:[%s2526 + $0x3c] sm:$0xe]
        %v3319 = vld [vmem:[%s2526 + $0x48] sm:$0xe]
        %v3320 = vld [vmem:[%s2526 + $0x54] sm:$0xe]
        %v3321 = vld [vmem:[%s2526 + $0x60] sm:$0xe]
        %v3322 = vld [vmem:[%s2526 + $0x6c] sm:$0xe]
        %v3353 = vrot.slane %v3313, 5
        %v3354 = vrot.slane %v3353, 4
        %v3355 = vrot.slane %v2806, 5
        %v3356 = vsel %vm1082, %v3354, %v3355
        %v3357 = vrot.slane %v3355, 4
        %v3358 = vrot.slane %v2807, 5
        %v3359 = vsel %vm1082, %v3357, %v3358
        %v3360 = vrot.slane %v3314, 5
        %v3361 = vrot.slane %v3360, 4
        %v3362 = vrot.slane %v2809, 5
        %v3363 = vsel %vm1082, %v3361, %v3362
        %v3364 = vrot.slane %v3362, 4
        %v3365 = vrot.slane %v2810, 5
        %v3366 = vsel %vm1082, %v3364, %v3365
        %v3367 = vrot.slane %v3315, 5
        %v3368 = vrot.slane %v3367, 4
        %v3369 = vrot.slane %v2812, 5
        %v3370 = vsel %vm1082, %v3368, %v3369
        %v3371 = vrot.slane %v3369, 4
        %v3372 = vrot.slane %v2813, 5
        %v3373 = vsel %vm1082, %v3371, %v3372
        %v3374 = vrot.slane %v3316, 5
        %v3375 = vrot.slane %v3374, 4
        %v3376 = vrot.slane %v2815, 5
        %v3377 = vsel %vm1082, %v3375, %v3376
        %v3378 = vrot.slane %v3376, 4
        %v3379 = vrot.slane %v2816, 5
        %v3380 = vsel %vm1082, %v3378, %v3379
        %v3381 = vrot.slane %v3317, 5
        %v3382 = vrot.slane %v3381, 4
        %v3383 = vrot.slane %v2818, 5
        %v3384 = vsel %vm1082, %v3382, %v3383
        %v3385 = vrot.slane %v3383, 4
        %v3386 = vrot.slane %v2819, 5
        %v3387 = vsel %vm1082, %v3385, %v3386
        %v3388 = vrot.slane %v3318, 5
        %v3389 = vrot.slane %v3388, 4
        %v3390 = vrot.slane %v2821, 5
        %v3391 = vsel %vm1082, %v3389, %v3390
        %v3392 = vrot.slane %v3390, 4
        %v3393 = vrot.slane %v2822, 5
        %v3394 = vsel %vm1082, %v3392, %v3393
        %v3395 = vrot.slane %v3319, 5
        %v3396 = vrot.slane %v3395, 4
        %v3397 = vrot.slane %v2824, 5
        %v3398 = vsel %vm1082, %v3396, %v3397
        %v3399 = vrot.slane %v3397, 4
        %v3400 = vrot.slane %v2825, 5
        %v3401 = vsel %vm1082, %v3399, %v3400
        %v3402 = vrot.slane %v3320, 5
        %v3403 = vrot.slane %v3402, 4
        %v3404 = vrot.slane %v2827, 5
        %v3405 = vsel %vm1082, %v3403, %v3404
        %v3406 = vrot.slane %v3404, 4
        %v3407 = vrot.slane %v2828, 5
        %v3408 = vsel %vm1082, %v3406, %v3407
        %v3409 = vrot.slane %v3321, 5
        %v3410 = vrot.slane %v3409, 4
        %v3411 = vrot.slane %v2830, 5
        %v3412 = vsel %vm1082, %v3410, %v3411
        %v3413 = vrot.slane %v3411, 4
        %v3414 = vrot.slane %v2831, 5
        %v3415 = vsel %vm1082, %v3413, %v3414
        %v3416 = vrot.slane %v3322, 5
        %v3417 = vrot.slane %v3416, 4
        %v3418 = vrot.slane %v2833, 5
        %v3419 = vsel %vm1082, %v3417, %v3418
        %v3420 = vrot.slane %v3418, 4
        %v3421 = vrot.slane %v2834, 5
        %v3422 = vsel %vm1082, %v3420, %v3421
        %s3423 = scalar_lea.vmem %s1, 512
        %v3424 = vld [vmem:[%s3423] sm:$0xf]
        %v3425 = vld [vmem:[%s3423 + $0x4] sm:$0xf]
        %v3426 = vld [vmem:[%s3423 + $0x8] sm:$0xf]
        %v3427 = vld [vmem:[%s3423 + $0xc] sm:$0xf]
        %v3428 = vld [vmem:[%s3423 + $0x10] sm:$0xf]
        %v3429 = vld [vmem:[%s3423 + $0x14] sm:$0xf]
        %v3430 = vld [vmem:[%s3423 + $0x18] sm:$0xf]
        %v3431 = vld [vmem:[%s3423 + $0x1c] sm:$0xf]
        %v3432 = vld [vmem:[%s3423 + $0x20] sm:$0xf]
        %v3433 = vld [vmem:[%s3423 + $0x24] sm:$0xf]
        %v3434 = vld [vmem:[%s3423 + $0x28] sm:$0xf]
        %v3435 = vld [vmem:[%s3423 + $0x2c] sm:$0xf]
        %v3436 = vld [vmem:[%s3423 + $0x30] sm:$0xf]
        %v3437 = vld [vmem:[%s3423 + $0x34] sm:$0xf]
        %v3438 = vld [vmem:[%s3423 + $0x38] sm:$0xf]
        %v3439 = vld [vmem:[%s3423 + $0x3c] sm:$0xf]
        %v3440 = vunpack.c.l.b16 %v3356
        %v3441 = vunpack.c.l.b16 %v3359
        %v3442 = vunpack.c.l.b16 %v3363
        %v3443 = vunpack.c.l.b16 %v3366
        %v3444 = vunpack.c.l.b16 %v3370
        %v3445 = vunpack.c.l.b16 %v3373
        %v3446 = vunpack.c.l.b16 %v3377
        %v3447 = vunpack.c.l.b16 %v3380
        %v3448 = vunpack.c.l.b16 %v3384
        %v3449 = vunpack.c.l.b16 %v3387
        %v3450 = vunpack.c.l.b16 %v3391
        %v3451 = vunpack.c.l.b16 %v3394
        %v3452 = vunpack.c.l.b16 %v3398
        %v3453 = vunpack.c.l.b16 %v3401
        %v3454 = vunpack.c.l.b16 %v3405
        %v3455 = vunpack.c.l.b16 %v3408
        %v3456 = vunpack.c.l.b16 %v3412
        %v3457 = vunpack.c.l.b16 %v3415
        %v3458 = vunpack.c.l.b16 %v3419
        %v3459 = vunpack.c.l.b16 %v3422
        %v3460 = vpack.c.b16 %v3441, %v3440
        %v3461 = vpack.c.b16 %v3443, %v3442
        %v3462 = vpack.c.b16 %v3445, %v3444
        %v3463 = vpack.c.b16 %v3447, %v3446
        %v3464 = vpack.c.b16 %v3449, %v3448
        %v3465 = vpack.c.b16 %v3451, %v3450
        %v3466 = vpack.c.b16 %v3453, %v3452
        %v3467 = vpack.c.b16 %v3455, %v3454
        %v3468 = vpack.c.b16 %v3457, %v3456
        %v3469 = vpack.c.b16 %v3459, %v3458
        %v3496 = vunpack.c.l.b16 %v3424
        %v3497 = vunpack.c.l.b16 %v3425
        %v3498 = vunpack.c.l.b16 %v3426
        %v3499 = vunpack.c.l.b16 %v3427
        %v3500 = vunpack.c.l.b16 %v3428
        %v3501 = vunpack.c.l.b16 %v3429
        %v3502 = vunpack.c.l.b16 %v3430
        %v3503 = vunpack.c.l.b16 %v3431
        %v3504 = vunpack.c.l.b16 %v3432
        %v3505 = vunpack.c.l.b16 %v3433
        %v3506 = vunpack.c.l.b16 %v3434
        %v3507 = vunpack.c.l.b16 %v3435
        %v3508 = vunpack.c.l.b16 %v3436
        %v3509 = vunpack.c.l.b16 %v3437
        %v3510 = vunpack.c.l.b16 %v3438
        %v3511 = vunpack.c.l.b16 %v3439
        %v3512 = vpack.c.b16 %v3497, %v3496
        %v3513 = vpack.c.b16 %v3499, %v3498
        %v3514 = vpack.c.b16 %v3501, %v3500
        %v3515 = vpack.c.b16 %v3503, %v3502
        %v3516 = vpack.c.b16 %v3505, %v3504
        %v3517 = vpack.c.b16 %v3507, %v3506
        %v3518 = vpack.c.b16 %v3509, %v3508
        %v3519 = vpack.c.b16 %v3511, %v3510
        %3528 = vmatprep.subr.bf16.mxu0 0
        %3529 = vmatpush1.bf16.msra.mxu0 %v3512
        %3530 = vmatprep.subr.bf16.mxu0 0
        %3531 = vmatpush1.bf16.msra.mxu0 %v3513
        %3532 = vmatprep.subr.bf16.mxu0 0
        %3533 = vmatpush1.bf16.msra.mxu0 %v3514
        %3534 = vmatprep.subr.bf16.mxu0 0
        %3535 = vmatpush1.bf16.msra.mxu0 %v3515
        %3536 = vmatprep.subr.bf16.mxu0 0
        %3537 = vmatpush1.bf16.msra.mxu0 %v3516
        %3538 = vmatprep.subr.bf16.mxu0 0
        %3539 = vmatpush1.bf16.msra.mxu0 %v3517
        %3540 = vmatprep.subr.bf16.mxu0 0
        %3541 = vmatpush1.bf16.msra.mxu0 %v3518
        %3542 = vmatprep.subr.bf16.mxu0 0
        %3543 = vmatpush1.bf16.msra.mxu0 %v3519
        %3544 = vmatprep.subr.bf16.mxu0 0
        %3545 = vmatpush1.bf16.msra.mxu0 0
        %3546 = vmatprep.subr.bf16.mxu0 0
        %3547 = vmatpush1.bf16.msra.mxu0 0
        %3548 = vmatprep.subr.bf16.mxu0 0
        %3549 = vmatpush1.bf16.msra.mxu0 0
        %3550 = vmatprep.subr.bf16.mxu0 0
        %3551 = vmatpush1.bf16.msra.mxu0 0
        %3552 = vmatprep.subr.bf16.mxu0 0
        %3553 = vmatpush1.bf16.msra.mxu0 0
        %3554 = vmatprep.subr.bf16.mxu0 0
        %3555 = vmatpush1.bf16.msra.mxu0 0
        %3556 = vmatprep.subr.bf16.mxu0 0
        %3557 = vmatpush1.bf16.msra.mxu0 0
        %3558 = vmatprep.subr.bf16.mxu0 0
        %3559 = vmatpush1.bf16.msra.mxu0 0
        %3560 = vmatprep.mubr.bf16.mxu0 0
        %3561 = vmatmul.mubr.bf16.gmra.mrb[0].mxu0 %v3460
        %v3562 = vpop.f32.mrb[0].mxu0
        %v3563 = vadd.f32 0.0, %v3562
        %v3564 = vpop.f32.mrb[0].mxu0
        %v3565 = vpop.f32.mrb[0].mxu0
        %v3566 = vadd.f32 0.0, %v3565
        %v3567 = vpop.f32.mrb[0].mxu0
        %3568 = vmatprep.mubr.bf16.mxu0 0
        %3569 = vmatmul.mubr.bf16.gmra.mrb[0].mxu0 %v3461
        %v3570 = vpop.f32.mrb[0].mxu0
        %v3571 = vadd.f32 0.0, %v3570
        %v3572 = vpop.f32.mrb[0].mxu0
        %v3573 = vpop.f32.mrb[0].mxu0
        %v3574 = vadd.f32 0.0, %v3573
        %v3575 = vpop.f32.mrb[0].mxu0
        %3576 = vmatprep.mubr.bf16.mxu0 0
        %3577 = vmatmul.mubr.bf16.gmra.mrb[0].mxu0 %v3462
        %v3578 = vpop.f32.mrb[0].mxu0
        %v3579 = vadd.f32 0.0, %v3578
        %v3580 = vpop.f32.mrb[0].mxu0
        %v3581 = vpop.f32.mrb[0].mxu0
        %v3582 = vadd.f32 0.0, %v3581
        %v3583 = vpop.f32.mrb[0].mxu0
        %3584 = vmatprep.mubr.bf16.mxu0 0
        %3585 = vmatmul.mubr.bf16.gmra.mrb[0].mxu0 %v3463
        %v3586 = vpop.f32.mrb[0].mxu0
        %v3587 = vadd.f32 0.0, %v3586
        %v3588 = vpop.f32.mrb[0].mxu0
        %v3589 = vpop.f32.mrb[0].mxu0
        %v3590 = vadd.f32 0.0, %v3589
        %v3591 = vpop.f32.mrb[0].mxu0
        %3592 = vmatprep.mubr.bf16.mxu0 0
        %3593 = vmatmul.mubr.bf16.gmra.mrb[0].mxu0 %v3464
        %v3594 = vpop.f32.mrb[0].mxu0
        %v3595 = vadd.f32 0.0, %v3594
        %v3596 = vpop.f32.mrb[0].mxu0
        %v3597 = vpop.f32.mrb[0].mxu0
        %v3598 = vadd.f32 0.0, %v3597
        %v3599 = vpop.f32.mrb[0].mxu0
        %3600 = vmatprep.mubr.bf16.mxu0 0
        %3601 = vmatmul.mubr.bf16.gmra.mrb[0].mxu0 %v3465
        %v3602 = vpop.f32.mrb[0].mxu0
        %v3603 = vadd.f32 0.0, %v3602
        %v3604 = vpop.f32.mrb[0].mxu0
        %v3605 = vpop.f32.mrb[0].mxu0
        %v3606 = vadd.f32 0.0, %v3605
        %v3607 = vpop.f32.mrb[0].mxu0
        %3608 = vmatprep.mubr.bf16.mxu0 0
        %3609 = vmatmul.mubr.bf16.gmra.mrb[0].mxu0 %v3466
        %v3610 = vpop.f32.mrb[0].mxu0
        %v3611 = vadd.f32 0.0, %v3610
        %v3612 = vpop.f32.mrb[0].mxu0
        %v3613 = vpop.f32.mrb[0].mxu0
        %v3614 = vadd.f32 0.0, %v3613
        %v3615 = vpop.f32.mrb[0].mxu0
        %3616 = vmatprep.mubr.bf16.mxu0 0
        %3617 = vmatmul.mubr.bf16.gmra.mrb[0].mxu0 %v3467
        %v3618 = vpop.f32.mrb[0].mxu0
        %v3619 = vadd.f32 0.0, %v3618
        %v3620 = vpop.f32.mrb[0].mxu0
        %v3621 = vpop.f32.mrb[0].mxu0
        %v3622 = vadd.f32 0.0, %v3621
        %v3623 = vpop.f32.mrb[0].mxu0
        %3624 = vmatprep.mubr.bf16.mxu0 0
        %3625 = vmatmul.mubr.bf16.gmra.mrb[0].mxu0 %v3468
        %v3626 = vpop.f32.mrb[0].mxu0
        %v3627 = vadd.f32 0.0, %v3626
        %v3628 = vpop.f32.mrb[0].mxu0
        %v3629 = vpop.f32.mrb[0].mxu0
        %v3630 = vadd.f32 0.0, %v3629
        %v3631 = vpop.f32.mrb[0].mxu0
        %3632 = vmatprep.mubr.bf16.mxu0 0
        %3633 = vmatmul.mubr.bf16.gmra.mrb[0].mxu0 %v3469
        %v3634 = vpop.f32.mrb[0].mxu0
        %v3635 = vadd.f32 0.0, %v3634
        %v3636 = vpop.f32.mrb[0].mxu0
        %v3637 = vpop.f32.mrb[0].mxu0
        %v3638 = vadd.f32 0.0, %v3637
        %v3639 = vpop.f32.mrb[0].mxu0
        %3640 = vdwg.mxu0
        %v3641 = vadd.f32 %v3293, %v3563
        %v3642 = vadd.f32 %v3294, %v3566
        %v3643 = vadd.f32 %v3295, %v3571
        %v3644 = vadd.f32 %v3296, %v3574
        %v3645 = vadd.f32 %v3297, %v3579
        %v3646 = vadd.f32 %v3298, %v3582
        %v3647 = vadd.f32 %v3299, %v3587
        %v3648 = vadd.f32 %v3300, %v3590
        %v3649 = vadd.f32 %v3301, %v3595
        %v3650 = vadd.f32 %v3302, %v3598
        %v3651 = vadd.f32 %v3303, %v3603
        %v3652 = vadd.f32 %v3304, %v3606
        %v3653 = vadd.f32 %v3305, %v3611
        %v3654 = vadd.f32 %v3306, %v3614
        %v3655 = vadd.f32 %v3307, %v3619
        %v3656 = vadd.f32 %v3308, %v3622
        %v3657 = vadd.f32 %v3309, %v3627
        %v3658 = vadd.f32 %v3310, %v3630
        %v3659 = vadd.f32 %v3311, %v3635
        %v3660 = vadd.f32 %v3312, %v3638
        %v3661 = vld [vmem:[%s2] sm:$0x1]
        %v3663 = vlaneseq
        %v3664 = vshrl.u32 %v3663, 7
        %v3665 = vsub.s32 0, %v3664
        %v3666 = vrot.slane %v3661, %v3665
        %v3668 = vadd.f32 %v3641, %v3666
        %v3669 = vadd.f32 %v3642, %v3666
        %v3670 = vadd.f32 %v3643, %v3666
        %v3671 = vadd.f32 %v3644, %v3666
        %v3672 = vadd.f32 %v3645, %v3666
        %v3673 = vadd.f32 %v3646, %v3666
        %v3674 = vadd.f32 %v3647, %v3666
        %v3675 = vadd.f32 %v3648, %v3666
        %v3676 = vadd.f32 %v3649, %v3666
        %v3677 = vadd.f32 %v3650, %v3666
        %v3678 = vadd.f32 %v3651, %v3666
        %v3679 = vadd.f32 %v3652, %v3666
        %v3680 = vadd.f32 %v3653, %v3666
        %v3681 = vadd.f32 %v3654, %v3666
        %v3682 = vadd.f32 %v3655, %v3666
        %v3683 = vadd.f32 %v3656, %v3666
        %v3684 = vadd.f32 %v3657, %v3666
        %v3685 = vadd.f32 %v3658, %v3666
        %v3686 = vadd.f32 %v3659, %v3666
        %v3687 = vadd.f32 %v3660, %v3666
        %v3688 = vmax.f32 %v3668, 0.0
        %v3689 = vmax.f32 %v3669, 0.0
        %v3690 = vmax.f32 %v3670, 0.0
        %v3691 = vmax.f32 %v3671, 0.0
        %v3692 = vmax.f32 %v3672, 0.0
        %v3693 = vmax.f32 %v3673, 0.0
        %v3694 = vmax.f32 %v3674, 0.0
        %v3695 = vmax.f32 %v3675, 0.0
        %v3696 = vmax.f32 %v3676, 0.0
        %v3697 = vmax.f32 %v3677, 0.0
        %v3698 = vmax.f32 %v3678, 0.0
        %v3699 = vmax.f32 %v3679, 0.0
        %v3700 = vmax.f32 %v3680, 0.0
        %v3701 = vmax.f32 %v3681, 0.0
        %v3702 = vmax.f32 %v3682, 0.0
        %v3703 = vmax.f32 %v3683, 0.0
        %v3704 = vmax.f32 %v3684, 0.0
        %v3705 = vmax.f32 %v3685, 0.0
        %v3706 = vmax.f32 %v3686, 0.0
        %v3707 = vmax.f32 %v3687, 0.0
        %v3708 = vpack.c.bf16 %v3689, %v3688
        %v3709 = vpack.c.bf16 %v3691, %v3690
        %v3710 = vpack.c.bf16 %v3693, %v3692
        %v3711 = vpack.c.bf16 %v3695, %v3694
        %v3712 = vpack.c.bf16 %v3697, %v3696
        %v3713 = vpack.c.bf16 %v3699, %v3698
        %v3714 = vpack.c.bf16 %v3701, %v3700
        %v3715 = vpack.c.bf16 %v3703, %v3702
        %v3716 = vpack.c.bf16 %v3705, %v3704
        %v3717 = vpack.c.bf16 %v3707, %v3706
        %v3728 = vunpack.c.l.b16 %v3708
        %v3729 = vunpack.c.h.b16 %v3708
        %v3730 = vunpack.c.l.b16 %v3709
        %v3731 = vunpack.c.h.b16 %v3709
        %v3732 = vunpack.c.l.b16 %v3710
        %v3733 = vunpack.c.h.b16 %v3710
        %v3734 = vunpack.c.l.b16 %v3711
        %v3735 = vunpack.c.h.b16 %v3711
        %v3736 = vunpack.c.l.b16 %v3712
        %v3737 = vunpack.c.h.b16 %v3712
        %v3738 = vunpack.c.l.b16 %v3713
        %v3739 = vunpack.c.h.b16 %v3713
        %v3740 = vunpack.c.l.b16 %v3714
        %v3741 = vunpack.c.h.b16 %v3714
        %v3742 = vunpack.c.l.b16 %v3715
        %v3743 = vunpack.c.h.b16 %v3715
        %v3744 = vunpack.c.l.b16 %v3716
        %v3745 = vunpack.c.h.b16 %v3716
        %v3746 = vunpack.c.l.b16 %v3717
        %v3747 = vunpack.c.h.b16 %v3717
        %v3748 = vpack.c.b16 %v3728, %v3728
        %v3749 = vpack.c.b16 %v3729, %v3729
        %v3750 = vpack.c.b16 %v3730, %v3730
        %v3751 = vpack.c.b16 %v3731, %v3731
        %v3752 = vpack.c.b16 %v3732, %v3732
        %v3753 = vpack.c.b16 %v3733, %v3733
        %v3754 = vpack.c.b16 %v3734, %v3734
        %v3755 = vpack.c.b16 %v3735, %v3735
        %v3756 = vpack.c.b16 %v3736, %v3736
        %v3757 = vpack.c.b16 %v3737, %v3737
        %v3758 = vpack.c.b16 %v3738, %v3738
        %v3759 = vpack.c.b16 %v3739, %v3739
        %v3760 = vpack.c.b16 %v3740, %v3740
        %v3761 = vpack.c.b16 %v3741, %v3741
        %v3762 = vpack.c.b16 %v3742, %v3742
        %v3763 = vpack.c.b16 %v3743, %v3743
        %v3764 = vpack.c.b16 %v3744, %v3744
        %v3765 = vpack.c.b16 %v3745, %v3745
        %v3766 = vpack.c.b16 %v3746, %v3746
        %v3767 = vpack.c.b16 %v3747, %v3747
        %vm3768 = vsmask.f32 256
        %vm3769 = vsmask.f32 4368
        %vm3770 = vmor %vm3768, %vm3769
        %v3772 = vshrl.u32 %v3748, 16
        %v3774 = vrot.slane %v3772, 7
        %v3775 = vshll.u32 %v3748, 16
        %v3777 = vor.u32 %v3774, %v3775
        %v3778 = vrot.slane %v3774, 4
        %v3780 = vshrl.u32 %v3749, 16
        %v3782 = vrot.slane %v3780, 7
        %v3783 = vshll.u32 %v3749, 16
        %v3785 = vor.u32 %v3782, %v3783
        %v3786 = vsel %vm3770, %v3778, %v3785
        %v3787 = vrot.slane %v3782, 4
        %v3789 = vshrl.u32 %v3750, 16
        %v3791 = vrot.slane %v3789, 7
        %v3792 = vshll.u32 %v3750, 16
        %v3794 = vor.u32 %v3791, %v3792
        %v3795 = vrot.slane %v3791, 4
        %v3797 = vshrl.u32 %v3751, 16
        %v3799 = vrot.slane %v3797, 7
        %v3800 = vshll.u32 %v3751, 16
        %v3802 = vor.u32 %v3799, %v3800
        %v3803 = vsel %vm3770, %v3795, %v3802
        %v3804 = vrot.slane %v3799, 4
        %v3806 = vshrl.u32 %v3752, 16
        %v3808 = vrot.slane %v3806, 7
        %v3809 = vshll.u32 %v3752, 16
        %v3811 = vor.u32 %v3808, %v3809
        %v3812 = vrot.slane %v3808, 4
        %v3814 = vshrl.u32 %v3753, 16
        %v3816 = vrot.slane %v3814, 7
        %v3817 = vshll.u32 %v3753, 16
        %v3819 = vor.u32 %v3816, %v3817
        %v3820 = vsel %vm3770, %v3812, %v3819
        %v3821 = vrot.slane %v3816, 4
        %v3823 = vshrl.u32 %v3754, 16
        %v3825 = vrot.slane %v3823, 7
        %v3826 = vshll.u32 %v3754, 16
        %v3828 = vor.u32 %v3825, %v3826
        %v3829 = vrot.slane %v3825, 4
        %v3831 = vshrl.u32 %v3755, 16
        %v3833 = vrot.slane %v3831, 7
        %v3834 = vshll.u32 %v3755, 16
        %v3836 = vor.u32 %v3833, %v3834
        %v3837 = vsel %vm3770, %v3829, %v3836
        %v3838 = vrot.slane %v3833, 4
        %v3840 = vshrl.u32 %v3756, 16
        %v3842 = vrot.slane %v3840, 7
        %v3843 = vshll.u32 %v3756, 16
        %v3845 = vor.u32 %v3842, %v3843
        %v3846 = vrot.slane %v3842, 4
        %v3848 = vshrl.u32 %v3757, 16
        %v3850 = vrot.slane %v3848, 7
        %v3851 = vshll.u32 %v3757, 16
        %v3853 = vor.u32 %v3850, %v3851
        %v3854 = vsel %vm3770, %v3846, %v3853
        %v3855 = vrot.slane %v3850, 4
        %v3857 = vshrl.u32 %v3758, 16
        %v3859 = vrot.slane %v3857, 7
        %v3860 = vshll.u32 %v3758, 16
        %v3862 = vor.u32 %v3859, %v3860
        %v3863 = vrot.slane %v3859, 4
        %v3865 = vshrl.u32 %v3759, 16
        %v3867 = vrot.slane %v3865, 7
        %v3868 = vshll.u32 %v3759, 16
        %v3870 = vor.u32 %v3867, %v3868
        %v3871 = vsel %vm3770, %v3863, %v3870
        %v3872 = vrot.slane %v3867, 4
        %v3874 = vshrl.u32 %v3760, 16
        %v3876 = vrot.slane %v3874, 7
        %v3877 = vshll.u32 %v3760, 16
        %v3879 = vor.u32 %v3876, %v3877
        %v3880 = vrot.slane %v3876, 4
        %v3882 = vshrl.u32 %v3761, 16
        %v3884 = vrot.slane %v3882, 7
        %v3885 = vshll.u32 %v3761, 16
        %v3887 = vor.u32 %v3884, %v3885
        %v3888 = vsel %vm3770, %v3880, %v3887
        %v3889 = vrot.slane %v3884, 4
        %v3891 = vshrl.u32 %v3762, 16
        %v3893 = vrot.slane %v3891, 7
        %v3894 = vshll.u32 %v3762, 16
        %v3896 = vor.u32 %v3893, %v3894
        %v3897 = vrot.slane %v3893, 4
        %v3899 = vshrl.u32 %v3763, 16
        %v3901 = vrot.slane %v3899, 7
        %v3902 = vshll.u32 %v3763, 16
        %v3904 = vor.u32 %v3901, %v3902
        %v3905 = vsel %vm3770, %v3897, %v3904
        %v3906 = vrot.slane %v3901, 4
        %v3908 = vshrl.u32 %v3764, 16
        %v3910 = vrot.slane %v3908, 7
        %v3911 = vshll.u32 %v3764, 16
        %v3913 = vor.u32 %v3910, %v3911
        %v3914 = vrot.slane %v3910, 4
        %v3916 = vshrl.u32 %v3765, 16
        %v3918 = vrot.slane %v3916, 7
        %v3919 = vshll.u32 %v3765, 16
        %v3921 = vor.u32 %v3918, %v3919
        %v3922 = vsel %vm3770, %v3914, %v3921
        %v3923 = vrot.slane %v3918, 4
        %v3925 = vshrl.u32 %v3766, 16
        %v3927 = vrot.slane %v3925, 7
        %v3928 = vshll.u32 %v3766, 16
        %v3930 = vor.u32 %v3927, %v3928
        %v3931 = vrot.slane %v3927, 4
        %v3933 = vshrl.u32 %v3767, 16
        %v3935 = vrot.slane %v3933, 7
        %v3936 = vshll.u32 %v3767, 16
        %v3938 = vor.u32 %v3935, %v3936
        %v3939 = vsel %vm3770, %v3931, %v3938
        %v3940 = vrot.slane %v3935, 4
        %vm3971 = vcmask 1043456
        %vm3972 = vsmask.f32 7938
        %vm3973 = vmand %vm3971, %vm3972
        %v3974 = vld [vmem:[#allocation2] sm:$0xf]
        %v3975 = vsel %vm3973, %v3777, %v3974
        %3976 = vst [vmem:[#allocation2] sm:$0xf] %v3975
        %3977 = vst [vmem:[#allocation2 + $0x4] sm:$0xf] %v3786
        %vm3978 = vcmask 1040384
        %vm3979 = vmand %vm3978, %vm3768
        %v3980 = vld [vmem:[#allocation2 + $0x8] sm:$0x1]
        %v3981 = vsel %vm3979, %v3787, %v3980
        %3982 = vst [vmem:[#allocation2 + $0x8] sm:$0x1] %v3981
        %v3983 = vld [vmem:[#allocation2 + $0xc] sm:$0xf]
        %v3984 = vsel %vm3973, %v3794, %v3983
        %3985 = vst [vmem:[#allocation2 + $0xc] sm:$0xf] %v3984
        %3986 = vst [vmem:[#allocation2 + $0x10] sm:$0xf] %v3803
        %v3987 = vld [vmem:[#allocation2 + $0x14] sm:$0x1]
        %v3988 = vsel %vm3979, %v3804, %v3987
        %3989 = vst [vmem:[#allocation2 + $0x14] sm:$0x1] %v3988
        %v3990 = vld [vmem:[#allocation2 + $0x18] sm:$0xf]
        %v3991 = vsel %vm3973, %v3811, %v3990
        %3992 = vst [vmem:[#allocation2 + $0x18] sm:$0xf] %v3991
        %3993 = vst [vmem:[#allocation2 + $0x1c] sm:$0xf] %v3820
        %v3994 = vld [vmem:[#allocation2 + $0x20] sm:$0x1]
        %v3995 = vsel %vm3979, %v3821, %v3994
        %3996 = vst [vmem:[#allocation2 + $0x20] sm:$0x1] %v3995
        %v3997 = vld [vmem:[#allocation2 + $0x24] sm:$0xf]
        %v3998 = vsel %vm3973, %v3828, %v3997
        %3999 = vst [vmem:[#allocation2 + $0x24] sm:$0xf] %v3998
        %4000 = vst [vmem:[#allocation2 + $0x28] sm:$0xf] %v3837
        %v4001 = vld [vmem:[#allocation2 + $0x2c] sm:$0x1]
        %v4002 = vsel %vm3979, %v3838, %v4001
        %4003 = vst [vmem:[#allocation2 + $0x2c] sm:$0x1] %v4002
        %v4004 = vld [vmem:[#allocation2 + $0x30] sm:$0xf]
        %v4005 = vsel %vm3973, %v3845, %v4004
        %4006 = vst [vmem:[#allocation2 + $0x30] sm:$0xf] %v4005
        %4007 = vst [vmem:[#allocation2 + $0x34] sm:$0xf] %v3854
        %v4008 = vld [vmem:[#allocation2 + $0x38] sm:$0x1]
        %v4009 = vsel %vm3979, %v3855, %v4008
        %4010 = vst [vmem:[#allocation2 + $0x38] sm:$0x1] %v4009
        %v4011 = vld [vmem:[#allocation2 + $0x3c] sm:$0xf]
        %v4012 = vsel %vm3973, %v3862, %v4011
        %4013 = vst [vmem:[#allocation2 + $0x3c] sm:$0xf] %v4012
        %4014 = vst [vmem:[#allocation2 + $0x40] sm:$0xf] %v3871
        %v4015 = vld [vmem:[#allocation2 + $0x44] sm:$0x1]
        %v4016 = vsel %vm3979, %v3872, %v4015
        %4017 = vst [vmem:[#allocation2 + $0x44] sm:$0x1] %v4016
        %v4018 = vld [vmem:[#allocation2 + $0x48] sm:$0xf]
        %v4019 = vsel %vm3973, %v3879, %v4018
        %4020 = vst [vmem:[#allocation2 + $0x48] sm:$0xf] %v4019
        %4021 = vst [vmem:[#allocation2 + $0x4c] sm:$0xf] %v3888
        %v4022 = vld [vmem:[#allocation2 + $0x50] sm:$0x1]
        %v4023 = vsel %vm3979, %v3889, %v4022
        %4024 = vst [vmem:[#allocation2 + $0x50] sm:$0x1] %v4023
        %v4025 = vld [vmem:[#allocation2 + $0x54] sm:$0xf]
        %v4026 = vsel %vm3973, %v3896, %v4025
        %4027 = vst [vmem:[#allocation2 + $0x54] sm:$0xf] %v4026
        %4028 = vst [vmem:[#allocation2 + $0x58] sm:$0xf] %v3905
        %v4029 = vld [vmem:[#allocation2 + $0x5c] sm:$0x1]
        %v4030 = vsel %vm3979, %v3906, %v4029
        %4031 = vst [vmem:[#allocation2 + $0x5c] sm:$0x1] %v4030
        %v4032 = vld [vmem:[#allocation2 + $0x60] sm:$0xf]
        %v4033 = vsel %vm3973, %v3913, %v4032
        %4034 = vst [vmem:[#allocation2 + $0x60] sm:$0xf] %v4033
        %4035 = vst [vmem:[#allocation2 + $0x64] sm:$0xf] %v3922
        %v4036 = vld [vmem:[#allocation2 + $0x68] sm:$0x1]
        %v4037 = vsel %vm3979, %v3923, %v4036
        %4038 = vst [vmem:[#allocation2 + $0x68] sm:$0x1] %v4037
        %v4039 = vld [vmem:[#allocation2 + $0x6c] sm:$0xf]
        %v4040 = vsel %vm3973, %v3930, %v4039
        %4041 = vst [vmem:[#allocation2 + $0x6c] sm:$0xf] %v4040
        %4042 = vst [vmem:[#allocation2 + $0x70] sm:$0xf] %v3939
        %v4043 = vld [vmem:[#allocation2 + $0x74] sm:$0x1]
        %v4044 = vsel %vm3979, %v3940, %v4043
        %4045 = vst [vmem:[#allocation2 + $0x74] sm:$0x1] %v4044
        %v4046 = vld [vmem:[#allocation2] sm:$0x1]
        %v4047 = vsel %vm3979, 0, %v4046
        %4048 = vst [vmem:[#allocation2] sm:$0x1] %v4047
        %v4049 = vld [vmem:[#allocation2 + $0xc] sm:$0x1]
        %v4050 = vsel %vm3979, 0, %v4049
        %4051 = vst [vmem:[#allocation2 + $0xc] sm:$0x1] %v4050
        %v4052 = vld [vmem:[#allocation2 + $0x18] sm:$0x1]
        %v4053 = vsel %vm3979, 0, %v4052
        %4054 = vst [vmem:[#allocation2 + $0x18] sm:$0x1] %v4053
        %v4055 = vld [vmem:[#allocation2 + $0x24] sm:$0x1]
        %v4056 = vsel %vm3979, 0, %v4055
        %4057 = vst [vmem:[#allocation2 + $0x24] sm:$0x1] %v4056
        %v4058 = vld [vmem:[#allocation2 + $0x30] sm:$0x1]
        %v4059 = vsel %vm3979, 0, %v4058
        %4060 = vst [vmem:[#allocation2 + $0x30] sm:$0x1] %v4059
        %v4061 = vld [vmem:[#allocation2 + $0x3c] sm:$0x1]
        %v4062 = vsel %vm3979, 0, %v4061
        %4063 = vst [vmem:[#allocation2 + $0x3c] sm:$0x1] %v4062
        %v4064 = vld [vmem:[#allocation2 + $0x48] sm:$0x1]
        %v4065 = vsel %vm3979, 0, %v4064
        %4066 = vst [vmem:[#allocation2 + $0x48] sm:$0x1] %v4065
        %v4067 = vld [vmem:[#allocation2 + $0x54] sm:$0x1]
        %v4068 = vsel %vm3979, 0, %v4067
        %4069 = vst [vmem:[#allocation2 + $0x54] sm:$0x1] %v4068
        %v4070 = vld [vmem:[#allocation2 + $0x60] sm:$0x1]
        %v4071 = vsel %vm3979, 0, %v4070
        %4072 = vst [vmem:[#allocation2 + $0x60] sm:$0x1] %v4071
        %v4073 = vld [vmem:[#allocation2 + $0x6c] sm:$0x1]
        %v4074 = vsel %vm3979, 0, %v4073
        %4075 = vst [vmem:[#allocation2 + $0x6c] sm:$0x1] %v4074
        %vm4076 = vmand %vm3978, %vm3972
        %v4077 = vld [vmem:[#allocation2 + $0x8] sm:$0x1]
        %v4078 = vsel %vm4076, 0, %v4077
        %4079 = vst [vmem:[#allocation2 + $0x8] sm:$0x1] %v4078
        %v4080 = vld [vmem:[#allocation2 + $0x14] sm:$0x1]
        %v4081 = vsel %vm4076, 0, %v4080
        %4082 = vst [vmem:[#allocation2 + $0x14] sm:$0x1] %v4081
        %v4083 = vld [vmem:[#allocation2 + $0x20] sm:$0x1]
        %v4084 = vsel %vm4076, 0, %v4083
        %4085 = vst [vmem:[#allocation2 + $0x20] sm:$0x1] %v4084
        %v4086 = vld [vmem:[#allocation2 + $0x2c] sm:$0x1]
        %v4087 = vsel %vm4076, 0, %v4086
        %4088 = vst [vmem:[#allocation2 + $0x2c] sm:$0x1] %v4087
        %v4089 = vld [vmem:[#allocation2 + $0x38] sm:$0x1]
        %v4090 = vsel %vm4076, 0, %v4089
        %4091 = vst [vmem:[#allocation2 + $0x38] sm:$0x1] %v4090
        %v4092 = vld [vmem:[#allocation2 + $0x44] sm:$0x1]
        %v4093 = vsel %vm4076, 0, %v4092
        %4094 = vst [vmem:[#allocation2 + $0x44] sm:$0x1] %v4093
        %v4095 = vld [vmem:[#allocation2 + $0x50] sm:$0x1]
        %v4096 = vsel %vm4076, 0, %v4095
        %4097 = vst [vmem:[#allocation2 + $0x50] sm:$0x1] %v4096
        %v4098 = vld [vmem:[#allocation2 + $0x5c] sm:$0x1]
        %v4099 = vsel %vm4076, 0, %v4098
        %4100 = vst [vmem:[#allocation2 + $0x5c] sm:$0x1] %v4099
        %v4101 = vld [vmem:[#allocation2 + $0x68] sm:$0x1]
        %v4102 = vsel %vm4076, 0, %v4101
        %4103 = vst [vmem:[#allocation2 + $0x68] sm:$0x1] %v4102
        %v4104 = vld [vmem:[#allocation2 + $0x74] sm:$0x1]
        %v4105 = vsel %vm4076, 0, %v4104
        %4106 = vst [vmem:[#allocation2 + $0x74] sm:$0x1] %v4105
        %p4107 = scmp.eq.s32.totalorder %s27, 0
        // Predicated region
        $region53: #{tpu_custom_call.1} parent=47 // pred_check
          %p4108 = pneg %p4107
        $region54: #{tpu_custom_call.1} parent=47 // pred_check_branch
          %4110 = sbr.rel (%p4108) target = $region56
        $region55: #{tpu_custom_call.1} parent=47 // pred_region
          %4111 = vst [vmem:[#allocation2] sm:$0xf] 0
          %4112 = vst [vmem:[#allocation2 + $0x4] sm:$0xf] 0
          %4113 = vst [vmem:[#allocation2 + $0x8] sm:$0x1] 0
        $region56: #{tpu_custom_call.1} parent=47 // pred_fallthru
          _
        %p4114 = scmp.eq.s32.totalorder %s27, 1
        // Predicated region
        $region57: #{tpu_custom_call.1} parent=47 // pred_check
          %p4115 = pneg %p4114
        $region58: #{tpu_custom_call.1} parent=47 // pred_check_branch
          %4117 = sbr.rel (%p4115) target = $region60
        $region59: #{tpu_custom_call.1} parent=47 // pred_region
          %s4118 = scalar_lea.vmem [#allocation2], 108
          %4119 = vst [vmem:[%s4118] sm:$0xf] 0
          %4120 = vst [vmem:[%s4118 + $0x4] sm:$0xf] 0
          %4121 = vst [vmem:[%s4118 + $0x8] sm:$0x1] 0
        $region60: #{tpu_custom_call.1} parent=47 // pred_fallthru
          _
        %v4122 = vld [vmem:[#allocation2] sm:$0xf]
        %v4123 = vld [vmem:[#allocation2 + $0x4] sm:$0xf]
        %v4124 = vld [vmem:[#allocation2 + $0xc] sm:$0xf]
        %v4125 = vld [vmem:[#allocation2 + $0x10] sm:$0xf]
        %v4126 = vld [vmem:[#allocation2 + $0x18] sm:$0xf]
        %v4127 = vld [vmem:[#allocation2 + $0x1c] sm:$0xf]
        %v4128 = vld [vmem:[#allocation2 + $0x24] sm:$0xf]
        %v4129 = vld [vmem:[#allocation2 + $0x28] sm:$0xf]
        %v4130 = vld [vmem:[#allocation2 + $0x30] sm:$0xf]
        %v4131 = vld [vmem:[#allocation2 + $0x34] sm:$0xf]
        %v4132 = vld [vmem:[#allocation2 + $0x3c] sm:$0xf]
        %v4133 = vld [vmem:[#allocation2 + $0x40] sm:$0xf]
        %v4134 = vld [vmem:[#allocation2 + $0x48] sm:$0xf]
        %v4135 = vld [vmem:[#allocation2 + $0x4c] sm:$0xf]
        %v4136 = vld [vmem:[#allocation2 + $0x54] sm:$0xf]
        %v4137 = vld [vmem:[#allocation2 + $0x58] sm:$0xf]
        %v4138 = vld [vmem:[#allocation3] sm:$0xf]
        %v4139 = vld [vmem:[#allocation3 + $0x4] sm:$0xf]
        %v4140 = vld [vmem:[#allocation3 + $0x8] sm:$0xf]
        %v4141 = vld [vmem:[#allocation3 + $0xc] sm:$0xf]
        %v4142 = vld [vmem:[#allocation3 + $0x10] sm:$0xf]
        %v4143 = vld [vmem:[#allocation3 + $0x14] sm:$0xf]
        %v4144 = vld [vmem:[#allocation3 + $0x18] sm:$0xf]
        %v4145 = vld [vmem:[#allocation3 + $0x1c] sm:$0xf]
        %v4146 = vld [vmem:[#allocation3 + $0x20] sm:$0xf]
        %v4147 = vld [vmem:[#allocation3 + $0x24] sm:$0xf]
        %v4148 = vld [vmem:[#allocation3 + $0x28] sm:$0xf]
        %v4149 = vld [vmem:[#allocation3 + $0x2c] sm:$0xf]
        %v4150 = vld [vmem:[#allocation3 + $0x30] sm:$0xf]
        %v4151 = vld [vmem:[#allocation3 + $0x34] sm:$0xf]
        %v4152 = vld [vmem:[#allocation3 + $0x38] sm:$0xf]
        %v4153 = vld [vmem:[#allocation3 + $0x3c] sm:$0xf]
        %v4154 = vld [vmem:[#allocation2 + $0x8] sm:$0x1]
        %v4155 = vld [vmem:[#allocation2 + $0x14] sm:$0x1]
        %v4156 = vld [vmem:[#allocation2 + $0x20] sm:$0x1]
        %v4157 = vld [vmem:[#allocation2 + $0x2c] sm:$0x1]
        %v4158 = vld [vmem:[#allocation2 + $0x38] sm:$0x1]
        %v4159 = vld [vmem:[#allocation2 + $0x44] sm:$0x1]
        %v4160 = vld [vmem:[#allocation2 + $0x50] sm:$0x1]
        %v4161 = vld [vmem:[#allocation2 + $0x5c] sm:$0x1]
        %v4163 = vshrl.u32 %v4122, 16
        %v4165 = vrot.slane %v4163, 4
        %v4166 = vshll.u32 %v4122, 16
        %v4168 = vrot.slane %v4166, 5
        %v4169 = vor.u32 %v4165, %v4168
        %v4170 = vrot.slane %v4169, 4
        %v4172 = vshll.u32 %v4123, 16
        %v4174 = vrot.slane %v4172, 5
        %v4175 = vsel %vm370, %v4170, %v4174
        %v4176 = vshrl.u32 %v4123, 16
        %v4178 = vrot.slane %v4176, 4
        %v4179 = vor.u32 %v4178, %v4174
        %v4180 = vrot.slane %v4179, 4
        %v4182 = vshll.u32 %v4154, 16
        %v4184 = vrot.slane %v4182, 5
        %v4185 = vsel %vm370, %v4180, %v4184
        %v4187 = vshrl.u32 %v4124, 16
        %v4189 = vrot.slane %v4187, 4
        %v4190 = vshll.u32 %v4124, 16
        %v4192 = vrot.slane %v4190, 5
        %v4193 = vor.u32 %v4189, %v4192
        %v4194 = vrot.slane %v4193, 4
        %v4196 = vshll.u32 %v4125, 16
        %v4198 = vrot.slane %v4196, 5
        %v4199 = vsel %vm370, %v4194, %v4198
        %v4200 = vshrl.u32 %v4125, 16
        %v4202 = vrot.slane %v4200, 4
        %v4203 = vor.u32 %v4202, %v4198
        %v4204 = vrot.slane %v4203, 4
        %v4206 = vshll.u32 %v4155, 16
        %v4208 = vrot.slane %v4206, 5
        %v4209 = vsel %vm370, %v4204, %v4208
        %v4211 = vshrl.u32 %v4126, 16
        %v4213 = vrot.slane %v4211, 4
        %v4214 = vshll.u32 %v4126, 16
        %v4216 = vrot.slane %v4214, 5
        %v4217 = vor.u32 %v4213, %v4216
        %v4218 = vrot.slane %v4217, 4
        %v4220 = vshll.u32 %v4127, 16
        %v4222 = vrot.slane %v4220, 5
        %v4223 = vsel %vm370, %v4218, %v4222
        %v4224 = vshrl.u32 %v4127, 16
        %v4226 = vrot.slane %v4224, 4
        %v4227 = vor.u32 %v4226, %v4222
        %v4228 = vrot.slane %v4227, 4
        %v4230 = vshll.u32 %v4156, 16
        %v4232 = vrot.slane %v4230, 5
        %v4233 = vsel %vm370, %v4228, %v4232
        %v4235 = vshrl.u32 %v4128, 16
        %v4237 = vrot.slane %v4235, 4
        %v4238 = vshll.u32 %v4128, 16
        %v4240 = vrot.slane %v4238, 5
        %v4241 = vor.u32 %v4237, %v4240
        %v4242 = vrot.slane %v4241, 4
        %v4244 = vshll.u32 %v4129, 16
        %v4246 = vrot.slane %v4244, 5
        %v4247 = vsel %vm370, %v4242, %v4246
        %v4248 = vshrl.u32 %v4129, 16
        %v4250 = vrot.slane %v4248, 4
        %v4251 = vor.u32 %v4250, %v4246
        %v4252 = vrot.slane %v4251, 4
        %v4254 = vshll.u32 %v4157, 16
        %v4256 = vrot.slane %v4254, 5
        %v4257 = vsel %vm370, %v4252, %v4256
        %v4259 = vshrl.u32 %v4130, 16
        %v4261 = vrot.slane %v4259, 4
        %v4262 = vshll.u32 %v4130, 16
        %v4264 = vrot.slane %v4262, 5
        %v4265 = vor.u32 %v4261, %v4264
        %v4266 = vrot.slane %v4265, 4
        %v4268 = vshll.u32 %v4131, 16
        %v4270 = vrot.slane %v4268, 5
        %v4271 = vsel %vm370, %v4266, %v4270
        %v4272 = vshrl.u32 %v4131, 16
        %v4274 = vrot.slane %v4272, 4
        %v4275 = vor.u32 %v4274, %v4270
        %v4276 = vrot.slane %v4275, 4
        %v4278 = vshll.u32 %v4158, 16
        %v4280 = vrot.slane %v4278, 5
        %v4281 = vsel %vm370, %v4276, %v4280
        %v4283 = vshrl.u32 %v4132, 16
        %v4285 = vrot.slane %v4283, 4
        %v4286 = vshll.u32 %v4132, 16
        %v4288 = vrot.slane %v4286, 5
        %v4289 = vor.u32 %v4285, %v4288
        %v4290 = vrot.slane %v4289, 4
        %v4292 = vshll.u32 %v4133, 16
        %v4294 = vrot.slane %v4292, 5
        %v4295 = vsel %vm370, %v4290, %v4294
        %v4296 = vshrl.u32 %v4133, 16
        %v4298 = vrot.slane %v4296, 4
        %v4299 = vor.u32 %v4298, %v4294
        %v4300 = vrot.slane %v4299, 4
        %v4302 = vshll.u32 %v4159, 16
        %v4304 = vrot.slane %v4302, 5
        %v4305 = vsel %vm370, %v4300, %v4304
        %v4307 = vshrl.u32 %v4134, 16
        %v4309 = vrot.slane %v4307, 4
        %v4310 = vshll.u32 %v4134, 16
        %v4312 = vrot.slane %v4310, 5
        %v4313 = vor.u32 %v4309, %v4312
        %v4314 = vrot.slane %v4313, 4
        %v4316 = vshll.u32 %v4135, 16
        %v4318 = vrot.slane %v4316, 5
        %v4319 = vsel %vm370, %v4314, %v4318
        %v4320 = vshrl.u32 %v4135, 16
        %v4322 = vrot.slane %v4320, 4
        %v4323 = vor.u32 %v4322, %v4318
        %v4324 = vrot.slane %v4323, 4
        %v4326 = vshll.u32 %v4160, 16
        %v4328 = vrot.slane %v4326, 5
        %v4329 = vsel %vm370, %v4324, %v4328
        %v4331 = vshrl.u32 %v4136, 16
        %v4333 = vrot.slane %v4331, 4
        %v4334 = vshll.u32 %v4136, 16
        %v4336 = vrot.slane %v4334, 5
        %v4337 = vor.u32 %v4333, %v4336
        %v4338 = vrot.slane %v4337, 4
        %v4340 = vshll.u32 %v4137, 16
        %v4342 = vrot.slane %v4340, 5
        %v4343 = vsel %vm370, %v4338, %v4342
        %v4344 = vshrl.u32 %v4137, 16
        %v4346 = vrot.slane %v4344, 4
        %v4347 = vor.u32 %v4346, %v4342
        %v4348 = vrot.slane %v4347, 4
        %v4350 = vshll.u32 %v4161, 16
        %v4352 = vrot.slane %v4350, 5
        %v4353 = vsel %vm370, %v4348, %v4352
        %s4354 = scalar_lea.vmem [#allocation3], 64
        %v4355 = vld [vmem:[%s4354] sm:$0xf]
        %v4356 = vld [vmem:[%s4354 + $0x4] sm:$0xf]
        %v4357 = vld [vmem:[%s4354 + $0x8] sm:$0xf]
        %v4358 = vld [vmem:[%s4354 + $0xc] sm:$0xf]
        %v4359 = vld [vmem:[%s4354 + $0x10] sm:$0xf]
        %v4360 = vld [vmem:[%s4354 + $0x14] sm:$0xf]
        %v4361 = vld [vmem:[%s4354 + $0x18] sm:$0xf]
        %v4362 = vld [vmem:[%s4354 + $0x1c] sm:$0xf]
        %v4363 = vld [vmem:[%s4354 + $0x20] sm:$0xf]
        %v4364 = vld [vmem:[%s4354 + $0x24] sm:$0xf]
        %v4365 = vld [vmem:[%s4354 + $0x28] sm:$0xf]
        %v4366 = vld [vmem:[%s4354 + $0x2c] sm:$0xf]
        %v4367 = vld [vmem:[%s4354 + $0x30] sm:$0xf]
        %v4368 = vld [vmem:[%s4354 + $0x34] sm:$0xf]
        %v4369 = vld [vmem:[%s4354 + $0x38] sm:$0xf]
        %v4370 = vld [vmem:[%s4354 + $0x3c] sm:$0xf]
        %v4371 = vunpack.c.l.b16 %v4175
        %v4372 = vunpack.c.l.b16 %v4185
        %v4373 = vunpack.c.l.b16 %v4199
        %v4374 = vunpack.c.l.b16 %v4209
        %v4375 = vunpack.c.l.b16 %v4223
        %v4376 = vunpack.c.l.b16 %v4233
        %v4377 = vunpack.c.l.b16 %v4247
        %v4378 = vunpack.c.l.b16 %v4257
        %v4379 = vunpack.c.l.b16 %v4271
        %v4380 = vunpack.c.l.b16 %v4281
        %v4381 = vunpack.c.l.b16 %v4295
        %v4382 = vunpack.c.l.b16 %v4305
        %v4383 = vunpack.c.l.b16 %v4319
        %v4384 = vunpack.c.l.b16 %v4329
        %v4385 = vunpack.c.l.b16 %v4343
        %v4386 = vunpack.c.l.b16 %v4353
        %v4387 = vpack.c.b16 %v4372, %v4371
        %v4388 = vpack.c.b16 %v4374, %v4373
        %v4389 = vpack.c.b16 %v4376, %v4375
        %v4390 = vpack.c.b16 %v4378, %v4377
        %v4391 = vpack.c.b16 %v4380, %v4379
        %v4392 = vpack.c.b16 %v4382, %v4381
        %v4393 = vpack.c.b16 %v4384, %v4383
        %v4394 = vpack.c.b16 %v4386, %v4385
        %v4419 = vunpack.c.l.b16 %v4355
        %v4420 = vunpack.c.l.b16 %v4356
        %v4421 = vunpack.c.l.b16 %v4357
        %v4422 = vunpack.c.l.b16 %v4358
        %v4423 = vunpack.c.l.b16 %v4359
        %v4424 = vunpack.c.l.b16 %v4360
        %v4425 = vunpack.c.l.b16 %v4361
        %v4426 = vunpack.c.l.b16 %v4362
        %v4427 = vunpack.c.l.b16 %v4363
        %v4428 = vunpack.c.l.b16 %v4364
        %v4429 = vunpack.c.l.b16 %v4365
        %v4430 = vunpack.c.l.b16 %v4366
        %v4431 = vunpack.c.l.b16 %v4367
        %v4432 = vunpack.c.l.b16 %v4368
        %v4433 = vunpack.c.l.b16 %v4369
        %v4434 = vunpack.c.l.b16 %v4370
        %v4435 = vpack.c.b16 %v4420, %v4419
        %v4436 = vpack.c.b16 %v4422, %v4421
        %v4437 = vpack.c.b16 %v4424, %v4423
        %v4438 = vpack.c.b16 %v4426, %v4425
        %v4439 = vpack.c.b16 %v4428, %v4427
        %v4440 = vpack.c.b16 %v4430, %v4429
        %v4441 = vpack.c.b16 %v4432, %v4431
        %v4442 = vpack.c.b16 %v4434, %v4433
        %4451 = vmatprep.subr.bf16.mxu0 0
        %4452 = vmatpush1.bf16.msra.mxu0 %v4435
        %4453 = vmatprep.subr.bf16.mxu0 0
        %4454 = vmatpush1.bf16.msra.mxu0 %v4436
        %4455 = vmatprep.subr.bf16.mxu0 0
        %4456 = vmatpush1.bf16.msra.mxu0 %v4437
        %4457 = vmatprep.subr.bf16.mxu0 0
        %4458 = vmatpush1.bf16.msra.mxu0 %v4438
        %4459 = vmatprep.subr.bf16.mxu0 0
        %4460 = vmatpush1.bf16.msra.mxu0 %v4439
        %4461 = vmatprep.subr.bf16.mxu0 0
        %4462 = vmatpush1.bf16.msra.mxu0 %v4440
        %4463 = vmatprep.subr.bf16.mxu0 0
        %4464 = vmatpush1.bf16.msra.mxu0 %v4441
        %4465 = vmatprep.subr.bf16.mxu0 0
        %4466 = vmatpush1.bf16.msra.mxu0 %v4442
        %4467 = vmatprep.subr.bf16.mxu0 0
        %4468 = vmatpush1.bf16.msra.mxu0 0
        %4469 = vmatprep.subr.bf16.mxu0 0
        %4470 = vmatpush1.bf16.msra.mxu0 0
        %4471 = vmatprep.subr.bf16.mxu0 0
        %4472 = vmatpush1.bf16.msra.mxu0 0
        %4473 = vmatprep.subr.bf16.mxu0 0
        %4474 = vmatpush1.bf16.msra.mxu0 0
        %4475 = vmatprep.subr.bf16.mxu0 0
        %4476 = vmatpush1.bf16.msra.mxu0 0
        %4477 = vmatprep.subr.bf16.mxu0 0
        %4478 = vmatpush1.bf16.msra.mxu0 0
        %4479 = vmatprep.subr.bf16.mxu0 0
        %4480 = vmatpush1.bf16.msra.mxu0 0
        %4481 = vmatprep.subr.bf16.mxu0 0
        %4482 = vmatpush1.bf16.msra.mxu0 0
        %4483 = vmatprep.mubr.bf16.mxu0 0
        %4484 = vmatmul.mubr.bf16.gmra.mrb[0].mxu0 %v4387
        %v4485 = vpop.f32.mrb[0].mxu0
        %v4486 = vadd.f32 0.0, %v4485
        %v4487 = vpop.f32.mrb[0].mxu0
        %v4488 = vpop.f32.mrb[0].mxu0
        %v4489 = vadd.f32 0.0, %v4488
        %v4490 = vpop.f32.mrb[0].mxu0
        %4491 = vmatprep.mubr.bf16.mxu0 0
        %4492 = vmatmul.mubr.bf16.gmra.mrb[0].mxu0 %v4388
        %v4493 = vpop.f32.mrb[0].mxu0
        %v4494 = vadd.f32 0.0, %v4493
        %v4495 = vpop.f32.mrb[0].mxu0
        %v4496 = vpop.f32.mrb[0].mxu0
        %v4497 = vadd.f32 0.0, %v4496
        %v4498 = vpop.f32.mrb[0].mxu0
        %4499 = vmatprep.mubr.bf16.mxu0 0
        %4500 = vmatmul.mubr.bf16.gmra.mrb[0].mxu0 %v4389
        %v4501 = vpop.f32.mrb[0].mxu0
        %v4502 = vadd.f32 0.0, %v4501
        %v4503 = vpop.f32.mrb[0].mxu0
        %v4504 = vpop.f32.mrb[0].mxu0
        %v4505 = vadd.f32 0.0, %v4504
        %v4506 = vpop.f32.mrb[0].mxu0
        %4507 = vmatprep.mubr.bf16.mxu0 0
        %4508 = vmatmul.mubr.bf16.gmra.mrb[0].mxu0 %v4390
        %v4509 = vpop.f32.mrb[0].mxu0
        %v4510 = vadd.f32 0.0, %v4509
        %v4511 = vpop.f32.mrb[0].mxu0
        %v4512 = vpop.f32.mrb[0].mxu0
        %v4513 = vadd.f32 0.0, %v4512
        %v4514 = vpop.f32.mrb[0].mxu0
        %4515 = vmatprep.mubr.bf16.mxu0 0
        %4516 = vmatmul.mubr.bf16.gmra.mrb[0].mxu0 %v4391
        %v4517 = vpop.f32.mrb[0].mxu0
        %v4518 = vadd.f32 0.0, %v4517
        %v4519 = vpop.f32.mrb[0].mxu0
        %v4520 = vpop.f32.mrb[0].mxu0
        %v4521 = vadd.f32 0.0, %v4520
        %v4522 = vpop.f32.mrb[0].mxu0
        %4523 = vmatprep.mubr.bf16.mxu0 0
        %4524 = vmatmul.mubr.bf16.gmra.mrb[0].mxu0 %v4392
        %v4525 = vpop.f32.mrb[0].mxu0
        %v4526 = vadd.f32 0.0, %v4525
        %v4527 = vpop.f32.mrb[0].mxu0
        %v4528 = vpop.f32.mrb[0].mxu0
        %v4529 = vadd.f32 0.0, %v4528
        %v4530 = vpop.f32.mrb[0].mxu0
        %4531 = vmatprep.mubr.bf16.mxu0 0
        %4532 = vmatmul.mubr.bf16.gmra.mrb[0].mxu0 %v4393
        %v4533 = vpop.f32.mrb[0].mxu0
        %v4534 = vadd.f32 0.0, %v4533
        %v4535 = vpop.f32.mrb[0].mxu0
        %v4536 = vpop.f32.mrb[0].mxu0
        %v4537 = vadd.f32 0.0, %v4536
        %v4538 = vpop.f32.mrb[0].mxu0
        %4539 = vmatprep.mubr.bf16.mxu0 0
        %4540 = vmatmul.mubr.bf16.gmra.mrb[0].mxu0 %v4394
        %v4541 = vpop.f32.mrb[0].mxu0
        %v4542 = vadd.f32 0.0, %v4541
        %v4543 = vpop.f32.mrb[0].mxu0
        %v4544 = vpop.f32.mrb[0].mxu0
        %v4545 = vadd.f32 0.0, %v4544
        %v4546 = vpop.f32.mrb[0].mxu0
        %4547 = vdwg.mxu0
        %v4564 = vunpack.c.l.b16 %v4122
        %v4565 = vunpack.c.l.b16 %v4123
        %v4566 = vunpack.c.l.b16 %v4124
        %v4567 = vunpack.c.l.b16 %v4125
        %v4568 = vunpack.c.l.b16 %v4126
        %v4569 = vunpack.c.l.b16 %v4127
        %v4570 = vunpack.c.l.b16 %v4128
        %v4571 = vunpack.c.l.b16 %v4129
        %v4572 = vunpack.c.l.b16 %v4130
        %v4573 = vunpack.c.l.b16 %v4131
        %v4574 = vunpack.c.l.b16 %v4132
        %v4575 = vunpack.c.l.b16 %v4133
        %v4576 = vunpack.c.l.b16 %v4134
        %v4577 = vunpack.c.l.b16 %v4135
        %v4578 = vunpack.c.l.b16 %v4136
        %v4579 = vunpack.c.l.b16 %v4137
        %v4580 = vpack.c.b16 %v4565, %v4564
        %v4581 = vpack.c.b16 %v4567, %v4566
        %v4582 = vpack.c.b16 %v4569, %v4568
        %v4583 = vpack.c.b16 %v4571, %v4570
        %v4584 = vpack.c.b16 %v4573, %v4572
        %v4585 = vpack.c.b16 %v4575, %v4574
        %v4586 = vpack.c.b16 %v4577, %v4576
        %v4587 = vpack.c.b16 %v4579, %v4578
        %v4612 = vunpack.c.l.b16 %v4138
        %v4613 = vunpack.c.l.b16 %v4139
        %v4614 = vunpack.c.l.b16 %v4140
        %v4615 = vunpack.c.l.b16 %v4141
        %v4616 = vunpack.c.l.b16 %v4142
        %v4617 = vunpack.c.l.b16 %v4143
        %v4618 = vunpack.c.l.b16 %v4144
        %v4619 = vunpack.c.l.b16 %v4145
        %v4620 = vunpack.c.l.b16 %v4146
        %v4621 = vunpack.c.l.b16 %v4147
        %v4622 = vunpack.c.l.b16 %v4148
        %v4623 = vunpack.c.l.b16 %v4149
        %v4624 = vunpack.c.l.b16 %v4150
        %v4625 = vunpack.c.l.b16 %v4151
        %v4626 = vunpack.c.l.b16 %v4152
        %v4627 = vunpack.c.l.b16 %v4153
        %v4628 = vpack.c.b16 %v4613, %v4612
        %v4629 = vpack.c.b16 %v4615, %v4614
        %v4630 = vpack.c.b16 %v4617, %v4616
        %v4631 = vpack.c.b16 %v4619, %v4618
        %v4632 = vpack.c.b16 %v4621, %v4620
        %v4633 = vpack.c.b16 %v4623, %v4622
        %v4634 = vpack.c.b16 %v4625, %v4624
        %v4635 = vpack.c.b16 %v4627, %v4626
        %4644 = vmatprep.subr.bf16.mxu0 0
        %4645 = vmatpush1.bf16.msra.mxu0 %v4628
        %4646 = vmatprep.subr.bf16.mxu0 0
        %4647 = vmatpush1.bf16.msra.mxu0 %v4629
        %4648 = vmatprep.subr.bf16.mxu0 0
        %4649 = vmatpush1.bf16.msra.mxu0 %v4630
        %4650 = vmatprep.subr.bf16.mxu0 0
        %4651 = vmatpush1.bf16.msra.mxu0 %v4631
        %4652 = vmatprep.subr.bf16.mxu0 0
        %4653 = vmatpush1.bf16.msra.mxu0 %v4632
        %4654 = vmatprep.subr.bf16.mxu0 0
        %4655 = vmatpush1.bf16.msra.mxu0 %v4633
        %4656 = vmatprep.subr.bf16.mxu0 0
        %4657 = vmatpush1.bf16.msra.mxu0 %v4634
        %4658 = vmatprep.subr.bf16.mxu0 0
        %4659 = vmatpush1.bf16.msra.mxu0 %v4635
        %4660 = vmatprep.subr.bf16.mxu0 0
        %4661 = vmatpush1.bf16.msra.mxu0 0
        %4662 = vmatprep.subr.bf16.mxu0 0
        %4663 = vmatpush1.bf16.msra.mxu0 0
        %4664 = vmatprep.subr.bf16.mxu0 0
        %4665 = vmatpush1.bf16.msra.mxu0 0
        %4666 = vmatprep.subr.bf16.mxu0 0
        %4667 = vmatpush1.bf16.msra.mxu0 0
        %4668 = vmatprep.subr.bf16.mxu0 0
        %4669 = vmatpush1.bf16.msra.mxu0 0
        %4670 = vmatprep.subr.bf16.mxu0 0
        %4671 = vmatpush1.bf16.msra.mxu0 0
        %4672 = vmatprep.subr.bf16.mxu0 0
        %4673 = vmatpush1.bf16.msra.mxu0 0
        %4674 = vmatprep.subr.bf16.mxu0 0
        %4675 = vmatpush1.bf16.msra.mxu0 0
        %4676 = vmatprep.mubr.bf16.mxu0 0
        %4677 = vmatmul.mubr.bf16.gmra.mrb[0].mxu0 %v4580
        %v4678 = vpop.f32.mrb[0].mxu0
        %v4679 = vadd.f32 %v4486, %v4678
        %v4680 = vpop.f32.mrb[0].mxu0
        %v4681 = vpop.f32.mrb[0].mxu0
        %v4682 = vadd.f32 %v4489, %v4681
        %v4683 = vpop.f32.mrb[0].mxu0
        %4684 = vmatprep.mubr.bf16.mxu0 0
        %4685 = vmatmul.mubr.bf16.gmra.mrb[0].mxu0 %v4581
        %v4686 = vpop.f32.mrb[0].mxu0
        %v4687 = vadd.f32 %v4494, %v4686
        %v4688 = vpop.f32.mrb[0].mxu0
        %v4689 = vpop.f32.mrb[0].mxu0
        %v4690 = vadd.f32 %v4497, %v4689
        %v4691 = vpop.f32.mrb[0].mxu0
        %4692 = vmatprep.mubr.bf16.mxu0 0
        %4693 = vmatmul.mubr.bf16.gmra.mrb[0].mxu0 %v4582
        %v4694 = vpop.f32.mrb[0].mxu0
        %v4695 = vadd.f32 %v4502, %v4694
        %v4696 = vpop.f32.mrb[0].mxu0
        %v4697 = vpop.f32.mrb[0].mxu0
        %v4698 = vadd.f32 %v4505, %v4697
        %v4699 = vpop.f32.mrb[0].mxu0
        %4700 = vmatprep.mubr.bf16.mxu0 0
        %4701 = vmatmul.mubr.bf16.gmra.mrb[0].mxu0 %v4583
        %v4702 = vpop.f32.mrb[0].mxu0
        %v4703 = vadd.f32 %v4510, %v4702
        %v4704 = vpop.f32.mrb[0].mxu0
        %v4705 = vpop.f32.mrb[0].mxu0
        %v4706 = vadd.f32 %v4513, %v4705
        %v4707 = vpop.f32.mrb[0].mxu0
        %4708 = vmatprep.mubr.bf16.mxu0 0
        %4709 = vmatmul.mubr.bf16.gmra.mrb[0].mxu0 %v4584
        %v4710 = vpop.f32.mrb[0].mxu0
        %v4711 = vadd.f32 %v4518, %v4710
        %v4712 = vpop.f32.mrb[0].mxu0
        %v4713 = vpop.f32.mrb[0].mxu0
        %v4714 = vadd.f32 %v4521, %v4713
        %v4715 = vpop.f32.mrb[0].mxu0
        %4716 = vmatprep.mubr.bf16.mxu0 0
        %4717 = vmatmul.mubr.bf16.gmra.mrb[0].mxu0 %v4585
        %v4718 = vpop.f32.mrb[0].mxu0
        %v4719 = vadd.f32 %v4526, %v4718
        %v4720 = vpop.f32.mrb[0].mxu0
        %v4721 = vpop.f32.mrb[0].mxu0
        %v4722 = vadd.f32 %v4529, %v4721
        %v4723 = vpop.f32.mrb[0].mxu0
        %4724 = vmatprep.mubr.bf16.mxu0 0
        %4725 = vmatmul.mubr.bf16.gmra.mrb[0].mxu0 %v4586
        %v4726 = vpop.f32.mrb[0].mxu0
        %v4727 = vadd.f32 %v4534, %v4726
        %v4728 = vpop.f32.mrb[0].mxu0
        %v4729 = vpop.f32.mrb[0].mxu0
        %v4730 = vadd.f32 %v4537, %v4729
        %v4731 = vpop.f32.mrb[0].mxu0
        %4732 = vmatprep.mubr.bf16.mxu0 0
        %4733 = vmatmul.mubr.bf16.gmra.mrb[0].mxu0 %v4587
        %v4734 = vpop.f32.mrb[0].mxu0
        %v4735 = vadd.f32 %v4542, %v4734
        %v4736 = vpop.f32.mrb[0].mxu0
        %v4737 = vpop.f32.mrb[0].mxu0
        %v4738 = vadd.f32 %v4545, %v4737
        %v4739 = vpop.f32.mrb[0].mxu0
        %4740 = vdwg.mxu0
        %v4741 = vld [vmem:[#allocation2] sm:$0xe]
        %v4742 = vld [vmem:[#allocation2 + $0xc] sm:$0xe]
        %v4743 = vld [vmem:[#allocation2 + $0x18] sm:$0xe]
        %v4744 = vld [vmem:[#allocation2 + $0x24] sm:$0xe]
        %v4745 = vld [vmem:[#allocation2 + $0x30] sm:$0xe]
        %v4746 = vld [vmem:[#allocation2 + $0x3c] sm:$0xe]
        %v4747 = vld [vmem:[#allocation2 + $0x48] sm:$0xe]
        %v4748 = vld [vmem:[#allocation2 + $0x54] sm:$0xe]
        %v4765 = vrot.slane %v4741, 5
        %v4766 = vrot.slane %v4765, 4
        %v4767 = vrot.slane %v4123, 5
        %v4768 = vsel %vm1082, %v4766, %v4767
        %v4769 = vrot.slane %v4767, 4
        %v4770 = vrot.slane %v4154, 5
        %v4771 = vsel %vm1082, %v4769, %v4770
        %v4772 = vrot.slane %v4742, 5
        %v4773 = vrot.slane %v4772, 4
        %v4774 = vrot.slane %v4125, 5
        %v4775 = vsel %vm1082, %v4773, %v4774
        %v4776 = vrot.slane %v4774, 4
        %v4777 = vrot.slane %v4155, 5
        %v4778 = vsel %vm1082, %v4776, %v4777
        %v4779 = vrot.slane %v4743, 5
        %v4780 = vrot.slane %v4779, 4
        %v4781 = vrot.slane %v4127, 5
        %v4782 = vsel %vm1082, %v4780, %v4781
        %v4783 = vrot.slane %v4781, 4
        %v4784 = vrot.slane %v4156, 5
        %v4785 = vsel %vm1082, %v4783, %v4784
        %v4786 = vrot.slane %v4744, 5
        %v4787 = vrot.slane %v4786, 4
        %v4788 = vrot.slane %v4129, 5
        %v4789 = vsel %vm1082, %v4787, %v4788
        %v4790 = vrot.slane %v4788, 4
        %v4791 = vrot.slane %v4157, 5
        %v4792 = vsel %vm1082, %v4790, %v4791
        %v4793 = vrot.slane %v4745, 5
        %v4794 = vrot.slane %v4793, 4
        %v4795 = vrot.slane %v4131, 5
        %v4796 = vsel %vm1082, %v4794, %v4795
        %v4797 = vrot.slane %v4795, 4
        %v4798 = vrot.slane %v4158, 5
        %v4799 = vsel %vm1082, %v4797, %v4798
        %v4800 = vrot.slane %v4746, 5
        %v4801 = vrot.slane %v4800, 4
        %v4802 = vrot.slane %v4133, 5
        %v4803 = vsel %vm1082, %v4801, %v4802
        %v4804 = vrot.slane %v4802, 4
        %v4805 = vrot.slane %v4159, 5
        %v4806 = vsel %vm1082, %v4804, %v4805
        %v4807 = vrot.slane %v4747, 5
        %v4808 = vrot.slane %v4807, 4
        %v4809 = vrot.slane %v4135, 5
        %v4810 = vsel %vm1082, %v4808, %v4809
        %v4811 = vrot.slane %v4809, 4
        %v4812 = vrot.slane %v4160, 5
        %v4813 = vsel %vm1082, %v4811, %v4812
        %v4814 = vrot.slane %v4748, 5
        %v4815 = vrot.slane %v4814, 4
        %v4816 = vrot.slane %v4137, 5
        %v4817 = vsel %vm1082, %v4815, %v4816
        %v4818 = vrot.slane %v4816, 4
        %v4819 = vrot.slane %v4161, 5
        %v4820 = vsel %vm1082, %v4818, %v4819
        %s4821 = scalar_lea.vmem [#allocation3], 128
        %v4822 = vld [vmem:[%s4821] sm:$0xf]
        %v4823 = vld [vmem:[%s4821 + $0x4] sm:$0xf]
        %v4824 = vld [vmem:[%s4821 + $0x8] sm:$0xf]
        %v4825 = vld [vmem:[%s4821 + $0xc] sm:$0xf]
        %v4826 = vld [vmem:[%s4821 + $0x10] sm:$0xf]
        %v4827 = vld [vmem:[%s4821 + $0x14] sm:$0xf]
        %v4828 = vld [vmem:[%s4821 + $0x18] sm:$0xf]
        %v4829 = vld [vmem:[%s4821 + $0x1c] sm:$0xf]
        %v4830 = vld [vmem:[%s4821 + $0x20] sm:$0xf]
        %v4831 = vld [vmem:[%s4821 + $0x24] sm:$0xf]
        %v4832 = vld [vmem:[%s4821 + $0x28] sm:$0xf]
        %v4833 = vld [vmem:[%s4821 + $0x2c] sm:$0xf]
        %v4834 = vld [vmem:[%s4821 + $0x30] sm:$0xf]
        %v4835 = vld [vmem:[%s4821 + $0x34] sm:$0xf]
        %v4836 = vld [vmem:[%s4821 + $0x38] sm:$0xf]
        %v4837 = vld [vmem:[%s4821 + $0x3c] sm:$0xf]
        %v4838 = vunpack.c.l.b16 %v4768
        %v4839 = vunpack.c.l.b16 %v4771
        %v4840 = vunpack.c.l.b16 %v4775
        %v4841 = vunpack.c.l.b16 %v4778
        %v4842 = vunpack.c.l.b16 %v4782
        %v4843 = vunpack.c.l.b16 %v4785
        %v4844 = vunpack.c.l.b16 %v4789
        %v4845 = vunpack.c.l.b16 %v4792
        %v4846 = vunpack.c.l.b16 %v4796
        %v4847 = vunpack.c.l.b16 %v4799
        %v4848 = vunpack.c.l.b16 %v4803
        %v4849 = vunpack.c.l.b16 %v4806
        %v4850 = vunpack.c.l.b16 %v4810
        %v4851 = vunpack.c.l.b16 %v4813
        %v4852 = vunpack.c.l.b16 %v4817
        %v4853 = vunpack.c.l.b16 %v4820
        %v4854 = vpack.c.b16 %v4839, %v4838
        %v4855 = vpack.c.b16 %v4841, %v4840
        %v4856 = vpack.c.b16 %v4843, %v4842
        %v4857 = vpack.c.b16 %v4845, %v4844
        %v4858 = vpack.c.b16 %v4847, %v4846
        %v4859 = vpack.c.b16 %v4849, %v4848
        %v4860 = vpack.c.b16 %v4851, %v4850
        %v4861 = vpack.c.b16 %v4853, %v4852
        %v4886 = vunpack.c.l.b16 %v4822
        %v4887 = vunpack.c.l.b16 %v4823
        %v4888 = vunpack.c.l.b16 %v4824
        %v4889 = vunpack.c.l.b16 %v4825
        %v4890 = vunpack.c.l.b16 %v4826
        %v4891 = vunpack.c.l.b16 %v4827
        %v4892 = vunpack.c.l.b16 %v4828
        %v4893 = vunpack.c.l.b16 %v4829
        %v4894 = vunpack.c.l.b16 %v4830
        %v4895 = vunpack.c.l.b16 %v4831
        %v4896 = vunpack.c.l.b16 %v4832
        %v4897 = vunpack.c.l.b16 %v4833
        %v4898 = vunpack.c.l.b16 %v4834
        %v4899 = vunpack.c.l.b16 %v4835
        %v4900 = vunpack.c.l.b16 %v4836
        %v4901 = vunpack.c.l.b16 %v4837
        %v4902 = vpack.c.b16 %v4887, %v4886
        %v4903 = vpack.c.b16 %v4889, %v4888
        %v4904 = vpack.c.b16 %v4891, %v4890
        %v4905 = vpack.c.b16 %v4893, %v4892
        %v4906 = vpack.c.b16 %v4895, %v4894
        %v4907 = vpack.c.b16 %v4897, %v4896
        %v4908 = vpack.c.b16 %v4899, %v4898
        %v4909 = vpack.c.b16 %v4901, %v4900
        %4918 = vmatprep.subr.bf16.mxu0 0
        %4919 = vmatpush1.bf16.msra.mxu0 %v4902
        %4920 = vmatprep.subr.bf16.mxu0 0
        %4921 = vmatpush1.bf16.msra.mxu0 %v4903
        %4922 = vmatprep.subr.bf16.mxu0 0
        %4923 = vmatpush1.bf16.msra.mxu0 %v4904
        %4924 = vmatprep.subr.bf16.mxu0 0
        %4925 = vmatpush1.bf16.msra.mxu0 %v4905
        %4926 = vmatprep.subr.bf16.mxu0 0
        %4927 = vmatpush1.bf16.msra.mxu0 %v4906
        %4928 = vmatprep.subr.bf16.mxu0 0
        %4929 = vmatpush1.bf16.msra.mxu0 %v4907
        %4930 = vmatprep.subr.bf16.mxu0 0
        %4931 = vmatpush1.bf16.msra.mxu0 %v4908
        %4932 = vmatprep.subr.bf16.mxu0 0
        %4933 = vmatpush1.bf16.msra.mxu0 %v4909
        %4934 = vmatprep.subr.bf16.mxu0 0
        %4935 = vmatpush1.bf16.msra.mxu0 0
        %4936 = vmatprep.subr.bf16.mxu0 0
        %4937 = vmatpush1.bf16.msra.mxu0 0
        %4938 = vmatprep.subr.bf16.mxu0 0
        %4939 = vmatpush1.bf16.msra.mxu0 0
        %4940 = vmatprep.subr.bf16.mxu0 0
        %4941 = vmatpush1.bf16.msra.mxu0 0
        %4942 = vmatprep.subr.bf16.mxu0 0
        %4943 = vmatpush1.bf16.msra.mxu0 0
        %4944 = vmatprep.subr.bf16.mxu0 0
        %4945 = vmatpush1.bf16.msra.mxu0 0
        %4946 = vmatprep.subr.bf16.mxu0 0
        %4947 = vmatpush1.bf16.msra.mxu0 0
        %4948 = vmatprep.subr.bf16.mxu0 0
        %4949 = vmatpush1.bf16.msra.mxu0 0
        %4950 = vmatprep.mubr.bf16.mxu0 0
        %4951 = vmatmul.mubr.bf16.gmra.mrb[0].mxu0 %v4854
        %v4952 = vpop.f32.mrb[0].mxu0
        %v4953 = vadd.f32 0.0, %v4952
        %v4954 = vpop.f32.mrb[0].mxu0
        %v4955 = vpop.f32.mrb[0].mxu0
        %v4956 = vadd.f32 0.0, %v4955
        %v4957 = vpop.f32.mrb[0].mxu0
        %4958 = vmatprep.mubr.bf16.mxu0 0
        %4959 = vmatmul.mubr.bf16.gmra.mrb[0].mxu0 %v4855
        %v4960 = vpop.f32.mrb[0].mxu0
        %v4961 = vadd.f32 0.0, %v4960
        %v4962 = vpop.f32.mrb[0].mxu0
        %v4963 = vpop.f32.mrb[0].mxu0
        %v4964 = vadd.f32 0.0, %v4963
        %v4965 = vpop.f32.mrb[0].mxu0
        %4966 = vmatprep.mubr.bf16.mxu0 0
        %4967 = vmatmul.mubr.bf16.gmra.mrb[0].mxu0 %v4856
        %v4968 = vpop.f32.mrb[0].mxu0
        %v4969 = vadd.f32 0.0, %v4968
        %v4970 = vpop.f32.mrb[0].mxu0
        %v4971 = vpop.f32.mrb[0].mxu0
        %v4972 = vadd.f32 0.0, %v4971
        %v4973 = vpop.f32.mrb[0].mxu0
        %4974 = vmatprep.mubr.bf16.mxu0 0
        %4975 = vmatmul.mubr.bf16.gmra.mrb[0].mxu0 %v4857
        %v4976 = vpop.f32.mrb[0].mxu0
        %v4977 = vadd.f32 0.0, %v4976
        %v4978 = vpop.f32.mrb[0].mxu0
        %v4979 = vpop.f32.mrb[0].mxu0
        %v4980 = vadd.f32 0.0, %v4979
        %v4981 = vpop.f32.mrb[0].mxu0
        %4982 = vmatprep.mubr.bf16.mxu0 0
        %4983 = vmatmul.mubr.bf16.gmra.mrb[0].mxu0 %v4858
        %v4984 = vpop.f32.mrb[0].mxu0
        %v4985 = vadd.f32 0.0, %v4984
        %v4986 = vpop.f32.mrb[0].mxu0
        %v4987 = vpop.f32.mrb[0].mxu0
        %v4988 = vadd.f32 0.0, %v4987
        %v4989 = vpop.f32.mrb[0].mxu0
        %4990 = vmatprep.mubr.bf16.mxu0 0
        %4991 = vmatmul.mubr.bf16.gmra.mrb[0].mxu0 %v4859
        %v4992 = vpop.f32.mrb[0].mxu0
        %v4993 = vadd.f32 0.0, %v4992
        %v4994 = vpop.f32.mrb[0].mxu0
        %v4995 = vpop.f32.mrb[0].mxu0
        %v4996 = vadd.f32 0.0, %v4995
        %v4997 = vpop.f32.mrb[0].mxu0
        %4998 = vmatprep.mubr.bf16.mxu0 0
        %4999 = vmatmul.mubr.bf16.gmra.mrb[0].mxu0 %v4860
        %v5000 = vpop.f32.mrb[0].mxu0
        %v5001 = vadd.f32 0.0, %v5000
        %v5002 = vpop.f32.mrb[0].mxu0
        %v5003 = vpop.f32.mrb[0].mxu0
        %v5004 = vadd.f32 0.0, %v5003
        %v5005 = vpop.f32.mrb[0].mxu0
        %5006 = vmatprep.mubr.bf16.mxu0 0
        %5007 = vmatmul.mubr.bf16.gmra.mrb[0].mxu0 %v4861
        %v5008 = vpop.f32.mrb[0].mxu0
        %v5009 = vadd.f32 0.0, %v5008
        %v5010 = vpop.f32.mrb[0].mxu0
        %v5011 = vpop.f32.mrb[0].mxu0
        %v5012 = vadd.f32 0.0, %v5011
        %v5013 = vpop.f32.mrb[0].mxu0
        %5014 = vdwg.mxu0
        %v5015 = vadd.f32 %v4679, %v4953
        %v5016 = vadd.f32 %v4682, %v4956
        %v5017 = vadd.f32 %v4687, %v4961
        %v5018 = vadd.f32 %v4690, %v4964
        %v5019 = vadd.f32 %v4695, %v4969
        %v5020 = vadd.f32 %v4698, %v4972
        %v5021 = vadd.f32 %v4703, %v4977
        %v5022 = vadd.f32 %v4706, %v4980
        %v5023 = vadd.f32 %v4711, %v4985
        %v5024 = vadd.f32 %v4714, %v4988
        %v5025 = vadd.f32 %v4719, %v4993
        %v5026 = vadd.f32 %v4722, %v4996
        %v5027 = vadd.f32 %v4727, %v5001
        %v5028 = vadd.f32 %v4730, %v5004
        %v5029 = vadd.f32 %v4735, %v5009
        %v5030 = vadd.f32 %v4738, %v5012
        %s5031 = scalar_lea.vmem [#allocation2], 12
        %v5032 = vld [vmem:[%s5031] sm:$0xf]
        %v5033 = vld [vmem:[%s5031 + $0x4] sm:$0xf]
        %v5034 = vld [vmem:[%s5031 + $0xc] sm:$0xf]
        %v5035 = vld [vmem:[%s5031 + $0x10] sm:$0xf]
        %v5036 = vld [vmem:[%s5031 + $0x18] sm:$0xf]
        %v5037 = vld [vmem:[%s5031 + $0x1c] sm:$0xf]
        %v5038 = vld [vmem:[%s5031 + $0x24] sm:$0xf]
        %v5039 = vld [vmem:[%s5031 + $0x28] sm:$0xf]
        %v5040 = vld [vmem:[%s5031 + $0x30] sm:$0xf]
        %v5041 = vld [vmem:[%s5031 + $0x34] sm:$0xf]
        %v5042 = vld [vmem:[%s5031 + $0x3c] sm:$0xf]
        %v5043 = vld [vmem:[%s5031 + $0x40] sm:$0xf]
        %v5044 = vld [vmem:[%s5031 + $0x48] sm:$0xf]
        %v5045 = vld [vmem:[%s5031 + $0x4c] sm:$0xf]
        %v5046 = vld [vmem:[%s5031 + $0x54] sm:$0xf]
        %v5047 = vld [vmem:[%s5031 + $0x58] sm:$0xf]
        %s5048 = scalar_lea.vmem [#allocation3], 192
        %v5049 = vld [vmem:[%s5048] sm:$0xf]
        %v5050 = vld [vmem:[%s5048 + $0x4] sm:$0xf]
        %v5051 = vld [vmem:[%s5048 + $0x8] sm:$0xf]
        %v5052 = vld [vmem:[%s5048 + $0xc] sm:$0xf]
        %v5053 = vld [vmem:[%s5048 + $0x10] sm:$0xf]
        %v5054 = vld [vmem:[%s5048 + $0x14] sm:$0xf]
        %v5055 = vld [vmem:[%s5048 + $0x18] sm:$0xf]
        %v5056 = vld [vmem:[%s5048 + $0x1c] sm:$0xf]
        %v5057 = vld [vmem:[%s5048 + $0x20] sm:$0xf]
        %v5058 = vld [vmem:[%s5048 + $0x24] sm:$0xf]
        %v5059 = vld [vmem:[%s5048 + $0x28] sm:$0xf]
        %v5060 = vld [vmem:[%s5048 + $0x2c] sm:$0xf]
        %v5061 = vld [vmem:[%s5048 + $0x30] sm:$0xf]
        %v5062 = vld [vmem:[%s5048 + $0x34] sm:$0xf]
        %v5063 = vld [vmem:[%s5048 + $0x38] sm:$0xf]
        %v5064 = vld [vmem:[%s5048 + $0x3c] sm:$0xf]
        %v5081 = vunpack.c.l.b16 %v5032
        %v5082 = vunpack.c.l.b16 %v5033
        %v5083 = vunpack.c.l.b16 %v5034
        %v5084 = vunpack.c.l.b16 %v5035
        %v5085 = vunpack.c.l.b16 %v5036
        %v5086 = vunpack.c.l.b16 %v5037
        %v5087 = vunpack.c.l.b16 %v5038
        %v5088 = vunpack.c.l.b16 %v5039
        %v5089 = vunpack.c.l.b16 %v5040
        %v5090 = vunpack.c.l.b16 %v5041
        %v5091 = vunpack.c.l.b16 %v5042
        %v5092 = vunpack.c.l.b16 %v5043
        %v5093 = vunpack.c.l.b16 %v5044
        %v5094 = vunpack.c.l.b16 %v5045
        %v5095 = vunpack.c.l.b16 %v5046
        %v5096 = vunpack.c.l.b16 %v5047
        %v5097 = vpack.c.b16 %v5082, %v5081
        %v5098 = vpack.c.b16 %v5084, %v5083
        %v5099 = vpack.c.b16 %v5086, %v5085
        %v5100 = vpack.c.b16 %v5088, %v5087
        %v5101 = vpack.c.b16 %v5090, %v5089
        %v5102 = vpack.c.b16 %v5092, %v5091
        %v5103 = vpack.c.b16 %v5094, %v5093
        %v5104 = vpack.c.b16 %v5096, %v5095
        %v5129 = vunpack.c.l.b16 %v5049
        %v5130 = vunpack.c.l.b16 %v5050
        %v5131 = vunpack.c.l.b16 %v5051
        %v5132 = vunpack.c.l.b16 %v5052
        %v5133 = vunpack.c.l.b16 %v5053
        %v5134 = vunpack.c.l.b16 %v5054
        %v5135 = vunpack.c.l.b16 %v5055
        %v5136 = vunpack.c.l.b16 %v5056
        %v5137 = vunpack.c.l.b16 %v5057
        %v5138 = vunpack.c.l.b16 %v5058
        %v5139 = vunpack.c.l.b16 %v5059
        %v5140 = vunpack.c.l.b16 %v5060
        %v5141 = vunpack.c.l.b16 %v5061
        %v5142 = vunpack.c.l.b16 %v5062
        %v5143 = vunpack.c.l.b16 %v5063
        %v5144 = vunpack.c.l.b16 %v5064
        %v5145 = vpack.c.b16 %v5130, %v5129
        %v5146 = vpack.c.b16 %v5132, %v5131
        %v5147 = vpack.c.b16 %v5134, %v5133
        %v5148 = vpack.c.b16 %v5136, %v5135
        %v5149 = vpack.c.b16 %v5138, %v5137
        %v5150 = vpack.c.b16 %v5140, %v5139
        %v5151 = vpack.c.b16 %v5142, %v5141
        %v5152 = vpack.c.b16 %v5144, %v5143
        %5161 = vmatprep.subr.bf16.mxu0 0
        %5162 = vmatpush1.bf16.msra.mxu0 %v5145
        %5163 = vmatprep.subr.bf16.mxu0 0
        %5164 = vmatpush1.bf16.msra.mxu0 %v5146
        %5165 = vmatprep.subr.bf16.mxu0 0
        %5166 = vmatpush1.bf16.msra.mxu0 %v5147
        %5167 = vmatprep.subr.bf16.mxu0 0
        %5168 = vmatpush1.bf16.msra.mxu0 %v5148
        %5169 = vmatprep.subr.bf16.mxu0 0
        %5170 = vmatpush1.bf16.msra.mxu0 %v5149
        %5171 = vmatprep.subr.bf16.mxu0 0
        %5172 = vmatpush1.bf16.msra.mxu0 %v5150
        %5173 = vmatprep.subr.bf16.mxu0 0
        %5174 = vmatpush1.bf16.msra.mxu0 %v5151
        %5175 = vmatprep.subr.bf16.mxu0 0
        %5176 = vmatpush1.bf16.msra.mxu0 %v5152
        %5177 = vmatprep.subr.bf16.mxu0 0
        %5178 = vmatpush1.bf16.msra.mxu0 0
        %5179 = vmatprep.subr.bf16.mxu0 0
        %5180 = vmatpush1.bf16.msra.mxu0 0
        %5181 = vmatprep.subr.bf16.mxu0 0
        %5182 = vmatpush1.bf16.msra.mxu0 0
        %5183 = vmatprep.subr.bf16.mxu0 0
        %5184 = vmatpush1.bf16.msra.mxu0 0
        %5185 = vmatprep.subr.bf16.mxu0 0
        %5186 = vmatpush1.bf16.msra.mxu0 0
        %5187 = vmatprep.subr.bf16.mxu0 0
        %5188 = vmatpush1.bf16.msra.mxu0 0
        %5189 = vmatprep.subr.bf16.mxu0 0
        %5190 = vmatpush1.bf16.msra.mxu0 0
        %5191 = vmatprep.subr.bf16.mxu0 0
        %5192 = vmatpush1.bf16.msra.mxu0 0
        %5193 = vmatprep.mubr.bf16.mxu0 0
        %5194 = vmatmul.mubr.bf16.gmra.mrb[0].mxu0 %v5097
        %v5195 = vpop.f32.mrb[0].mxu0
        %v5196 = vadd.f32 0.0, %v5195
        %v5197 = vpop.f32.mrb[0].mxu0
        %v5198 = vpop.f32.mrb[0].mxu0
        %v5199 = vadd.f32 0.0, %v5198
        %v5200 = vpop.f32.mrb[0].mxu0
        %5201 = vmatprep.mubr.bf16.mxu0 0
        %5202 = vmatmul.mubr.bf16.gmra.mrb[0].mxu0 %v5098
        %v5203 = vpop.f32.mrb[0].mxu0
        %v5204 = vadd.f32 0.0, %v5203
        %v5205 = vpop.f32.mrb[0].mxu0
        %v5206 = vpop.f32.mrb[0].mxu0
        %v5207 = vadd.f32 0.0, %v5206
        %v5208 = vpop.f32.mrb[0].mxu0
        %5209 = vmatprep.mubr.bf16.mxu0 0
        %5210 = vmatmul.mubr.bf16.gmra.mrb[0].mxu0 %v5099
        %v5211 = vpop.f32.mrb[0].mxu0
        %v5212 = vadd.f32 0.0, %v5211
        %v5213 = vpop.f32.mrb[0].mxu0
        %v5214 = vpop.f32.mrb[0].mxu0
        %v5215 = vadd.f32 0.0, %v5214
        %v5216 = vpop.f32.mrb[0].mxu0
        %5217 = vmatprep.mubr.bf16.mxu0 0
        %5218 = vmatmul.mubr.bf16.gmra.mrb[0].mxu0 %v5100
        %v5219 = vpop.f32.mrb[0].mxu0
        %v5220 = vadd.f32 0.0, %v5219
        %v5221 = vpop.f32.mrb[0].mxu0
        %v5222 = vpop.f32.mrb[0].mxu0
        %v5223 = vadd.f32 0.0, %v5222
        %v5224 = vpop.f32.mrb[0].mxu0
        %5225 = vmatprep.mubr.bf16.mxu0 0
        %5226 = vmatmul.mubr.bf16.gmra.mrb[0].mxu0 %v5101
        %v5227 = vpop.f32.mrb[0].mxu0
        %v5228 = vadd.f32 0.0, %v5227
        %v5229 = vpop.f32.mrb[0].mxu0
        %v5230 = vpop.f32.mrb[0].mxu0
        %v5231 = vadd.f32 0.0, %v5230
        %v5232 = vpop.f32.mrb[0].mxu0
        %5233 = vmatprep.mubr.bf16.mxu0 0
        %5234 = vmatmul.mubr.bf16.gmra.mrb[0].mxu0 %v5102
        %v5235 = vpop.f32.mrb[0].mxu0
        %v5236 = vadd.f32 0.0, %v5235
        %v5237 = vpop.f32.mrb[0].mxu0
        %v5238 = vpop.f32.mrb[0].mxu0
        %v5239 = vadd.f32 0.0, %v5238
        %v5240 = vpop.f32.mrb[0].mxu0
        %5241 = vmatprep.mubr.bf16.mxu0 0
        %5242 = vmatmul.mubr.bf16.gmra.mrb[0].mxu0 %v5103
        %v5243 = vpop.f32.mrb[0].mxu0
        %v5244 = vadd.f32 0.0, %v5243
        %v5245 = vpop.f32.mrb[0].mxu0
        %v5246 = vpop.f32.mrb[0].mxu0
        %v5247 = vadd.f32 0.0, %v5246
        %v5248 = vpop.f32.mrb[0].mxu0
        %5249 = vmatprep.mubr.bf16.mxu0 0
        %5250 = vmatmul.mubr.bf16.gmra.mrb[0].mxu0 %v5104
        %v5251 = vpop.f32.mrb[0].mxu0
        %v5252 = vadd.f32 0.0, %v5251
        %v5253 = vpop.f32.mrb[0].mxu0
        %v5254 = vpop.f32.mrb[0].mxu0
        %v5255 = vadd.f32 0.0, %v5254
        %v5256 = vpop.f32.mrb[0].mxu0
        %5257 = vdwg.mxu0
        %v5258 = vadd.f32 %v5015, %v5196
        %v5259 = vadd.f32 %v5016, %v5199
        %v5260 = vadd.f32 %v5017, %v5204
        %v5261 = vadd.f32 %v5018, %v5207
        %v5262 = vadd.f32 %v5019, %v5212
        %v5263 = vadd.f32 %v5020, %v5215
        %v5264 = vadd.f32 %v5021, %v5220
        %v5265 = vadd.f32 %v5022, %v5223
        %v5266 = vadd.f32 %v5023, %v5228
        %v5267 = vadd.f32 %v5024, %v5231
        %v5268 = vadd.f32 %v5025, %v5236
        %v5269 = vadd.f32 %v5026, %v5239
        %v5270 = vadd.f32 %v5027, %v5244
        %v5271 = vadd.f32 %v5028, %v5247
        %v5272 = vadd.f32 %v5029, %v5252
        %v5273 = vadd.f32 %v5030, %v5255
        %v5274 = vld [vmem:[%s5031] sm:$0xf]
        %v5275 = vld [vmem:[%s5031 + $0x4] sm:$0xf]
        %v5276 = vld [vmem:[%s5031 + $0x8] sm:$0x1]
        %v5277 = vld [vmem:[%s5031 + $0xc] sm:$0xf]
        %v5278 = vld [vmem:[%s5031 + $0x10] sm:$0xf]
        %v5279 = vld [vmem:[%s5031 + $0x14] sm:$0x1]
        %v5280 = vld [vmem:[%s5031 + $0x18] sm:$0xf]
        %v5281 = vld [vmem:[%s5031 + $0x1c] sm:$0xf]
        %v5282 = vld [vmem:[%s5031 + $0x20] sm:$0x1]
        %v5283 = vld [vmem:[%s5031 + $0x24] sm:$0xf]
        %v5284 = vld [vmem:[%s5031 + $0x28] sm:$0xf]
        %v5285 = vld [vmem:[%s5031 + $0x2c] sm:$0x1]
        %v5286 = vld [vmem:[%s5031 + $0x30] sm:$0xf]
        %v5287 = vld [vmem:[%s5031 + $0x34] sm:$0xf]
        %v5288 = vld [vmem:[%s5031 + $0x38] sm:$0x1]
        %v5289 = vld [vmem:[%s5031 + $0x3c] sm:$0xf]
        %v5290 = vld [vmem:[%s5031 + $0x40] sm:$0xf]
        %v5291 = vld [vmem:[%s5031 + $0x44] sm:$0x1]
        %v5292 = vld [vmem:[%s5031 + $0x48] sm:$0xf]
        %v5293 = vld [vmem:[%s5031 + $0x4c] sm:$0xf]
        %v5294 = vld [vmem:[%s5031 + $0x50] sm:$0x1]
        %v5295 = vld [vmem:[%s5031 + $0x54] sm:$0xf]
        %v5296 = vld [vmem:[%s5031 + $0x58] sm:$0xf]
        %v5297 = vld [vmem:[%s5031 + $0x5c] sm:$0x1]
        %v5299 = vshrl.u32 %v5274, 16
        %v5301 = vrot.slane %v5299, 4
        %v5302 = vshll.u32 %v5274, 16
        %v5304 = vrot.slane %v5302, 5
        %v5305 = vor.u32 %v5301, %v5304
        %v5306 = vrot.slane %v5305, 4
        %v5308 = vshll.u32 %v5275, 16
        %v5310 = vrot.slane %v5308, 5
        %v5311 = vsel %vm370, %v5306, %v5310
        %v5312 = vshrl.u32 %v5275, 16
        %v5314 = vrot.slane %v5312, 4
        %v5315 = vor.u32 %v5314, %v5310
        %v5316 = vrot.slane %v5315, 4
        %v5318 = vshll.u32 %v5276, 16
        %v5320 = vrot.slane %v5318, 5
        %v5321 = vsel %vm370, %v5316, %v5320
        %v5323 = vshrl.u32 %v5277, 16
        %v5325 = vrot.slane %v5323, 4
        %v5326 = vshll.u32 %v5277, 16
        %v5328 = vrot.slane %v5326, 5
        %v5329 = vor.u32 %v5325, %v5328
        %v5330 = vrot.slane %v5329, 4
        %v5332 = vshll.u32 %v5278, 16
        %v5334 = vrot.slane %v5332, 5
        %v5335 = vsel %vm370, %v5330, %v5334
        %v5336 = vshrl.u32 %v5278, 16
        %v5338 = vrot.slane %v5336, 4
        %v5339 = vor.u32 %v5338, %v5334
        %v5340 = vrot.slane %v5339, 4
        %v5342 = vshll.u32 %v5279, 16
        %v5344 = vrot.slane %v5342, 5
        %v5345 = vsel %vm370, %v5340, %v5344
        %v5347 = vshrl.u32 %v5280, 16
        %v5349 = vrot.slane %v5347, 4
        %v5350 = vshll.u32 %v5280, 16
        %v5352 = vrot.slane %v5350, 5
        %v5353 = vor.u32 %v5349, %v5352
        %v5354 = vrot.slane %v5353, 4
        %v5356 = vshll.u32 %v5281, 16
        %v5358 = vrot.slane %v5356, 5
        %v5359 = vsel %vm370, %v5354, %v5358
        %v5360 = vshrl.u32 %v5281, 16
        %v5362 = vrot.slane %v5360, 4
        %v5363 = vor.u32 %v5362, %v5358
        %v5364 = vrot.slane %v5363, 4
        %v5366 = vshll.u32 %v5282, 16
        %v5368 = vrot.slane %v5366, 5
        %v5369 = vsel %vm370, %v5364, %v5368
        %v5371 = vshrl.u32 %v5283, 16
        %v5373 = vrot.slane %v5371, 4
        %v5374 = vshll.u32 %v5283, 16
        %v5376 = vrot.slane %v5374, 5
        %v5377 = vor.u32 %v5373, %v5376
        %v5378 = vrot.slane %v5377, 4
        %v5380 = vshll.u32 %v5284, 16
        %v5382 = vrot.slane %v5380, 5
        %v5383 = vsel %vm370, %v5378, %v5382
        %v5384 = vshrl.u32 %v5284, 16
        %v5386 = vrot.slane %v5384, 4
        %v5387 = vor.u32 %v5386, %v5382
        %v5388 = vrot.slane %v5387, 4
        %v5390 = vshll.u32 %v5285, 16
        %v5392 = vrot.slane %v5390, 5
        %v5393 = vsel %vm370, %v5388, %v5392
        %v5395 = vshrl.u32 %v5286, 16
        %v5397 = vrot.slane %v5395, 4
        %v5398 = vshll.u32 %v5286, 16
        %v5400 = vrot.slane %v5398, 5
        %v5401 = vor.u32 %v5397, %v5400
        %v5402 = vrot.slane %v5401, 4
        %v5404 = vshll.u32 %v5287, 16
        %v5406 = vrot.slane %v5404, 5
        %v5407 = vsel %vm370, %v5402, %v5406
        %v5408 = vshrl.u32 %v5287, 16
        %v5410 = vrot.slane %v5408, 4
        %v5411 = vor.u32 %v5410, %v5406
        %v5412 = vrot.slane %v5411, 4
        %v5414 = vshll.u32 %v5288, 16
        %v5416 = vrot.slane %v5414, 5
        %v5417 = vsel %vm370, %v5412, %v5416
        %v5419 = vshrl.u32 %v5289, 16
        %v5421 = vrot.slane %v5419, 4
        %v5422 = vshll.u32 %v5289, 16
        %v5424 = vrot.slane %v5422, 5
        %v5425 = vor.u32 %v5421, %v5424
        %v5426 = vrot.slane %v5425, 4
        %v5428 = vshll.u32 %v5290, 16
        %v5430 = vrot.slane %v5428, 5
        %v5431 = vsel %vm370, %v5426, %v5430
        %v5432 = vshrl.u32 %v5290, 16
        %v5434 = vrot.slane %v5432, 4
        %v5435 = vor.u32 %v5434, %v5430
        %v5436 = vrot.slane %v5435, 4
        %v5438 = vshll.u32 %v5291, 16
        %v5440 = vrot.slane %v5438, 5
        %v5441 = vsel %vm370, %v5436, %v5440
        %v5443 = vshrl.u32 %v5292, 16
        %v5445 = vrot.slane %v5443, 4
        %v5446 = vshll.u32 %v5292, 16
        %v5448 = vrot.slane %v5446, 5
        %v5449 = vor.u32 %v5445, %v5448
        %v5450 = vrot.slane %v5449, 4
        %v5452 = vshll.u32 %v5293, 16
        %v5454 = vrot.slane %v5452, 5
        %v5455 = vsel %vm370, %v5450, %v5454
        %v5456 = vshrl.u32 %v5293, 16
        %v5458 = vrot.slane %v5456, 4
        %v5459 = vor.u32 %v5458, %v5454
        %v5460 = vrot.slane %v5459, 4
        %v5462 = vshll.u32 %v5294, 16
        %v5464 = vrot.slane %v5462, 5
        %v5465 = vsel %vm370, %v5460, %v5464
        %v5467 = vshrl.u32 %v5295, 16
        %v5469 = vrot.slane %v5467, 4
        %v5470 = vshll.u32 %v5295, 16
        %v5472 = vrot.slane %v5470, 5
        %v5473 = vor.u32 %v5469, %v5472
        %v5474 = vrot.slane %v5473, 4
        %v5476 = vshll.u32 %v5296, 16
        %v5478 = vrot.slane %v5476, 5
        %v5479 = vsel %vm370, %v5474, %v5478
        %v5480 = vshrl.u32 %v5296, 16
        %v5482 = vrot.slane %v5480, 4
        %v5483 = vor.u32 %v5482, %v5478
        %v5484 = vrot.slane %v5483, 4
        %v5486 = vshll.u32 %v5297, 16
        %v5488 = vrot.slane %v5486, 5
        %v5489 = vsel %vm370, %v5484, %v5488
        %s5490 = scalar_lea.vmem [#allocation3], 256
        %v5491 = vld [vmem:[%s5490] sm:$0xf]
        %v5492 = vld [vmem:[%s5490 + $0x4] sm:$0xf]
        %v5493 = vld [vmem:[%s5490 + $0x8] sm:$0xf]
        %v5494 = vld [vmem:[%s5490 + $0xc] sm:$0xf]
        %v5495 = vld [vmem:[%s5490 + $0x10] sm:$0xf]
        %v5496 = vld [vmem:[%s5490 + $0x14] sm:$0xf]
        %v5497 = vld [vmem:[%s5490 + $0x18] sm:$0xf]
        %v5498 = vld [vmem:[%s5490 + $0x1c] sm:$0xf]
        %v5499 = vld [vmem:[%s5490 + $0x20] sm:$0xf]
        %v5500 = vld [vmem:[%s5490 + $0x24] sm:$0xf]
        %v5501 = vld [vmem:[%s5490 + $0x28] sm:$0xf]
        %v5502 = vld [vmem:[%s5490 + $0x2c] sm:$0xf]
        %v5503 = vld [vmem:[%s5490 + $0x30] sm:$0xf]
        %v5504 = vld [vmem:[%s5490 + $0x34] sm:$0xf]
        %v5505 = vld [vmem:[%s5490 + $0x38] sm:$0xf]
        %v5506 = vld [vmem:[%s5490 + $0x3c] sm:$0xf]
        %v5507 = vunpack.c.l.b16 %v5311
        %v5508 = vunpack.c.l.b16 %v5321
        %v5509 = vunpack.c.l.b16 %v5335
        %v5510 = vunpack.c.l.b16 %v5345
        %v5511 = vunpack.c.l.b16 %v5359
        %v5512 = vunpack.c.l.b16 %v5369
        %v5513 = vunpack.c.l.b16 %v5383
        %v5514 = vunpack.c.l.b16 %v5393
        %v5515 = vunpack.c.l.b16 %v5407
        %v5516 = vunpack.c.l.b16 %v5417
        %v5517 = vunpack.c.l.b16 %v5431
        %v5518 = vunpack.c.l.b16 %v5441
        %v5519 = vunpack.c.l.b16 %v5455
        %v5520 = vunpack.c.l.b16 %v5465
        %v5521 = vunpack.c.l.b16 %v5479
        %v5522 = vunpack.c.l.b16 %v5489
        %v5523 = vpack.c.b16 %v5508, %v5507
        %v5524 = vpack.c.b16 %v5510, %v5509
        %v5525 = vpack.c.b16 %v5512, %v5511
        %v5526 = vpack.c.b16 %v5514, %v5513
        %v5527 = vpack.c.b16 %v5516, %v5515
        %v5528 = vpack.c.b16 %v5518, %v5517
        %v5529 = vpack.c.b16 %v5520, %v5519
        %v5530 = vpack.c.b16 %v5522, %v5521
        %v5555 = vunpack.c.l.b16 %v5491
        %v5556 = vunpack.c.l.b16 %v5492
        %v5557 = vunpack.c.l.b16 %v5493
        %v5558 = vunpack.c.l.b16 %v5494
        %v5559 = vunpack.c.l.b16 %v5495
        %v5560 = vunpack.c.l.b16 %v5496
        %v5561 = vunpack.c.l.b16 %v5497
        %v5562 = vunpack.c.l.b16 %v5498
        %v5563 = vunpack.c.l.b16 %v5499
        %v5564 = vunpack.c.l.b16 %v5500
        %v5565 = vunpack.c.l.b16 %v5501
        %v5566 = vunpack.c.l.b16 %v5502
        %v5567 = vunpack.c.l.b16 %v5503
        %v5568 = vunpack.c.l.b16 %v5504
        %v5569 = vunpack.c.l.b16 %v5505
        %v5570 = vunpack.c.l.b16 %v5506
        %v5571 = vpack.c.b16 %v5556, %v5555
        %v5572 = vpack.c.b16 %v5558, %v5557
        %v5573 = vpack.c.b16 %v5560, %v5559
        %v5574 = vpack.c.b16 %v5562, %v5561
        %v5575 = vpack.c.b16 %v5564, %v5563
        %v5576 = vpack.c.b16 %v5566, %v5565
        %v5577 = vpack.c.b16 %v5568, %v5567
        %v5578 = vpack.c.b16 %v5570, %v5569
        %5587 = vmatprep.subr.bf16.mxu0 0
        %5588 = vmatpush1.bf16.msra.mxu0 %v5571
        %5589 = vmatprep.subr.bf16.mxu0 0
        %5590 = vmatpush1.bf16.msra.mxu0 %v5572
        %5591 = vmatprep.subr.bf16.mxu0 0
        %5592 = vmatpush1.bf16.msra.mxu0 %v5573
        %5593 = vmatprep.subr.bf16.mxu0 0
        %5594 = vmatpush1.bf16.msra.mxu0 %v5574
        %5595 = vmatprep.subr.bf16.mxu0 0
        %5596 = vmatpush1.bf16.msra.mxu0 %v5575
        %5597 = vmatprep.subr.bf16.mxu0 0
        %5598 = vmatpush1.bf16.msra.mxu0 %v5576
        %5599 = vmatprep.subr.bf16.mxu0 0
        %5600 = vmatpush1.bf16.msra.mxu0 %v5577
        %5601 = vmatprep.subr.bf16.mxu0 0
        %5602 = vmatpush1.bf16.msra.mxu0 %v5578
        %5603 = vmatprep.subr.bf16.mxu0 0
        %5604 = vmatpush1.bf16.msra.mxu0 0
        %5605 = vmatprep.subr.bf16.mxu0 0
        %5606 = vmatpush1.bf16.msra.mxu0 0
        %5607 = vmatprep.subr.bf16.mxu0 0
        %5608 = vmatpush1.bf16.msra.mxu0 0
        %5609 = vmatprep.subr.bf16.mxu0 0
        %5610 = vmatpush1.bf16.msra.mxu0 0
        %5611 = vmatprep.subr.bf16.mxu0 0
        %5612 = vmatpush1.bf16.msra.mxu0 0
        %5613 = vmatprep.subr.bf16.mxu0 0
        %5614 = vmatpush1.bf16.msra.mxu0 0
        %5615 = vmatprep.subr.bf16.mxu0 0
        %5616 = vmatpush1.bf16.msra.mxu0 0
        %5617 = vmatprep.subr.bf16.mxu0 0
        %5618 = vmatpush1.bf16.msra.mxu0 0
        %5619 = vmatprep.mubr.bf16.mxu0 0
        %5620 = vmatmul.mubr.bf16.gmra.mrb[0].mxu0 %v5523
        %v5621 = vpop.f32.mrb[0].mxu0
        %v5622 = vadd.f32 0.0, %v5621
        %v5623 = vpop.f32.mrb[0].mxu0
        %v5624 = vpop.f32.mrb[0].mxu0
        %v5625 = vadd.f32 0.0, %v5624
        %v5626 = vpop.f32.mrb[0].mxu0
        %5627 = vmatprep.mubr.bf16.mxu0 0
        %5628 = vmatmul.mubr.bf16.gmra.mrb[0].mxu0 %v5524
        %v5629 = vpop.f32.mrb[0].mxu0
        %v5630 = vadd.f32 0.0, %v5629
        %v5631 = vpop.f32.mrb[0].mxu0
        %v5632 = vpop.f32.mrb[0].mxu0
        %v5633 = vadd.f32 0.0, %v5632
        %v5634 = vpop.f32.mrb[0].mxu0
        %5635 = vmatprep.mubr.bf16.mxu0 0
        %5636 = vmatmul.mubr.bf16.gmra.mrb[0].mxu0 %v5525
        %v5637 = vpop.f32.mrb[0].mxu0
        %v5638 = vadd.f32 0.0, %v5637
        %v5639 = vpop.f32.mrb[0].mxu0
        %v5640 = vpop.f32.mrb[0].mxu0
        %v5641 = vadd.f32 0.0, %v5640
        %v5642 = vpop.f32.mrb[0].mxu0
        %5643 = vmatprep.mubr.bf16.mxu0 0
        %5644 = vmatmul.mubr.bf16.gmra.mrb[0].mxu0 %v5526
        %v5645 = vpop.f32.mrb[0].mxu0
        %v5646 = vadd.f32 0.0, %v5645
        %v5647 = vpop.f32.mrb[0].mxu0
        %v5648 = vpop.f32.mrb[0].mxu0
        %v5649 = vadd.f32 0.0, %v5648
        %v5650 = vpop.f32.mrb[0].mxu0
        %5651 = vmatprep.mubr.bf16.mxu0 0
        %5652 = vmatmul.mubr.bf16.gmra.mrb[0].mxu0 %v5527
        %v5653 = vpop.f32.mrb[0].mxu0
        %v5654 = vadd.f32 0.0, %v5653
        %v5655 = vpop.f32.mrb[0].mxu0
        %v5656 = vpop.f32.mrb[0].mxu0
        %v5657 = vadd.f32 0.0, %v5656
        %v5658 = vpop.f32.mrb[0].mxu0
        %5659 = vmatprep.mubr.bf16.mxu0 0
        %5660 = vmatmul.mubr.bf16.gmra.mrb[0].mxu0 %v5528
        %v5661 = vpop.f32.mrb[0].mxu0
        %v5662 = vadd.f32 0.0, %v5661
        %v5663 = vpop.f32.mrb[0].mxu0
        %v5664 = vpop.f32.mrb[0].mxu0
        %v5665 = vadd.f32 0.0, %v5664
        %v5666 = vpop.f32.mrb[0].mxu0
        %5667 = vmatprep.mubr.bf16.mxu0 0
        %5668 = vmatmul.mubr.bf16.gmra.mrb[0].mxu0 %v5529
        %v5669 = vpop.f32.mrb[0].mxu0
        %v5670 = vadd.f32 0.0, %v5669
        %v5671 = vpop.f32.mrb[0].mxu0
        %v5672 = vpop.f32.mrb[0].mxu0
        %v5673 = vadd.f32 0.0, %v5672
        %v5674 = vpop.f32.mrb[0].mxu0
        %5675 = vmatprep.mubr.bf16.mxu0 0
        %5676 = vmatmul.mubr.bf16.gmra.mrb[0].mxu0 %v5530
        %v5677 = vpop.f32.mrb[0].mxu0
        %v5678 = vadd.f32 0.0, %v5677
        %v5679 = vpop.f32.mrb[0].mxu0
        %v5680 = vpop.f32.mrb[0].mxu0
        %v5681 = vadd.f32 0.0, %v5680
        %v5682 = vpop.f32.mrb[0].mxu0
        %5683 = vdwg.mxu0
        %v5684 = vadd.f32 %v5258, %v5622
        %v5685 = vadd.f32 %v5259, %v5625
        %v5686 = vadd.f32 %v5260, %v5630
        %v5687 = vadd.f32 %v5261, %v5633
        %v5688 = vadd.f32 %v5262, %v5638
        %v5689 = vadd.f32 %v5263, %v5641
        %v5690 = vadd.f32 %v5264, %v5646
        %v5691 = vadd.f32 %v5265, %v5649
        %v5692 = vadd.f32 %v5266, %v5654
        %v5693 = vadd.f32 %v5267, %v5657
        %v5694 = vadd.f32 %v5268, %v5662
        %v5695 = vadd.f32 %v5269, %v5665
        %v5696 = vadd.f32 %v5270, %v5670
        %v5697 = vadd.f32 %v5271, %v5673
        %v5698 = vadd.f32 %v5272, %v5678
        %v5699 = vadd.f32 %v5273, %v5681
        %v5700 = vld [vmem:[%s5031] sm:$0xe]
        %v5701 = vld [vmem:[%s5031 + $0xc] sm:$0xe]
        %v5702 = vld [vmem:[%s5031 + $0x18] sm:$0xe]
        %v5703 = vld [vmem:[%s5031 + $0x24] sm:$0xe]
        %v5704 = vld [vmem:[%s5031 + $0x30] sm:$0xe]
        %v5705 = vld [vmem:[%s5031 + $0x3c] sm:$0xe]
        %v5706 = vld [vmem:[%s5031 + $0x48] sm:$0xe]
        %v5707 = vld [vmem:[%s5031 + $0x54] sm:$0xe]
        %v5732 = vrot.slane %v5700, 5
        %v5733 = vrot.slane %v5732, 4
        %v5734 = vrot.slane %v5275, 5
        %v5735 = vsel %vm1082, %v5733, %v5734
        %v5736 = vrot.slane %v5734, 4
        %v5737 = vrot.slane %v5276, 5
        %v5738 = vsel %vm1082, %v5736, %v5737
        %v5739 = vrot.slane %v5701, 5
        %v5740 = vrot.slane %v5739, 4
        %v5741 = vrot.slane %v5278, 5
        %v5742 = vsel %vm1082, %v5740, %v5741
        %v5743 = vrot.slane %v5741, 4
        %v5744 = vrot.slane %v5279, 5
        %v5745 = vsel %vm1082, %v5743, %v5744
        %v5746 = vrot.slane %v5702, 5
        %v5747 = vrot.slane %v5746, 4
        %v5748 = vrot.slane %v5281, 5
        %v5749 = vsel %vm1082, %v5747, %v5748
        %v5750 = vrot.slane %v5748, 4
        %v5751 = vrot.slane %v5282, 5
        %v5752 = vsel %vm1082, %v5750, %v5751
        %v5753 = vrot.slane %v5703, 5
        %v5754 = vrot.slane %v5753, 4
        %v5755 = vrot.slane %v5284, 5
        %v5756 = vsel %vm1082, %v5754, %v5755
        %v5757 = vrot.slane %v5755, 4
        %v5758 = vrot.slane %v5285, 5
        %v5759 = vsel %vm1082, %v5757, %v5758
        %v5760 = vrot.slane %v5704, 5
        %v5761 = vrot.slane %v5760, 4
        %v5762 = vrot.slane %v5287, 5
        %v5763 = vsel %vm1082, %v5761, %v5762
        %v5764 = vrot.slane %v5762, 4
        %v5765 = vrot.slane %v5288, 5
        %v5766 = vsel %vm1082, %v5764, %v5765
        %v5767 = vrot.slane %v5705, 5
        %v5768 = vrot.slane %v5767, 4
        %v5769 = vrot.slane %v5290, 5
        %v5770 = vsel %vm1082, %v5768, %v5769
        %v5771 = vrot.slane %v5769, 4
        %v5772 = vrot.slane %v5291, 5
        %v5773 = vsel %vm1082, %v5771, %v5772
        %v5774 = vrot.slane %v5706, 5
        %v5775 = vrot.slane %v5774, 4
        %v5776 = vrot.slane %v5293, 5
        %v5777 = vsel %vm1082, %v5775, %v5776
        %v5778 = vrot.slane %v5776, 4
        %v5779 = vrot.slane %v5294, 5
        %v5780 = vsel %vm1082, %v5778, %v5779
        %v5781 = vrot.slane %v5707, 5
        %v5782 = vrot.slane %v5781, 4
        %v5783 = vrot.slane %v5296, 5
        %v5784 = vsel %vm1082, %v5782, %v5783
        %v5785 = vrot.slane %v5783, 4
        %v5786 = vrot.slane %v5297, 5
        %v5787 = vsel %vm1082, %v5785, %v5786
        %s5788 = scalar_lea.vmem [#allocation3], 320
        %v5789 = vld [vmem:[%s5788] sm:$0xf]
        %v5790 = vld [vmem:[%s5788 + $0x4] sm:$0xf]
        %v5791 = vld [vmem:[%s5788 + $0x8] sm:$0xf]
        %v5792 = vld [vmem:[%s5788 + $0xc] sm:$0xf]
        %v5793 = vld [vmem:[%s5788 + $0x10] sm:$0xf]
        %v5794 = vld [vmem:[%s5788 + $0x14] sm:$0xf]
        %v5795 = vld [vmem:[%s5788 + $0x18] sm:$0xf]
        %v5796 = vld [vmem:[%s5788 + $0x1c] sm:$0xf]
        %v5797 = vld [vmem:[%s5788 + $0x20] sm:$0xf]
        %v5798 = vld [vmem:[%s5788 + $0x24] sm:$0xf]
        %v5799 = vld [vmem:[%s5788 + $0x28] sm:$0xf]
        %v5800 = vld [vmem:[%s5788 + $0x2c] sm:$0xf]
        %v5801 = vld [vmem:[%s5788 + $0x30] sm:$0xf]
        %v5802 = vld [vmem:[%s5788 + $0x34] sm:$0xf]
        %v5803 = vld [vmem:[%s5788 + $0x38] sm:$0xf]
        %v5804 = vld [vmem:[%s5788 + $0x3c] sm:$0xf]
        %v5805 = vunpack.c.l.b16 %v5735
        %v5806 = vunpack.c.l.b16 %v5738
        %v5807 = vunpack.c.l.b16 %v5742
        %v5808 = vunpack.c.l.b16 %v5745
        %v5809 = vunpack.c.l.b16 %v5749
        %v5810 = vunpack.c.l.b16 %v5752
        %v5811 = vunpack.c.l.b16 %v5756
        %v5812 = vunpack.c.l.b16 %v5759
        %v5813 = vunpack.c.l.b16 %v5763
        %v5814 = vunpack.c.l.b16 %v5766
        %v5815 = vunpack.c.l.b16 %v5770
        %v5816 = vunpack.c.l.b16 %v5773
        %v5817 = vunpack.c.l.b16 %v5777
        %v5818 = vunpack.c.l.b16 %v5780
        %v5819 = vunpack.c.l.b16 %v5784
        %v5820 = vunpack.c.l.b16 %v5787
        %v5821 = vpack.c.b16 %v5806, %v5805
        %v5822 = vpack.c.b16 %v5808, %v5807
        %v5823 = vpack.c.b16 %v5810, %v5809
        %v5824 = vpack.c.b16 %v5812, %v5811
        %v5825 = vpack.c.b16 %v5814, %v5813
        %v5826 = vpack.c.b16 %v5816, %v5815
        %v5827 = vpack.c.b16 %v5818, %v5817
        %v5828 = vpack.c.b16 %v5820, %v5819
        %v5853 = vunpack.c.l.b16 %v5789
        %v5854 = vunpack.c.l.b16 %v5790
        %v5855 = vunpack.c.l.b16 %v5791
        %v5856 = vunpack.c.l.b16 %v5792
        %v5857 = vunpack.c.l.b16 %v5793
        %v5858 = vunpack.c.l.b16 %v5794
        %v5859 = vunpack.c.l.b16 %v5795
        %v5860 = vunpack.c.l.b16 %v5796
        %v5861 = vunpack.c.l.b16 %v5797
        %v5862 = vunpack.c.l.b16 %v5798
        %v5863 = vunpack.c.l.b16 %v5799
        %v5864 = vunpack.c.l.b16 %v5800
        %v5865 = vunpack.c.l.b16 %v5801
        %v5866 = vunpack.c.l.b16 %v5802
        %v5867 = vunpack.c.l.b16 %v5803
        %v5868 = vunpack.c.l.b16 %v5804
        %v5869 = vpack.c.b16 %v5854, %v5853
        %v5870 = vpack.c.b16 %v5856, %v5855
        %v5871 = vpack.c.b16 %v5858, %v5857
        %v5872 = vpack.c.b16 %v5860, %v5859
        %v5873 = vpack.c.b16 %v5862, %v5861
        %v5874 = vpack.c.b16 %v5864, %v5863
        %v5875 = vpack.c.b16 %v5866, %v5865
        %v5876 = vpack.c.b16 %v5868, %v5867
        %5885 = vmatprep.subr.bf16.mxu0 0
        %5886 = vmatpush1.bf16.msra.mxu0 %v5869
        %5887 = vmatprep.subr.bf16.mxu0 0
        %5888 = vmatpush1.bf16.msra.mxu0 %v5870
        %5889 = vmatprep.subr.bf16.mxu0 0
        %5890 = vmatpush1.bf16.msra.mxu0 %v5871
        %5891 = vmatprep.subr.bf16.mxu0 0
        %5892 = vmatpush1.bf16.msra.mxu0 %v5872
        %5893 = vmatprep.subr.bf16.mxu0 0
        %5894 = vmatpush1.bf16.msra.mxu0 %v5873
        %5895 = vmatprep.subr.bf16.mxu0 0
        %5896 = vmatpush1.bf16.msra.mxu0 %v5874
        %5897 = vmatprep.subr.bf16.mxu0 0
        %5898 = vmatpush1.bf16.msra.mxu0 %v5875
        %5899 = vmatprep.subr.bf16.mxu0 0
        %5900 = vmatpush1.bf16.msra.mxu0 %v5876
        %5901 = vmatprep.subr.bf16.mxu0 0
        %5902 = vmatpush1.bf16.msra.mxu0 0
        %5903 = vmatprep.subr.bf16.mxu0 0
        %5904 = vmatpush1.bf16.msra.mxu0 0
        %5905 = vmatprep.subr.bf16.mxu0 0
        %5906 = vmatpush1.bf16.msra.mxu0 0
        %5907 = vmatprep.subr.bf16.mxu0 0
        %5908 = vmatpush1.bf16.msra.mxu0 0
        %5909 = vmatprep.subr.bf16.mxu0 0
        %5910 = vmatpush1.bf16.msra.mxu0 0
        %5911 = vmatprep.subr.bf16.mxu0 0
        %5912 = vmatpush1.bf16.msra.mxu0 0
        %5913 = vmatprep.subr.bf16.mxu0 0
        %5914 = vmatpush1.bf16.msra.mxu0 0
        %5915 = vmatprep.subr.bf16.mxu0 0
        %5916 = vmatpush1.bf16.msra.mxu0 0
        %5917 = vmatprep.mubr.bf16.mxu0 0
        %5918 = vmatmul.mubr.bf16.gmra.mrb[0].mxu0 %v5821
        %v5919 = vpop.f32.mrb[0].mxu0
        %v5920 = vadd.f32 0.0, %v5919
        %v5921 = vpop.f32.mrb[0].mxu0
        %v5922 = vpop.f32.mrb[0].mxu0
        %v5923 = vadd.f32 0.0, %v5922
        %v5924 = vpop.f32.mrb[0].mxu0
        %5925 = vmatprep.mubr.bf16.mxu0 0
        %5926 = vmatmul.mubr.bf16.gmra.mrb[0].mxu0 %v5822
        %v5927 = vpop.f32.mrb[0].mxu0
        %v5928 = vadd.f32 0.0, %v5927
        %v5929 = vpop.f32.mrb[0].mxu0
        %v5930 = vpop.f32.mrb[0].mxu0
        %v5931 = vadd.f32 0.0, %v5930
        %v5932 = vpop.f32.mrb[0].mxu0
        %5933 = vmatprep.mubr.bf16.mxu0 0
        %5934 = vmatmul.mubr.bf16.gmra.mrb[0].mxu0 %v5823
        %v5935 = vpop.f32.mrb[0].mxu0
        %v5936 = vadd.f32 0.0, %v5935
        %v5937 = vpop.f32.mrb[0].mxu0
        %v5938 = vpop.f32.mrb[0].mxu0
        %v5939 = vadd.f32 0.0, %v5938
        %v5940 = vpop.f32.mrb[0].mxu0
        %5941 = vmatprep.mubr.bf16.mxu0 0
        %5942 = vmatmul.mubr.bf16.gmra.mrb[0].mxu0 %v5824
        %v5943 = vpop.f32.mrb[0].mxu0
        %v5944 = vadd.f32 0.0, %v5943
        %v5945 = vpop.f32.mrb[0].mxu0
        %v5946 = vpop.f32.mrb[0].mxu0
        %v5947 = vadd.f32 0.0, %v5946
        %v5948 = vpop.f32.mrb[0].mxu0
        %5949 = vmatprep.mubr.bf16.mxu0 0
        %5950 = vmatmul.mubr.bf16.gmra.mrb[0].mxu0 %v5825
        %v5951 = vpop.f32.mrb[0].mxu0
        %v5952 = vadd.f32 0.0, %v5951
        %v5953 = vpop.f32.mrb[0].mxu0
        %v5954 = vpop.f32.mrb[0].mxu0
        %v5955 = vadd.f32 0.0, %v5954
        %v5956 = vpop.f32.mrb[0].mxu0
        %5957 = vmatprep.mubr.bf16.mxu0 0
        %5958 = vmatmul.mubr.bf16.gmra.mrb[0].mxu0 %v5826
        %v5959 = vpop.f32.mrb[0].mxu0
        %v5960 = vadd.f32 0.0, %v5959
        %v5961 = vpop.f32.mrb[0].mxu0
        %v5962 = vpop.f32.mrb[0].mxu0
        %v5963 = vadd.f32 0.0, %v5962
        %v5964 = vpop.f32.mrb[0].mxu0
        %5965 = vmatprep.mubr.bf16.mxu0 0
        %5966 = vmatmul.mubr.bf16.gmra.mrb[0].mxu0 %v5827
        %v5967 = vpop.f32.mrb[0].mxu0
        %v5968 = vadd.f32 0.0, %v5967
        %v5969 = vpop.f32.mrb[0].mxu0
        %v5970 = vpop.f32.mrb[0].mxu0
        %v5971 = vadd.f32 0.0, %v5970
        %v5972 = vpop.f32.mrb[0].mxu0
        %5973 = vmatprep.mubr.bf16.mxu0 0
        %5974 = vmatmul.mubr.bf16.gmra.mrb[0].mxu0 %v5828
        %v5975 = vpop.f32.mrb[0].mxu0
        %v5976 = vadd.f32 0.0, %v5975
        %v5977 = vpop.f32.mrb[0].mxu0
        %v5978 = vpop.f32.mrb[0].mxu0
        %v5979 = vadd.f32 0.0, %v5978
        %v5980 = vpop.f32.mrb[0].mxu0
        %5981 = vdwg.mxu0
        %v5982 = vadd.f32 %v5684, %v5920
        %v5983 = vadd.f32 %v5685, %v5923
        %v5984 = vadd.f32 %v5686, %v5928
        %v5985 = vadd.f32 %v5687, %v5931
        %v5986 = vadd.f32 %v5688, %v5936
        %v5987 = vadd.f32 %v5689, %v5939
        %v5988 = vadd.f32 %v5690, %v5944
        %v5989 = vadd.f32 %v5691, %v5947
        %v5990 = vadd.f32 %v5692, %v5952
        %v5991 = vadd.f32 %v5693, %v5955
        %v5992 = vadd.f32 %v5694, %v5960
        %v5993 = vadd.f32 %v5695, %v5963
        %v5994 = vadd.f32 %v5696, %v5968
        %v5995 = vadd.f32 %v5697, %v5971
        %v5996 = vadd.f32 %v5698, %v5976
        %v5997 = vadd.f32 %v5699, %v5979
        %s5998 = scalar_lea.vmem [#allocation2], 24
        %v5999 = vld [vmem:[%s5998] sm:$0xf]
        %v6000 = vld [vmem:[%s5998 + $0x4] sm:$0xf]
        %v6001 = vld [vmem:[%s5998 + $0xc] sm:$0xf]
        %v6002 = vld [vmem:[%s5998 + $0x10] sm:$0xf]
        %v6003 = vld [vmem:[%s5998 + $0x18] sm:$0xf]
        %v6004 = vld [vmem:[%s5998 + $0x1c] sm:$0xf]
        %v6005 = vld [vmem:[%s5998 + $0x24] sm:$0xf]
        %v6006 = vld [vmem:[%s5998 + $0x28] sm:$0xf]
        %v6007 = vld [vmem:[%s5998 + $0x30] sm:$0xf]
        %v6008 = vld [vmem:[%s5998 + $0x34] sm:$0xf]
        %v6009 = vld [vmem:[%s5998 + $0x3c] sm:$0xf]
        %v6010 = vld [vmem:[%s5998 + $0x40] sm:$0xf]
        %v6011 = vld [vmem:[%s5998 + $0x48] sm:$0xf]
        %v6012 = vld [vmem:[%s5998 + $0x4c] sm:$0xf]
        %v6013 = vld [vmem:[%s5998 + $0x54] sm:$0xf]
        %v6014 = vld [vmem:[%s5998 + $0x58] sm:$0xf]
        %s6015 = scalar_lea.vmem [#allocation3], 384
        %v6016 = vld [vmem:[%s6015] sm:$0xf]
        %v6017 = vld [vmem:[%s6015 + $0x4] sm:$0xf]
        %v6018 = vld [vmem:[%s6015 + $0x8] sm:$0xf]
        %v6019 = vld [vmem:[%s6015 + $0xc] sm:$0xf]
        %v6020 = vld [vmem:[%s6015 + $0x10] sm:$0xf]
        %v6021 = vld [vmem:[%s6015 + $0x14] sm:$0xf]
        %v6022 = vld [vmem:[%s6015 + $0x18] sm:$0xf]
        %v6023 = vld [vmem:[%s6015 + $0x1c] sm:$0xf]
        %v6024 = vld [vmem:[%s6015 + $0x20] sm:$0xf]
        %v6025 = vld [vmem:[%s6015 + $0x24] sm:$0xf]
        %v6026 = vld [vmem:[%s6015 + $0x28] sm:$0xf]
        %v6027 = vld [vmem:[%s6015 + $0x2c] sm:$0xf]
        %v6028 = vld [vmem:[%s6015 + $0x30] sm:$0xf]
        %v6029 = vld [vmem:[%s6015 + $0x34] sm:$0xf]
        %v6030 = vld [vmem:[%s6015 + $0x38] sm:$0xf]
        %v6031 = vld [vmem:[%s6015 + $0x3c] sm:$0xf]
        %v6048 = vunpack.c.l.b16 %v5999
        %v6049 = vunpack.c.l.b16 %v6000
        %v6050 = vunpack.c.l.b16 %v6001
        %v6051 = vunpack.c.l.b16 %v6002
        %v6052 = vunpack.c.l.b16 %v6003
        %v6053 = vunpack.c.l.b16 %v6004
        %v6054 = vunpack.c.l.b16 %v6005
        %v6055 = vunpack.c.l.b16 %v6006
        %v6056 = vunpack.c.l.b16 %v6007
        %v6057 = vunpack.c.l.b16 %v6008
        %v6058 = vunpack.c.l.b16 %v6009
        %v6059 = vunpack.c.l.b16 %v6010
        %v6060 = vunpack.c.l.b16 %v6011
        %v6061 = vunpack.c.l.b16 %v6012
        %v6062 = vunpack.c.l.b16 %v6013
        %v6063 = vunpack.c.l.b16 %v6014
        %v6064 = vpack.c.b16 %v6049, %v6048
        %v6065 = vpack.c.b16 %v6051, %v6050
        %v6066 = vpack.c.b16 %v6053, %v6052
        %v6067 = vpack.c.b16 %v6055, %v6054
        %v6068 = vpack.c.b16 %v6057, %v6056
        %v6069 = vpack.c.b16 %v6059, %v6058
        %v6070 = vpack.c.b16 %v6061, %v6060
        %v6071 = vpack.c.b16 %v6063, %v6062
        %v6096 = vunpack.c.l.b16 %v6016
        %v6097 = vunpack.c.l.b16 %v6017
        %v6098 = vunpack.c.l.b16 %v6018
        %v6099 = vunpack.c.l.b16 %v6019
        %v6100 = vunpack.c.l.b16 %v6020
        %v6101 = vunpack.c.l.b16 %v6021
        %v6102 = vunpack.c.l.b16 %v6022
        %v6103 = vunpack.c.l.b16 %v6023
        %v6104 = vunpack.c.l.b16 %v6024
        %v6105 = vunpack.c.l.b16 %v6025
        %v6106 = vunpack.c.l.b16 %v6026
        %v6107 = vunpack.c.l.b16 %v6027
        %v6108 = vunpack.c.l.b16 %v6028
        %v6109 = vunpack.c.l.b16 %v6029
        %v6110 = vunpack.c.l.b16 %v6030
        %v6111 = vunpack.c.l.b16 %v6031
        %v6112 = vpack.c.b16 %v6097, %v6096
        %v6113 = vpack.c.b16 %v6099, %v6098
        %v6114 = vpack.c.b16 %v6101, %v6100
        %v6115 = vpack.c.b16 %v6103, %v6102
        %v6116 = vpack.c.b16 %v6105, %v6104
        %v6117 = vpack.c.b16 %v6107, %v6106
        %v6118 = vpack.c.b16 %v6109, %v6108
        %v6119 = vpack.c.b16 %v6111, %v6110
        %6128 = vmatprep.subr.bf16.mxu0 0
        %6129 = vmatpush1.bf16.msra.mxu0 %v6112
        %6130 = vmatprep.subr.bf16.mxu0 0
        %6131 = vmatpush1.bf16.msra.mxu0 %v6113
        %6132 = vmatprep.subr.bf16.mxu0 0
        %6133 = vmatpush1.bf16.msra.mxu0 %v6114
        %6134 = vmatprep.subr.bf16.mxu0 0
        %6135 = vmatpush1.bf16.msra.mxu0 %v6115
        %6136 = vmatprep.subr.bf16.mxu0 0
        %6137 = vmatpush1.bf16.msra.mxu0 %v6116
        %6138 = vmatprep.subr.bf16.mxu0 0
        %6139 = vmatpush1.bf16.msra.mxu0 %v6117
        %6140 = vmatprep.subr.bf16.mxu0 0
        %6141 = vmatpush1.bf16.msra.mxu0 %v6118
        %6142 = vmatprep.subr.bf16.mxu0 0
        %6143 = vmatpush1.bf16.msra.mxu0 %v6119
        %6144 = vmatprep.subr.bf16.mxu0 0
        %6145 = vmatpush1.bf16.msra.mxu0 0
        %6146 = vmatprep.subr.bf16.mxu0 0
        %6147 = vmatpush1.bf16.msra.mxu0 0
        %6148 = vmatprep.subr.bf16.mxu0 0
        %6149 = vmatpush1.bf16.msra.mxu0 0
        %6150 = vmatprep.subr.bf16.mxu0 0
        %6151 = vmatpush1.bf16.msra.mxu0 0
        %6152 = vmatprep.subr.bf16.mxu0 0
        %6153 = vmatpush1.bf16.msra.mxu0 0
        %6154 = vmatprep.subr.bf16.mxu0 0
        %6155 = vmatpush1.bf16.msra.mxu0 0
        %6156 = vmatprep.subr.bf16.mxu0 0
        %6157 = vmatpush1.bf16.msra.mxu0 0
        %6158 = vmatprep.subr.bf16.mxu0 0
        %6159 = vmatpush1.bf16.msra.mxu0 0
        %6160 = vmatprep.mubr.bf16.mxu0 0
        %6161 = vmatmul.mubr.bf16.gmra.mrb[0].mxu0 %v6064
        %v6162 = vpop.f32.mrb[0].mxu0
        %v6163 = vadd.f32 0.0, %v6162
        %v6164 = vpop.f32.mrb[0].mxu0
        %v6165 = vpop.f32.mrb[0].mxu0
        %v6166 = vadd.f32 0.0, %v6165
        %v6167 = vpop.f32.mrb[0].mxu0
        %6168 = vmatprep.mubr.bf16.mxu0 0
        %6169 = vmatmul.mubr.bf16.gmra.mrb[0].mxu0 %v6065
        %v6170 = vpop.f32.mrb[0].mxu0
        %v6171 = vadd.f32 0.0, %v6170
        %v6172 = vpop.f32.mrb[0].mxu0
        %v6173 = vpop.f32.mrb[0].mxu0
        %v6174 = vadd.f32 0.0, %v6173
        %v6175 = vpop.f32.mrb[0].mxu0
        %6176 = vmatprep.mubr.bf16.mxu0 0
        %6177 = vmatmul.mubr.bf16.gmra.mrb[0].mxu0 %v6066
        %v6178 = vpop.f32.mrb[0].mxu0
        %v6179 = vadd.f32 0.0, %v6178
        %v6180 = vpop.f32.mrb[0].mxu0
        %v6181 = vpop.f32.mrb[0].mxu0
        %v6182 = vadd.f32 0.0, %v6181
        %v6183 = vpop.f32.mrb[0].mxu0
        %6184 = vmatprep.mubr.bf16.mxu0 0
        %6185 = vmatmul.mubr.bf16.gmra.mrb[0].mxu0 %v6067
        %v6186 = vpop.f32.mrb[0].mxu0
        %v6187 = vadd.f32 0.0, %v6186
        %v6188 = vpop.f32.mrb[0].mxu0
        %v6189 = vpop.f32.mrb[0].mxu0
        %v6190 = vadd.f32 0.0, %v6189
        %v6191 = vpop.f32.mrb[0].mxu0
        %6192 = vmatprep.mubr.bf16.mxu0 0
        %6193 = vmatmul.mubr.bf16.gmra.mrb[0].mxu0 %v6068
        %v6194 = vpop.f32.mrb[0].mxu0
        %v6195 = vadd.f32 0.0, %v6194
        %v6196 = vpop.f32.mrb[0].mxu0
        %v6197 = vpop.f32.mrb[0].mxu0
        %v6198 = vadd.f32 0.0, %v6197
        %v6199 = vpop.f32.mrb[0].mxu0
        %6200 = vmatprep.mubr.bf16.mxu0 0
        %6201 = vmatmul.mubr.bf16.gmra.mrb[0].mxu0 %v6069
        %v6202 = vpop.f32.mrb[0].mxu0
        %v6203 = vadd.f32 0.0, %v6202
        %v6204 = vpop.f32.mrb[0].mxu0
        %v6205 = vpop.f32.mrb[0].mxu0
        %v6206 = vadd.f32 0.0, %v6205
        %v6207 = vpop.f32.mrb[0].mxu0
        %6208 = vmatprep.mubr.bf16.mxu0 0
        %6209 = vmatmul.mubr.bf16.gmra.mrb[0].mxu0 %v6070
        %v6210 = vpop.f32.mrb[0].mxu0
        %v6211 = vadd.f32 0.0, %v6210
        %v6212 = vpop.f32.mrb[0].mxu0
        %v6213 = vpop.f32.mrb[0].mxu0
        %v6214 = vadd.f32 0.0, %v6213
        %v6215 = vpop.f32.mrb[0].mxu0
        %6216 = vmatprep.mubr.bf16.mxu0 0
        %6217 = vmatmul.mubr.bf16.gmra.mrb[0].mxu0 %v6071
        %v6218 = vpop.f32.mrb[0].mxu0
        %v6219 = vadd.f32 0.0, %v6218
        %v6220 = vpop.f32.mrb[0].mxu0
        %v6221 = vpop.f32.mrb[0].mxu0
        %v6222 = vadd.f32 0.0, %v6221
        %v6223 = vpop.f32.mrb[0].mxu0
        %6224 = vdwg.mxu0
        %v6225 = vadd.f32 %v5982, %v6163
        %v6226 = vadd.f32 %v5983, %v6166
        %v6227 = vadd.f32 %v5984, %v6171
        %v6228 = vadd.f32 %v5985, %v6174
        %v6229 = vadd.f32 %v5986, %v6179
        %v6230 = vadd.f32 %v5987, %v6182
        %v6231 = vadd.f32 %v5988, %v6187
        %v6232 = vadd.f32 %v5989, %v6190
        %v6233 = vadd.f32 %v5990, %v6195
        %v6234 = vadd.f32 %v5991, %v6198
        %v6235 = vadd.f32 %v5992, %v6203
        %v6236 = vadd.f32 %v5993, %v6206
        %v6237 = vadd.f32 %v5994, %v6211
        %v6238 = vadd.f32 %v5995, %v6214
        %v6239 = vadd.f32 %v5996, %v6219
        %v6240 = vadd.f32 %v5997, %v6222
        %v6241 = vld [vmem:[%s5998] sm:$0xf]
        %v6242 = vld [vmem:[%s5998 + $0x4] sm:$0xf]
        %v6243 = vld [vmem:[%s5998 + $0x8] sm:$0x1]
        %v6244 = vld [vmem:[%s5998 + $0xc] sm:$0xf]
        %v6245 = vld [vmem:[%s5998 + $0x10] sm:$0xf]
        %v6246 = vld [vmem:[%s5998 + $0x14] sm:$0x1]
        %v6247 = vld [vmem:[%s5998 + $0x18] sm:$0xf]
        %v6248 = vld [vmem:[%s5998 + $0x1c] sm:$0xf]
        %v6249 = vld [vmem:[%s5998 + $0x20] sm:$0x1]
        %v6250 = vld [vmem:[%s5998 + $0x24] sm:$0xf]
        %v6251 = vld [vmem:[%s5998 + $0x28] sm:$0xf]
        %v6252 = vld [vmem:[%s5998 + $0x2c] sm:$0x1]
        %v6253 = vld [vmem:[%s5998 + $0x30] sm:$0xf]
        %v6254 = vld [vmem:[%s5998 + $0x34] sm:$0xf]
        %v6255 = vld [vmem:[%s5998 + $0x38] sm:$0x1]
        %v6256 = vld [vmem:[%s5998 + $0x3c] sm:$0xf]
        %v6257 = vld [vmem:[%s5998 + $0x40] sm:$0xf]
        %v6258 = vld [vmem:[%s5998 + $0x44] sm:$0x1]
        %v6259 = vld [vmem:[%s5998 + $0x48] sm:$0xf]
        %v6260 = vld [vmem:[%s5998 + $0x4c] sm:$0xf]
        %v6261 = vld [vmem:[%s5998 + $0x50] sm:$0x1]
        %v6262 = vld [vmem:[%s5998 + $0x54] sm:$0xf]
        %v6263 = vld [vmem:[%s5998 + $0x58] sm:$0xf]
        %v6264 = vld [vmem:[%s5998 + $0x5c] sm:$0x1]
        %v6266 = vshrl.u32 %v6241, 16
        %v6268 = vrot.slane %v6266, 4
        %v6269 = vshll.u32 %v6241, 16
        %v6271 = vrot.slane %v6269, 5
        %v6272 = vor.u32 %v6268, %v6271
        %v6273 = vrot.slane %v6272, 4
        %v6275 = vshll.u32 %v6242, 16
        %v6277 = vrot.slane %v6275, 5
        %v6278 = vsel %vm370, %v6273, %v6277
        %v6279 = vshrl.u32 %v6242, 16
        %v6281 = vrot.slane %v6279, 4
        %v6282 = vor.u32 %v6281, %v6277
        %v6283 = vrot.slane %v6282, 4
        %v6285 = vshll.u32 %v6243, 16
        %v6287 = vrot.slane %v6285, 5
        %v6288 = vsel %vm370, %v6283, %v6287
        %v6290 = vshrl.u32 %v6244, 16
        %v6292 = vrot.slane %v6290, 4
        %v6293 = vshll.u32 %v6244, 16
        %v6295 = vrot.slane %v6293, 5
        %v6296 = vor.u32 %v6292, %v6295
        %v6297 = vrot.slane %v6296, 4
        %v6299 = vshll.u32 %v6245, 16
        %v6301 = vrot.slane %v6299, 5
        %v6302 = vsel %vm370, %v6297, %v6301
        %v6303 = vshrl.u32 %v6245, 16
        %v6305 = vrot.slane %v6303, 4
        %v6306 = vor.u32 %v6305, %v6301
        %v6307 = vrot.slane %v6306, 4
        %v6309 = vshll.u32 %v6246, 16
        %v6311 = vrot.slane %v6309, 5
        %v6312 = vsel %vm370, %v6307, %v6311
        %v6314 = vshrl.u32 %v6247, 16
        %v6316 = vrot.slane %v6314, 4
        %v6317 = vshll.u32 %v6247, 16
        %v6319 = vrot.slane %v6317, 5
        %v6320 = vor.u32 %v6316, %v6319
        %v6321 = vrot.slane %v6320, 4
        %v6323 = vshll.u32 %v6248, 16
        %v6325 = vrot.slane %v6323, 5
        %v6326 = vsel %vm370, %v6321, %v6325
        %v6327 = vshrl.u32 %v6248, 16
        %v6329 = vrot.slane %v6327, 4
        %v6330 = vor.u32 %v6329, %v6325
        %v6331 = vrot.slane %v6330, 4
        %v6333 = vshll.u32 %v6249, 16
        %v6335 = vrot.slane %v6333, 5
        %v6336 = vsel %vm370, %v6331, %v6335
        %v6338 = vshrl.u32 %v6250, 16
        %v6340 = vrot.slane %v6338, 4
        %v6341 = vshll.u32 %v6250, 16
        %v6343 = vrot.slane %v6341, 5
        %v6344 = vor.u32 %v6340, %v6343
        %v6345 = vrot.slane %v6344, 4
        %v6347 = vshll.u32 %v6251, 16
        %v6349 = vrot.slane %v6347, 5
        %v6350 = vsel %vm370, %v6345, %v6349
        %v6351 = vshrl.u32 %v6251, 16
        %v6353 = vrot.slane %v6351, 4
        %v6354 = vor.u32 %v6353, %v6349
        %v6355 = vrot.slane %v6354, 4
        %v6357 = vshll.u32 %v6252, 16
        %v6359 = vrot.slane %v6357, 5
        %v6360 = vsel %vm370, %v6355, %v6359
        %v6362 = vshrl.u32 %v6253, 16
        %v6364 = vrot.slane %v6362, 4
        %v6365 = vshll.u32 %v6253, 16
        %v6367 = vrot.slane %v6365, 5
        %v6368 = vor.u32 %v6364, %v6367
        %v6369 = vrot.slane %v6368, 4
        %v6371 = vshll.u32 %v6254, 16
        %v6373 = vrot.slane %v6371, 5
        %v6374 = vsel %vm370, %v6369, %v6373
        %v6375 = vshrl.u32 %v6254, 16
        %v6377 = vrot.slane %v6375, 4
        %v6378 = vor.u32 %v6377, %v6373
        %v6379 = vrot.slane %v6378, 4
        %v6381 = vshll.u32 %v6255, 16
        %v6383 = vrot.slane %v6381, 5
        %v6384 = vsel %vm370, %v6379, %v6383
        %v6386 = vshrl.u32 %v6256, 16
        %v6388 = vrot.slane %v6386, 4
        %v6389 = vshll.u32 %v6256, 16
        %v6391 = vrot.slane %v6389, 5
        %v6392 = vor.u32 %v6388, %v6391
        %v6393 = vrot.slane %v6392, 4
        %v6395 = vshll.u32 %v6257, 16
        %v6397 = vrot.slane %v6395, 5
        %v6398 = vsel %vm370, %v6393, %v6397
        %v6399 = vshrl.u32 %v6257, 16
        %v6401 = vrot.slane %v6399, 4
        %v6402 = vor.u32 %v6401, %v6397
        %v6403 = vrot.slane %v6402, 4
        %v6405 = vshll.u32 %v6258, 16
        %v6407 = vrot.slane %v6405, 5
        %v6408 = vsel %vm370, %v6403, %v6407
        %v6410 = vshrl.u32 %v6259, 16
        %v6412 = vrot.slane %v6410, 4
        %v6413 = vshll.u32 %v6259, 16
        %v6415 = vrot.slane %v6413, 5
        %v6416 = vor.u32 %v6412, %v6415
        %v6417 = vrot.slane %v6416, 4
        %v6419 = vshll.u32 %v6260, 16
        %v6421 = vrot.slane %v6419, 5
        %v6422 = vsel %vm370, %v6417, %v6421
        %v6423 = vshrl.u32 %v6260, 16
        %v6425 = vrot.slane %v6423, 4
        %v6426 = vor.u32 %v6425, %v6421
        %v6427 = vrot.slane %v6426, 4
        %v6429 = vshll.u32 %v6261, 16
        %v6431 = vrot.slane %v6429, 5
        %v6432 = vsel %vm370, %v6427, %v6431
        %v6434 = vshrl.u32 %v6262, 16
        %v6436 = vrot.slane %v6434, 4
        %v6437 = vshll.u32 %v6262, 16
        %v6439 = vrot.slane %v6437, 5
        %v6440 = vor.u32 %v6436, %v6439
        %v6441 = vrot.slane %v6440, 4
        %v6443 = vshll.u32 %v6263, 16
        %v6445 = vrot.slane %v6443, 5
        %v6446 = vsel %vm370, %v6441, %v6445
        %v6447 = vshrl.u32 %v6263, 16
        %v6449 = vrot.slane %v6447, 4
        %v6450 = vor.u32 %v6449, %v6445
        %v6451 = vrot.slane %v6450, 4
        %v6453 = vshll.u32 %v6264, 16
        %v6455 = vrot.slane %v6453, 5
        %v6456 = vsel %vm370, %v6451, %v6455
        %s6457 = scalar_lea.vmem [#allocation3], 448
        %v6458 = vld [vmem:[%s6457] sm:$0xf]
        %v6459 = vld [vmem:[%s6457 + $0x4] sm:$0xf]
        %v6460 = vld [vmem:[%s6457 + $0x8] sm:$0xf]
        %v6461 = vld [vmem:[%s6457 + $0xc] sm:$0xf]
        %v6462 = vld [vmem:[%s6457 + $0x10] sm:$0xf]
        %v6463 = vld [vmem:[%s6457 + $0x14] sm:$0xf]
        %v6464 = vld [vmem:[%s6457 + $0x18] sm:$0xf]
        %v6465 = vld [vmem:[%s6457 + $0x1c] sm:$0xf]
        %v6466 = vld [vmem:[%s6457 + $0x20] sm:$0xf]
        %v6467 = vld [vmem:[%s6457 + $0x24] sm:$0xf]
        %v6468 = vld [vmem:[%s6457 + $0x28] sm:$0xf]
        %v6469 = vld [vmem:[%s6457 + $0x2c] sm:$0xf]
        %v6470 = vld [vmem:[%s6457 + $0x30] sm:$0xf]
        %v6471 = vld [vmem:[%s6457 + $0x34] sm:$0xf]
        %v6472 = vld [vmem:[%s6457 + $0x38] sm:$0xf]
        %v6473 = vld [vmem:[%s6457 + $0x3c] sm:$0xf]
        %v6474 = vunpack.c.l.b16 %v6278
        %v6475 = vunpack.c.l.b16 %v6288
        %v6476 = vunpack.c.l.b16 %v6302
        %v6477 = vunpack.c.l.b16 %v6312
        %v6478 = vunpack.c.l.b16 %v6326
        %v6479 = vunpack.c.l.b16 %v6336
        %v6480 = vunpack.c.l.b16 %v6350
        %v6481 = vunpack.c.l.b16 %v6360
        %v6482 = vunpack.c.l.b16 %v6374
        %v6483 = vunpack.c.l.b16 %v6384
        %v6484 = vunpack.c.l.b16 %v6398
        %v6485 = vunpack.c.l.b16 %v6408
        %v6486 = vunpack.c.l.b16 %v6422
        %v6487 = vunpack.c.l.b16 %v6432
        %v6488 = vunpack.c.l.b16 %v6446
        %v6489 = vunpack.c.l.b16 %v6456
        %v6490 = vpack.c.b16 %v6475, %v6474
        %v6491 = vpack.c.b16 %v6477, %v6476
        %v6492 = vpack.c.b16 %v6479, %v6478
        %v6493 = vpack.c.b16 %v6481, %v6480
        %v6494 = vpack.c.b16 %v6483, %v6482
        %v6495 = vpack.c.b16 %v6485, %v6484
        %v6496 = vpack.c.b16 %v6487, %v6486
        %v6497 = vpack.c.b16 %v6489, %v6488
        %v6522 = vunpack.c.l.b16 %v6458
        %v6523 = vunpack.c.l.b16 %v6459
        %v6524 = vunpack.c.l.b16 %v6460
        %v6525 = vunpack.c.l.b16 %v6461
        %v6526 = vunpack.c.l.b16 %v6462
        %v6527 = vunpack.c.l.b16 %v6463
        %v6528 = vunpack.c.l.b16 %v6464
        %v6529 = vunpack.c.l.b16 %v6465
        %v6530 = vunpack.c.l.b16 %v6466
        %v6531 = vunpack.c.l.b16 %v6467
        %v6532 = vunpack.c.l.b16 %v6468
        %v6533 = vunpack.c.l.b16 %v6469
        %v6534 = vunpack.c.l.b16 %v6470
        %v6535 = vunpack.c.l.b16 %v6471
        %v6536 = vunpack.c.l.b16 %v6472
        %v6537 = vunpack.c.l.b16 %v6473
        %v6538 = vpack.c.b16 %v6523, %v6522
        %v6539 = vpack.c.b16 %v6525, %v6524
        %v6540 = vpack.c.b16 %v6527, %v6526
        %v6541 = vpack.c.b16 %v6529, %v6528
        %v6542 = vpack.c.b16 %v6531, %v6530
        %v6543 = vpack.c.b16 %v6533, %v6532
        %v6544 = vpack.c.b16 %v6535, %v6534
        %v6545 = vpack.c.b16 %v6537, %v6536
        %6554 = vmatprep.subr.bf16.mxu0 0
        %6555 = vmatpush1.bf16.msra.mxu0 %v6538
        %6556 = vmatprep.subr.bf16.mxu0 0
        %6557 = vmatpush1.bf16.msra.mxu0 %v6539
        %6558 = vmatprep.subr.bf16.mxu0 0
        %6559 = vmatpush1.bf16.msra.mxu0 %v6540
        %6560 = vmatprep.subr.bf16.mxu0 0
        %6561 = vmatpush1.bf16.msra.mxu0 %v6541
        %6562 = vmatprep.subr.bf16.mxu0 0
        %6563 = vmatpush1.bf16.msra.mxu0 %v6542
        %6564 = vmatprep.subr.bf16.mxu0 0
        %6565 = vmatpush1.bf16.msra.mxu0 %v6543
        %6566 = vmatprep.subr.bf16.mxu0 0
        %6567 = vmatpush1.bf16.msra.mxu0 %v6544
        %6568 = vmatprep.subr.bf16.mxu0 0
        %6569 = vmatpush1.bf16.msra.mxu0 %v6545
        %6570 = vmatprep.subr.bf16.mxu0 0
        %6571 = vmatpush1.bf16.msra.mxu0 0
        %6572 = vmatprep.subr.bf16.mxu0 0
        %6573 = vmatpush1.bf16.msra.mxu0 0
        %6574 = vmatprep.subr.bf16.mxu0 0
        %6575 = vmatpush1.bf16.msra.mxu0 0
        %6576 = vmatprep.subr.bf16.mxu0 0
        %6577 = vmatpush1.bf16.msra.mxu0 0
        %6578 = vmatprep.subr.bf16.mxu0 0
        %6579 = vmatpush1.bf16.msra.mxu0 0
        %6580 = vmatprep.subr.bf16.mxu0 0
        %6581 = vmatpush1.bf16.msra.mxu0 0
        %6582 = vmatprep.subr.bf16.mxu0 0
        %6583 = vmatpush1.bf16.msra.mxu0 0
        %6584 = vmatprep.subr.bf16.mxu0 0
        %6585 = vmatpush1.bf16.msra.mxu0 0
        %6586 = vmatprep.mubr.bf16.mxu0 0
        %6587 = vmatmul.mubr.bf16.gmra.mrb[0].mxu0 %v6490
        %v6588 = vpop.f32.mrb[0].mxu0
        %v6589 = vadd.f32 0.0, %v6588
        %v6590 = vpop.f32.mrb[0].mxu0
        %v6591 = vpop.f32.mrb[0].mxu0
        %v6592 = vadd.f32 0.0, %v6591
        %v6593 = vpop.f32.mrb[0].mxu0
        %6594 = vmatprep.mubr.bf16.mxu0 0
        %6595 = vmatmul.mubr.bf16.gmra.mrb[0].mxu0 %v6491
        %v6596 = vpop.f32.mrb[0].mxu0
        %v6597 = vadd.f32 0.0, %v6596
        %v6598 = vpop.f32.mrb[0].mxu0
        %v6599 = vpop.f32.mrb[0].mxu0
        %v6600 = vadd.f32 0.0, %v6599
        %v6601 = vpop.f32.mrb[0].mxu0
        %6602 = vmatprep.mubr.bf16.mxu0 0
        %6603 = vmatmul.mubr.bf16.gmra.mrb[0].mxu0 %v6492
        %v6604 = vpop.f32.mrb[0].mxu0
        %v6605 = vadd.f32 0.0, %v6604
        %v6606 = vpop.f32.mrb[0].mxu0
        %v6607 = vpop.f32.mrb[0].mxu0
        %v6608 = vadd.f32 0.0, %v6607
        %v6609 = vpop.f32.mrb[0].mxu0
        %6610 = vmatprep.mubr.bf16.mxu0 0
        %6611 = vmatmul.mubr.bf16.gmra.mrb[0].mxu0 %v6493
        %v6612 = vpop.f32.mrb[0].mxu0
        %v6613 = vadd.f32 0.0, %v6612
        %v6614 = vpop.f32.mrb[0].mxu0
        %v6615 = vpop.f32.mrb[0].mxu0
        %v6616 = vadd.f32 0.0, %v6615
        %v6617 = vpop.f32.mrb[0].mxu0
        %6618 = vmatprep.mubr.bf16.mxu0 0
        %6619 = vmatmul.mubr.bf16.gmra.mrb[0].mxu0 %v6494
        %v6620 = vpop.f32.mrb[0].mxu0
        %v6621 = vadd.f32 0.0, %v6620
        %v6622 = vpop.f32.mrb[0].mxu0
        %v6623 = vpop.f32.mrb[0].mxu0
        %v6624 = vadd.f32 0.0, %v6623
        %v6625 = vpop.f32.mrb[0].mxu0
        %6626 = vmatprep.mubr.bf16.mxu0 0
        %6627 = vmatmul.mubr.bf16.gmra.mrb[0].mxu0 %v6495
        %v6628 = vpop.f32.mrb[0].mxu0
        %v6629 = vadd.f32 0.0, %v6628
        %v6630 = vpop.f32.mrb[0].mxu0
        %v6631 = vpop.f32.mrb[0].mxu0
        %v6632 = vadd.f32 0.0, %v6631
        %v6633 = vpop.f32.mrb[0].mxu0
        %6634 = vmatprep.mubr.bf16.mxu0 0
        %6635 = vmatmul.mubr.bf16.gmra.mrb[0].mxu0 %v6496
        %v6636 = vpop.f32.mrb[0].mxu0
        %v6637 = vadd.f32 0.0, %v6636
        %v6638 = vpop.f32.mrb[0].mxu0
        %v6639 = vpop.f32.mrb[0].mxu0
        %v6640 = vadd.f32 0.0, %v6639
        %v6641 = vpop.f32.mrb[0].mxu0
        %6642 = vmatprep.mubr.bf16.mxu0 0
        %6643 = vmatmul.mubr.bf16.gmra.mrb[0].mxu0 %v6497
        %v6644 = vpop.f32.mrb[0].mxu0
        %v6645 = vadd.f32 0.0, %v6644
        %v6646 = vpop.f32.mrb[0].mxu0
        %v6647 = vpop.f32.mrb[0].mxu0
        %v6648 = vadd.f32 0.0, %v6647
        %v6649 = vpop.f32.mrb[0].mxu0
        %6650 = vdwg.mxu0
        %v6651 = vadd.f32 %v6225, %v6589
        %v6652 = vadd.f32 %v6226, %v6592
        %v6653 = vadd.f32 %v6227, %v6597
        %v6654 = vadd.f32 %v6228, %v6600
        %v6655 = vadd.f32 %v6229, %v6605
        %v6656 = vadd.f32 %v6230, %v6608
        %v6657 = vadd.f32 %v6231, %v6613
        %v6658 = vadd.f32 %v6232, %v6616
        %v6659 = vadd.f32 %v6233, %v6621
        %v6660 = vadd.f32 %v6234, %v6624
        %v6661 = vadd.f32 %v6235, %v6629
        %v6662 = vadd.f32 %v6236, %v6632
        %v6663 = vadd.f32 %v6237, %v6637
        %v6664 = vadd.f32 %v6238, %v6640
        %v6665 = vadd.f32 %v6239, %v6645
        %v6666 = vadd.f32 %v6240, %v6648
        %v6667 = vld [vmem:[%s5998] sm:$0xe]
        %v6668 = vld [vmem:[%s5998 + $0xc] sm:$0xe]
        %v6669 = vld [vmem:[%s5998 + $0x18] sm:$0xe]
        %v6670 = vld [vmem:[%s5998 + $0x24] sm:$0xe]
        %v6671 = vld [vmem:[%s5998 + $0x30] sm:$0xe]
        %v6672 = vld [vmem:[%s5998 + $0x3c] sm:$0xe]
        %v6673 = vld [vmem:[%s5998 + $0x48] sm:$0xe]
        %v6674 = vld [vmem:[%s5998 + $0x54] sm:$0xe]
        %v6699 = vrot.slane %v6667, 5
        %v6700 = vrot.slane %v6699, 4
        %v6701 = vrot.slane %v6242, 5
        %v6702 = vsel %vm1082, %v6700, %v6701
        %v6703 = vrot.slane %v6701, 4
        %v6704 = vrot.slane %v6243, 5
        %v6705 = vsel %vm1082, %v6703, %v6704
        %v6706 = vrot.slane %v6668, 5
        %v6707 = vrot.slane %v6706, 4
        %v6708 = vrot.slane %v6245, 5
        %v6709 = vsel %vm1082, %v6707, %v6708
        %v6710 = vrot.slane %v6708, 4
        %v6711 = vrot.slane %v6246, 5
        %v6712 = vsel %vm1082, %v6710, %v6711
        %v6713 = vrot.slane %v6669, 5
        %v6714 = vrot.slane %v6713, 4
        %v6715 = vrot.slane %v6248, 5
        %v6716 = vsel %vm1082, %v6714, %v6715
        %v6717 = vrot.slane %v6715, 4
        %v6718 = vrot.slane %v6249, 5
        %v6719 = vsel %vm1082, %v6717, %v6718
        %v6720 = vrot.slane %v6670, 5
        %v6721 = vrot.slane %v6720, 4
        %v6722 = vrot.slane %v6251, 5
        %v6723 = vsel %vm1082, %v6721, %v6722
        %v6724 = vrot.slane %v6722, 4
        %v6725 = vrot.slane %v6252, 5
        %v6726 = vsel %vm1082, %v6724, %v6725
        %v6727 = vrot.slane %v6671, 5
        %v6728 = vrot.slane %v6727, 4
        %v6729 = vrot.slane %v6254, 5
        %v6730 = vsel %vm1082, %v6728, %v6729
        %v6731 = vrot.slane %v6729, 4
        %v6732 = vrot.slane %v6255, 5
        %v6733 = vsel %vm1082, %v6731, %v6732
        %v6734 = vrot.slane %v6672, 5
        %v6735 = vrot.slane %v6734, 4
        %v6736 = vrot.slane %v6257, 5
        %v6737 = vsel %vm1082, %v6735, %v6736
        %v6738 = vrot.slane %v6736, 4
        %v6739 = vrot.slane %v6258, 5
        %v6740 = vsel %vm1082, %v6738, %v6739
        %v6741 = vrot.slane %v6673, 5
        %v6742 = vrot.slane %v6741, 4
        %v6743 = vrot.slane %v6260, 5
        %v6744 = vsel %vm1082, %v6742, %v6743
        %v6745 = vrot.slane %v6743, 4
        %v6746 = vrot.slane %v6261, 5
        %v6747 = vsel %vm1082, %v6745, %v6746
        %v6748 = vrot.slane %v6674, 5
        %v6749 = vrot.slane %v6748, 4
        %v6750 = vrot.slane %v6263, 5
        %v6751 = vsel %vm1082, %v6749, %v6750
        %v6752 = vrot.slane %v6750, 4
        %v6753 = vrot.slane %v6264, 5
        %v6754 = vsel %vm1082, %v6752, %v6753
        %s6755 = scalar_lea.vmem [#allocation3], 512
        %v6756 = vld [vmem:[%s6755] sm:$0xf]
        %v6757 = vld [vmem:[%s6755 + $0x4] sm:$0xf]
        %v6758 = vld [vmem:[%s6755 + $0x8] sm:$0xf]
        %v6759 = vld [vmem:[%s6755 + $0xc] sm:$0xf]
        %v6760 = vld [vmem:[%s6755 + $0x10] sm:$0xf]
        %v6761 = vld [vmem:[%s6755 + $0x14] sm:$0xf]
        %v6762 = vld [vmem:[%s6755 + $0x18] sm:$0xf]
        %v6763 = vld [vmem:[%s6755 + $0x1c] sm:$0xf]
        %v6764 = vld [vmem:[%s6755 + $0x20] sm:$0xf]
        %v6765 = vld [vmem:[%s6755 + $0x24] sm:$0xf]
        %v6766 = vld [vmem:[%s6755 + $0x28] sm:$0xf]
        %v6767 = vld [vmem:[%s6755 + $0x2c] sm:$0xf]
        %v6768 = vld [vmem:[%s6755 + $0x30] sm:$0xf]
        %v6769 = vld [vmem:[%s6755 + $0x34] sm:$0xf]
        %v6770 = vld [vmem:[%s6755 + $0x38] sm:$0xf]
        %v6771 = vld [vmem:[%s6755 + $0x3c] sm:$0xf]
        %v6772 = vunpack.c.l.b16 %v6702
        %v6773 = vunpack.c.l.b16 %v6705
        %v6774 = vunpack.c.l.b16 %v6709
        %v6775 = vunpack.c.l.b16 %v6712
        %v6776 = vunpack.c.l.b16 %v6716
        %v6777 = vunpack.c.l.b16 %v6719
        %v6778 = vunpack.c.l.b16 %v6723
        %v6779 = vunpack.c.l.b16 %v6726
        %v6780 = vunpack.c.l.b16 %v6730
        %v6781 = vunpack.c.l.b16 %v6733
        %v6782 = vunpack.c.l.b16 %v6737
        %v6783 = vunpack.c.l.b16 %v6740
        %v6784 = vunpack.c.l.b16 %v6744
        %v6785 = vunpack.c.l.b16 %v6747
        %v6786 = vunpack.c.l.b16 %v6751
        %v6787 = vunpack.c.l.b16 %v6754
        %v6788 = vpack.c.b16 %v6773, %v6772
        %v6789 = vpack.c.b16 %v6775, %v6774
        %v6790 = vpack.c.b16 %v6777, %v6776
        %v6791 = vpack.c.b16 %v6779, %v6778
        %v6792 = vpack.c.b16 %v6781, %v6780
        %v6793 = vpack.c.b16 %v6783, %v6782
        %v6794 = vpack.c.b16 %v6785, %v6784
        %v6795 = vpack.c.b16 %v6787, %v6786
        %v6820 = vunpack.c.l.b16 %v6756
        %v6821 = vunpack.c.l.b16 %v6757
        %v6822 = vunpack.c.l.b16 %v6758
        %v6823 = vunpack.c.l.b16 %v6759
        %v6824 = vunpack.c.l.b16 %v6760
        %v6825 = vunpack.c.l.b16 %v6761
        %v6826 = vunpack.c.l.b16 %v6762
        %v6827 = vunpack.c.l.b16 %v6763
        %v6828 = vunpack.c.l.b16 %v6764
        %v6829 = vunpack.c.l.b16 %v6765
        %v6830 = vunpack.c.l.b16 %v6766
        %v6831 = vunpack.c.l.b16 %v6767
        %v6832 = vunpack.c.l.b16 %v6768
        %v6833 = vunpack.c.l.b16 %v6769
        %v6834 = vunpack.c.l.b16 %v6770
        %v6835 = vunpack.c.l.b16 %v6771
        %v6836 = vpack.c.b16 %v6821, %v6820
        %v6837 = vpack.c.b16 %v6823, %v6822
        %v6838 = vpack.c.b16 %v6825, %v6824
        %v6839 = vpack.c.b16 %v6827, %v6826
        %v6840 = vpack.c.b16 %v6829, %v6828
        %v6841 = vpack.c.b16 %v6831, %v6830
        %v6842 = vpack.c.b16 %v6833, %v6832
        %v6843 = vpack.c.b16 %v6835, %v6834
        %6852 = vmatprep.subr.bf16.mxu0 0
        %6853 = vmatpush1.bf16.msra.mxu0 %v6836
        %6854 = vmatprep.subr.bf16.mxu0 0
        %6855 = vmatpush1.bf16.msra.mxu0 %v6837
        %6856 = vmatprep.subr.bf16.mxu0 0
        %6857 = vmatpush1.bf16.msra.mxu0 %v6838
        %6858 = vmatprep.subr.bf16.mxu0 0
        %6859 = vmatpush1.bf16.msra.mxu0 %v6839
        %6860 = vmatprep.subr.bf16.mxu0 0
        %6861 = vmatpush1.bf16.msra.mxu0 %v6840
        %6862 = vmatprep.subr.bf16.mxu0 0
        %6863 = vmatpush1.bf16.msra.mxu0 %v6841
        %6864 = vmatprep.subr.bf16.mxu0 0
        %6865 = vmatpush1.bf16.msra.mxu0 %v6842
        %6866 = vmatprep.subr.bf16.mxu0 0
        %6867 = vmatpush1.bf16.msra.mxu0 %v6843
        %6868 = vmatprep.subr.bf16.mxu0 0
        %6869 = vmatpush1.bf16.msra.mxu0 0
        %6870 = vmatprep.subr.bf16.mxu0 0
        %6871 = vmatpush1.bf16.msra.mxu0 0
        %6872 = vmatprep.subr.bf16.mxu0 0
        %6873 = vmatpush1.bf16.msra.mxu0 0
        %6874 = vmatprep.subr.bf16.mxu0 0
        %6875 = vmatpush1.bf16.msra.mxu0 0
        %6876 = vmatprep.subr.bf16.mxu0 0
        %6877 = vmatpush1.bf16.msra.mxu0 0
        %6878 = vmatprep.subr.bf16.mxu0 0
        %6879 = vmatpush1.bf16.msra.mxu0 0
        %6880 = vmatprep.subr.bf16.mxu0 0
        %6881 = vmatpush1.bf16.msra.mxu0 0
        %6882 = vmatprep.subr.bf16.mxu0 0
        %6883 = vmatpush1.bf16.msra.mxu0 0
        %6884 = vmatprep.mubr.bf16.mxu0 0
        %6885 = vmatmul.mubr.bf16.gmra.mrb[0].mxu0 %v6788
        %v6886 = vpop.f32.mrb[0].mxu0
        %v6887 = vadd.f32 0.0, %v6886
        %v6888 = vpop.f32.mrb[0].mxu0
        %v6889 = vpop.f32.mrb[0].mxu0
        %v6890 = vadd.f32 0.0, %v6889
        %v6891 = vpop.f32.mrb[0].mxu0
        %6892 = vmatprep.mubr.bf16.mxu0 0
        %6893 = vmatmul.mubr.bf16.gmra.mrb[0].mxu0 %v6789
        %v6894 = vpop.f32.mrb[0].mxu0
        %v6895 = vadd.f32 0.0, %v6894
        %v6896 = vpop.f32.mrb[0].mxu0
        %v6897 = vpop.f32.mrb[0].mxu0
        %v6898 = vadd.f32 0.0, %v6897
        %v6899 = vpop.f32.mrb[0].mxu0
        %6900 = vmatprep.mubr.bf16.mxu0 0
        %6901 = vmatmul.mubr.bf16.gmra.mrb[0].mxu0 %v6790
        %v6902 = vpop.f32.mrb[0].mxu0
        %v6903 = vadd.f32 0.0, %v6902
        %v6904 = vpop.f32.mrb[0].mxu0
        %v6905 = vpop.f32.mrb[0].mxu0
        %v6906 = vadd.f32 0.0, %v6905
        %v6907 = vpop.f32.mrb[0].mxu0
        %6908 = vmatprep.mubr.bf16.mxu0 0
        %6909 = vmatmul.mubr.bf16.gmra.mrb[0].mxu0 %v6791
        %v6910 = vpop.f32.mrb[0].mxu0
        %v6911 = vadd.f32 0.0, %v6910
        %v6912 = vpop.f32.mrb[0].mxu0
        %v6913 = vpop.f32.mrb[0].mxu0
        %v6914 = vadd.f32 0.0, %v6913
        %v6915 = vpop.f32.mrb[0].mxu0
        %6916 = vmatprep.mubr.bf16.mxu0 0
        %6917 = vmatmul.mubr.bf16.gmra.mrb[0].mxu0 %v6792
        %v6918 = vpop.f32.mrb[0].mxu0
        %v6919 = vadd.f32 0.0, %v6918
        %v6920 = vpop.f32.mrb[0].mxu0
        %v6921 = vpop.f32.mrb[0].mxu0
        %v6922 = vadd.f32 0.0, %v6921
        %v6923 = vpop.f32.mrb[0].mxu0
        %6924 = vmatprep.mubr.bf16.mxu0 0
        %6925 = vmatmul.mubr.bf16.gmra.mrb[0].mxu0 %v6793
        %v6926 = vpop.f32.mrb[0].mxu0
        %v6927 = vadd.f32 0.0, %v6926
        %v6928 = vpop.f32.mrb[0].mxu0
        %v6929 = vpop.f32.mrb[0].mxu0
        %v6930 = vadd.f32 0.0, %v6929
        %v6931 = vpop.f32.mrb[0].mxu0
        %6932 = vmatprep.mubr.bf16.mxu0 0
        %6933 = vmatmul.mubr.bf16.gmra.mrb[0].mxu0 %v6794
        %v6934 = vpop.f32.mrb[0].mxu0
        %v6935 = vadd.f32 0.0, %v6934
        %v6936 = vpop.f32.mrb[0].mxu0
        %v6937 = vpop.f32.mrb[0].mxu0
        %v6938 = vadd.f32 0.0, %v6937
        %v6939 = vpop.f32.mrb[0].mxu0
        %6940 = vmatprep.mubr.bf16.mxu0 0
        %6941 = vmatmul.mubr.bf16.gmra.mrb[0].mxu0 %v6795
        %v6942 = vpop.f32.mrb[0].mxu0
        %v6943 = vadd.f32 0.0, %v6942
        %v6944 = vpop.f32.mrb[0].mxu0
        %v6945 = vpop.f32.mrb[0].mxu0
        %v6946 = vadd.f32 0.0, %v6945
        %v6947 = vpop.f32.mrb[0].mxu0
        %6948 = vdwg.mxu0
        %v6949 = vadd.f32 %v6651, %v6887
        %v6950 = vadd.f32 %v6652, %v6890
        %v6951 = vadd.f32 %v6653, %v6895
        %v6952 = vadd.f32 %v6654, %v6898
        %v6953 = vadd.f32 %v6655, %v6903
        %v6954 = vadd.f32 %v6656, %v6906
        %v6955 = vadd.f32 %v6657, %v6911
        %v6956 = vadd.f32 %v6658, %v6914
        %v6957 = vadd.f32 %v6659, %v6919
        %v6958 = vadd.f32 %v6660, %v6922
        %v6959 = vadd.f32 %v6661, %v6927
        %v6960 = vadd.f32 %v6662, %v6930
        %v6961 = vadd.f32 %v6663, %v6935
        %v6962 = vadd.f32 %v6664, %v6938
        %v6963 = vadd.f32 %v6665, %v6943
        %v6964 = vadd.f32 %v6666, %v6946
        %v6965 = vld [vmem:[%s4] sm:$0x1]
        %v6967 = vlaneseq
        %v6968 = vshrl.u32 %v6967, 7
        %v6969 = vsub.s32 0, %v6968
        %v6970 = vrot.slane %v6965, %v6969
        %v6972 = vadd.f32 %v6949, %v6970
        %v6973 = vadd.f32 %v6950, %v6970
        %v6974 = vadd.f32 %v6951, %v6970
        %v6975 = vadd.f32 %v6952, %v6970
        %v6976 = vadd.f32 %v6953, %v6970
        %v6977 = vadd.f32 %v6954, %v6970
        %v6978 = vadd.f32 %v6955, %v6970
        %v6979 = vadd.f32 %v6956, %v6970
        %v6980 = vadd.f32 %v6957, %v6970
        %v6981 = vadd.f32 %v6958, %v6970
        %v6982 = vadd.f32 %v6959, %v6970
        %v6983 = vadd.f32 %v6960, %v6970
        %v6984 = vadd.f32 %v6961, %v6970
        %v6985 = vadd.f32 %v6962, %v6970
        %v6986 = vadd.f32 %v6963, %v6970
        %v6987 = vadd.f32 %v6964, %v6970
        %v6988 = vld [vmem:[%s2526] sm:$0xf]
        %v6989 = vld [vmem:[%s2526 + $0x4] sm:$0xf]
        %v6990 = vld [vmem:[%s2526 + $0x8] sm:$0x1]
        %v6991 = vld [vmem:[%s2526 + $0xc] sm:$0xf]
        %v6992 = vld [vmem:[%s2526 + $0x10] sm:$0xf]
        %v6993 = vld [vmem:[%s2526 + $0x14] sm:$0x1]
        %v6994 = vld [vmem:[%s2526 + $0x18] sm:$0xf]
        %v6995 = vld [vmem:[%s2526 + $0x1c] sm:$0xf]
        %v6996 = vld [vmem:[%s2526 + $0x20] sm:$0x1]
        %v6997 = vld [vmem:[%s2526 + $0x24] sm:$0xf]
        %v6998 = vld [vmem:[%s2526 + $0x28] sm:$0xf]
        %v6999 = vld [vmem:[%s2526 + $0x2c] sm:$0x1]
        %v7000 = vld [vmem:[%s2526 + $0x30] sm:$0xf]
        %v7001 = vld [vmem:[%s2526 + $0x34] sm:$0xf]
        %v7002 = vld [vmem:[%s2526 + $0x38] sm:$0x1]
        %v7003 = vld [vmem:[%s2526 + $0x3c] sm:$0xf]
        %v7004 = vld [vmem:[%s2526 + $0x40] sm:$0xf]
        %v7005 = vld [vmem:[%s2526 + $0x44] sm:$0x1]
        %v7006 = vld [vmem:[%s2526 + $0x48] sm:$0xf]
        %v7007 = vld [vmem:[%s2526 + $0x4c] sm:$0xf]
        %v7008 = vld [vmem:[%s2526 + $0x50] sm:$0x1]
        %v7009 = vld [vmem:[%s2526 + $0x54] sm:$0xf]
        %v7010 = vld [vmem:[%s2526 + $0x58] sm:$0xf]
        %v7011 = vld [vmem:[%s2526 + $0x5c] sm:$0x1]
        %v7013 = vshrl.u32 %v6988, 16
        %v7015 = vrot.slane %v7013, 4
        %v7016 = vshll.u32 %v6988, 16
        %v7018 = vrot.slane %v7016, 5
        %v7019 = vor.u32 %v7015, %v7018
        %v7020 = vrot.slane %v7019, 4
        %v7022 = vshll.u32 %v6989, 16
        %v7024 = vrot.slane %v7022, 5
        %v7025 = vsel %vm370, %v7020, %v7024
        %v7026 = vshrl.u32 %v6989, 16
        %v7028 = vrot.slane %v7026, 4
        %v7029 = vor.u32 %v7028, %v7024
        %v7030 = vrot.slane %v7029, 4
        %v7032 = vshll.u32 %v6990, 16
        %v7034 = vrot.slane %v7032, 5
        %v7035 = vsel %vm370, %v7030, %v7034
        %v7037 = vshrl.u32 %v6991, 16
        %v7039 = vrot.slane %v7037, 4
        %v7040 = vshll.u32 %v6991, 16
        %v7042 = vrot.slane %v7040, 5
        %v7043 = vor.u32 %v7039, %v7042
        %v7044 = vrot.slane %v7043, 4
        %v7046 = vshll.u32 %v6992, 16
        %v7048 = vrot.slane %v7046, 5
        %v7049 = vsel %vm370, %v7044, %v7048
        %v7050 = vshrl.u32 %v6992, 16
        %v7052 = vrot.slane %v7050, 4
        %v7053 = vor.u32 %v7052, %v7048
        %v7054 = vrot.slane %v7053, 4
        %v7056 = vshll.u32 %v6993, 16
        %v7058 = vrot.slane %v7056, 5
        %v7059 = vsel %vm370, %v7054, %v7058
        %v7061 = vshrl.u32 %v6994, 16
        %v7063 = vrot.slane %v7061, 4
        %v7064 = vshll.u32 %v6994, 16
        %v7066 = vrot.slane %v7064, 5
        %v7067 = vor.u32 %v7063, %v7066
        %v7068 = vrot.slane %v7067, 4
        %v7070 = vshll.u32 %v6995, 16
        %v7072 = vrot.slane %v7070, 5
        %v7073 = vsel %vm370, %v7068, %v7072
        %v7074 = vshrl.u32 %v6995, 16
        %v7076 = vrot.slane %v7074, 4
        %v7077 = vor.u32 %v7076, %v7072
        %v7078 = vrot.slane %v7077, 4
        %v7080 = vshll.u32 %v6996, 16
        %v7082 = vrot.slane %v7080, 5
        %v7083 = vsel %vm370, %v7078, %v7082
        %v7085 = vshrl.u32 %v6997, 16
        %v7087 = vrot.slane %v7085, 4
        %v7088 = vshll.u32 %v6997, 16
        %v7090 = vrot.slane %v7088, 5
        %v7091 = vor.u32 %v7087, %v7090
        %v7092 = vrot.slane %v7091, 4
        %v7094 = vshll.u32 %v6998, 16
        %v7096 = vrot.slane %v7094, 5
        %v7097 = vsel %vm370, %v7092, %v7096
        %v7098 = vshrl.u32 %v6998, 16
        %v7100 = vrot.slane %v7098, 4
        %v7101 = vor.u32 %v7100, %v7096
        %v7102 = vrot.slane %v7101, 4
        %v7104 = vshll.u32 %v6999, 16
        %v7106 = vrot.slane %v7104, 5
        %v7107 = vsel %vm370, %v7102, %v7106
        %v7109 = vshrl.u32 %v7000, 16
        %v7111 = vrot.slane %v7109, 4
        %v7112 = vshll.u32 %v7000, 16
        %v7114 = vrot.slane %v7112, 5
        %v7115 = vor.u32 %v7111, %v7114
        %v7116 = vrot.slane %v7115, 4
        %v7118 = vshll.u32 %v7001, 16
        %v7120 = vrot.slane %v7118, 5
        %v7121 = vsel %vm370, %v7116, %v7120
        %v7122 = vshrl.u32 %v7001, 16
        %v7124 = vrot.slane %v7122, 4
        %v7125 = vor.u32 %v7124, %v7120
        %v7126 = vrot.slane %v7125, 4
        %v7128 = vshll.u32 %v7002, 16
        %v7130 = vrot.slane %v7128, 5
        %v7131 = vsel %vm370, %v7126, %v7130
        %v7133 = vshrl.u32 %v7003, 16
        %v7135 = vrot.slane %v7133, 4
        %v7136 = vshll.u32 %v7003, 16
        %v7138 = vrot.slane %v7136, 5
        %v7139 = vor.u32 %v7135, %v7138
        %v7140 = vrot.slane %v7139, 4
        %v7142 = vshll.u32 %v7004, 16
        %v7144 = vrot.slane %v7142, 5
        %v7145 = vsel %vm370, %v7140, %v7144
        %v7146 = vshrl.u32 %v7004, 16
        %v7148 = vrot.slane %v7146, 4
        %v7149 = vor.u32 %v7148, %v7144
        %v7150 = vrot.slane %v7149, 4
        %v7152 = vshll.u32 %v7005, 16
        %v7154 = vrot.slane %v7152, 5
        %v7155 = vsel %vm370, %v7150, %v7154
        %v7157 = vshrl.u32 %v7006, 16
        %v7159 = vrot.slane %v7157, 4
        %v7160 = vshll.u32 %v7006, 16
        %v7162 = vrot.slane %v7160, 5
        %v7163 = vor.u32 %v7159, %v7162
        %v7164 = vrot.slane %v7163, 4
        %v7166 = vshll.u32 %v7007, 16
        %v7168 = vrot.slane %v7166, 5
        %v7169 = vsel %vm370, %v7164, %v7168
        %v7170 = vshrl.u32 %v7007, 16
        %v7172 = vrot.slane %v7170, 4
        %v7173 = vor.u32 %v7172, %v7168
        %v7174 = vrot.slane %v7173, 4
        %v7176 = vshll.u32 %v7008, 16
        %v7178 = vrot.slane %v7176, 5
        %v7179 = vsel %vm370, %v7174, %v7178
        %v7181 = vshrl.u32 %v7009, 16
        %v7183 = vrot.slane %v7181, 4
        %v7184 = vshll.u32 %v7009, 16
        %v7186 = vrot.slane %v7184, 5
        %v7187 = vor.u32 %v7183, %v7186
        %v7188 = vrot.slane %v7187, 4
        %v7190 = vshll.u32 %v7010, 16
        %v7192 = vrot.slane %v7190, 5
        %v7193 = vsel %vm370, %v7188, %v7192
        %v7194 = vshrl.u32 %v7010, 16
        %v7196 = vrot.slane %v7194, 4
        %v7197 = vor.u32 %v7196, %v7192
        %v7198 = vrot.slane %v7197, 4
        %v7200 = vshll.u32 %v7011, 16
        %v7202 = vrot.slane %v7200, 5
        %v7203 = vsel %vm370, %v7198, %v7202
        %v7204 = vld [vmem:[%s5] sm:$0xf]
        %v7205 = vld [vmem:[%s5 + $0x4] sm:$0xf]
        %v7206 = vld [vmem:[%s5 + $0x8] sm:$0xf]
        %v7207 = vld [vmem:[%s5 + $0xc] sm:$0xf]
        %v7208 = vld [vmem:[%s5 + $0x10] sm:$0xf]
        %v7209 = vld [vmem:[%s5 + $0x14] sm:$0xf]
        %v7210 = vld [vmem:[%s5 + $0x18] sm:$0xf]
        %v7211 = vld [vmem:[%s5 + $0x1c] sm:$0xf]
        %v7212 = vld [vmem:[%s5 + $0x20] sm:$0xf]
        %v7213 = vld [vmem:[%s5 + $0x24] sm:$0xf]
        %v7214 = vld [vmem:[%s5 + $0x28] sm:$0xf]
        %v7215 = vld [vmem:[%s5 + $0x2c] sm:$0xf]
        %v7216 = vld [vmem:[%s5 + $0x30] sm:$0xf]
        %v7217 = vld [vmem:[%s5 + $0x34] sm:$0xf]
        %v7218 = vld [vmem:[%s5 + $0x38] sm:$0xf]
        %v7219 = vld [vmem:[%s5 + $0x3c] sm:$0xf]
        %v7220 = vld [vmem:[%s6] sm:$0x1]
        %v7222 = vlaneseq
        %v7223 = vshrl.u32 %v7222, 7
        %v7224 = vsub.s32 0, %v7223
        %v7225 = vrot.slane %v7220, %v7224
        %v7227 = vunpack.c.l.b16 %v7025
        %v7228 = vunpack.c.l.b16 %v7035
        %v7229 = vunpack.c.l.b16 %v7049
        %v7230 = vunpack.c.l.b16 %v7059
        %v7231 = vunpack.c.l.b16 %v7073
        %v7232 = vunpack.c.l.b16 %v7083
        %v7233 = vunpack.c.l.b16 %v7097
        %v7234 = vunpack.c.l.b16 %v7107
        %v7235 = vunpack.c.l.b16 %v7121
        %v7236 = vunpack.c.l.b16 %v7131
        %v7237 = vunpack.c.l.b16 %v7145
        %v7238 = vunpack.c.l.b16 %v7155
        %v7239 = vunpack.c.l.b16 %v7169
        %v7240 = vunpack.c.l.b16 %v7179
        %v7241 = vunpack.c.l.b16 %v7193
        %v7242 = vunpack.c.l.b16 %v7203
        %v7243 = vpack.c.b16 %v7228, %v7227
        %v7244 = vpack.c.b16 %v7230, %v7229
        %v7245 = vpack.c.b16 %v7232, %v7231
        %v7246 = vpack.c.b16 %v7234, %v7233
        %v7247 = vpack.c.b16 %v7236, %v7235
        %v7248 = vpack.c.b16 %v7238, %v7237
        %v7249 = vpack.c.b16 %v7240, %v7239
        %v7250 = vpack.c.b16 %v7242, %v7241
        %v7275 = vunpack.c.l.b16 %v7204
        %v7276 = vunpack.c.l.b16 %v7205
        %v7277 = vunpack.c.l.b16 %v7206
        %v7278 = vunpack.c.l.b16 %v7207
        %v7279 = vunpack.c.l.b16 %v7208
        %v7280 = vunpack.c.l.b16 %v7209
        %v7281 = vunpack.c.l.b16 %v7210
        %v7282 = vunpack.c.l.b16 %v7211
        %v7283 = vunpack.c.l.b16 %v7212
        %v7284 = vunpack.c.l.b16 %v7213
        %v7285 = vunpack.c.l.b16 %v7214
        %v7286 = vunpack.c.l.b16 %v7215
        %v7287 = vunpack.c.l.b16 %v7216
        %v7288 = vunpack.c.l.b16 %v7217
        %v7289 = vunpack.c.l.b16 %v7218
        %v7290 = vunpack.c.l.b16 %v7219
        %v7291 = vpack.c.b16 %v7276, %v7275
        %v7292 = vpack.c.b16 %v7278, %v7277
        %v7293 = vpack.c.b16 %v7280, %v7279
        %v7294 = vpack.c.b16 %v7282, %v7281
        %v7295 = vpack.c.b16 %v7284, %v7283
        %v7296 = vpack.c.b16 %v7286, %v7285
        %v7297 = vpack.c.b16 %v7288, %v7287
        %v7298 = vpack.c.b16 %v7290, %v7289
        %7307 = vmatprep.subr.bf16.mxu0 0
        %7308 = vmatpush1.bf16.msra.mxu0 %v7291
        %7309 = vmatprep.subr.bf16.mxu0 0
        %7310 = vmatpush1.bf16.msra.mxu0 %v7292
        %7311 = vmatprep.subr.bf16.mxu0 0
        %7312 = vmatpush1.bf16.msra.mxu0 %v7293
        %7313 = vmatprep.subr.bf16.mxu0 0
        %7314 = vmatpush1.bf16.msra.mxu0 %v7294
        %7315 = vmatprep.subr.bf16.mxu0 0
        %7316 = vmatpush1.bf16.msra.mxu0 %v7295
        %7317 = vmatprep.subr.bf16.mxu0 0
        %7318 = vmatpush1.bf16.msra.mxu0 %v7296
        %7319 = vmatprep.subr.bf16.mxu0 0
        %7320 = vmatpush1.bf16.msra.mxu0 %v7297
        %7321 = vmatprep.subr.bf16.mxu0 0
        %7322 = vmatpush1.bf16.msra.mxu0 %v7298
        %7323 = vmatprep.subr.bf16.mxu0 0
        %7324 = vmatpush1.bf16.msra.mxu0 0
        %7325 = vmatprep.subr.bf16.mxu0 0
        %7326 = vmatpush1.bf16.msra.mxu0 0
        %7327 = vmatprep.subr.bf16.mxu0 0
        %7328 = vmatpush1.bf16.msra.mxu0 0
        %7329 = vmatprep.subr.bf16.mxu0 0
        %7330 = vmatpush1.bf16.msra.mxu0 0
        %7331 = vmatprep.subr.bf16.mxu0 0
        %7332 = vmatpush1.bf16.msra.mxu0 0
        %7333 = vmatprep.subr.bf16.mxu0 0
        %7334 = vmatpush1.bf16.msra.mxu0 0
        %7335 = vmatprep.subr.bf16.mxu0 0
        %7336 = vmatpush1.bf16.msra.mxu0 0
        %7337 = vmatprep.subr.bf16.mxu0 0
        %7338 = vmatpush1.bf16.msra.mxu0 0
        %7339 = vmatprep.mubr.bf16.mxu0 0
        %7340 = vmatmul.mubr.bf16.gmra.mrb[0].mxu0 %v7243
        %v7341 = vpop.f32.mrb[0].mxu0
        %v7342 = vadd.f32 %v7225, %v7341
        %v7343 = vpop.f32.mrb[0].mxu0
        %v7344 = vpop.f32.mrb[0].mxu0
        %v7345 = vadd.f32 %v7225, %v7344
        %v7346 = vpop.f32.mrb[0].mxu0
        %7347 = vmatprep.mubr.bf16.mxu0 0
        %7348 = vmatmul.mubr.bf16.gmra.mrb[0].mxu0 %v7244
        %v7349 = vpop.f32.mrb[0].mxu0
        %v7350 = vadd.f32 %v7225, %v7349
        %v7351 = vpop.f32.mrb[0].mxu0
        %v7352 = vpop.f32.mrb[0].mxu0
        %v7353 = vadd.f32 %v7225, %v7352
        %v7354 = vpop.f32.mrb[0].mxu0
        %7355 = vmatprep.mubr.bf16.mxu0 0
        %7356 = vmatmul.mubr.bf16.gmra.mrb[0].mxu0 %v7245
        %v7357 = vpop.f32.mrb[0].mxu0
        %v7358 = vadd.f32 %v7225, %v7357
        %v7359 = vpop.f32.mrb[0].mxu0
        %v7360 = vpop.f32.mrb[0].mxu0
        %v7361 = vadd.f32 %v7225, %v7360
        %v7362 = vpop.f32.mrb[0].mxu0
        %7363 = vmatprep.mubr.bf16.mxu0 0
        %7364 = vmatmul.mubr.bf16.gmra.mrb[0].mxu0 %v7246
        %v7365 = vpop.f32.mrb[0].mxu0
        %v7366 = vadd.f32 %v7225, %v7365
        %v7367 = vpop.f32.mrb[0].mxu0
        %v7368 = vpop.f32.mrb[0].mxu0
        %v7369 = vadd.f32 %v7225, %v7368
        %v7370 = vpop.f32.mrb[0].mxu0
        %7371 = vmatprep.mubr.bf16.mxu0 0
        %7372 = vmatmul.mubr.bf16.gmra.mrb[0].mxu0 %v7247
        %v7373 = vpop.f32.mrb[0].mxu0
        %v7374 = vadd.f32 %v7225, %v7373
        %v7375 = vpop.f32.mrb[0].mxu0
        %v7376 = vpop.f32.mrb[0].mxu0
        %v7377 = vadd.f32 %v7225, %v7376
        %v7378 = vpop.f32.mrb[0].mxu0
        %7379 = vmatprep.mubr.bf16.mxu0 0
        %7380 = vmatmul.mubr.bf16.gmra.mrb[0].mxu0 %v7248
        %v7381 = vpop.f32.mrb[0].mxu0
        %v7382 = vadd.f32 %v7225, %v7381
        %v7383 = vpop.f32.mrb[0].mxu0
        %v7384 = vpop.f32.mrb[0].mxu0
        %v7385 = vadd.f32 %v7225, %v7384
        %v7386 = vpop.f32.mrb[0].mxu0
        %7387 = vmatprep.mubr.bf16.mxu0 0
        %7388 = vmatmul.mubr.bf16.gmra.mrb[0].mxu0 %v7249
        %v7389 = vpop.f32.mrb[0].mxu0
        %v7390 = vadd.f32 %v7225, %v7389
        %v7391 = vpop.f32.mrb[0].mxu0
        %v7392 = vpop.f32.mrb[0].mxu0
        %v7393 = vadd.f32 %v7225, %v7392
        %v7394 = vpop.f32.mrb[0].mxu0
        %7395 = vmatprep.mubr.bf16.mxu0 0
        %7396 = vmatmul.mubr.bf16.gmra.mrb[0].mxu0 %v7250
        %v7397 = vpop.f32.mrb[0].mxu0
        %v7398 = vadd.f32 %v7225, %v7397
        %v7399 = vpop.f32.mrb[0].mxu0
        %v7400 = vpop.f32.mrb[0].mxu0
        %v7401 = vadd.f32 %v7225, %v7400
        %v7402 = vpop.f32.mrb[0].mxu0
        %7403 = vdwg.mxu0
        %v7404 = vadd.f32 %v7342, %v6972
        %v7405 = vadd.f32 %v7345, %v6973
        %v7406 = vadd.f32 %v7350, %v6974
        %v7407 = vadd.f32 %v7353, %v6975
        %v7408 = vadd.f32 %v7358, %v6976
        %v7409 = vadd.f32 %v7361, %v6977
        %v7410 = vadd.f32 %v7366, %v6978
        %v7411 = vadd.f32 %v7369, %v6979
        %v7412 = vadd.f32 %v7374, %v6980
        %v7413 = vadd.f32 %v7377, %v6981
        %v7414 = vadd.f32 %v7382, %v6982
        %v7415 = vadd.f32 %v7385, %v6983
        %v7416 = vadd.f32 %v7390, %v6984
        %v7417 = vadd.f32 %v7393, %v6985
        %v7418 = vadd.f32 %v7398, %v6986
        %v7419 = vadd.f32 %v7401, %v6987
        %v7420 = vmul.f32 %v7404, 0.7072136
        %v7421 = vmul.f32 %v7405, 0.7072136
        %v7422 = vmul.f32 %v7406, 0.7072136
        %v7423 = vmul.f32 %v7407, 0.7072136
        %v7424 = vmul.f32 %v7408, 0.7072136
        %v7425 = vmul.f32 %v7409, 0.7072136
        %v7426 = vmul.f32 %v7410, 0.7072136
        %v7427 = vmul.f32 %v7411, 0.7072136
        %v7428 = vmul.f32 %v7412, 0.7072136
        %v7429 = vmul.f32 %v7413, 0.7072136
        %v7430 = vmul.f32 %v7414, 0.7072136
        %v7431 = vmul.f32 %v7415, 0.7072136
        %v7432 = vmul.f32 %v7416, 0.7072136
        %v7433 = vmul.f32 %v7417, 0.7072136
        %v7434 = vmul.f32 %v7418, 0.7072136
        %v7435 = vmul.f32 %v7419, 0.7072136
        %v7436 = vmax.f32 %v7420, 0.0
        %v7437 = vmax.f32 %v7421, 0.0
        %v7438 = vmax.f32 %v7422, 0.0
        %v7439 = vmax.f32 %v7423, 0.0
        %v7440 = vmax.f32 %v7424, 0.0
        %v7441 = vmax.f32 %v7425, 0.0
        %v7442 = vmax.f32 %v7426, 0.0
        %v7443 = vmax.f32 %v7427, 0.0
        %v7444 = vmax.f32 %v7428, 0.0
        %v7445 = vmax.f32 %v7429, 0.0
        %v7446 = vmax.f32 %v7430, 0.0
        %v7447 = vmax.f32 %v7431, 0.0
        %v7448 = vmax.f32 %v7432, 0.0
        %v7449 = vmax.f32 %v7433, 0.0
        %v7450 = vmax.f32 %v7434, 0.0
        %v7451 = vmax.f32 %v7435, 0.0
        %7452 = vst [vmem:[%s310] sm:$0xff] %v7436
        %7453 = vst [vmem:[%s310 + $0x8] sm:$0xff] %v7437
        %7454 = vst [vmem:[%s310 + $0x10] sm:$0xff] %v7438
        %7455 = vst [vmem:[%s310 + $0x18] sm:$0xff] %v7439
        %7456 = vst [vmem:[%s310 + $0x20] sm:$0xff] %v7440
        %7457 = vst [vmem:[%s310 + $0x28] sm:$0xff] %v7441
        %7458 = vst [vmem:[%s310 + $0x30] sm:$0xff] %v7442
        %7459 = vst [vmem:[%s310 + $0x38] sm:$0xff] %v7443
        %7460 = vst [vmem:[%s310 + $0x40] sm:$0xff] %v7444
        %7461 = vst [vmem:[%s310 + $0x48] sm:$0xff] %v7445
        %7462 = vst [vmem:[%s310 + $0x50] sm:$0xff] %v7446
        %7463 = vst [vmem:[%s310 + $0x58] sm:$0xff] %v7447
        %7464 = vst [vmem:[%s310 + $0x60] sm:$0xff] %v7448
        %7465 = vst [vmem:[%s310 + $0x68] sm:$0xff] %v7449
        %7466 = vst [vmem:[%s310 + $0x70] sm:$0xff] %v7450
        %7467 = vst [vmem:[%s310 + $0x78] sm:$0xff] %v7451
        %s7468 = sand.u32 %s198, 1
        %s7469 = scalar_lea.sflag [#allocation5], %s7468
        %s7470 = sand.u32 %s198, 1
        %s7471 = smul.addr %s7470, 128
        %s7472 = scalar_lea.vmem [#allocation6], %s7471
        // Predicated region
        $region61: #{tpu_custom_call.1} parent=47 // pred_check
          %p7473 = pneg %p208
        $region62: #{tpu_custom_call.1} parent=47 // pred_check_branch
          %7475 = sbr.rel (%p7473) target = $region64
        $region63: #{tpu_custom_call.1} parent=47 // pred_region
          %s7476 = smul.u32 8, %s27
          %s7478 = ssub.s32 2048, 2048
          %7479 = vsyncadd %s7469, %s7478
          %s7480 = smul.addr %s7476, 2
          %s7481 = smul.addr %s26, 32
          %s7482 = sadd.s32 %s7480, %s7481
          %s7483 = smul.addr %s7482, 128
          %s7484 = scalar_lea.hbm %s7, %s7483
          %s7485 = sshll.u32 %s7472, 4
          %s7486 = int_to_ptr.vmem [resolvable:$true] %s7485
          %7491 = dma.vmem_to_hbm [thread:$0]  %s7486, 2048, %s7484, %s7469, 128, 128, 8
        $region64: #{tpu_custom_call.1} parent=47 // pred_fallthru
          _
      $region48: #{tpu_custom_call.1} parent=5 // pred_fallthru
        _
      %p7492 = scmp.le.s32.totalorder 2, %s17
      // Predicated region
      $region65: #{tpu_custom_call.1} parent=5 // pred_check
        %p7493 = pneg %p7492
      $region66: #{tpu_custom_call.1} parent=5 // pred_check_branch
        %7495 = sbr.rel (%p7493) target = $region68
      $region67: #{tpu_custom_call.1} parent=5 // pred_region
        %s7496 = ssub.s32 %s17, 2
        // Predicated region
        $region69: #{tpu_custom_call.1} parent=67 // pred_check
          %p7497 = pneg %p214
        $region70: #{tpu_custom_call.1} parent=67 // pred_check_branch
          %7499 = sbr.rel (%p7497) target = $region72
        $region71: #{tpu_custom_call.1} parent=67 // pred_region
          %s7500 = sand.u32 %s199, 1
          %s7501 = scalar_lea.sflag [#allocation5], %s7500
          %s7502 = sand.u32 %s199, 1
          %s7503 = smul.addr %s7502, 128
          %s7504 = scalar_lea.vmem [#allocation6], %s7503
          %7505 = dma.done %s7501, 2048
        $region72: #{tpu_custom_call.1} parent=67 // pred_fallthru
          _
      $region68: #{tpu_custom_call.1} parent=5 // pred_fallthru
        _
    $region6: #{tpu_custom_call.1} parent=1 // loop_footer
      %s21 = sadd.s32 1, %s17
    $region7: #{tpu_custom_call.1} parent=1 // loop_footer_branch
      %16 = sbr.rel target = $region3
    $region8: #{tpu_custom_call.1} parent=1 // loop_exit
      _
    %7506 = vsyncpa [#allocation4], 1
    %s7507 = scalar_lea.sflag [#allocation4], 1
    %7508 = vsyncpa %s7507, 1
    %7509 = vsyncpa [#allocation5], 1
    %s7510 = scalar_lea.sflag [#allocation5], 1
    %7511 = vsyncpa %s7510, 1

</llo_original>
